<compile_context>
chip_gen: v5e
topology: v5e:2x2
jax: 0.10.0
libtpu: 0.0.40
codegen_flags: <defaults>
</compile_context>

<pallas_src>
import functools

import jax
import jax.numpy as jnp
from jax.experimental import pallas as pl
from jax.experimental.pallas import tpu as pltpu

LANES = 128  # conv/dense output channels are zero-padded to one lane group


def _round_up(x, m):
    return (x + m - 1) // m * m


# ---------------------------------------------------------------------------
# Kernel 1: fused  Conv2d(k, stride 1, valid)  (+ bias / folded BN shift)
#                  + MaxPool2d(2) + ReLU,   one image per grid step.
# Input  x:  (1, H, W, Cin)      (f32 for conv1, bf16 for conv2)
# Weight w:  (k*k*Cin, 128) bf16 (BN scale pre-folded, Cout zero-padded)
# shift:     (1, 128) f32
# Output:    (1, Ho/2 * Wo/2, 128) bf16, rows in (ph, pw) row-major order.
# ---------------------------------------------------------------------------
def _conv_pool_relu_kernel(x_ref, w_ref, shift_ref, o_ref, scr_ref,
                           *, k, ho, wo, cin):
    ho2, wo2 = ho // 2, wo // 2
    p = ho * wo

    # f32 working copy keeps every reshape below (8,128)-tile aligned.
    x = x_ref[0].astype(jnp.float32)                     # (H, W, Cin)

    # In-kernel im2col, one (kh, kw) tap at a time: static contiguous slices of
    # the VMEM-resident image; the patch matrix never exists in HBM.
    acc = jnp.zeros((p, LANES), jnp.float32)
    for i in range(k):
        for j in range(k):
            piece = x[i:i + ho, j:j + wo, :].reshape(p, cin)   # wo % 8 == 0
            r0 = (i * k + j) * cin
            if cin == 1:
                # conv1: rank-1 update on the VPU (avoids K=1 MXU underfill).
                acc = acc + piece * w_ref[pl.ds(r0, 1), :].astype(jnp.float32)
            else:
                acc = acc + jnp.dot(piece.astype(jnp.bfloat16),
                                    w_ref[pl.ds(r0, cin), :],
                                    preferred_element_type=jnp.float32)

    acc = acc + shift_ref[...]                           # bias / folded BN shift

    # Fused MaxPool2d(2) + ReLU (conv -> [BN] -> pool -> relu order preserved).
    acc4 = acc.reshape(ho2, 2, wo, LANES)                # aligned: wo % 8 == 0
    hmax = jnp.maximum(acc4[:, 0], acc4[:, 1])           # pool over row pairs
    scr_ref[...] = hmax.reshape(ho2 * wo, LANES)
    even = scr_ref[pl.ds(0, ho2 * wo2, 2), :]            # pool over column pairs
    odd = scr_ref[pl.ds(1, ho2 * wo2, 2), :]             # (strided VMEM load)
    pooled = jnp.maximum(jnp.maximum(even, odd), 0.0)    # ReLU
    o_ref[0] = pooled.astype(o_ref.dtype)                # bf16, lane-dense store


def conv_pool_relu(x, wmat, shift, *, k, ho, wo, cin):
    """x: (N, H, W, Cin) -> (N, (ho//2)*(wo//2), 128) bf16, pooled NHWC rows."""
    assert wo % 8 == 0 and ho % 2 == 0 and wo % 2 == 0
    n = x.shape[0]
    p2 = (ho // 2) * (wo // 2)
    kernel = functools.partial(_conv_pool_relu_kernel, k=k, ho=ho, wo=wo, cin=cin)

    flops = 2 * n * ho * wo * (k * k * cin) * LANES
    bytes_accessed = (x.size * jnp.dtype(x.dtype).itemsize
                      + wmat.size * 2 + n * p2 * LANES * 2)

    return pl.pallas_call(
        kernel,
        grid=(n,),                                       # one image per step
        in_specs=[
            pl.BlockSpec((1,) + x.shape[1:], lambda i: (i, 0, 0, 0)),
            pl.BlockSpec(wmat.shape, lambda i: (0, 0)),  # resident weights
            pl.BlockSpec((1, LANES), lambda i: (0, 0)),  # resident shift
        ],
        out_specs=pl.BlockSpec((1, p2, LANES), lambda i: (i, 0, 0)),
        out_shape=jax.ShapeDtypeStruct((n, p2, LANES), jnp.bfloat16),
        scratch_shapes=[pltpu.VMEM(((ho // 2) * wo, LANES), jnp.float32)],
        compiler_params=pltpu.CompilerParams(dimension_semantics=("parallel",)),
        cost_estimate=pl.CostEstimate(flops=flops, transcendentals=0,
                                      bytes_accessed=bytes_accessed),
    )(x, wmat, shift)


# ---------------------------------------------------------------------------
# Kernel 2: fused dense head
#   out = relu( relu(x @ W1 + s1) @ W2 + s2 )   (BN scale folded into W1)
# x: (M, 2048) bf16 (flattened conv2 output, zero-padded lanes), out: (M, 128).
# ---------------------------------------------------------------------------
def _dense_head_kernel(x_ref, w1_ref, s1_ref, w2_ref, s2_ref, o_ref):
    h = jnp.dot(x_ref[...], w1_ref[...], preferred_element_type=jnp.float32)
    h = jnp.maximum(h + s1_ref[...], 0.0)
    y = jnp.dot(h.astype(jnp.bfloat16), w2_ref[...],
                preferred_element_type=jnp.float32)
    o_ref[...] = jnp.maximum(y + s2_ref[...], 0.0).astype(o_ref.dtype)


def _pick_tm(m, cap=512):
    # >=2 row tiles when possible (keeps both v7x TensorCores busy), blocks
    # stay (8,128)-legal, and VMEM bounded for huge batches.
    if m < 16 or m % 8 != 0:
        return m                     # single block == full dim (always legal)
    return min(cap, _round_up(pl.cdiv(m, 2), 8))


def fused_dense(x, w1, s1, w2, s2):
    m, kdim = x.shape
    tm = _pick_tm(m)
    grid_m = pl.cdiv(m, tm)

    flops = 2 * m * (kdim * LANES + LANES * LANES)
    bytes_accessed = m * kdim * 2 + w1.size * 2 + w2.size * 2 + m * LANES * 4

    return pl.pallas_call(
        _dense_head_kernel,
        grid=(grid_m,),
        in_specs=[
            pl.BlockSpec((tm, kdim), lambda i: (i, 0)),  # streamed row tiles
            pl.BlockSpec(w1.shape, lambda i: (0, 0)),    # resident weights
            pl.BlockSpec((1, LANES), lambda i: (0, 0)),
            pl.BlockSpec(w2.shape, lambda i: (0, 0)),
            pl.BlockSpec((1, LANES), lambda i: (0, 0)),
        ],
        out_specs=pl.BlockSpec((tm, LANES), lambda i: (i, 0)),
        out_shape=jax.ShapeDtypeStruct((m, LANES), jnp.float32),
        compiler_params=pltpu.CompilerParams(dimension_semantics=("parallel",)),
        cost_estimate=pl.CostEstimate(flops=flops, transcendentals=0,
                                      bytes_accessed=bytes_accessed),
    )(x, w1, s1, w2, s2)


# ---------------------------------------------------------------------------
# Full forward pass (BatchNorm in inference mode, running stats folded).
# ---------------------------------------------------------------------------
def compliant_relu_forward(x_nchw, params):
    eps = 1e-5
    n = x_nchw.shape[0]

    # NCHW -> NHWC once; with Cin == 1 this is a free (bitcast) reshape.
    x = x_nchw.transpose(0, 2, 3, 1)                     # (N, 28, 28, 1)

    # ---- Conv2d(1,10,5)+bias -> MaxPool2d(2) -> ReLU (one fused kernel) ----
    w1 = params["w1"]                                    # (10, 1, 5, 5)
    w1mat = jnp.zeros((25, LANES), jnp.float32)
    w1mat = w1mat.at[:, :10].set(w1.transpose(2, 3, 1, 0).reshape(25, 10))
    s1 = jnp.zeros((1, LANES), jnp.float32).at[0, :10].set(params["b1"])
    y = conv_pool_relu(x, w1mat.astype(jnp.bfloat16), s1,
                       k=5, ho=24, wo=24, cin=1)         # (N, 144, 128) bf16
    y = y.reshape(n, 12, 12, LANES)                      # free row-major bitcast

    # ---- Conv2d(10,20,5)+bias -> BatchNorm2d(20) -> MaxPool2d(2) -> ReLU ---
    s2 = params["bn2_gamma"] / jnp.sqrt(params["bn2_var"] + eps)
    t2 = (params["b2"] - params["bn2_mean"]) * s2 + params["bn2_beta"]
    w2t = params["w2"].transpose(2, 3, 1, 0) * s2.reshape(1, 1, 1, 20)  # fold BN
    w2mat = jnp.zeros((5, 5, LANES, LANES), jnp.float32)
    w2mat = w2mat.at[:, :, :10, :20].set(w2t).reshape(25 * LANES, LANES)
    s2v = jnp.zeros((1, LANES), jnp.float32).at[0, :20].set(t2)
    y = conv_pool_relu(y, w2mat.astype(jnp.bfloat16), s2v,
                       k=5, ho=8, wo=8, cin=LANES)       # (N, 16, 128) bf16

    # ---- flatten: PyTorch's x.view(-1, 320) is (c, h, w)-major.  Fold that
    # permutation into dense1's weights; the activation reshape is a bitcast. --
    y = y.reshape(n, 16 * LANES)                         # cols ordered (p, c)

    s3 = params["bn1d_gamma"] / jnp.sqrt(params["bn1d_var"] + eps)
    t3 = (params["d1_b"] - params["bn1d_mean"]) * s3 + params["bn1d_beta"]
    w1eff = (params["d1_w"] * s3[:, None]).T.reshape(20, 16, 50)   # [c, p, o]
    w1p = jnp.zeros((16, LANES, LANES), jnp.float32)
    w1p = w1p.at[:, :20, :50].set(jnp.transpose(w1eff, (1, 0, 2)))  # [p, c, o]
    w1p = w1p.reshape(16 * LANES, LANES)
    t3v = jnp.zeros((1, LANES), jnp.float32).at[0, :50].set(t3)

    w2p = jnp.zeros((LANES, LANES), jnp.float32).at[:50, :10].set(params["d2_w"].T)
    b2v = jnp.zeros((1, LANES), jnp.float32).at[0, :10].set(params["d2_b"])

    out = fused_dense(y, w1p.astype(jnp.bfloat16), t3v,
                      w2p.astype(jnp.bfloat16), b2v)     # (N, 128) f32
    return out[:, :10]


if __name__ == "__main__":
    key = jax.random.PRNGKey(0)
    ks = jax.random.split(key, 9)

    # Deterministic synthetic parameters (shapes from the module's __init__).
    params = {
        "w1": jax.random.normal(ks[0], (10, 1, 5, 5), jnp.float32) * 0.1,
        "b1": jax.random.normal(ks[1], (10,), jnp.float32) * 0.1,
        "w2": jax.random.normal(ks[2], (20, 10, 5, 5), jnp.float32) * 0.05,
        "b2": jax.random.normal(ks[3], (20,), jnp.float32) * 0.1,
        "bn2_gamma": jnp.ones((20,), jnp.float32),
        "bn2_beta": jnp.zeros((20,), jnp.float32),
        "bn2_mean": jnp.zeros((20,), jnp.float32),
        "bn2_var": jnp.ones((20,), jnp.float32),
        "d1_w": jax.random.normal(ks[4], (50, 320), jnp.float32) * 0.05,
        "d1_b": jax.random.normal(ks[5], (50,), jnp.float32) * 0.1,
        "bn1d_gamma": jnp.ones((50,), jnp.float32),
        "bn1d_beta": jnp.zeros((50,), jnp.float32),
        "bn1d_mean": jnp.zeros((50,), jnp.float32),
        "bn1d_var": jnp.ones((50,), jnp.float32),
        "d2_w": jax.random.normal(ks[6], (10, 50), jnp.float32) * 0.1,
        "d2_b": jax.random.normal(ks[7], (10,), jnp.float32) * 0.1,
    }

    # 28x28 input is required by the architecture (20 * 4 * 4 = 320 features).
    x = jax.random.normal(ks[8], (2, 1, 28, 28), jnp.float32)

    out = jax.jit(compliant_relu_forward)(x, params)
    out = jax.block_until_ready(out)
    assert out.shape == (2, 10) and out.dtype == jnp.float32
    assert bool(jnp.all(out >= 0.0))  # final ReLU
    print("KERNEL_OK")
</pallas_src>

<mosaic_0001>
module attributes {stable_mosaic.version = 11 : i64} {
  func.func @_conv_pool_relu_kernel(%arg0: i32, %arg1: memref<1x28x28x1xf32, #tpu.memory_space<vmem>>, %arg2: memref<25x128xbf16, #tpu.memory_space<vmem>>, %arg3: memref<1x128xf32, #tpu.memory_space<vmem>>, %arg4: memref<1x144x128xbf16, #tpu.memory_space<vmem>>, %arg5: memref<288x128xf32, #tpu.memory_space<vmem>>) attributes {dimension_semantics = [#tpu.dimension_semantics<parallel>], iteration_bounds = array<i64: 2>, scalar_prefetch = 0 : i64, scratch_operands = 1 : i64, tpu.core_type = #tpu.core_type<tc>, window_params = [{transform_indices = @transform_0, window_bounds = array<i64: 1, 28, 28, 1>}, {pipeline_mode = #tpu.pipeline_mode<synchronous>, transform_indices = @transform_1, window_bounds = array<i64: 25, 128>}, {pipeline_mode = #tpu.pipeline_mode<synchronous>, transform_indices = @transform_2, window_bounds = array<i64: 1, 128>}, {transform_indices = @transform_3, window_bounds = array<i64: 1, 144, 128>}]} {
    %c0 = arith.constant 0 : index
    %c0_0 = arith.constant 0 : index
    %c0_1 = arith.constant 0 : index
    %c0_2 = arith.constant 0 : index
    %0 = vector.load %arg1[%c0, %c0_0, %c0_1, %c0_2] : memref<1x28x28x1xf32, #tpu.memory_space<vmem>>, vector<1x28x28x1xf32>
    %1 = vector.shape_cast %0 : vector<1x28x28x1xf32> to vector<28x28x1xf32>
    %cst = arith.constant 0.000000e+00 : f32
    %2 = vector.broadcast %cst : f32 to vector<576x128xf32>
    %3 = vector.extract_strided_slice %1 {offsets = [0, 0, 0], sizes = [24, 24, 1], strides = [1, 1, 1]} : vector<28x28x1xf32> to vector<24x24x1xf32>
    %4 = vector.shape_cast %3 : vector<24x24x1xf32> to vector<576x1xf32>
    %c0_3 = arith.constant 0 : index
    %c0_4 = arith.constant 0 : index
    %5 = vector.load %arg2[%c0_3, %c0_4] : memref<25x128xbf16, #tpu.memory_space<vmem>>, vector<1x128xbf16>
    %6 = arith.extf %5 : vector<1x128xbf16> to vector<1x128xf32>
    %7 = vector.broadcast %4 : vector<576x1xf32> to vector<576x128xf32>
    %8 = vector.broadcast %6 : vector<1x128xf32> to vector<576x128xf32>
    %9 = arith.mulf %7, %8 : vector<576x128xf32>
    %10 = arith.addf %2, %9 : vector<576x128xf32>
    %11 = vector.extract_strided_slice %1 {offsets = [0, 1, 0], sizes = [24, 24, 1], strides = [1, 1, 1]} : vector<28x28x1xf32> to vector<24x24x1xf32>
    %12 = vector.shape_cast %11 : vector<24x24x1xf32> to vector<576x1xf32>
    %c1 = arith.constant 1 : index
    %c0_5 = arith.constant 0 : index
    %13 = vector.load %arg2[%c1, %c0_5] : memref<25x128xbf16, #tpu.memory_space<vmem>>, vector<1x128xbf16>
    %14 = arith.extf %13 : vector<1x128xbf16> to vector<1x128xf32>
    %15 = vector.broadcast %12 : vector<576x1xf32> to vector<576x128xf32>
    %16 = vector.broadcast %14 : vector<1x128xf32> to vector<576x128xf32>
    %17 = arith.mulf %15, %16 : vector<576x128xf32>
    %18 = arith.addf %10, %17 : vector<576x128xf32>
    %19 = vector.extract_strided_slice %1 {offsets = [0, 2, 0], sizes = [24, 24, 1], strides = [1, 1, 1]} : vector<28x28x1xf32> to vector<24x24x1xf32>
    %20 = vector.shape_cast %19 : vector<24x24x1xf32> to vector<576x1xf32>
    %c2 = arith.constant 2 : index
    %c0_6 = arith.constant 0 : index
    %21 = vector.load %arg2[%c2, %c0_6] : memref<25x128xbf16, #tpu.memory_space<vmem>>, vector<1x128xbf16>
    %22 = arith.extf %21 : vector<1x128xbf16> to vector<1x128xf32>
    %23 = vector.broadcast %20 : vector<576x1xf32> to vector<576x128xf32>
    %24 = vector.broadcast %22 : vector<1x128xf32> to vector<576x128xf32>
    %25 = arith.mulf %23, %24 : vector<576x128xf32>
    %26 = arith.addf %18, %25 : vector<576x128xf32>
    %27 = vector.extract_strided_slice %1 {offsets = [0, 3, 0], sizes = [24, 24, 1], strides = [1, 1, 1]} : vector<28x28x1xf32> to vector<24x24x1xf32>
    %28 = vector.shape_cast %27 : vector<24x24x1xf32> to vector<576x1xf32>
    %c3 = arith.constant 3 : index
    %c0_7 = arith.constant 0 : index
    %29 = vector.load %arg2[%c3, %c0_7] : memref<25x128xbf16, #tpu.memory_space<vmem>>, vector<1x128xbf16>
    %30 = arith.extf %29 : vector<1x128xbf16> to vector<1x128xf32>
    %31 = vector.broadcast %28 : vector<576x1xf32> to vector<576x128xf32>
    %32 = vector.broadcast %30 : vector<1x128xf32> to vector<576x128xf32>
    %33 = arith.mulf %31, %32 : vector<576x128xf32>
    %34 = arith.addf %26, %33 : vector<576x128xf32>
    %35 = vector.extract_strided_slice %1 {offsets = [0, 4, 0], sizes = [24, 24, 1], strides = [1, 1, 1]} : vector<28x28x1xf32> to vector<24x24x1xf32>
    %36 = vector.shape_cast %35 : vector<24x24x1xf32> to vector<576x1xf32>
    %c4 = arith.constant 4 : index
    %c0_8 = arith.constant 0 : index
    %37 = vector.load %arg2[%c4, %c0_8] : memref<25x128xbf16, #tpu.memory_space<vmem>>, vector<1x128xbf16>
    %38 = arith.extf %37 : vector<1x128xbf16> to vector<1x128xf32>
    %39 = vector.broadcast %36 : vector<576x1xf32> to vector<576x128xf32>
    %40 = vector.broadcast %38 : vector<1x128xf32> to vector<576x128xf32>
    %41 = arith.mulf %39, %40 : vector<576x128xf32>
    %42 = arith.addf %34, %41 : vector<576x128xf32>
    %43 = vector.extract_strided_slice %1 {offsets = [1, 0, 0], sizes = [24, 24, 1], strides = [1, 1, 1]} : vector<28x28x1xf32> to vector<24x24x1xf32>
    %44 = vector.shape_cast %43 : vector<24x24x1xf32> to vector<576x1xf32>
    %c5 = arith.constant 5 : index
    %c0_9 = arith.constant 0 : index
    %45 = vector.load %arg2[%c5, %c0_9] : memref<25x128xbf16, #tpu.memory_space<vmem>>, vector<1x128xbf16>
    %46 = arith.extf %45 : vector<1x128xbf16> to vector<1x128xf32>
    %47 = vector.broadcast %44 : vector<576x1xf32> to vector<576x128xf32>
    %48 = vector.broadcast %46 : vector<1x128xf32> to vector<576x128xf32>
    %49 = arith.mulf %47, %48 : vector<576x128xf32>
    %50 = arith.addf %42, %49 : vector<576x128xf32>
    %51 = vector.extract_strided_slice %1 {offsets = [1, 1, 0], sizes = [24, 24, 1], strides = [1, 1, 1]} : vector<28x28x1xf32> to vector<24x24x1xf32>
    %52 = vector.shape_cast %51 : vector<24x24x1xf32> to vector<576x1xf32>
    %c6 = arith.constant 6 : index
    %c0_10 = arith.constant 0 : index
    %53 = vector.load %arg2[%c6, %c0_10] : memref<25x128xbf16, #tpu.memory_space<vmem>>, vector<1x128xbf16>
    %54 = arith.extf %53 : vector<1x128xbf16> to vector<1x128xf32>
    %55 = vector.broadcast %52 : vector<576x1xf32> to vector<576x128xf32>
    %56 = vector.broadcast %54 : vector<1x128xf32> to vector<576x128xf32>
    %57 = arith.mulf %55, %56 : vector<576x128xf32>
    %58 = arith.addf %50, %57 : vector<576x128xf32>
    %59 = vector.extract_strided_slice %1 {offsets = [1, 2, 0], sizes = [24, 24, 1], strides = [1, 1, 1]} : vector<28x28x1xf32> to vector<24x24x1xf32>
    %60 = vector.shape_cast %59 : vector<24x24x1xf32> to vector<576x1xf32>
    %c7 = arith.constant 7 : index
    %c0_11 = arith.constant 0 : index
    %61 = vector.load %arg2[%c7, %c0_11] : memref<25x128xbf16, #tpu.memory_space<vmem>>, vector<1x128xbf16>
    %62 = arith.extf %61 : vector<1x128xbf16> to vector<1x128xf32>
    %63 = vector.broadcast %60 : vector<576x1xf32> to vector<576x128xf32>
    %64 = vector.broadcast %62 : vector<1x128xf32> to vector<576x128xf32>
    %65 = arith.mulf %63, %64 : vector<576x128xf32>
    %66 = arith.addf %58, %65 : vector<576x128xf32>
    %67 = vector.extract_strided_slice %1 {offsets = [1, 3, 0], sizes = [24, 24, 1], strides = [1, 1, 1]} : vector<28x28x1xf32> to vector<24x24x1xf32>
    %68 = vector.shape_cast %67 : vector<24x24x1xf32> to vector<576x1xf32>
    %c8 = arith.constant 8 : index
    %c0_12 = arith.constant 0 : index
    %69 = vector.load %arg2[%c8, %c0_12] : memref<25x128xbf16, #tpu.memory_space<vmem>>, vector<1x128xbf16>
    %70 = arith.extf %69 : vector<1x128xbf16> to vector<1x128xf32>
    %71 = vector.broadcast %68 : vector<576x1xf32> to vector<576x128xf32>
    %72 = vector.broadcast %70 : vector<1x128xf32> to vector<576x128xf32>
    %73 = arith.mulf %71, %72 : vector<576x128xf32>
    %74 = arith.addf %66, %73 : vector<576x128xf32>
    %75 = vector.extract_strided_slice %1 {offsets = [1, 4, 0], sizes = [24, 24, 1], strides = [1, 1, 1]} : vector<28x28x1xf32> to vector<24x24x1xf32>
    %76 = vector.shape_cast %75 : vector<24x24x1xf32> to vector<576x1xf32>
    %c9 = arith.constant 9 : index
    %c0_13 = arith.constant 0 : index
    %77 = vector.load %arg2[%c9, %c0_13] : memref<25x128xbf16, #tpu.memory_space<vmem>>, vector<1x128xbf16>
    %78 = arith.extf %77 : vector<1x128xbf16> to vector<1x128xf32>
    %79 = vector.broadcast %76 : vector<576x1xf32> to vector<576x128xf32>
    %80 = vector.broadcast %78 : vector<1x128xf32> to vector<576x128xf32>
    %81 = arith.mulf %79, %80 : vector<576x128xf32>
    %82 = arith.addf %74, %81 : vector<576x128xf32>
    %83 = vector.extract_strided_slice %1 {offsets = [2, 0, 0], sizes = [24, 24, 1], strides = [1, 1, 1]} : vector<28x28x1xf32> to vector<24x24x1xf32>
    %84 = vector.shape_cast %83 : vector<24x24x1xf32> to vector<576x1xf32>
    %c10 = arith.constant 10 : index
    %c0_14 = arith.constant 0 : index
    %85 = vector.load %arg2[%c10, %c0_14] : memref<25x128xbf16, #tpu.memory_space<vmem>>, vector<1x128xbf16>
    %86 = arith.extf %85 : vector<1x128xbf16> to vector<1x128xf32>
    %87 = vector.broadcast %84 : vector<576x1xf32> to vector<576x128xf32>
    %88 = vector.broadcast %86 : vector<1x128xf32> to vector<576x128xf32>
    %89 = arith.mulf %87, %88 : vector<576x128xf32>
    %90 = arith.addf %82, %89 : vector<576x128xf32>
    %91 = vector.extract_strided_slice %1 {offsets = [2, 1, 0], sizes = [24, 24, 1], strides = [1, 1, 1]} : vector<28x28x1xf32> to vector<24x24x1xf32>
    %92 = vector.shape_cast %91 : vector<24x24x1xf32> to vector<576x1xf32>
    %c11 = arith.constant 11 : index
    %c0_15 = arith.constant 0 : index
    %93 = vector.load %arg2[%c11, %c0_15] : memref<25x128xbf16, #tpu.memory_space<vmem>>, vector<1x128xbf16>
    %94 = arith.extf %93 : vector<1x128xbf16> to vector<1x128xf32>
    %95 = vector.broadcast %92 : vector<576x1xf32> to vector<576x128xf32>
    %96 = vector.broadcast %94 : vector<1x128xf32> to vector<576x128xf32>
    %97 = arith.mulf %95, %96 : vector<576x128xf32>
    %98 = arith.addf %90, %97 : vector<576x128xf32>
    %99 = vector.extract_strided_slice %1 {offsets = [2, 2, 0], sizes = [24, 24, 1], strides = [1, 1, 1]} : vector<28x28x1xf32> to vector<24x24x1xf32>
    %100 = vector.shape_cast %99 : vector<24x24x1xf32> to vector<576x1xf32>
    %c12 = arith.constant 12 : index
    %c0_16 = arith.constant 0 : index
    %101 = vector.load %arg2[%c12, %c0_16] : memref<25x128xbf16, #tpu.memory_space<vmem>>, vector<1x128xbf16>
    %102 = arith.extf %101 : vector<1x128xbf16> to vector<1x128xf32>
    %103 = vector.broadcast %100 : vector<576x1xf32> to vector<576x128xf32>
    %104 = vector.broadcast %102 : vector<1x128xf32> to vector<576x128xf32>
    %105 = arith.mulf %103, %104 : vector<576x128xf32>
    %106 = arith.addf %98, %105 : vector<576x128xf32>
    %107 = vector.extract_strided_slice %1 {offsets = [2, 3, 0], sizes = [24, 24, 1], strides = [1, 1, 1]} : vector<28x28x1xf32> to vector<24x24x1xf32>
    %108 = vector.shape_cast %107 : vector<24x24x1xf32> to vector<576x1xf32>
    %c13 = arith.constant 13 : index
    %c0_17 = arith.constant 0 : index
    %109 = vector.load %arg2[%c13, %c0_17] : memref<25x128xbf16, #tpu.memory_space<vmem>>, vector<1x128xbf16>
    %110 = arith.extf %109 : vector<1x128xbf16> to vector<1x128xf32>
    %111 = vector.broadcast %108 : vector<576x1xf32> to vector<576x128xf32>
    %112 = vector.broadcast %110 : vector<1x128xf32> to vector<576x128xf32>
    %113 = arith.mulf %111, %112 : vector<576x128xf32>
    %114 = arith.addf %106, %113 : vector<576x128xf32>
    %115 = vector.extract_strided_slice %1 {offsets = [2, 4, 0], sizes = [24, 24, 1], strides = [1, 1, 1]} : vector<28x28x1xf32> to vector<24x24x1xf32>
    %116 = vector.shape_cast %115 : vector<24x24x1xf32> to vector<576x1xf32>
    %c14 = arith.constant 14 : index
    %c0_18 = arith.constant 0 : index
    %117 = vector.load %arg2[%c14, %c0_18] : memref<25x128xbf16, #tpu.memory_space<vmem>>, vector<1x128xbf16>
    %118 = arith.extf %117 : vector<1x128xbf16> to vector<1x128xf32>
    %119 = vector.broadcast %116 : vector<576x1xf32> to vector<576x128xf32>
    %120 = vector.broadcast %118 : vector<1x128xf32> to vector<576x128xf32>
    %121 = arith.mulf %119, %120 : vector<576x128xf32>
    %122 = arith.addf %114, %121 : vector<576x128xf32>
    %123 = vector.extract_strided_slice %1 {offsets = [3, 0, 0], sizes = [24, 24, 1], strides = [1, 1, 1]} : vector<28x28x1xf32> to vector<24x24x1xf32>
    %124 = vector.shape_cast %123 : vector<24x24x1xf32> to vector<576x1xf32>
    %c15 = arith.constant 15 : index
    %c0_19 = arith.constant 0 : index
    %125 = vector.load %arg2[%c15, %c0_19] : memref<25x128xbf16, #tpu.memory_space<vmem>>, vector<1x128xbf16>
    %126 = arith.extf %125 : vector<1x128xbf16> to vector<1x128xf32>
    %127 = vector.broadcast %124 : vector<576x1xf32> to vector<576x128xf32>
    %128 = vector.broadcast %126 : vector<1x128xf32> to vector<576x128xf32>
    %129 = arith.mulf %127, %128 : vector<576x128xf32>
    %130 = arith.addf %122, %129 : vector<576x128xf32>
    %131 = vector.extract_strided_slice %1 {offsets = [3, 1, 0], sizes = [24, 24, 1], strides = [1, 1, 1]} : vector<28x28x1xf32> to vector<24x24x1xf32>
    %132 = vector.shape_cast %131 : vector<24x24x1xf32> to vector<576x1xf32>
    %c16 = arith.constant 16 : index
    %c0_20 = arith.constant 0 : index
    %133 = vector.load %arg2[%c16, %c0_20] : memref<25x128xbf16, #tpu.memory_space<vmem>>, vector<1x128xbf16>
    %134 = arith.extf %133 : vector<1x128xbf16> to vector<1x128xf32>
    %135 = vector.broadcast %132 : vector<576x1xf32> to vector<576x128xf32>
    %136 = vector.broadcast %134 : vector<1x128xf32> to vector<576x128xf32>
    %137 = arith.mulf %135, %136 : vector<576x128xf32>
    %138 = arith.addf %130, %137 : vector<576x128xf32>
    %139 = vector.extract_strided_slice %1 {offsets = [3, 2, 0], sizes = [24, 24, 1], strides = [1, 1, 1]} : vector<28x28x1xf32> to vector<24x24x1xf32>
    %140 = vector.shape_cast %139 : vector<24x24x1xf32> to vector<576x1xf32>
    %c17 = arith.constant 17 : index
    %c0_21 = arith.constant 0 : index
    %141 = vector.load %arg2[%c17, %c0_21] : memref<25x128xbf16, #tpu.memory_space<vmem>>, vector<1x128xbf16>
    %142 = arith.extf %141 : vector<1x128xbf16> to vector<1x128xf32>
    %143 = vector.broadcast %140 : vector<576x1xf32> to vector<576x128xf32>
    %144 = vector.broadcast %142 : vector<1x128xf32> to vector<576x128xf32>
    %145 = arith.mulf %143, %144 : vector<576x128xf32>
    %146 = arith.addf %138, %145 : vector<576x128xf32>
    %147 = vector.extract_strided_slice %1 {offsets = [3, 3, 0], sizes = [24, 24, 1], strides = [1, 1, 1]} : vector<28x28x1xf32> to vector<24x24x1xf32>
    %148 = vector.shape_cast %147 : vector<24x24x1xf32> to vector<576x1xf32>
    %c18 = arith.constant 18 : index
    %c0_22 = arith.constant 0 : index
    %149 = vector.load %arg2[%c18, %c0_22] : memref<25x128xbf16, #tpu.memory_space<vmem>>, vector<1x128xbf16>
    %150 = arith.extf %149 : vector<1x128xbf16> to vector<1x128xf32>
    %151 = vector.broadcast %148 : vector<576x1xf32> to vector<576x128xf32>
    %152 = vector.broadcast %150 : vector<1x128xf32> to vector<576x128xf32>
    %153 = arith.mulf %151, %152 : vector<576x128xf32>
    %154 = arith.addf %146, %153 : vector<576x128xf32>
    %155 = vector.extract_strided_slice %1 {offsets = [3, 4, 0], sizes = [24, 24, 1], strides = [1, 1, 1]} : vector<28x28x1xf32> to vector<24x24x1xf32>
    %156 = vector.shape_cast %155 : vector<24x24x1xf32> to vector<576x1xf32>
    %c19 = arith.constant 19 : index
    %c0_23 = arith.constant 0 : index
    %157 = vector.load %arg2[%c19, %c0_23] : memref<25x128xbf16, #tpu.memory_space<vmem>>, vector<1x128xbf16>
    %158 = arith.extf %157 : vector<1x128xbf16> to vector<1x128xf32>
    %159 = vector.broadcast %156 : vector<576x1xf32> to vector<576x128xf32>
    %160 = vector.broadcast %158 : vector<1x128xf32> to vector<576x128xf32>
    %161 = arith.mulf %159, %160 : vector<576x128xf32>
    %162 = arith.addf %154, %161 : vector<576x128xf32>
    %163 = vector.extract_strided_slice %1 {offsets = [4, 0, 0], sizes = [24, 24, 1], strides = [1, 1, 1]} : vector<28x28x1xf32> to vector<24x24x1xf32>
    %164 = vector.shape_cast %163 : vector<24x24x1xf32> to vector<576x1xf32>
    %c20 = arith.constant 20 : index
    %c0_24 = arith.constant 0 : index
    %165 = vector.load %arg2[%c20, %c0_24] : memref<25x128xbf16, #tpu.memory_space<vmem>>, vector<1x128xbf16>
    %166 = arith.extf %165 : vector<1x128xbf16> to vector<1x128xf32>
    %167 = vector.broadcast %164 : vector<576x1xf32> to vector<576x128xf32>
    %168 = vector.broadcast %166 : vector<1x128xf32> to vector<576x128xf32>
    %169 = arith.mulf %167, %168 : vector<576x128xf32>
    %170 = arith.addf %162, %169 : vector<576x128xf32>
    %171 = vector.extract_strided_slice %1 {offsets = [4, 1, 0], sizes = [24, 24, 1], strides = [1, 1, 1]} : vector<28x28x1xf32> to vector<24x24x1xf32>
    %172 = vector.shape_cast %171 : vector<24x24x1xf32> to vector<576x1xf32>
    %c21 = arith.constant 21 : index
    %c0_25 = arith.constant 0 : index
    %173 = vector.load %arg2[%c21, %c0_25] : memref<25x128xbf16, #tpu.memory_space<vmem>>, vector<1x128xbf16>
    %174 = arith.extf %173 : vector<1x128xbf16> to vector<1x128xf32>
    %175 = vector.broadcast %172 : vector<576x1xf32> to vector<576x128xf32>
    %176 = vector.broadcast %174 : vector<1x128xf32> to vector<576x128xf32>
    %177 = arith.mulf %175, %176 : vector<576x128xf32>
    %178 = arith.addf %170, %177 : vector<576x128xf32>
    %179 = vector.extract_strided_slice %1 {offsets = [4, 2, 0], sizes = [24, 24, 1], strides = [1, 1, 1]} : vector<28x28x1xf32> to vector<24x24x1xf32>
    %180 = vector.shape_cast %179 : vector<24x24x1xf32> to vector<576x1xf32>
    %c22 = arith.constant 22 : index
    %c0_26 = arith.constant 0 : index
    %181 = vector.load %arg2[%c22, %c0_26] : memref<25x128xbf16, #tpu.memory_space<vmem>>, vector<1x128xbf16>
    %182 = arith.extf %181 : vector<1x128xbf16> to vector<1x128xf32>
    %183 = vector.broadcast %180 : vector<576x1xf32> to vector<576x128xf32>
    %184 = vector.broadcast %182 : vector<1x128xf32> to vector<576x128xf32>
    %185 = arith.mulf %183, %184 : vector<576x128xf32>
    %186 = arith.addf %178, %185 : vector<576x128xf32>
    %187 = vector.extract_strided_slice %1 {offsets = [4, 3, 0], sizes = [24, 24, 1], strides = [1, 1, 1]} : vector<28x28x1xf32> to vector<24x24x1xf32>
    %188 = vector.shape_cast %187 : vector<24x24x1xf32> to vector<576x1xf32>
    %c23 = arith.constant 23 : index
    %c0_27 = arith.constant 0 : index
    %189 = vector.load %arg2[%c23, %c0_27] : memref<25x128xbf16, #tpu.memory_space<vmem>>, vector<1x128xbf16>
    %190 = arith.extf %189 : vector<1x128xbf16> to vector<1x128xf32>
    %191 = vector.broadcast %188 : vector<576x1xf32> to vector<576x128xf32>
    %192 = vector.broadcast %190 : vector<1x128xf32> to vector<576x128xf32>
    %193 = arith.mulf %191, %192 : vector<576x128xf32>
    %194 = arith.addf %186, %193 : vector<576x128xf32>
    %195 = vector.extract_strided_slice %1 {offsets = [4, 4, 0], sizes = [24, 24, 1], strides = [1, 1, 1]} : vector<28x28x1xf32> to vector<24x24x1xf32>
    %196 = vector.shape_cast %195 : vector<24x24x1xf32> to vector<576x1xf32>
    %c24 = arith.constant 24 : index
    %c0_28 = arith.constant 0 : index
    %197 = vector.load %arg2[%c24, %c0_28] : memref<25x128xbf16, #tpu.memory_space<vmem>>, vector<1x128xbf16>
    %198 = arith.extf %197 : vector<1x128xbf16> to vector<1x128xf32>
    %199 = vector.broadcast %196 : vector<576x1xf32> to vector<576x128xf32>
    %200 = vector.broadcast %198 : vector<1x128xf32> to vector<576x128xf32>
    %201 = arith.mulf %199, %200 : vector<576x128xf32>
    %202 = arith.addf %194, %201 : vector<576x128xf32>
    %c0_29 = arith.constant 0 : index
    %c0_30 = arith.constant 0 : index
    %203 = vector.load %arg3[%c0_29, %c0_30] : memref<1x128xf32, #tpu.memory_space<vmem>>, vector<1x128xf32>
    %204 = vector.broadcast %203 : vector<1x128xf32> to vector<576x128xf32>
    %205 = arith.addf %202, %204 : vector<576x128xf32>
    %206 = vector.shape_cast %205 : vector<576x128xf32> to vector<12x2x24x128xf32>
    %207 = vector.extract_strided_slice %206 {offsets = [0, 0, 0, 0], sizes = [12, 1, 24, 128], strides = [1, 1, 1, 1]} : vector<12x2x24x128xf32> to vector<12x1x24x128xf32>
    %208 = vector.shape_cast %207 : vector<12x1x24x128xf32> to vector<12x24x128xf32>
    %209 = vector.extract_strided_slice %206 {offsets = [0, 1, 0, 0], sizes = [12, 1, 24, 128], strides = [1, 1, 1, 1]} : vector<12x2x24x128xf32> to vector<12x1x24x128xf32>
    %210 = vector.shape_cast %209 : vector<12x1x24x128xf32> to vector<12x24x128xf32>
    %211 = arith.maximumf %208, %210 : vector<12x24x128xf32>
    %212 = vector.shape_cast %211 : vector<12x24x128xf32> to vector<288x128xf32>
    %c0_31 = arith.constant 0 : index
    %c0_32 = arith.constant 0 : index
    %213 = vector.load %arg5[%c0_31, %c0_32] : memref<288x128xf32, #tpu.memory_space<vmem>>, vector<288x128xf32>
    tpu.vector_store %arg5[%c0_31, %c0_32], %212 {strides = array<i32>} : memref<288x128xf32, #tpu.memory_space<vmem>>, vector<288x128xf32>,
    %c0_33 = arith.constant 0 : index
    %c0_34 = arith.constant 0 : index
    %214 = tpu.strided_load %arg5[%c0_33, %c0_34] {strides = array<i32: 2, 1>} : memref<288x128xf32, #tpu.memory_space<vmem>>, vector<144x128xf32>
    %c1_35 = arith.constant 1 : index
    %c0_36 = arith.constant 0 : index
    %215 = tpu.strided_load %arg5[%c1_35, %c0_36] {strides = array<i32: 2, 1>} : memref<288x128xf32, #tpu.memory_space<vmem>>, vector<144x128xf32>
    %216 = arith.maximumf %214, %215 : vector<144x128xf32>
    %cst_37 = arith.constant 0.000000e+00 : f32
    %217 = vector.broadcast %cst_37 : f32 to vector<144x128xf32>
    %218 = arith.maximumf %216, %217 : vector<144x128xf32>
    %219 = arith.truncf %218 : vector<144x128xf32> to vector<144x128xbf16>
    %c0_38 = arith.constant 0 : index
    %c0_39 = arith.constant 0 : index
    %c0_40 = arith.constant 0 : index
    %220 = vector.load %arg4[%c0_38, %c0_39, %c0_40] : memref<1x144x128xbf16, #tpu.memory_space<vmem>>, vector<1x144x128xbf16>
    %221 = vector.shape_cast %220 : vector<1x144x128xbf16> to vector<144x128xbf16>
    %222 = vector.shape_cast %219 : vector<144x128xbf16> to vector<1x144x128xbf16>
    tpu.vector_store %arg4[%c0_38, %c0_39, %c0_40], %222 {strides = array<i32>} : memref<1x144x128xbf16, #tpu.memory_space<vmem>>, vector<1x144x128xbf16>,
    return
  }
  func.func @transform_0(%arg0: i32) -> (i32, i32, i32, i32) {
    %c0_i32 = arith.constant 0 : i32
    %c0_i32_0 = arith.constant 0 : i32
    %c0_i32_1 = arith.constant 0 : i32
    %c0_i32_2 = arith.constant 0 : i32
    return %arg0, %c0_i32, %c0_i32_0, %c0_i32_1 : i32, i32, i32, i32
  }
  func.func @transform_1(%arg0: i32) -> (i32, i32) {
    %c0_i32 = arith.constant 0 : i32
    %c0_i32_0 = arith.constant 0 : i32
    %c0_i32_1 = arith.constant 0 : i32
    return %c0_i32, %c0_i32_0 : i32, i32
  }
  func.func @transform_2(%arg0: i32) -> (i32, i32) {
    %c0_i32 = arith.constant 0 : i32
    %c0_i32_0 = arith.constant 0 : i32
    %c0_i32_1 = arith.constant 0 : i32
    return %c0_i32, %c0_i32_0 : i32, i32
  }
  func.func @transform_3(%arg0: i32) -> (i32, i32, i32) {
    %c0_i32 = arith.constant 0 : i32
    %c0_i32_0 = arith.constant 0 : i32
    %c0_i32_1 = arith.constant 0 : i32
    return %arg0, %c0_i32, %c0_i32_0 : i32, i32, i32
  }
}

module attributes {stable_mosaic.version = 11 : i64} {
  func.func @_conv_pool_relu_kernel(%arg0: i32, %arg1: memref<1x12x12x128xbf16, #tpu.memory_space<vmem>>, %arg2: memref<3200x128xbf16, #tpu.memory_space<vmem>>, %arg3: memref<1x128xf32, #tpu.memory_space<vmem>>, %arg4: memref<1x16x128xbf16, #tpu.memory_space<vmem>>, %arg5: memref<32x128xf32, #tpu.memory_space<vmem>>) attributes {dimension_semantics = [#tpu.dimension_semantics<parallel>], iteration_bounds = array<i64: 2>, scalar_prefetch = 0 : i64, scratch_operands = 1 : i64, tpu.core_type = #tpu.core_type<tc>, window_params = [{transform_indices = @transform_0, window_bounds = array<i64: 1, 12, 12, 128>}, {pipeline_mode = #tpu.pipeline_mode<synchronous>, transform_indices = @transform_1, window_bounds = array<i64: 3200, 128>}, {pipeline_mode = #tpu.pipeline_mode<synchronous>, transform_indices = @transform_2, window_bounds = array<i64: 1, 128>}, {transform_indices = @transform_3, window_bounds = array<i64: 1, 16, 128>}]} {
    %c0 = arith.constant 0 : index
    %c0_0 = arith.constant 0 : index
    %c0_1 = arith.constant 0 : index
    %c0_2 = arith.constant 0 : index
    %0 = vector.load %arg1[%c0, %c0_0, %c0_1, %c0_2] : memref<1x12x12x128xbf16, #tpu.memory_space<vmem>>, vector<1x12x12x128xbf16>
    %1 = vector.shape_cast %0 : vector<1x12x12x128xbf16> to vector<12x12x128xbf16>
    %2 = arith.extf %1 : vector<12x12x128xbf16> to vector<12x12x128xf32>
    %cst = arith.constant 0.000000e+00 : f32
    %3 = vector.broadcast %cst : f32 to vector<64x128xf32>
    %4 = vector.extract_strided_slice %2 {offsets = [0, 0, 0], sizes = [8, 8, 128], strides = [1, 1, 1]} : vector<12x12x128xf32> to vector<8x8x128xf32>
    %5 = vector.shape_cast %4 : vector<8x8x128xf32> to vector<64x128xf32>
    %6 = arith.truncf %5 : vector<64x128xf32> to vector<64x128xbf16>
    %c0_3 = arith.constant 0 : index
    %c0_4 = arith.constant 0 : index
    %7 = vector.load %arg2[%c0_3, %c0_4] : memref<3200x128xbf16, #tpu.memory_space<vmem>>, vector<128x128xbf16>
    %cst_5 = arith.constant dense<0.000000e+00> : vector<64x128xf32>
    %8 = tpu.matmul %6, %7, %cst_5 {dimension_numbers = #tpu.dot_dimension_numbers<[1], [0], [0], [1], [0, 0, 1, 1], [], []>} : vector<64x128xbf16>, vector<128x128xbf16>, vector<64x128xf32> -> vector<64x128xf32>
    %9 = arith.addf %3, %8 : vector<64x128xf32>
    %10 = vector.extract_strided_slice %2 {offsets = [0, 1, 0], sizes = [8, 8, 128], strides = [1, 1, 1]} : vector<12x12x128xf32> to vector<8x8x128xf32>
    %11 = vector.shape_cast %10 : vector<8x8x128xf32> to vector<64x128xf32>
    %12 = arith.truncf %11 : vector<64x128xf32> to vector<64x128xbf16>
    %c128 = arith.constant 128 : index
    %c0_6 = arith.constant 0 : index
    %13 = vector.load %arg2[%c128, %c0_6] : memref<3200x128xbf16, #tpu.memory_space<vmem>>, vector<128x128xbf16>
    %cst_7 = arith.constant dense<0.000000e+00> : vector<64x128xf32>
    %14 = tpu.matmul %12, %13, %cst_7 {dimension_numbers = #tpu.dot_dimension_numbers<[1], [0], [0], [1], [0, 0, 1, 1], [], []>} : vector<64x128xbf16>, vector<128x128xbf16>, vector<64x128xf32> -> vector<64x128xf32>
    %15 = arith.addf %9, %14 : vector<64x128xf32>
    %16 = vector.extract_strided_slice %2 {offsets = [0, 2, 0], sizes = [8, 8, 128], strides = [1, 1, 1]} : vector<12x12x128xf32> to vector<8x8x128xf32>
    %17 = vector.shape_cast %16 : vector<8x8x128xf32> to vector<64x128xf32>
    %18 = arith.truncf %17 : vector<64x128xf32> to vector<64x128xbf16>
    %c256 = arith.constant 256 : index
    %c0_8 = arith.constant 0 : index
    %19 = vector.load %arg2[%c256, %c0_8] : memref<3200x128xbf16, #tpu.memory_space<vmem>>, vector<128x128xbf16>
    %cst_9 = arith.constant dense<0.000000e+00> : vector<64x128xf32>
    %20 = tpu.matmul %18, %19, %cst_9 {dimension_numbers = #tpu.dot_dimension_numbers<[1], [0], [0], [1], [0, 0, 1, 1], [], []>} : vector<64x128xbf16>, vector<128x128xbf16>, vector<64x128xf32> -> vector<64x128xf32>
    %21 = arith.addf %15, %20 : vector<64x128xf32>
    %22 = vector.extract_strided_slice %2 {offsets = [0, 3, 0], sizes = [8, 8, 128], strides = [1, 1, 1]} : vector<12x12x128xf32> to vector<8x8x128xf32>
    %23 = vector.shape_cast %22 : vector<8x8x128xf32> to vector<64x128xf32>
    %24 = arith.truncf %23 : vector<64x128xf32> to vector<64x128xbf16>
    %c384 = arith.constant 384 : index
    %c0_10 = arith.constant 0 : index
    %25 = vector.load %arg2[%c384, %c0_10] : memref<3200x128xbf16, #tpu.memory_space<vmem>>, vector<128x128xbf16>
    %cst_11 = arith.constant dense<0.000000e+00> : vector<64x128xf32>
    %26 = tpu.matmul %24, %25, %cst_11 {dimension_numbers = #tpu.dot_dimension_numbers<[1], [0], [0], [1], [0, 0, 1, 1], [], []>} : vector<64x128xbf16>, vector<128x128xbf16>, vector<64x128xf32> -> vector<64x128xf32>
    %27 = arith.addf %21, %26 : vector<64x128xf32>
    %28 = vector.extract_strided_slice %2 {offsets = [0, 4, 0], sizes = [8, 8, 128], strides = [1, 1, 1]} : vector<12x12x128xf32> to vector<8x8x128xf32>
    %29 = vector.shape_cast %28 : vector<8x8x128xf32> to vector<64x128xf32>
    %30 = arith.truncf %29 : vector<64x128xf32> to vector<64x128xbf16>
    %c512 = arith.constant 512 : index
    %c0_12 = arith.constant 0 : index
    %31 = vector.load %arg2[%c512, %c0_12] : memref<3200x128xbf16, #tpu.memory_space<vmem>>, vector<128x128xbf16>
    %cst_13 = arith.constant dense<0.000000e+00> : vector<64x128xf32>
    %32 = tpu.matmul %30, %31, %cst_13 {dimension_numbers = #tpu.dot_dimension_numbers<[1], [0], [0], [1], [0, 0, 1, 1], [], []>} : vector<64x128xbf16>, vector<128x128xbf16>, vector<64x128xf32> -> vector<64x128xf32>
    %33 = arith.addf %27, %32 : vector<64x128xf32>
    %34 = vector.extract_strided_slice %2 {offsets = [1, 0, 0], sizes = [8, 8, 128], strides = [1, 1, 1]} : vector<12x12x128xf32> to vector<8x8x128xf32>
    %35 = vector.shape_cast %34 : vector<8x8x128xf32> to vector<64x128xf32>
    %36 = arith.truncf %35 : vector<64x128xf32> to vector<64x128xbf16>
    %c640 = arith.constant 640 : index
    %c0_14 = arith.constant 0 : index
    %37 = vector.load %arg2[%c640, %c0_14] : memref<3200x128xbf16, #tpu.memory_space<vmem>>, vector<128x128xbf16>
    %cst_15 = arith.constant dense<0.000000e+00> : vector<64x128xf32>
    %38 = tpu.matmul %36, %37, %cst_15 {dimension_numbers = #tpu.dot_dimension_numbers<[1], [0], [0], [1], [0, 0, 1, 1], [], []>} : vector<64x128xbf16>, vector<128x128xbf16>, vector<64x128xf32> -> vector<64x128xf32>
    %39 = arith.addf %33, %38 : vector<64x128xf32>
    %40 = vector.extract_strided_slice %2 {offsets = [1, 1, 0], sizes = [8, 8, 128], strides = [1, 1, 1]} : vector<12x12x128xf32> to vector<8x8x128xf32>
    %41 = vector.shape_cast %40 : vector<8x8x128xf32> to vector<64x128xf32>
    %42 = arith.truncf %41 : vector<64x128xf32> to vector<64x128xbf16>
    %c768 = arith.constant 768 : index
    %c0_16 = arith.constant 0 : index
    %43 = vector.load %arg2[%c768, %c0_16] : memref<3200x128xbf16, #tpu.memory_space<vmem>>, vector<128x128xbf16>
    %cst_17 = arith.constant dense<0.000000e+00> : vector<64x128xf32>
    %44 = tpu.matmul %42, %43, %cst_17 {dimension_numbers = #tpu.dot_dimension_numbers<[1], [0], [0], [1], [0, 0, 1, 1], [], []>} : vector<64x128xbf16>, vector<128x128xbf16>, vector<64x128xf32> -> vector<64x128xf32>
    %45 = arith.addf %39, %44 : vector<64x128xf32>
    %46 = vector.extract_strided_slice %2 {offsets = [1, 2, 0], sizes = [8, 8, 128], strides = [1, 1, 1]} : vector<12x12x128xf32> to vector<8x8x128xf32>
    %47 = vector.shape_cast %46 : vector<8x8x128xf32> to vector<64x128xf32>
    %48 = arith.truncf %47 : vector<64x128xf32> to vector<64x128xbf16>
    %c896 = arith.constant 896 : index
    %c0_18 = arith.constant 0 : index
    %49 = vector.load %arg2[%c896, %c0_18] : memref<3200x128xbf16, #tpu.memory_space<vmem>>, vector<128x128xbf16>
    %cst_19 = arith.constant dense<0.000000e+00> : vector<64x128xf32>
    %50 = tpu.matmul %48, %49, %cst_19 {dimension_numbers = #tpu.dot_dimension_numbers<[1], [0], [0], [1], [0, 0, 1, 1], [], []>} : vector<64x128xbf16>, vector<128x128xbf16>, vector<64x128xf32> -> vector<64x128xf32>
    %51 = arith.addf %45, %50 : vector<64x128xf32>
    %52 = vector.extract_strided_slice %2 {offsets = [1, 3, 0], sizes = [8, 8, 128], strides = [1, 1, 1]} : vector<12x12x128xf32> to vector<8x8x128xf32>
    %53 = vector.shape_cast %52 : vector<8x8x128xf32> to vector<64x128xf32>
    %54 = arith.truncf %53 : vector<64x128xf32> to vector<64x128xbf16>
    %c1024 = arith.constant 1024 : index
    %c0_20 = arith.constant 0 : index
    %55 = vector.load %arg2[%c1024, %c0_20] : memref<3200x128xbf16, #tpu.memory_space<vmem>>, vector<128x128xbf16>
    %cst_21 = arith.constant dense<0.000000e+00> : vector<64x128xf32>
    %56 = tpu.matmul %54, %55, %cst_21 {dimension_numbers = #tpu.dot_dimension_numbers<[1], [0], [0], [1], [0, 0, 1, 1], [], []>} : vector<64x128xbf16>, vector<128x128xbf16>, vector<64x128xf32> -> vector<64x128xf32>
    %57 = arith.addf %51, %56 : vector<64x128xf32>
    %58 = vector.extract_strided_slice %2 {offsets = [1, 4, 0], sizes = [8, 8, 128], strides = [1, 1, 1]} : vector<12x12x128xf32> to vector<8x8x128xf32>
    %59 = vector.shape_cast %58 : vector<8x8x128xf32> to vector<64x128xf32>
    %60 = arith.truncf %59 : vector<64x128xf32> to vector<64x128xbf16>
    %c1152 = arith.constant 1152 : index
    %c0_22 = arith.constant 0 : index
    %61 = vector.load %arg2[%c1152, %c0_22] : memref<3200x128xbf16, #tpu.memory_space<vmem>>, vector<128x128xbf16>
    %cst_23 = arith.constant dense<0.000000e+00> : vector<64x128xf32>
    %62 = tpu.matmul %60, %61, %cst_23 {dimension_numbers = #tpu.dot_dimension_numbers<[1], [0], [0], [1], [0, 0, 1, 1], [], []>} : vector<64x128xbf16>, vector<128x128xbf16>, vector<64x128xf32> -> vector<64x128xf32>
    %63 = arith.addf %57, %62 : vector<64x128xf32>
    %64 = vector.extract_strided_slice %2 {offsets = [2, 0, 0], sizes = [8, 8, 128], strides = [1, 1, 1]} : vector<12x12x128xf32> to vector<8x8x128xf32>
    %65 = vector.shape_cast %64 : vector<8x8x128xf32> to vector<64x128xf32>
    %66 = arith.truncf %65 : vector<64x128xf32> to vector<64x128xbf16>
    %c1280 = arith.constant 1280 : index
    %c0_24 = arith.constant 0 : index
    %67 = vector.load %arg2[%c1280, %c0_24] : memref<3200x128xbf16, #tpu.memory_space<vmem>>, vector<128x128xbf16>
    %cst_25 = arith.constant dense<0.000000e+00> : vector<64x128xf32>
    %68 = tpu.matmul %66, %67, %cst_25 {dimension_numbers = #tpu.dot_dimension_numbers<[1], [0], [0], [1], [0, 0, 1, 1], [], []>} : vector<64x128xbf16>, vector<128x128xbf16>, vector<64x128xf32> -> vector<64x128xf32>
    %69 = arith.addf %63, %68 : vector<64x128xf32>
    %70 = vector.extract_strided_slice %2 {offsets = [2, 1, 0], sizes = [8, 8, 128], strides = [1, 1, 1]} : vector<12x12x128xf32> to vector<8x8x128xf32>
    %71 = vector.shape_cast %70 : vector<8x8x128xf32> to vector<64x128xf32>
    %72 = arith.truncf %71 : vector<64x128xf32> to vector<64x128xbf16>
    %c1408 = arith.constant 1408 : index
    %c0_26 = arith.constant 0 : index
    %73 = vector.load %arg2[%c1408, %c0_26] : memref<3200x128xbf16, #tpu.memory_space<vmem>>, vector<128x128xbf16>
    %cst_27 = arith.constant dense<0.000000e+00> : vector<64x128xf32>
    %74 = tpu.matmul %72, %73, %cst_27 {dimension_numbers = #tpu.dot_dimension_numbers<[1], [0], [0], [1], [0, 0, 1, 1], [], []>} : vector<64x128xbf16>, vector<128x128xbf16>, vector<64x128xf32> -> vector<64x128xf32>
    %75 = arith.addf %69, %74 : vector<64x128xf32>
    %76 = vector.extract_strided_slice %2 {offsets = [2, 2, 0], sizes = [8, 8, 128], strides = [1, 1, 1]} : vector<12x12x128xf32> to vector<8x8x128xf32>
    %77 = vector.shape_cast %76 : vector<8x8x128xf32> to vector<64x128xf32>
    %78 = arith.truncf %77 : vector<64x128xf32> to vector<64x128xbf16>
    %c1536 = arith.constant 1536 : index
    %c0_28 = arith.constant 0 : index
    %79 = vector.load %arg2[%c1536, %c0_28] : memref<3200x128xbf16, #tpu.memory_space<vmem>>, vector<128x128xbf16>
    %cst_29 = arith.constant dense<0.000000e+00> : vector<64x128xf32>
    %80 = tpu.matmul %78, %79, %cst_29 {dimension_numbers = #tpu.dot_dimension_numbers<[1], [0], [0], [1], [0, 0, 1, 1], [], []>} : vector<64x128xbf16>, vector<128x128xbf16>, vector<64x128xf32> -> vector<64x128xf32>
    %81 = arith.addf %75, %80 : vector<64x128xf32>
    %82 = vector.extract_strided_slice %2 {offsets = [2, 3, 0], sizes = [8, 8, 128], strides = [1, 1, 1]} : vector<12x12x128xf32> to vector<8x8x128xf32>
    %83 = vector.shape_cast %82 : vector<8x8x128xf32> to vector<64x128xf32>
    %84 = arith.truncf %83 : vector<64x128xf32> to vector<64x128xbf16>
    %c1664 = arith.constant 1664 : index
    %c0_30 = arith.constant 0 : index
    %85 = vector.load %arg2[%c1664, %c0_30] : memref<3200x128xbf16, #tpu.memory_space<vmem>>, vector<128x128xbf16>
    %cst_31 = arith.constant dense<0.000000e+00> : vector<64x128xf32>
    %86 = tpu.matmul %84, %85, %cst_31 {dimension_numbers = #tpu.dot_dimension_numbers<[1], [0], [0], [1], [0, 0, 1, 1], [], []>} : vector<64x128xbf16>, vector<128x128xbf16>, vector<64x128xf32> -> vector<64x128xf32>
    %87 = arith.addf %81, %86 : vector<64x128xf32>
    %88 = vector.extract_strided_slice %2 {offsets = [2, 4, 0], sizes = [8, 8, 128], strides = [1, 1, 1]} : vector<12x12x128xf32> to vector<8x8x128xf32>
    %89 = vector.shape_cast %88 : vector<8x8x128xf32> to vector<64x128xf32>
    %90 = arith.truncf %89 : vector<64x128xf32> to vector<64x128xbf16>
    %c1792 = arith.constant 1792 : index
    %c0_32 = arith.constant 0 : index
    %91 = vector.load %arg2[%c1792, %c0_32] : memref<3200x128xbf16, #tpu.memory_space<vmem>>, vector<128x128xbf16>
    %cst_33 = arith.constant dense<0.000000e+00> : vector<64x128xf32>
    %92 = tpu.matmul %90, %91, %cst_33 {dimension_numbers = #tpu.dot_dimension_numbers<[1], [0], [0], [1], [0, 0, 1, 1], [], []>} : vector<64x128xbf16>, vector<128x128xbf16>, vector<64x128xf32> -> vector<64x128xf32>
    %93 = arith.addf %87, %92 : vector<64x128xf32>
    %94 = vector.extract_strided_slice %2 {offsets = [3, 0, 0], sizes = [8, 8, 128], strides = [1, 1, 1]} : vector<12x12x128xf32> to vector<8x8x128xf32>
    %95 = vector.shape_cast %94 : vector<8x8x128xf32> to vector<64x128xf32>
    %96 = arith.truncf %95 : vector<64x128xf32> to vector<64x128xbf16>
    %c1920 = arith.constant 1920 : index
    %c0_34 = arith.constant 0 : index
    %97 = vector.load %arg2[%c1920, %c0_34] : memref<3200x128xbf16, #tpu.memory_space<vmem>>, vector<128x128xbf16>
    %cst_35 = arith.constant dense<0.000000e+00> : vector<64x128xf32>
    %98 = tpu.matmul %96, %97, %cst_35 {dimension_numbers = #tpu.dot_dimension_numbers<[1], [0], [0], [1], [0, 0, 1, 1], [], []>} : vector<64x128xbf16>, vector<128x128xbf16>, vector<64x128xf32> -> vector<64x128xf32>
    %99 = arith.addf %93, %98 : vector<64x128xf32>
    %100 = vector.extract_strided_slice %2 {offsets = [3, 1, 0], sizes = [8, 8, 128], strides = [1, 1, 1]} : vector<12x12x128xf32> to vector<8x8x128xf32>
    %101 = vector.shape_cast %100 : vector<8x8x128xf32> to vector<64x128xf32>
    %102 = arith.truncf %101 : vector<64x128xf32> to vector<64x128xbf16>
    %c2048 = arith.constant 2048 : index
    %c0_36 = arith.constant 0 : index
    %103 = vector.load %arg2[%c2048, %c0_36] : memref<3200x128xbf16, #tpu.memory_space<vmem>>, vector<128x128xbf16>
    %cst_37 = arith.constant dense<0.000000e+00> : vector<64x128xf32>
    %104 = tpu.matmul %102, %103, %cst_37 {dimension_numbers = #tpu.dot_dimension_numbers<[1], [0], [0], [1], [0, 0, 1, 1], [], []>} : vector<64x128xbf16>, vector<128x128xbf16>, vector<64x128xf32> -> vector<64x128xf32>
    %105 = arith.addf %99, %104 : vector<64x128xf32>
    %106 = vector.extract_strided_slice %2 {offsets = [3, 2, 0], sizes = [8, 8, 128], strides = [1, 1, 1]} : vector<12x12x128xf32> to vector<8x8x128xf32>
    %107 = vector.shape_cast %106 : vector<8x8x128xf32> to vector<64x128xf32>
    %108 = arith.truncf %107 : vector<64x128xf32> to vector<64x128xbf16>
    %c2176 = arith.constant 2176 : index
    %c0_38 = arith.constant 0 : index
    %109 = vector.load %arg2[%c2176, %c0_38] : memref<3200x128xbf16, #tpu.memory_space<vmem>>, vector<128x128xbf16>
    %cst_39 = arith.constant dense<0.000000e+00> : vector<64x128xf32>
    %110 = tpu.matmul %108, %109, %cst_39 {dimension_numbers = #tpu.dot_dimension_numbers<[1], [0], [0], [1], [0, 0, 1, 1], [], []>} : vector<64x128xbf16>, vector<128x128xbf16>, vector<64x128xf32> -> vector<64x128xf32>
    %111 = arith.addf %105, %110 : vector<64x128xf32>
    %112 = vector.extract_strided_slice %2 {offsets = [3, 3, 0], sizes = [8, 8, 128], strides = [1, 1, 1]} : vector<12x12x128xf32> to vector<8x8x128xf32>
    %113 = vector.shape_cast %112 : vector<8x8x128xf32> to vector<64x128xf32>
    %114 = arith.truncf %113 : vector<64x128xf32> to vector<64x128xbf16>
    %c2304 = arith.constant 2304 : index
    %c0_40 = arith.constant 0 : index
    %115 = vector.load %arg2[%c2304, %c0_40] : memref<3200x128xbf16, #tpu.memory_space<vmem>>, vector<128x128xbf16>
    %cst_41 = arith.constant dense<0.000000e+00> : vector<64x128xf32>
    %116 = tpu.matmul %114, %115, %cst_41 {dimension_numbers = #tpu.dot_dimension_numbers<[1], [0], [0], [1], [0, 0, 1, 1], [], []>} : vector<64x128xbf16>, vector<128x128xbf16>, vector<64x128xf32> -> vector<64x128xf32>
    %117 = arith.addf %111, %116 : vector<64x128xf32>
    %118 = vector.extract_strided_slice %2 {offsets = [3, 4, 0], sizes = [8, 8, 128], strides = [1, 1, 1]} : vector<12x12x128xf32> to vector<8x8x128xf32>
    %119 = vector.shape_cast %118 : vector<8x8x128xf32> to vector<64x128xf32>
    %120 = arith.truncf %119 : vector<64x128xf32> to vector<64x128xbf16>
    %c2432 = arith.constant 2432 : index
    %c0_42 = arith.constant 0 : index
    %121 = vector.load %arg2[%c2432, %c0_42] : memref<3200x128xbf16, #tpu.memory_space<vmem>>, vector<128x128xbf16>
    %cst_43 = arith.constant dense<0.000000e+00> : vector<64x128xf32>
    %122 = tpu.matmul %120, %121, %cst_43 {dimension_numbers = #tpu.dot_dimension_numbers<[1], [0], [0], [1], [0, 0, 1, 1], [], []>} : vector<64x128xbf16>, vector<128x128xbf16>, vector<64x128xf32> -> vector<64x128xf32>
    %123 = arith.addf %117, %122 : vector<64x128xf32>
    %124 = vector.extract_strided_slice %2 {offsets = [4, 0, 0], sizes = [8, 8, 128], strides = [1, 1, 1]} : vector<12x12x128xf32> to vector<8x8x128xf32>
    %125 = vector.shape_cast %124 : vector<8x8x128xf32> to vector<64x128xf32>
    %126 = arith.truncf %125 : vector<64x128xf32> to vector<64x128xbf16>
    %c2560 = arith.constant 2560 : index
    %c0_44 = arith.constant 0 : index
    %127 = vector.load %arg2[%c2560, %c0_44] : memref<3200x128xbf16, #tpu.memory_space<vmem>>, vector<128x128xbf16>
    %cst_45 = arith.constant dense<0.000000e+00> : vector<64x128xf32>
    %128 = tpu.matmul %126, %127, %cst_45 {dimension_numbers = #tpu.dot_dimension_numbers<[1], [0], [0], [1], [0, 0, 1, 1], [], []>} : vector<64x128xbf16>, vector<128x128xbf16>, vector<64x128xf32> -> vector<64x128xf32>
    %129 = arith.addf %123, %128 : vector<64x128xf32>
    %130 = vector.extract_strided_slice %2 {offsets = [4, 1, 0], sizes = [8, 8, 128], strides = [1, 1, 1]} : vector<12x12x128xf32> to vector<8x8x128xf32>
    %131 = vector.shape_cast %130 : vector<8x8x128xf32> to vector<64x128xf32>
    %132 = arith.truncf %131 : vector<64x128xf32> to vector<64x128xbf16>
    %c2688 = arith.constant 2688 : index
    %c0_46 = arith.constant 0 : index
    %133 = vector.load %arg2[%c2688, %c0_46] : memref<3200x128xbf16, #tpu.memory_space<vmem>>, vector<128x128xbf16>
    %cst_47 = arith.constant dense<0.000000e+00> : vector<64x128xf32>
    %134 = tpu.matmul %132, %133, %cst_47 {dimension_numbers = #tpu.dot_dimension_numbers<[1], [0], [0], [1], [0, 0, 1, 1], [], []>} : vector<64x128xbf16>, vector<128x128xbf16>, vector<64x128xf32> -> vector<64x128xf32>
    %135 = arith.addf %129, %134 : vector<64x128xf32>
    %136 = vector.extract_strided_slice %2 {offsets = [4, 2, 0], sizes = [8, 8, 128], strides = [1, 1, 1]} : vector<12x12x128xf32> to vector<8x8x128xf32>
    %137 = vector.shape_cast %136 : vector<8x8x128xf32> to vector<64x128xf32>
    %138 = arith.truncf %137 : vector<64x128xf32> to vector<64x128xbf16>
    %c2816 = arith.constant 2816 : index
    %c0_48 = arith.constant 0 : index
    %139 = vector.load %arg2[%c2816, %c0_48] : memref<3200x128xbf16, #tpu.memory_space<vmem>>, vector<128x128xbf16>
    %cst_49 = arith.constant dense<0.000000e+00> : vector<64x128xf32>
    %140 = tpu.matmul %138, %139, %cst_49 {dimension_numbers = #tpu.dot_dimension_numbers<[1], [0], [0], [1], [0, 0, 1, 1], [], []>} : vector<64x128xbf16>, vector<128x128xbf16>, vector<64x128xf32> -> vector<64x128xf32>
    %141 = arith.addf %135, %140 : vector<64x128xf32>
    %142 = vector.extract_strided_slice %2 {offsets = [4, 3, 0], sizes = [8, 8, 128], strides = [1, 1, 1]} : vector<12x12x128xf32> to vector<8x8x128xf32>
    %143 = vector.shape_cast %142 : vector<8x8x128xf32> to vector<64x128xf32>
    %144 = arith.truncf %143 : vector<64x128xf32> to vector<64x128xbf16>
    %c2944 = arith.constant 2944 : index
    %c0_50 = arith.constant 0 : index
    %145 = vector.load %arg2[%c2944, %c0_50] : memref<3200x128xbf16, #tpu.memory_space<vmem>>, vector<128x128xbf16>
    %cst_51 = arith.constant dense<0.000000e+00> : vector<64x128xf32>
    %146 = tpu.matmul %144, %145, %cst_51 {dimension_numbers = #tpu.dot_dimension_numbers<[1], [0], [0], [1], [0, 0, 1, 1], [], []>} : vector<64x128xbf16>, vector<128x128xbf16>, vector<64x128xf32> -> vector<64x128xf32>
    %147 = arith.addf %141, %146 : vector<64x128xf32>
    %148 = vector.extract_strided_slice %2 {offsets = [4, 4, 0], sizes = [8, 8, 128], strides = [1, 1, 1]} : vector<12x12x128xf32> to vector<8x8x128xf32>
    %149 = vector.shape_cast %148 : vector<8x8x128xf32> to vector<64x128xf32>
    %150 = arith.truncf %149 : vector<64x128xf32> to vector<64x128xbf16>
    %c3072 = arith.constant 3072 : index
    %c0_52 = arith.constant 0 : index
    %151 = vector.load %arg2[%c3072, %c0_52] : memref<3200x128xbf16, #tpu.memory_space<vmem>>, vector<128x128xbf16>
    %cst_53 = arith.constant dense<0.000000e+00> : vector<64x128xf32>
    %152 = tpu.matmul %150, %151, %cst_53 {dimension_numbers = #tpu.dot_dimension_numbers<[1], [0], [0], [1], [0, 0, 1, 1], [], []>} : vector<64x128xbf16>, vector<128x128xbf16>, vector<64x128xf32> -> vector<64x128xf32>
    %153 = arith.addf %147, %152 : vector<64x128xf32>
    %c0_54 = arith.constant 0 : index
    %c0_55 = arith.constant 0 : index
    %154 = vector.load %arg3[%c0_54, %c0_55] : memref<1x128xf32, #tpu.memory_space<vmem>>, vector<1x128xf32>
    %155 = vector.broadcast %154 : vector<1x128xf32> to vector<64x128xf32>
    %156 = arith.addf %153, %155 : vector<64x128xf32>
    %157 = vector.shape_cast %156 : vector<64x128xf32> to vector<4x2x8x128xf32>
    %158 = vector.extract_strided_slice %157 {offsets = [0, 0, 0, 0], sizes = [4, 1, 8, 128], strides = [1, 1, 1, 1]} : vector<4x2x8x128xf32> to vector<4x1x8x128xf32>
    %159 = vector.shape_cast %158 : vector<4x1x8x128xf32> to vector<4x8x128xf32>
    %160 = vector.extract_strided_slice %157 {offsets = [0, 1, 0, 0], sizes = [4, 1, 8, 128], strides = [1, 1, 1, 1]} : vector<4x2x8x128xf32> to vector<4x1x8x128xf32>
    %161 = vector.shape_cast %160 : vector<4x1x8x128xf32> to vector<4x8x128xf32>
    %162 = arith.maximumf %159, %161 : vector<4x8x128xf32>
    %163 = vector.shape_cast %162 : vector<4x8x128xf32> to vector<32x128xf32>
    %c0_56 = arith.constant 0 : index
    %c0_57 = arith.constant 0 : index
    %164 = vector.load %arg5[%c0_56, %c0_57] : memref<32x128xf32, #tpu.memory_space<vmem>>, vector<32x128xf32>
    tpu.vector_store %arg5[%c0_56, %c0_57], %163 {strides = array<i32>} : memref<32x128xf32, #tpu.memory_space<vmem>>, vector<32x128xf32>,
    %c0_58 = arith.constant 0 : index
    %c0_59 = arith.constant 0 : index
    %165 = tpu.strided_load %arg5[%c0_58, %c0_59] {strides = array<i32: 2, 1>} : memref<32x128xf32, #tpu.memory_space<vmem>>, vector<16x128xf32>
    %c1 = arith.constant 1 : index
    %c0_60 = arith.constant 0 : index
    %166 = tpu.strided_load %arg5[%c1, %c0_60] {strides = array<i32: 2, 1>} : memref<32x128xf32, #tpu.memory_space<vmem>>, vector<16x128xf32>
    %167 = arith.maximumf %165, %166 : vector<16x128xf32>
    %cst_61 = arith.constant 0.000000e+00 : f32
    %168 = vector.broadcast %cst_61 : f32 to vector<16x128xf32>
    %169 = arith.maximumf %167, %168 : vector<16x128xf32>
    %170 = arith.truncf %169 : vector<16x128xf32> to vector<16x128xbf16>
    %c0_62 = arith.constant 0 : index
    %c0_63 = arith.constant 0 : index
    %c0_64 = arith.constant 0 : index
    %171 = vector.load %arg4[%c0_62, %c0_63, %c0_64] : memref<1x16x128xbf16, #tpu.memory_space<vmem>>, vector<1x16x128xbf16>
    %172 = vector.shape_cast %171 : vector<1x16x128xbf16> to vector<16x128xbf16>
    %173 = vector.shape_cast %170 : vector<16x128xbf16> to vector<1x16x128xbf16>
    tpu.vector_store %arg4[%c0_62, %c0_63, %c0_64], %173 {strides = array<i32>} : memref<1x16x128xbf16, #tpu.memory_space<vmem>>, vector<1x16x128xbf16>,
    return
  }
  func.func @transform_0(%arg0: i32) -> (i32, i32, i32, i32) {
    %c0_i32 = arith.constant 0 : i32
    %c0_i32_0 = arith.constant 0 : i32
    %c0_i32_1 = arith.constant 0 : i32
    %c0_i32_2 = arith.constant 0 : i32
    return %arg0, %c0_i32, %c0_i32_0, %c0_i32_1 : i32, i32, i32, i32
  }
  func.func @transform_1(%arg0: i32) -> (i32, i32) {
    %c0_i32 = arith.constant 0 : i32
    %c0_i32_0 = arith.constant 0 : i32
    %c0_i32_1 = arith.constant 0 : i32
    return %c0_i32, %c0_i32_0 : i32, i32
  }
  func.func @transform_2(%arg0: i32) -> (i32, i32) {
    %c0_i32 = arith.constant 0 : i32
    %c0_i32_0 = arith.constant 0 : i32
    %c0_i32_1 = arith.constant 0 : i32
    return %c0_i32, %c0_i32_0 : i32, i32
  }
  func.func @transform_3(%arg0: i32) -> (i32, i32, i32) {
    %c0_i32 = arith.constant 0 : i32
    %c0_i32_0 = arith.constant 0 : i32
    %c0_i32_1 = arith.constant 0 : i32
    return %arg0, %c0_i32, %c0_i32_0 : i32, i32, i32
  }
}

module attributes {stable_mosaic.version = 11 : i64} {
  func.func @_dense_head_kernel(%arg0: i32, %arg1: memref<2x2048xbf16, #tpu.memory_space<vmem>>, %arg2: memref<2048x128xbf16, #tpu.memory_space<vmem>>, %arg3: memref<1x128xf32, #tpu.memory_space<vmem>>, %arg4: memref<128x128xbf16, #tpu.memory_space<vmem>>, %arg5: memref<1x128xf32, #tpu.memory_space<vmem>>, %arg6: memref<2x128xf32, #tpu.memory_space<vmem>>) attributes {dimension_semantics = [#tpu.dimension_semantics<parallel>], iteration_bounds = array<i64: 1>, scalar_prefetch = 0 : i64, scratch_operands = 0 : i64, tpu.core_type = #tpu.core_type<tc>, window_params = [{transform_indices = @transform_0, window_bounds = array<i64: 2, 2048>}, {pipeline_mode = #tpu.pipeline_mode<synchronous>, transform_indices = @transform_1, window_bounds = array<i64: 2048, 128>}, {pipeline_mode = #tpu.pipeline_mode<synchronous>, transform_indices = @transform_2, window_bounds = array<i64: 1, 128>}, {pipeline_mode = #tpu.pipeline_mode<synchronous>, transform_indices = @transform_3, window_bounds = array<i64: 128, 128>}, {pipeline_mode = #tpu.pipeline_mode<synchronous>, transform_indices = @transform_4, window_bounds = array<i64: 1, 128>}, {transform_indices = @transform_5, window_bounds = array<i64: 2, 128>}]} {
    %c0 = arith.constant 0 : index
    %c0_0 = arith.constant 0 : index
    %0 = vector.load %arg1[%c0, %c0_0] : memref<2x2048xbf16, #tpu.memory_space<vmem>>, vector<2x2048xbf16>
    %c0_1 = arith.constant 0 : index
    %c0_2 = arith.constant 0 : index
    %1 = vector.load %arg2[%c0_1, %c0_2] : memref<2048x128xbf16, #tpu.memory_space<vmem>>, vector<2048x128xbf16>
    %cst = arith.constant dense<0.000000e+00> : vector<2x128xf32>
    %2 = tpu.matmul %0, %1, %cst {dimension_numbers = #tpu.dot_dimension_numbers<[1], [0], [0], [1], [0, 0, 1, 1], [], []>} : vector<2x2048xbf16>, vector<2048x128xbf16>, vector<2x128xf32> -> vector<2x128xf32>
    %c0_3 = arith.constant 0 : index
    %c0_4 = arith.constant 0 : index
    %3 = vector.load %arg3[%c0_3, %c0_4] : memref<1x128xf32, #tpu.memory_space<vmem>>, vector<1x128xf32>
    %4 = vector.broadcast %3 : vector<1x128xf32> to vector<2x128xf32>
    %5 = arith.addf %2, %4 : vector<2x128xf32>
    %cst_5 = arith.constant 0.000000e+00 : f32
    %6 = vector.broadcast %cst_5 : f32 to vector<2x128xf32>
    %7 = arith.maximumf %5, %6 : vector<2x128xf32>
    %8 = arith.truncf %7 : vector<2x128xf32> to vector<2x128xbf16>
    %c0_6 = arith.constant 0 : index
    %c0_7 = arith.constant 0 : index
    %9 = vector.load %arg4[%c0_6, %c0_7] : memref<128x128xbf16, #tpu.memory_space<vmem>>, vector<128x128xbf16>
    %cst_8 = arith.constant dense<0.000000e+00> : vector<2x128xf32>
    %10 = tpu.matmul %8, %9, %cst_8 {dimension_numbers = #tpu.dot_dimension_numbers<[1], [0], [0], [1], [0, 0, 1, 1], [], []>} : vector<2x128xbf16>, vector<128x128xbf16>, vector<2x128xf32> -> vector<2x128xf32>
    %c0_9 = arith.constant 0 : index
    %c0_10 = arith.constant 0 : index
    %11 = vector.load %arg5[%c0_9, %c0_10] : memref<1x128xf32, #tpu.memory_space<vmem>>, vector<1x128xf32>
    %12 = vector.broadcast %11 : vector<1x128xf32> to vector<2x128xf32>
    %13 = arith.addf %10, %12 : vector<2x128xf32>
    %cst_11 = arith.constant 0.000000e+00 : f32
    %14 = vector.broadcast %cst_11 : f32 to vector<2x128xf32>
    %15 = arith.maximumf %13, %14 : vector<2x128xf32>
    %c0_12 = arith.constant 0 : index
    %c0_13 = arith.constant 0 : index
    %16 = vector.load %arg6[%c0_12, %c0_13] : memref<2x128xf32, #tpu.memory_space<vmem>>, vector<2x128xf32>
    tpu.vector_store %arg6[%c0_12, %c0_13], %15 {strides = array<i32>} : memref<2x128xf32, #tpu.memory_space<vmem>>, vector<2x128xf32>,
    return
  }
  func.func @transform_0(%arg0: i32) -> (i32, i32) {
    %c0_i32 = arith.constant 0 : i32
    %c0_i32_0 = arith.constant 0 : i32
    return %arg0, %c0_i32 : i32, i32
  }
  func.func @transform_1(%arg0: i32) -> (i32, i32) {
    %c0_i32 = arith.constant 0 : i32
    %c0_i32_0 = arith.constant 0 : i32
    %c0_i32_1 = arith.constant 0 : i32
    return %c0_i32, %c0_i32_0 : i32, i32
  }
  func.func @transform_2(%arg0: i32) -> (i32, i32) {
    %c0_i32 = arith.constant 0 : i32
    %c0_i32_0 = arith.constant 0 : i32
    %c0_i32_1 = arith.constant 0 : i32
    return %c0_i32, %c0_i32_0 : i32, i32
  }
  func.func @transform_3(%arg0: i32) -> (i32, i32) {
    %c0_i32 = arith.constant 0 : i32
    %c0_i32_0 = arith.constant 0 : i32
    %c0_i32_1 = arith.constant 0 : i32
    return %c0_i32, %c0_i32_0 : i32, i32
  }
  func.func @transform_4(%arg0: i32) -> (i32, i32) {
    %c0_i32 = arith.constant 0 : i32
    %c0_i32_0 = arith.constant 0 : i32
    %c0_i32_1 = arith.constant 0 : i32
    return %c0_i32, %c0_i32_0 : i32, i32
  }
  func.func @transform_5(%arg0: i32) -> (i32, i32) {
    %c0_i32 = arith.constant 0 : i32
    %c0_i32_0 = arith.constant 0 : i32
    return %arg0, %c0_i32 : i32, i32
  }
}

</mosaic_0001>

<llo_original>
// kernel: compliant_relu_forward.5
$region0: #{compliant_relu_forward.5}
  #allocation0 [shape = 'u32[]', space=smem, size = 0x4, offset = 0x4, fixed_abs, tag = 'smem constant byte address 0x4 - core index']
  #allocation1 [shape = 'u32[72,128]{1,0:T(1,128)}', space=vmem, size = 0x9000, scoped, tag = 'internal scratch']
  %s0 = inlined_call_operand.vmem [shape: bf16[2,2048], index: 0, kind: input, shape index: {}]
  %s1 = inlined_call_operand.vmem [shape: bf16[2048,128], index: 1, kind: input, shape index: {}]
  %s2 = inlined_call_operand.vmem [shape: f32[1,128], index: 2, kind: input, shape index: {}]
  %s3 = inlined_call_operand.vmem [shape: bf16[128,128], index: 3, kind: input, shape index: {}]
  %s4 = inlined_call_operand.vmem [shape: f32[1,128], index: 4, kind: input, shape index: {}]
  %s5 = inlined_call_operand.hbm [shape: f32[2,128], index: 5, kind: output, shape index: {}]
  %s6 = sld [smem:[#allocation0]]
  $region30: #{compliant_relu_forward.5} parent=0
    _
  %s8 = ssub.s32 1, %s6
  %s9 = scalar_select 0, %s8, %s6
  $region1: #{compliant_relu_forward.5} parent=0
    #allocation2 [shape = 'u8[1024]{0}', space=vmem, size = 0x400, scoped, tag = 'output window, operand 0, single buffered']
    #allocation3 [shape = 's32[1]{0}', space=sflag, size = 0x4, scoped, tag = 'scoped memory for compliant_relu_forward.5']
    %10 = vsyncpa [#allocation3], 0
    // Predicated region
    $region2: #{compliant_relu_forward.5} parent=1 // pred_check
      _
    $region3: #{compliant_relu_forward.5} parent=1 // pred_check_branch
      %12 = sbr.rel (0) target = $region5
    $region4: #{compliant_relu_forward.5} parent=1 // pred_region
      _
    $region5: #{compliant_relu_forward.5} parent=1 // pred_fallthru
      _
    // Predicated region
    $region6: #{compliant_relu_forward.5} parent=1 // pred_check
      _
    $region7: #{compliant_relu_forward.5} parent=1 // pred_check_branch
      %14 = sbr.rel (0) target = $region9
    $region8: #{compliant_relu_forward.5} parent=1 // pred_region
      _
    $region9: #{compliant_relu_forward.5} parent=1 // pred_fallthru
      _
    // Predicated region
    $region10: #{compliant_relu_forward.5} parent=1 // pred_check
      _
    $region11: #{compliant_relu_forward.5} parent=1 // pred_check_branch
      %16 = sbr.rel (0) target = $region13
    $region12: #{compliant_relu_forward.5} parent=1 // pred_region
      _
    $region13: #{compliant_relu_forward.5} parent=1 // pred_fallthru
      _
    // Predicated region
    $region14: #{compliant_relu_forward.5} parent=1 // pred_check
      _
    $region15: #{compliant_relu_forward.5} parent=1 // pred_check_branch
      %18 = sbr.rel (0) target = $region17
    $region16: #{compliant_relu_forward.5} parent=1 // pred_region
      _
    $region17: #{compliant_relu_forward.5} parent=1 // pred_fallthru
      _
    // Predicated region
    $region18: #{compliant_relu_forward.5} parent=1 // pred_check
      _
    $region19: #{compliant_relu_forward.5} parent=1 // pred_check_branch
      %20 = sbr.rel (0) target = $region21
    $region20: #{compliant_relu_forward.5} parent=1 // pred_region
      _
    $region21: #{compliant_relu_forward.5} parent=1 // pred_fallthru
      _
    %v21 = vld [vmem:[%s0] sm:$0xff]
    %v22 = vld [vmem:[%s0 + $0x8] sm:$0xff]
    %v23 = vld [vmem:[%s1] sm:$0xf]
    %v24 = vld [vmem:[%s1 + $0x4] sm:$0xf]
    %v25 = vld [vmem:[%s1 + $0x8] sm:$0xf]
    %v26 = vld [vmem:[%s1 + $0xc] sm:$0xf]
    %v27 = vld [vmem:[%s1 + $0x10] sm:$0xf]
    %v28 = vld [vmem:[%s1 + $0x14] sm:$0xf]
    %v29 = vld [vmem:[%s1 + $0x18] sm:$0xf]
    %v30 = vld [vmem:[%s1 + $0x1c] sm:$0xf]
    %v31 = vld [vmem:[%s1 + $0x20] sm:$0xf]
    %v32 = vld [vmem:[%s1 + $0x24] sm:$0xf]
    %v33 = vld [vmem:[%s1 + $0x28] sm:$0xf]
    %v34 = vld [vmem:[%s1 + $0x2c] sm:$0xf]
    %v35 = vld [vmem:[%s1 + $0x30] sm:$0xf]
    %v36 = vld [vmem:[%s1 + $0x34] sm:$0xf]
    %v37 = vld [vmem:[%s1 + $0x38] sm:$0xf]
    %v38 = vld [vmem:[%s1 + $0x3c] sm:$0xf]
    %v39 = vld [vmem:[%s1 + $0x40] sm:$0xf]
    %v40 = vld [vmem:[%s1 + $0x44] sm:$0xf]
    %v41 = vld [vmem:[%s1 + $0x48] sm:$0xf]
    %v42 = vld [vmem:[%s1 + $0x4c] sm:$0xf]
    %v43 = vld [vmem:[%s1 + $0x50] sm:$0xf]
    %v44 = vld [vmem:[%s1 + $0x54] sm:$0xf]
    %v45 = vld [vmem:[%s1 + $0x58] sm:$0xf]
    %v46 = vld [vmem:[%s1 + $0x5c] sm:$0xf]
    %v47 = vld [vmem:[%s1 + $0x60] sm:$0xf]
    %v48 = vld [vmem:[%s1 + $0x64] sm:$0xf]
    %v49 = vld [vmem:[%s1 + $0x68] sm:$0xf]
    %v50 = vld [vmem:[%s1 + $0x6c] sm:$0xf]
    %v51 = vld [vmem:[%s1 + $0x70] sm:$0xf]
    %v52 = vld [vmem:[%s1 + $0x74] sm:$0xf]
    %v53 = vld [vmem:[%s1 + $0x78] sm:$0xf]
    %v54 = vld [vmem:[%s1 + $0x7c] sm:$0xf]
    %v55 = vld [vmem:[%s1 + $0x80] sm:$0xf]
    %v56 = vld [vmem:[%s1 + $0x84] sm:$0xf]
    %v57 = vld [vmem:[%s1 + $0x88] sm:$0xf]
    %v58 = vld [vmem:[%s1 + $0x8c] sm:$0xf]
    %v59 = vld [vmem:[%s1 + $0x90] sm:$0xf]
    %v60 = vld [vmem:[%s1 + $0x94] sm:$0xf]
    %v61 = vld [vmem:[%s1 + $0x98] sm:$0xf]
    %v62 = vld [vmem:[%s1 + $0x9c] sm:$0xf]
    %v63 = vld [vmem:[%s1 + $0xa0] sm:$0xf]
    %v64 = vld [vmem:[%s1 + $0xa4] sm:$0xf]
    %v65 = vld [vmem:[%s1 + $0xa8] sm:$0xf]
    %v66 = vld [vmem:[%s1 + $0xac] sm:$0xf]
    %v67 = vld [vmem:[%s1 + $0xb0] sm:$0xf]
    %v68 = vld [vmem:[%s1 + $0xb4] sm:$0xf]
    %v69 = vld [vmem:[%s1 + $0xb8] sm:$0xf]
    %v70 = vld [vmem:[%s1 + $0xbc] sm:$0xf]
    %v71 = vld [vmem:[%s1 + $0xc0] sm:$0xf]
    %v72 = vld [vmem:[%s1 + $0xc4] sm:$0xf]
    %v73 = vld [vmem:[%s1 + $0xc8] sm:$0xf]
    %v74 = vld [vmem:[%s1 + $0xcc] sm:$0xf]
    %v75 = vld [vmem:[%s1 + $0xd0] sm:$0xf]
    %v76 = vld [vmem:[%s1 + $0xd4] sm:$0xf]
    %v77 = vld [vmem:[%s1 + $0xd8] sm:$0xf]
    %v78 = vld [vmem:[%s1 + $0xdc] sm:$0xf]
    %v79 = vld [vmem:[%s1 + $0xe0] sm:$0xf]
    %v80 = vld [vmem:[%s1 + $0xe4] sm:$0xf]
    %v81 = vld [vmem:[%s1 + $0xe8] sm:$0xf]
    %v82 = vld [vmem:[%s1 + $0xec] sm:$0xf]
    %v83 = vld [vmem:[%s1 + $0xf0] sm:$0xf]
    %v84 = vld [vmem:[%s1 + $0xf4] sm:$0xf]
    %v85 = vld [vmem:[%s1 + $0xf8] sm:$0xf]
    %v86 = vld [vmem:[%s1 + $0xfc] sm:$0xf]
    %v87 = vld [vmem:[%s1 + $0x100] sm:$0xf]
    %v88 = vld [vmem:[%s1 + $0x104] sm:$0xf]
    %v89 = vld [vmem:[%s1 + $0x108] sm:$0xf]
    %v90 = vld [vmem:[%s1 + $0x10c] sm:$0xf]
    %v91 = vld [vmem:[%s1 + $0x110] sm:$0xf]
    %v92 = vld [vmem:[%s1 + $0x114] sm:$0xf]
    %v93 = vld [vmem:[%s1 + $0x118] sm:$0xf]
    %v94 = vld [vmem:[%s1 + $0x11c] sm:$0xf]
    %v95 = vld [vmem:[%s1 + $0x120] sm:$0xf]
    %v96 = vld [vmem:[%s1 + $0x124] sm:$0xf]
    %v97 = vld [vmem:[%s1 + $0x128] sm:$0xf]
    %v98 = vld [vmem:[%s1 + $0x12c] sm:$0xf]
    %v99 = vld [vmem:[%s1 + $0x130] sm:$0xf]
    %v100 = vld [vmem:[%s1 + $0x134] sm:$0xf]
    %v101 = vld [vmem:[%s1 + $0x138] sm:$0xf]
    %v102 = vld [vmem:[%s1 + $0x13c] sm:$0xf]
    %v103 = vld [vmem:[%s1 + $0x140] sm:$0xf]
    %v104 = vld [vmem:[%s1 + $0x144] sm:$0xf]
    %v105 = vld [vmem:[%s1 + $0x148] sm:$0xf]
    %v106 = vld [vmem:[%s1 + $0x14c] sm:$0xf]
    %v107 = vld [vmem:[%s1 + $0x150] sm:$0xf]
    %v108 = vld [vmem:[%s1 + $0x154] sm:$0xf]
    %v109 = vld [vmem:[%s1 + $0x158] sm:$0xf]
    %v110 = vld [vmem:[%s1 + $0x15c] sm:$0xf]
    %v111 = vld [vmem:[%s1 + $0x160] sm:$0xf]
    %v112 = vld [vmem:[%s1 + $0x164] sm:$0xf]
    %v113 = vld [vmem:[%s1 + $0x168] sm:$0xf]
    %v114 = vld [vmem:[%s1 + $0x16c] sm:$0xf]
    %v115 = vld [vmem:[%s1 + $0x170] sm:$0xf]
    %v116 = vld [vmem:[%s1 + $0x174] sm:$0xf]
    %v117 = vld [vmem:[%s1 + $0x178] sm:$0xf]
    %v118 = vld [vmem:[%s1 + $0x17c] sm:$0xf]
    %v119 = vld [vmem:[%s1 + $0x180] sm:$0xf]
    %v120 = vld [vmem:[%s1 + $0x184] sm:$0xf]
    %v121 = vld [vmem:[%s1 + $0x188] sm:$0xf]
    %v122 = vld [vmem:[%s1 + $0x18c] sm:$0xf]
    %v123 = vld [vmem:[%s1 + $0x190] sm:$0xf]
    %v124 = vld [vmem:[%s1 + $0x194] sm:$0xf]
    %v125 = vld [vmem:[%s1 + $0x198] sm:$0xf]
    %v126 = vld [vmem:[%s1 + $0x19c] sm:$0xf]
    %v127 = vld [vmem:[%s1 + $0x1a0] sm:$0xf]
    %v128 = vld [vmem:[%s1 + $0x1a4] sm:$0xf]
    %v129 = vld [vmem:[%s1 + $0x1a8] sm:$0xf]
    %v130 = vld [vmem:[%s1 + $0x1ac] sm:$0xf]
    %v131 = vld [vmem:[%s1 + $0x1b0] sm:$0xf]
    %v132 = vld [vmem:[%s1 + $0x1b4] sm:$0xf]
    %v133 = vld [vmem:[%s1 + $0x1b8] sm:$0xf]
    %v134 = vld [vmem:[%s1 + $0x1bc] sm:$0xf]
    %v135 = vld [vmem:[%s1 + $0x1c0] sm:$0xf]
    %v136 = vld [vmem:[%s1 + $0x1c4] sm:$0xf]
    %v137 = vld [vmem:[%s1 + $0x1c8] sm:$0xf]
    %v138 = vld [vmem:[%s1 + $0x1cc] sm:$0xf]
    %v139 = vld [vmem:[%s1 + $0x1d0] sm:$0xf]
    %v140 = vld [vmem:[%s1 + $0x1d4] sm:$0xf]
    %v141 = vld [vmem:[%s1 + $0x1d8] sm:$0xf]
    %v142 = vld [vmem:[%s1 + $0x1dc] sm:$0xf]
    %v143 = vld [vmem:[%s1 + $0x1e0] sm:$0xf]
    %v144 = vld [vmem:[%s1 + $0x1e4] sm:$0xf]
    %v145 = vld [vmem:[%s1 + $0x1e8] sm:$0xf]
    %v146 = vld [vmem:[%s1 + $0x1ec] sm:$0xf]
    %v147 = vld [vmem:[%s1 + $0x1f0] sm:$0xf]
    %v148 = vld [vmem:[%s1 + $0x1f4] sm:$0xf]
    %v149 = vld [vmem:[%s1 + $0x1f8] sm:$0xf]
    %v150 = vld [vmem:[%s1 + $0x1fc] sm:$0xf]
    %v151 = vld [vmem:[%s1 + $0x200] sm:$0xf]
    %v152 = vld [vmem:[%s1 + $0x204] sm:$0xf]
    %v153 = vld [vmem:[%s1 + $0x208] sm:$0xf]
    %v154 = vld [vmem:[%s1 + $0x20c] sm:$0xf]
    %v155 = vld [vmem:[%s1 + $0x210] sm:$0xf]
    %v156 = vld [vmem:[%s1 + $0x214] sm:$0xf]
    %v157 = vld [vmem:[%s1 + $0x218] sm:$0xf]
    %v158 = vld [vmem:[%s1 + $0x21c] sm:$0xf]
    %v159 = vld [vmem:[%s1 + $0x220] sm:$0xf]
    %v160 = vld [vmem:[%s1 + $0x224] sm:$0xf]
    %v161 = vld [vmem:[%s1 + $0x228] sm:$0xf]
    %v162 = vld [vmem:[%s1 + $0x22c] sm:$0xf]
    %v163 = vld [vmem:[%s1 + $0x230] sm:$0xf]
    %v164 = vld [vmem:[%s1 + $0x234] sm:$0xf]
    %v165 = vld [vmem:[%s1 + $0x238] sm:$0xf]
    %v166 = vld [vmem:[%s1 + $0x23c] sm:$0xf]
    %v167 = vld [vmem:[%s1 + $0x240] sm:$0xf]
    %v168 = vld [vmem:[%s1 + $0x244] sm:$0xf]
    %v169 = vld [vmem:[%s1 + $0x248] sm:$0xf]
    %v170 = vld [vmem:[%s1 + $0x24c] sm:$0xf]
    %v171 = vld [vmem:[%s1 + $0x250] sm:$0xf]
    %v172 = vld [vmem:[%s1 + $0x254] sm:$0xf]
    %v173 = vld [vmem:[%s1 + $0x258] sm:$0xf]
    %v174 = vld [vmem:[%s1 + $0x25c] sm:$0xf]
    %v175 = vld [vmem:[%s1 + $0x260] sm:$0xf]
    %v176 = vld [vmem:[%s1 + $0x264] sm:$0xf]
    %v177 = vld [vmem:[%s1 + $0x268] sm:$0xf]
    %v178 = vld [vmem:[%s1 + $0x26c] sm:$0xf]
    %v179 = vld [vmem:[%s1 + $0x270] sm:$0xf]
    %v180 = vld [vmem:[%s1 + $0x274] sm:$0xf]
    %v181 = vld [vmem:[%s1 + $0x278] sm:$0xf]
    %v182 = vld [vmem:[%s1 + $0x27c] sm:$0xf]
    %v183 = vld [vmem:[%s1 + $0x280] sm:$0xf]
    %v184 = vld [vmem:[%s1 + $0x284] sm:$0xf]
    %v185 = vld [vmem:[%s1 + $0x288] sm:$0xf]
    %v186 = vld [vmem:[%s1 + $0x28c] sm:$0xf]
    %v187 = vld [vmem:[%s1 + $0x290] sm:$0xf]
    %v188 = vld [vmem:[%s1 + $0x294] sm:$0xf]
    %v189 = vld [vmem:[%s1 + $0x298] sm:$0xf]
    %v190 = vld [vmem:[%s1 + $0x29c] sm:$0xf]
    %v191 = vld [vmem:[%s1 + $0x2a0] sm:$0xf]
    %v192 = vld [vmem:[%s1 + $0x2a4] sm:$0xf]
    %v193 = vld [vmem:[%s1 + $0x2a8] sm:$0xf]
    %v194 = vld [vmem:[%s1 + $0x2ac] sm:$0xf]
    %v195 = vld [vmem:[%s1 + $0x2b0] sm:$0xf]
    %v196 = vld [vmem:[%s1 + $0x2b4] sm:$0xf]
    %v197 = vld [vmem:[%s1 + $0x2b8] sm:$0xf]
    %v198 = vld [vmem:[%s1 + $0x2bc] sm:$0xf]
    %v199 = vld [vmem:[%s1 + $0x2c0] sm:$0xf]
    %v200 = vld [vmem:[%s1 + $0x2c4] sm:$0xf]
    %v201 = vld [vmem:[%s1 + $0x2c8] sm:$0xf]
    %v202 = vld [vmem:[%s1 + $0x2cc] sm:$0xf]
    %v203 = vld [vmem:[%s1 + $0x2d0] sm:$0xf]
    %v204 = vld [vmem:[%s1 + $0x2d4] sm:$0xf]
    %v205 = vld [vmem:[%s1 + $0x2d8] sm:$0xf]
    %v206 = vld [vmem:[%s1 + $0x2dc] sm:$0xf]
    %v207 = vld [vmem:[%s1 + $0x2e0] sm:$0xf]
    %v208 = vld [vmem:[%s1 + $0x2e4] sm:$0xf]
    %v209 = vld [vmem:[%s1 + $0x2e8] sm:$0xf]
    %v210 = vld [vmem:[%s1 + $0x2ec] sm:$0xf]
    %v211 = vld [vmem:[%s1 + $0x2f0] sm:$0xf]
    %v212 = vld [vmem:[%s1 + $0x2f4] sm:$0xf]
    %v213 = vld [vmem:[%s1 + $0x2f8] sm:$0xf]
    %v214 = vld [vmem:[%s1 + $0x2fc] sm:$0xf]
    %v215 = vld [vmem:[%s1 + $0x300] sm:$0xf]
    %v216 = vld [vmem:[%s1 + $0x304] sm:$0xf]
    %v217 = vld [vmem:[%s1 + $0x308] sm:$0xf]
    %v218 = vld [vmem:[%s1 + $0x30c] sm:$0xf]
    %v219 = vld [vmem:[%s1 + $0x310] sm:$0xf]
    %v220 = vld [vmem:[%s1 + $0x314] sm:$0xf]
    %v221 = vld [vmem:[%s1 + $0x318] sm:$0xf]
    %v222 = vld [vmem:[%s1 + $0x31c] sm:$0xf]
    %v223 = vld [vmem:[%s1 + $0x320] sm:$0xf]
    %v224 = vld [vmem:[%s1 + $0x324] sm:$0xf]
    %v225 = vld [vmem:[%s1 + $0x328] sm:$0xf]
    %v226 = vld [vmem:[%s1 + $0x32c] sm:$0xf]
    %v227 = vld [vmem:[%s1 + $0x330] sm:$0xf]
    %v228 = vld [vmem:[%s1 + $0x334] sm:$0xf]
    %v229 = vld [vmem:[%s1 + $0x338] sm:$0xf]
    %v230 = vld [vmem:[%s1 + $0x33c] sm:$0xf]
    %v231 = vld [vmem:[%s1 + $0x340] sm:$0xf]
    %v232 = vld [vmem:[%s1 + $0x344] sm:$0xf]
    %v233 = vld [vmem:[%s1 + $0x348] sm:$0xf]
    %v234 = vld [vmem:[%s1 + $0x34c] sm:$0xf]
    %v235 = vld [vmem:[%s1 + $0x350] sm:$0xf]
    %v236 = vld [vmem:[%s1 + $0x354] sm:$0xf]
    %v237 = vld [vmem:[%s1 + $0x358] sm:$0xf]
    %v238 = vld [vmem:[%s1 + $0x35c] sm:$0xf]
    %v239 = vld [vmem:[%s1 + $0x360] sm:$0xf]
    %v240 = vld [vmem:[%s1 + $0x364] sm:$0xf]
    %v241 = vld [vmem:[%s1 + $0x368] sm:$0xf]
    %v242 = vld [vmem:[%s1 + $0x36c] sm:$0xf]
    %v243 = vld [vmem:[%s1 + $0x370] sm:$0xf]
    %v244 = vld [vmem:[%s1 + $0x374] sm:$0xf]
    %v245 = vld [vmem:[%s1 + $0x378] sm:$0xf]
    %v246 = vld [vmem:[%s1 + $0x37c] sm:$0xf]
    %v247 = vld [vmem:[%s1 + $0x380] sm:$0xf]
    %v248 = vld [vmem:[%s1 + $0x384] sm:$0xf]
    %v249 = vld [vmem:[%s1 + $0x388] sm:$0xf]
    %v250 = vld [vmem:[%s1 + $0x38c] sm:$0xf]
    %v251 = vld [vmem:[%s1 + $0x390] sm:$0xf]
    %v252 = vld [vmem:[%s1 + $0x394] sm:$0xf]
    %v253 = vld [vmem:[%s1 + $0x398] sm:$0xf]
    %v254 = vld [vmem:[%s1 + $0x39c] sm:$0xf]
    %v255 = vld [vmem:[%s1 + $0x3a0] sm:$0xf]
    %v256 = vld [vmem:[%s1 + $0x3a4] sm:$0xf]
    %v257 = vld [vmem:[%s1 + $0x3a8] sm:$0xf]
    %v258 = vld [vmem:[%s1 + $0x3ac] sm:$0xf]
    %v259 = vld [vmem:[%s1 + $0x3b0] sm:$0xf]
    %v260 = vld [vmem:[%s1 + $0x3b4] sm:$0xf]
    %v261 = vld [vmem:[%s1 + $0x3b8] sm:$0xf]
    %v262 = vld [vmem:[%s1 + $0x3bc] sm:$0xf]
    %v263 = vld [vmem:[%s1 + $0x3c0] sm:$0xf]
    %v264 = vld [vmem:[%s1 + $0x3c4] sm:$0xf]
    %v265 = vld [vmem:[%s1 + $0x3c8] sm:$0xf]
    %v266 = vld [vmem:[%s1 + $0x3cc] sm:$0xf]
    %v267 = vld [vmem:[%s1 + $0x3d0] sm:$0xf]
    %v268 = vld [vmem:[%s1 + $0x3d4] sm:$0xf]
    %v269 = vld [vmem:[%s1 + $0x3d8] sm:$0xf]
    %v270 = vld [vmem:[%s1 + $0x3dc] sm:$0xf]
    %v271 = vld [vmem:[%s1 + $0x3e0] sm:$0xf]
    %v272 = vld [vmem:[%s1 + $0x3e4] sm:$0xf]
    %v273 = vld [vmem:[%s1 + $0x3e8] sm:$0xf]
    %v274 = vld [vmem:[%s1 + $0x3ec] sm:$0xf]
    %v275 = vld [vmem:[%s1 + $0x3f0] sm:$0xf]
    %v276 = vld [vmem:[%s1 + $0x3f4] sm:$0xf]
    %v277 = vld [vmem:[%s1 + $0x3f8] sm:$0xf]
    %v278 = vld [vmem:[%s1 + $0x3fc] sm:$0xf]
    %v279 = vld [vmem:[%s2] sm:$0x1]
    %v281 = vperm.slane %v279, 0
    %284 = vst [vmem:[#allocation1] ss:$9 sm:$0xff] %v21
    %v285 = vld [vmem:[#allocation1] sm:$0xff]
    %v286 = vld [vmem:[#allocation1 + $0x9] sm:$0xff]
    %v287 = vld [vmem:[#allocation1 + $0x12] sm:$0xff]
    %v288 = vld [vmem:[#allocation1 + $0x1b] sm:$0xff]
    %v289 = vld [vmem:[#allocation1 + $0x24] sm:$0xff]
    %v290 = vld [vmem:[#allocation1 + $0x2d] sm:$0xff]
    %v291 = vld [vmem:[#allocation1 + $0x36] sm:$0xff]
    %v292 = vld [vmem:[#allocation1 + $0x3f] sm:$0xff]
    %294 = vst [vmem:[#allocation1] ss:$9 sm:$0xff] %v22
    %v295 = vld [vmem:[#allocation1] sm:$0xff]
    %v296 = vld [vmem:[#allocation1 + $0x9] sm:$0xff]
    %v297 = vld [vmem:[#allocation1 + $0x12] sm:$0xff]
    %v298 = vld [vmem:[#allocation1 + $0x1b] sm:$0xff]
    %v299 = vld [vmem:[#allocation1 + $0x24] sm:$0xff]
    %v300 = vld [vmem:[#allocation1 + $0x2d] sm:$0xff]
    %v301 = vld [vmem:[#allocation1 + $0x36] sm:$0xff]
    %v302 = vld [vmem:[#allocation1 + $0x3f] sm:$0xff]
    %v575 = vunpack.c.l.b16 %v23
    %v576 = vunpack.c.l.b16 %v24
    %v577 = vunpack.c.l.b16 %v25
    %v578 = vunpack.c.l.b16 %v26
    %v579 = vunpack.c.l.b16 %v27
    %v580 = vunpack.c.l.b16 %v28
    %v581 = vunpack.c.l.b16 %v29
    %v582 = vunpack.c.l.b16 %v30
    %v583 = vunpack.c.l.b16 %v31
    %v584 = vunpack.c.l.b16 %v32
    %v585 = vunpack.c.l.b16 %v33
    %v586 = vunpack.c.l.b16 %v34
    %v587 = vunpack.c.l.b16 %v35
    %v588 = vunpack.c.l.b16 %v36
    %v589 = vunpack.c.l.b16 %v37
    %v590 = vunpack.c.l.b16 %v38
    %v591 = vunpack.c.l.b16 %v39
    %v592 = vunpack.c.l.b16 %v40
    %v593 = vunpack.c.l.b16 %v41
    %v594 = vunpack.c.l.b16 %v42
    %v595 = vunpack.c.l.b16 %v43
    %v596 = vunpack.c.l.b16 %v44
    %v597 = vunpack.c.l.b16 %v45
    %v598 = vunpack.c.l.b16 %v46
    %v599 = vunpack.c.l.b16 %v47
    %v600 = vunpack.c.l.b16 %v48
    %v601 = vunpack.c.l.b16 %v49
    %v602 = vunpack.c.l.b16 %v50
    %v603 = vunpack.c.l.b16 %v51
    %v604 = vunpack.c.l.b16 %v52
    %v605 = vunpack.c.l.b16 %v53
    %v606 = vunpack.c.l.b16 %v54
    %v607 = vunpack.c.l.b16 %v55
    %v608 = vunpack.c.l.b16 %v56
    %v609 = vunpack.c.l.b16 %v57
    %v610 = vunpack.c.l.b16 %v58
    %v611 = vunpack.c.l.b16 %v59
    %v612 = vunpack.c.l.b16 %v60
    %v613 = vunpack.c.l.b16 %v61
    %v614 = vunpack.c.l.b16 %v62
    %v615 = vunpack.c.l.b16 %v63
    %v616 = vunpack.c.l.b16 %v64
    %v617 = vunpack.c.l.b16 %v65
    %v618 = vunpack.c.l.b16 %v66
    %v619 = vunpack.c.l.b16 %v67
    %v620 = vunpack.c.l.b16 %v68
    %v621 = vunpack.c.l.b16 %v69
    %v622 = vunpack.c.l.b16 %v70
    %v623 = vunpack.c.l.b16 %v71
    %v624 = vunpack.c.l.b16 %v72
    %v625 = vunpack.c.l.b16 %v73
    %v626 = vunpack.c.l.b16 %v74
    %v627 = vunpack.c.l.b16 %v75
    %v628 = vunpack.c.l.b16 %v76
    %v629 = vunpack.c.l.b16 %v77
    %v630 = vunpack.c.l.b16 %v78
    %v631 = vunpack.c.l.b16 %v79
    %v632 = vunpack.c.l.b16 %v80
    %v633 = vunpack.c.l.b16 %v81
    %v634 = vunpack.c.l.b16 %v82
    %v635 = vunpack.c.l.b16 %v83
    %v636 = vunpack.c.l.b16 %v84
    %v637 = vunpack.c.l.b16 %v85
    %v638 = vunpack.c.l.b16 %v86
    %v639 = vunpack.c.l.b16 %v87
    %v640 = vunpack.c.l.b16 %v88
    %v641 = vunpack.c.l.b16 %v89
    %v642 = vunpack.c.l.b16 %v90
    %v643 = vunpack.c.l.b16 %v91
    %v644 = vunpack.c.l.b16 %v92
    %v645 = vunpack.c.l.b16 %v93
    %v646 = vunpack.c.l.b16 %v94
    %v647 = vunpack.c.l.b16 %v95
    %v648 = vunpack.c.l.b16 %v96
    %v649 = vunpack.c.l.b16 %v97
    %v650 = vunpack.c.l.b16 %v98
    %v651 = vunpack.c.l.b16 %v99
    %v652 = vunpack.c.l.b16 %v100
    %v653 = vunpack.c.l.b16 %v101
    %v654 = vunpack.c.l.b16 %v102
    %v655 = vunpack.c.l.b16 %v103
    %v656 = vunpack.c.l.b16 %v104
    %v657 = vunpack.c.l.b16 %v105
    %v658 = vunpack.c.l.b16 %v106
    %v659 = vunpack.c.l.b16 %v107
    %v660 = vunpack.c.l.b16 %v108
    %v661 = vunpack.c.l.b16 %v109
    %v662 = vunpack.c.l.b16 %v110
    %v663 = vunpack.c.l.b16 %v111
    %v664 = vunpack.c.l.b16 %v112
    %v665 = vunpack.c.l.b16 %v113
    %v666 = vunpack.c.l.b16 %v114
    %v667 = vunpack.c.l.b16 %v115
    %v668 = vunpack.c.l.b16 %v116
    %v669 = vunpack.c.l.b16 %v117
    %v670 = vunpack.c.l.b16 %v118
    %v671 = vunpack.c.l.b16 %v119
    %v672 = vunpack.c.l.b16 %v120
    %v673 = vunpack.c.l.b16 %v121
    %v674 = vunpack.c.l.b16 %v122
    %v675 = vunpack.c.l.b16 %v123
    %v676 = vunpack.c.l.b16 %v124
    %v677 = vunpack.c.l.b16 %v125
    %v678 = vunpack.c.l.b16 %v126
    %v679 = vunpack.c.l.b16 %v127
    %v680 = vunpack.c.l.b16 %v128
    %v681 = vunpack.c.l.b16 %v129
    %v682 = vunpack.c.l.b16 %v130
    %v683 = vunpack.c.l.b16 %v131
    %v684 = vunpack.c.l.b16 %v132
    %v685 = vunpack.c.l.b16 %v133
    %v686 = vunpack.c.l.b16 %v134
    %v687 = vunpack.c.l.b16 %v135
    %v688 = vunpack.c.l.b16 %v136
    %v689 = vunpack.c.l.b16 %v137
    %v690 = vunpack.c.l.b16 %v138
    %v691 = vunpack.c.l.b16 %v139
    %v692 = vunpack.c.l.b16 %v140
    %v693 = vunpack.c.l.b16 %v141
    %v694 = vunpack.c.l.b16 %v142
    %v695 = vunpack.c.l.b16 %v143
    %v696 = vunpack.c.l.b16 %v144
    %v697 = vunpack.c.l.b16 %v145
    %v698 = vunpack.c.l.b16 %v146
    %v699 = vunpack.c.l.b16 %v147
    %v700 = vunpack.c.l.b16 %v148
    %v701 = vunpack.c.l.b16 %v149
    %v702 = vunpack.c.l.b16 %v150
    %v703 = vunpack.c.l.b16 %v151
    %v704 = vunpack.c.l.b16 %v152
    %v705 = vunpack.c.l.b16 %v153
    %v706 = vunpack.c.l.b16 %v154
    %v707 = vunpack.c.l.b16 %v155
    %v708 = vunpack.c.l.b16 %v156
    %v709 = vunpack.c.l.b16 %v157
    %v710 = vunpack.c.l.b16 %v158
    %v711 = vunpack.c.l.b16 %v159
    %v712 = vunpack.c.l.b16 %v160
    %v713 = vunpack.c.l.b16 %v161
    %v714 = vunpack.c.l.b16 %v162
    %v715 = vunpack.c.l.b16 %v163
    %v716 = vunpack.c.l.b16 %v164
    %v717 = vunpack.c.l.b16 %v165
    %v718 = vunpack.c.l.b16 %v166
    %v719 = vunpack.c.l.b16 %v167
    %v720 = vunpack.c.l.b16 %v168
    %v721 = vunpack.c.l.b16 %v169
    %v722 = vunpack.c.l.b16 %v170
    %v723 = vunpack.c.l.b16 %v171
    %v724 = vunpack.c.l.b16 %v172
    %v725 = vunpack.c.l.b16 %v173
    %v726 = vunpack.c.l.b16 %v174
    %v727 = vunpack.c.l.b16 %v175
    %v728 = vunpack.c.l.b16 %v176
    %v729 = vunpack.c.l.b16 %v177
    %v730 = vunpack.c.l.b16 %v178
    %v731 = vunpack.c.l.b16 %v179
    %v732 = vunpack.c.l.b16 %v180
    %v733 = vunpack.c.l.b16 %v181
    %v734 = vunpack.c.l.b16 %v182
    %v735 = vunpack.c.l.b16 %v183
    %v736 = vunpack.c.l.b16 %v184
    %v737 = vunpack.c.l.b16 %v185
    %v738 = vunpack.c.l.b16 %v186
    %v739 = vunpack.c.l.b16 %v187
    %v740 = vunpack.c.l.b16 %v188
    %v741 = vunpack.c.l.b16 %v189
    %v742 = vunpack.c.l.b16 %v190
    %v743 = vunpack.c.l.b16 %v191
    %v744 = vunpack.c.l.b16 %v192
    %v745 = vunpack.c.l.b16 %v193
    %v746 = vunpack.c.l.b16 %v194
    %v747 = vunpack.c.l.b16 %v195
    %v748 = vunpack.c.l.b16 %v196
    %v749 = vunpack.c.l.b16 %v197
    %v750 = vunpack.c.l.b16 %v198
    %v751 = vunpack.c.l.b16 %v199
    %v752 = vunpack.c.l.b16 %v200
    %v753 = vunpack.c.l.b16 %v201
    %v754 = vunpack.c.l.b16 %v202
    %v755 = vunpack.c.l.b16 %v203
    %v756 = vunpack.c.l.b16 %v204
    %v757 = vunpack.c.l.b16 %v205
    %v758 = vunpack.c.l.b16 %v206
    %v759 = vunpack.c.l.b16 %v207
    %v760 = vunpack.c.l.b16 %v208
    %v761 = vunpack.c.l.b16 %v209
    %v762 = vunpack.c.l.b16 %v210
    %v763 = vunpack.c.l.b16 %v211
    %v764 = vunpack.c.l.b16 %v212
    %v765 = vunpack.c.l.b16 %v213
    %v766 = vunpack.c.l.b16 %v214
    %v767 = vunpack.c.l.b16 %v215
    %v768 = vunpack.c.l.b16 %v216
    %v769 = vunpack.c.l.b16 %v217
    %v770 = vunpack.c.l.b16 %v218
    %v771 = vunpack.c.l.b16 %v219
    %v772 = vunpack.c.l.b16 %v220
    %v773 = vunpack.c.l.b16 %v221
    %v774 = vunpack.c.l.b16 %v222
    %v775 = vunpack.c.l.b16 %v223
    %v776 = vunpack.c.l.b16 %v224
    %v777 = vunpack.c.l.b16 %v225
    %v778 = vunpack.c.l.b16 %v226
    %v779 = vunpack.c.l.b16 %v227
    %v780 = vunpack.c.l.b16 %v228
    %v781 = vunpack.c.l.b16 %v229
    %v782 = vunpack.c.l.b16 %v230
    %v783 = vunpack.c.l.b16 %v231
    %v784 = vunpack.c.l.b16 %v232
    %v785 = vunpack.c.l.b16 %v233
    %v786 = vunpack.c.l.b16 %v234
    %v787 = vunpack.c.l.b16 %v235
    %v788 = vunpack.c.l.b16 %v236
    %v789 = vunpack.c.l.b16 %v237
    %v790 = vunpack.c.l.b16 %v238
    %v791 = vunpack.c.l.b16 %v239
    %v792 = vunpack.c.l.b16 %v240
    %v793 = vunpack.c.l.b16 %v241
    %v794 = vunpack.c.l.b16 %v242
    %v795 = vunpack.c.l.b16 %v243
    %v796 = vunpack.c.l.b16 %v244
    %v797 = vunpack.c.l.b16 %v245
    %v798 = vunpack.c.l.b16 %v246
    %v799 = vunpack.c.l.b16 %v247
    %v800 = vunpack.c.l.b16 %v248
    %v801 = vunpack.c.l.b16 %v249
    %v802 = vunpack.c.l.b16 %v250
    %v803 = vunpack.c.l.b16 %v251
    %v804 = vunpack.c.l.b16 %v252
    %v805 = vunpack.c.l.b16 %v253
    %v806 = vunpack.c.l.b16 %v254
    %v807 = vunpack.c.l.b16 %v255
    %v808 = vunpack.c.l.b16 %v256
    %v809 = vunpack.c.l.b16 %v257
    %v810 = vunpack.c.l.b16 %v258
    %v811 = vunpack.c.l.b16 %v259
    %v812 = vunpack.c.l.b16 %v260
    %v813 = vunpack.c.l.b16 %v261
    %v814 = vunpack.c.l.b16 %v262
    %v815 = vunpack.c.l.b16 %v263
    %v816 = vunpack.c.l.b16 %v264
    %v817 = vunpack.c.l.b16 %v265
    %v818 = vunpack.c.l.b16 %v266
    %v819 = vunpack.c.l.b16 %v267
    %v820 = vunpack.c.l.b16 %v268
    %v821 = vunpack.c.l.b16 %v269
    %v822 = vunpack.c.l.b16 %v270
    %v823 = vunpack.c.l.b16 %v271
    %v824 = vunpack.c.l.b16 %v272
    %v825 = vunpack.c.l.b16 %v273
    %v826 = vunpack.c.l.b16 %v274
    %v827 = vunpack.c.l.b16 %v275
    %v828 = vunpack.c.l.b16 %v276
    %v829 = vunpack.c.l.b16 %v277
    %v830 = vunpack.c.l.b16 %v278
    %v831 = vpack.c.b16 %v576, %v575
    %v832 = vpack.c.b16 %v578, %v577
    %v833 = vpack.c.b16 %v580, %v579
    %v834 = vpack.c.b16 %v582, %v581
    %v835 = vpack.c.b16 %v584, %v583
    %v836 = vpack.c.b16 %v586, %v585
    %v837 = vpack.c.b16 %v588, %v587
    %v838 = vpack.c.b16 %v590, %v589
    %v839 = vpack.c.b16 %v592, %v591
    %v840 = vpack.c.b16 %v594, %v593
    %v841 = vpack.c.b16 %v596, %v595
    %v842 = vpack.c.b16 %v598, %v597
    %v843 = vpack.c.b16 %v600, %v599
    %v844 = vpack.c.b16 %v602, %v601
    %v845 = vpack.c.b16 %v604, %v603
    %v846 = vpack.c.b16 %v606, %v605
    %v847 = vpack.c.b16 %v608, %v607
    %v848 = vpack.c.b16 %v610, %v609
    %v849 = vpack.c.b16 %v612, %v611
    %v850 = vpack.c.b16 %v614, %v613
    %v851 = vpack.c.b16 %v616, %v615
    %v852 = vpack.c.b16 %v618, %v617
    %v853 = vpack.c.b16 %v620, %v619
    %v854 = vpack.c.b16 %v622, %v621
    %v855 = vpack.c.b16 %v624, %v623
    %v856 = vpack.c.b16 %v626, %v625
    %v857 = vpack.c.b16 %v628, %v627
    %v858 = vpack.c.b16 %v630, %v629
    %v859 = vpack.c.b16 %v632, %v631
    %v860 = vpack.c.b16 %v634, %v633
    %v861 = vpack.c.b16 %v636, %v635
    %v862 = vpack.c.b16 %v638, %v637
    %v863 = vpack.c.b16 %v640, %v639
    %v864 = vpack.c.b16 %v642, %v641
    %v865 = vpack.c.b16 %v644, %v643
    %v866 = vpack.c.b16 %v646, %v645
    %v867 = vpack.c.b16 %v648, %v647
    %v868 = vpack.c.b16 %v650, %v649
    %v869 = vpack.c.b16 %v652, %v651
    %v870 = vpack.c.b16 %v654, %v653
    %v871 = vpack.c.b16 %v656, %v655
    %v872 = vpack.c.b16 %v658, %v657
    %v873 = vpack.c.b16 %v660, %v659
    %v874 = vpack.c.b16 %v662, %v661
    %v875 = vpack.c.b16 %v664, %v663
    %v876 = vpack.c.b16 %v666, %v665
    %v877 = vpack.c.b16 %v668, %v667
    %v878 = vpack.c.b16 %v670, %v669
    %v879 = vpack.c.b16 %v672, %v671
    %v880 = vpack.c.b16 %v674, %v673
    %v881 = vpack.c.b16 %v676, %v675
    %v882 = vpack.c.b16 %v678, %v677
    %v883 = vpack.c.b16 %v680, %v679
    %v884 = vpack.c.b16 %v682, %v681
    %v885 = vpack.c.b16 %v684, %v683
    %v886 = vpack.c.b16 %v686, %v685
    %v887 = vpack.c.b16 %v688, %v687
    %v888 = vpack.c.b16 %v690, %v689
    %v889 = vpack.c.b16 %v692, %v691
    %v890 = vpack.c.b16 %v694, %v693
    %v891 = vpack.c.b16 %v696, %v695
    %v892 = vpack.c.b16 %v698, %v697
    %v893 = vpack.c.b16 %v700, %v699
    %v894 = vpack.c.b16 %v702, %v701
    %v895 = vpack.c.b16 %v704, %v703
    %v896 = vpack.c.b16 %v706, %v705
    %v897 = vpack.c.b16 %v708, %v707
    %v898 = vpack.c.b16 %v710, %v709
    %v899 = vpack.c.b16 %v712, %v711
    %v900 = vpack.c.b16 %v714, %v713
    %v901 = vpack.c.b16 %v716, %v715
    %v902 = vpack.c.b16 %v718, %v717
    %v903 = vpack.c.b16 %v720, %v719
    %v904 = vpack.c.b16 %v722, %v721
    %v905 = vpack.c.b16 %v724, %v723
    %v906 = vpack.c.b16 %v726, %v725
    %v907 = vpack.c.b16 %v728, %v727
    %v908 = vpack.c.b16 %v730, %v729
    %v909 = vpack.c.b16 %v732, %v731
    %v910 = vpack.c.b16 %v734, %v733
    %v911 = vpack.c.b16 %v736, %v735
    %v912 = vpack.c.b16 %v738, %v737
    %v913 = vpack.c.b16 %v740, %v739
    %v914 = vpack.c.b16 %v742, %v741
    %v915 = vpack.c.b16 %v744, %v743
    %v916 = vpack.c.b16 %v746, %v745
    %v917 = vpack.c.b16 %v748, %v747
    %v918 = vpack.c.b16 %v750, %v749
    %v919 = vpack.c.b16 %v752, %v751
    %v920 = vpack.c.b16 %v754, %v753
    %v921 = vpack.c.b16 %v756, %v755
    %v922 = vpack.c.b16 %v758, %v757
    %v923 = vpack.c.b16 %v760, %v759
    %v924 = vpack.c.b16 %v762, %v761
    %v925 = vpack.c.b16 %v764, %v763
    %v926 = vpack.c.b16 %v766, %v765
    %v927 = vpack.c.b16 %v768, %v767
    %v928 = vpack.c.b16 %v770, %v769
    %v929 = vpack.c.b16 %v772, %v771
    %v930 = vpack.c.b16 %v774, %v773
    %v931 = vpack.c.b16 %v776, %v775
    %v932 = vpack.c.b16 %v778, %v777
    %v933 = vpack.c.b16 %v780, %v779
    %v934 = vpack.c.b16 %v782, %v781
    %v935 = vpack.c.b16 %v784, %v783
    %v936 = vpack.c.b16 %v786, %v785
    %v937 = vpack.c.b16 %v788, %v787
    %v938 = vpack.c.b16 %v790, %v789
    %v939 = vpack.c.b16 %v792, %v791
    %v940 = vpack.c.b16 %v794, %v793
    %v941 = vpack.c.b16 %v796, %v795
    %v942 = vpack.c.b16 %v798, %v797
    %v943 = vpack.c.b16 %v800, %v799
    %v944 = vpack.c.b16 %v802, %v801
    %v945 = vpack.c.b16 %v804, %v803
    %v946 = vpack.c.b16 %v806, %v805
    %v947 = vpack.c.b16 %v808, %v807
    %v948 = vpack.c.b16 %v810, %v809
    %v949 = vpack.c.b16 %v812, %v811
    %v950 = vpack.c.b16 %v814, %v813
    %v951 = vpack.c.b16 %v816, %v815
    %v952 = vpack.c.b16 %v818, %v817
    %v953 = vpack.c.b16 %v820, %v819
    %v954 = vpack.c.b16 %v822, %v821
    %v955 = vpack.c.b16 %v824, %v823
    %v956 = vpack.c.b16 %v826, %v825
    %v957 = vpack.c.b16 %v828, %v827
    %v958 = vpack.c.b16 %v830, %v829
    %1087 = vmatpush.bf16.msra.mxu0 %v838
    %1088 = vmatpush.bf16.msra.mxu0 %v837
    %1089 = vmatpush.bf16.msra.mxu0 %v836
    %1090 = vmatpush.bf16.msra.mxu0 %v835
    %1091 = vmatpush.bf16.msra.mxu0 %v834
    %1092 = vmatpush.bf16.msra.mxu0 %v833
    %1093 = vmatpush.bf16.msra.mxu0 %v832
    %1094 = vmatpush.bf16.msra.mxu0 %v831
    %1095 = vmatmul.bf16.gmra.mxu0 %v285
    %v1096 = vpop.f32.mrf.mxu0
    %v1097 = vadd.f32 %v281, %v1096
    %v1098 = vpop.f32.mrf.mxu0
    %1099 = vdwg.mxu0
    %1100 = vmatpush.bf16.msra.mxu0 %v846
    %1101 = vmatpush.bf16.msra.mxu0 %v845
    %1102 = vmatpush.bf16.msra.mxu0 %v844
    %1103 = vmatpush.bf16.msra.mxu0 %v843
    %1104 = vmatpush.bf16.msra.mxu0 %v842
    %1105 = vmatpush.bf16.msra.mxu0 %v841
    %1106 = vmatpush.bf16.msra.mxu0 %v840
    %1107 = vmatpush.bf16.msra.mxu0 %v839
    %1108 = vmatmul.bf16.gmra.mxu0 %v286
    %v1109 = vpop.f32.mrf.mxu0
    %v1110 = vadd.f32 %v1097, %v1109
    %v1111 = vpop.f32.mrf.mxu0
    %1112 = vdwg.mxu0
    %1113 = vmatpush.bf16.msra.mxu0 %v854
    %1114 = vmatpush.bf16.msra.mxu0 %v853
    %1115 = vmatpush.bf16.msra.mxu0 %v852
    %1116 = vmatpush.bf16.msra.mxu0 %v851
    %1117 = vmatpush.bf16.msra.mxu0 %v850
    %1118 = vmatpush.bf16.msra.mxu0 %v849
    %1119 = vmatpush.bf16.msra.mxu0 %v848
    %1120 = vmatpush.bf16.msra.mxu0 %v847
    %1121 = vmatmul.bf16.gmra.mxu0 %v287
    %v1122 = vpop.f32.mrf.mxu0
    %v1123 = vadd.f32 %v1110, %v1122
    %v1124 = vpop.f32.mrf.mxu0
    %1125 = vdwg.mxu0
    %1126 = vmatpush.bf16.msra.mxu0 %v862
    %1127 = vmatpush.bf16.msra.mxu0 %v861
    %1128 = vmatpush.bf16.msra.mxu0 %v860
    %1129 = vmatpush.bf16.msra.mxu0 %v859
    %1130 = vmatpush.bf16.msra.mxu0 %v858
    %1131 = vmatpush.bf16.msra.mxu0 %v857
    %1132 = vmatpush.bf16.msra.mxu0 %v856
    %1133 = vmatpush.bf16.msra.mxu0 %v855
    %1134 = vmatmul.bf16.gmra.mxu0 %v288
    %v1135 = vpop.f32.mrf.mxu0
    %v1136 = vadd.f32 %v1123, %v1135
    %v1137 = vpop.f32.mrf.mxu0
    %1138 = vdwg.mxu0
    %1139 = vmatpush.bf16.msra.mxu0 %v870
    %1140 = vmatpush.bf16.msra.mxu0 %v869
    %1141 = vmatpush.bf16.msra.mxu0 %v868
    %1142 = vmatpush.bf16.msra.mxu0 %v867
    %1143 = vmatpush.bf16.msra.mxu0 %v866
    %1144 = vmatpush.bf16.msra.mxu0 %v865
    %1145 = vmatpush.bf16.msra.mxu0 %v864
    %1146 = vmatpush.bf16.msra.mxu0 %v863
    %1147 = vmatmul.bf16.gmra.mxu0 %v289
    %v1148 = vpop.f32.mrf.mxu0
    %v1149 = vadd.f32 %v1136, %v1148
    %v1150 = vpop.f32.mrf.mxu0
    %1151 = vdwg.mxu0
    %1152 = vmatpush.bf16.msra.mxu0 %v878
    %1153 = vmatpush.bf16.msra.mxu0 %v877
    %1154 = vmatpush.bf16.msra.mxu0 %v876
    %1155 = vmatpush.bf16.msra.mxu0 %v875
    %1156 = vmatpush.bf16.msra.mxu0 %v874
    %1157 = vmatpush.bf16.msra.mxu0 %v873
    %1158 = vmatpush.bf16.msra.mxu0 %v872
    %1159 = vmatpush.bf16.msra.mxu0 %v871
    %1160 = vmatmul.bf16.gmra.mxu0 %v290
    %v1161 = vpop.f32.mrf.mxu0
    %v1162 = vadd.f32 %v1149, %v1161
    %v1163 = vpop.f32.mrf.mxu0
    %1164 = vdwg.mxu0
    %1165 = vmatpush.bf16.msra.mxu0 %v886
    %1166 = vmatpush.bf16.msra.mxu0 %v885
    %1167 = vmatpush.bf16.msra.mxu0 %v884
    %1168 = vmatpush.bf16.msra.mxu0 %v883
    %1169 = vmatpush.bf16.msra.mxu0 %v882
    %1170 = vmatpush.bf16.msra.mxu0 %v881
    %1171 = vmatpush.bf16.msra.mxu0 %v880
    %1172 = vmatpush.bf16.msra.mxu0 %v879
    %1173 = vmatmul.bf16.gmra.mxu0 %v291
    %v1174 = vpop.f32.mrf.mxu0
    %v1175 = vadd.f32 %v1162, %v1174
    %v1176 = vpop.f32.mrf.mxu0
    %1177 = vdwg.mxu0
    %1178 = vmatpush.bf16.msra.mxu0 %v894
    %1179 = vmatpush.bf16.msra.mxu0 %v893
    %1180 = vmatpush.bf16.msra.mxu0 %v892
    %1181 = vmatpush.bf16.msra.mxu0 %v891
    %1182 = vmatpush.bf16.msra.mxu0 %v890
    %1183 = vmatpush.bf16.msra.mxu0 %v889
    %1184 = vmatpush.bf16.msra.mxu0 %v888
    %1185 = vmatpush.bf16.msra.mxu0 %v887
    %1186 = vmatmul.bf16.gmra.mxu0 %v292
    %v1187 = vpop.f32.mrf.mxu0
    %v1188 = vadd.f32 %v1175, %v1187
    %v1189 = vpop.f32.mrf.mxu0
    %1190 = vdwg.mxu0
    %1191 = vmatpush.bf16.msra.mxu0 %v902
    %1192 = vmatpush.bf16.msra.mxu0 %v901
    %1193 = vmatpush.bf16.msra.mxu0 %v900
    %1194 = vmatpush.bf16.msra.mxu0 %v899
    %1195 = vmatpush.bf16.msra.mxu0 %v898
    %1196 = vmatpush.bf16.msra.mxu0 %v897
    %1197 = vmatpush.bf16.msra.mxu0 %v896
    %1198 = vmatpush.bf16.msra.mxu0 %v895
    %1199 = vmatmul.bf16.gmra.mxu0 %v295
    %v1200 = vpop.f32.mrf.mxu0
    %v1201 = vadd.f32 %v1188, %v1200
    %v1202 = vpop.f32.mrf.mxu0
    %1203 = vdwg.mxu0
    %1204 = vmatpush.bf16.msra.mxu0 %v910
    %1205 = vmatpush.bf16.msra.mxu0 %v909
    %1206 = vmatpush.bf16.msra.mxu0 %v908
    %1207 = vmatpush.bf16.msra.mxu0 %v907
    %1208 = vmatpush.bf16.msra.mxu0 %v906
    %1209 = vmatpush.bf16.msra.mxu0 %v905
    %1210 = vmatpush.bf16.msra.mxu0 %v904
    %1211 = vmatpush.bf16.msra.mxu0 %v903
    %1212 = vmatmul.bf16.gmra.mxu0 %v296
    %v1213 = vpop.f32.mrf.mxu0
    %v1214 = vadd.f32 %v1201, %v1213
    %v1215 = vpop.f32.mrf.mxu0
    %1216 = vdwg.mxu0
    %1217 = vmatpush.bf16.msra.mxu0 %v918
    %1218 = vmatpush.bf16.msra.mxu0 %v917
    %1219 = vmatpush.bf16.msra.mxu0 %v916
    %1220 = vmatpush.bf16.msra.mxu0 %v915
    %1221 = vmatpush.bf16.msra.mxu0 %v914
    %1222 = vmatpush.bf16.msra.mxu0 %v913
    %1223 = vmatpush.bf16.msra.mxu0 %v912
    %1224 = vmatpush.bf16.msra.mxu0 %v911
    %1225 = vmatmul.bf16.gmra.mxu0 %v297
    %v1226 = vpop.f32.mrf.mxu0
    %v1227 = vadd.f32 %v1214, %v1226
    %v1228 = vpop.f32.mrf.mxu0
    %1229 = vdwg.mxu0
    %1230 = vmatpush.bf16.msra.mxu0 %v926
    %1231 = vmatpush.bf16.msra.mxu0 %v925
    %1232 = vmatpush.bf16.msra.mxu0 %v924
    %1233 = vmatpush.bf16.msra.mxu0 %v923
    %1234 = vmatpush.bf16.msra.mxu0 %v922
    %1235 = vmatpush.bf16.msra.mxu0 %v921
    %1236 = vmatpush.bf16.msra.mxu0 %v920
    %1237 = vmatpush.bf16.msra.mxu0 %v919
    %1238 = vmatmul.bf16.gmra.mxu0 %v298
    %v1239 = vpop.f32.mrf.mxu0
    %v1240 = vadd.f32 %v1227, %v1239
    %v1241 = vpop.f32.mrf.mxu0
    %1242 = vdwg.mxu0
    %1243 = vmatpush.bf16.msra.mxu0 %v934
    %1244 = vmatpush.bf16.msra.mxu0 %v933
    %1245 = vmatpush.bf16.msra.mxu0 %v932
    %1246 = vmatpush.bf16.msra.mxu0 %v931
    %1247 = vmatpush.bf16.msra.mxu0 %v930
    %1248 = vmatpush.bf16.msra.mxu0 %v929
    %1249 = vmatpush.bf16.msra.mxu0 %v928
    %1250 = vmatpush.bf16.msra.mxu0 %v927
    %1251 = vmatmul.bf16.gmra.mxu0 %v299
    %v1252 = vpop.f32.mrf.mxu0
    %v1253 = vadd.f32 %v1240, %v1252
    %v1254 = vpop.f32.mrf.mxu0
    %1255 = vdwg.mxu0
    %1256 = vmatpush.bf16.msra.mxu0 %v942
    %1257 = vmatpush.bf16.msra.mxu0 %v941
    %1258 = vmatpush.bf16.msra.mxu0 %v940
    %1259 = vmatpush.bf16.msra.mxu0 %v939
    %1260 = vmatpush.bf16.msra.mxu0 %v938
    %1261 = vmatpush.bf16.msra.mxu0 %v937
    %1262 = vmatpush.bf16.msra.mxu0 %v936
    %1263 = vmatpush.bf16.msra.mxu0 %v935
    %1264 = vmatmul.bf16.gmra.mxu0 %v300
    %v1265 = vpop.f32.mrf.mxu0
    %v1266 = vadd.f32 %v1253, %v1265
    %v1267 = vpop.f32.mrf.mxu0
    %1268 = vdwg.mxu0
    %1269 = vmatpush.bf16.msra.mxu0 %v950
    %1270 = vmatpush.bf16.msra.mxu0 %v949
    %1271 = vmatpush.bf16.msra.mxu0 %v948
    %1272 = vmatpush.bf16.msra.mxu0 %v947
    %1273 = vmatpush.bf16.msra.mxu0 %v946
    %1274 = vmatpush.bf16.msra.mxu0 %v945
    %1275 = vmatpush.bf16.msra.mxu0 %v944
    %1276 = vmatpush.bf16.msra.mxu0 %v943
    %1277 = vmatmul.bf16.gmra.mxu0 %v301
    %v1278 = vpop.f32.mrf.mxu0
    %v1279 = vadd.f32 %v1266, %v1278
    %v1280 = vpop.f32.mrf.mxu0
    %1281 = vdwg.mxu0
    %1282 = vmatpush.bf16.msra.mxu0 %v958
    %1283 = vmatpush.bf16.msra.mxu0 %v957
    %1284 = vmatpush.bf16.msra.mxu0 %v956
    %1285 = vmatpush.bf16.msra.mxu0 %v955
    %1286 = vmatpush.bf16.msra.mxu0 %v954
    %1287 = vmatpush.bf16.msra.mxu0 %v953
    %1288 = vmatpush.bf16.msra.mxu0 %v952
    %1289 = vmatpush.bf16.msra.mxu0 %v951
    %1290 = vmatmul.bf16.gmra.mxu0 %v302
    %v1291 = vpop.f32.mrf.mxu0
    %v1292 = vadd.f32 %v1279, %v1291
    %v1293 = vpop.f32.mrf.mxu0
    %1294 = vdwg.mxu0
    %v1295 = vmax.f32 %v1292, 0.0
    %v1296 = vpack.c.bf16 %v1295, %v1295
    %v1297 = vld [vmem:[%s3] sm:$0xf]
    %v1298 = vld [vmem:[%s3 + $0x4] sm:$0xf]
    %v1299 = vld [vmem:[%s3 + $0x8] sm:$0xf]
    %v1300 = vld [vmem:[%s3 + $0xc] sm:$0xf]
    %v1301 = vld [vmem:[%s3 + $0x10] sm:$0xf]
    %v1302 = vld [vmem:[%s3 + $0x14] sm:$0xf]
    %v1303 = vld [vmem:[%s3 + $0x18] sm:$0xf]
    %v1304 = vld [vmem:[%s3 + $0x1c] sm:$0xf]
    %v1305 = vld [vmem:[%s3 + $0x20] sm:$0xf]
    %v1306 = vld [vmem:[%s3 + $0x24] sm:$0xf]
    %v1307 = vld [vmem:[%s3 + $0x28] sm:$0xf]
    %v1308 = vld [vmem:[%s3 + $0x2c] sm:$0xf]
    %v1309 = vld [vmem:[%s3 + $0x30] sm:$0xf]
    %v1310 = vld [vmem:[%s3 + $0x34] sm:$0xf]
    %v1311 = vld [vmem:[%s3 + $0x38] sm:$0xf]
    %v1312 = vld [vmem:[%s3 + $0x3c] sm:$0xf]
    %v1313 = vld [vmem:[%s4] sm:$0x1]
    %v1315 = vperm.slane %v1313, 0
    %v1333 = vunpack.c.l.b16 %v1297
    %v1334 = vunpack.c.l.b16 %v1298
    %v1335 = vunpack.c.l.b16 %v1299
    %v1336 = vunpack.c.l.b16 %v1300
    %v1337 = vunpack.c.l.b16 %v1301
    %v1338 = vunpack.c.l.b16 %v1302
    %v1339 = vunpack.c.l.b16 %v1303
    %v1340 = vunpack.c.l.b16 %v1304
    %v1341 = vunpack.c.l.b16 %v1305
    %v1342 = vunpack.c.l.b16 %v1306
    %v1343 = vunpack.c.l.b16 %v1307
    %v1344 = vunpack.c.l.b16 %v1308
    %v1345 = vunpack.c.l.b16 %v1309
    %v1346 = vunpack.c.l.b16 %v1310
    %v1347 = vunpack.c.l.b16 %v1311
    %v1348 = vunpack.c.l.b16 %v1312
    %v1349 = vpack.c.b16 %v1334, %v1333
    %v1350 = vpack.c.b16 %v1336, %v1335
    %v1351 = vpack.c.b16 %v1338, %v1337
    %v1352 = vpack.c.b16 %v1340, %v1339
    %v1353 = vpack.c.b16 %v1342, %v1341
    %v1354 = vpack.c.b16 %v1344, %v1343
    %v1355 = vpack.c.b16 %v1346, %v1345
    %v1356 = vpack.c.b16 %v1348, %v1347
    %1365 = vmatpush.bf16.msra.mxu0 %v1356
    %1366 = vmatpush.bf16.msra.mxu0 %v1355
    %1367 = vmatpush.bf16.msra.mxu0 %v1354
    %1368 = vmatpush.bf16.msra.mxu0 %v1353
    %1369 = vmatpush.bf16.msra.mxu0 %v1352
    %1370 = vmatpush.bf16.msra.mxu0 %v1351
    %1371 = vmatpush.bf16.msra.mxu0 %v1350
    %1372 = vmatpush.bf16.msra.mxu0 %v1349
    %1373 = vmatmul.bf16.gmra.mxu0 %v1296
    %v1374 = vpop.f32.mrf.mxu0
    %v1375 = vadd.f32 %v1315, %v1374
    %v1376 = vpop.f32.mrf.mxu0
    %1377 = vdwg.mxu0
    %v1378 = vmax.f32 %v1375, 0.0
    %1379 = vst [vmem:[#allocation2] sm:$0x3] %v1378
    // Predicated region
    $region22: #{compliant_relu_forward.5} parent=1 // pred_check
      _
    $region23: #{compliant_relu_forward.5} parent=1 // pred_check_branch
      %1381 = sbr.rel (0) target = $region25
    $region24: #{compliant_relu_forward.5} parent=1 // pred_region
      %1383 = vsyncadd [#allocation3], 0
      %s1385 = sshll.u32 [#allocation2], 4
      %s1386 = int_to_ptr.vmem [resolvable:$true] %s1385
      %s1387 = sshll.u32 %s5, 4
      %s1388 = int_to_ptr.hbm [resolvable:$true] %s1387
      %1390 = dma.vmem_to_hbm [thread:$0]  %s1386, 32, %s1388, [#allocation3]
    $region25: #{compliant_relu_forward.5} parent=1 // pred_fallthru
      _
    // Predicated region
    $region26: #{compliant_relu_forward.5} parent=1 // pred_check
      _
    $region27: #{compliant_relu_forward.5} parent=1 // pred_check_branch
      %1392 = sbr.rel (0) target = $region29
    $region28: #{compliant_relu_forward.5} parent=1 // pred_region
      %1394 = dma.done [#allocation3], 32
    $region29: #{compliant_relu_forward.5} parent=1 // pred_fallthru
      _
    %1395 = vsyncpa [#allocation3], 1

// kernel: compliant_relu_forward.4
$region0: #{compliant_relu_forward.4}
  #allocation0 [shape = 'u32[]', space=smem, size = 0x4, offset = 0x4, fixed_abs, tag = 'smem constant byte address 0x4 - core index']
  #allocation1 [shape = 'u32[72,128]{1,0:T(1,128)}', space=vmem, size = 0x9000, scoped, tag = 'internal scratch']
  #allocation2 [shape = 'f32[32,128]{1,0:T(8,128)}', space=vmem, size = 0x4000, scoped, tag = 'scratch operand']
  %s0 = inlined_call_operand.vmem [shape: bf16[2,12,12,128], index: 0, kind: input, shape index: {}]
  %s1 = inlined_call_operand.vmem [shape: bf16[3200,128], index: 1, kind: input, shape index: {}]
  %s2 = inlined_call_operand.vmem [shape: f32[1,128], index: 2, kind: input, shape index: {}]
  %s3 = inlined_call_operand.vmem [shape: bf16[2,16,128], index: 3, kind: output, shape index: {}]
  %s4 = sld [smem:[#allocation0]]
  $region45: #{compliant_relu_forward.4} parent=0
    _
  %s6 = ssub.s32 1, %s4
  %s7 = scalar_select 0, %s6, %s4
  loop: start=0, step=1, limit=4
  $region2: #{compliant_relu_forward.4} parent=0 // loop_pre_header
    _
  $region3: #{compliant_relu_forward.4} parent=0 // loop_header
    %s9 = sphi 0, %s13
    %p10 = scmp.ge.s32.totalorder %s9, 4
    %s19 = sphi 0, %s21
    %s22 = sphi 0, %s19
    %s23 = sphi 0, %s22
    %s39 = sphi 0, %s23
    %s43 = sphi 0, %s43
    %s45 = sphi 0, %s43
    %s46 = sphi 0, %s45
    %s60 = sphi 0, %s46
    %s64 = sphi 0, %s64
    %s66 = sphi 0, %s64
    %s67 = sphi 0, %s66
    %s81 = sphi 0, %s67
    %s87 = sphi 0, %s89
    %s90 = sphi 0, %s87
    %s91 = sphi 0, %s90
    %s107 = sphi 0, %s91
  $region4: #{compliant_relu_forward.4} parent=0 // loop_header_branch
    %12 = sbr.rel (%p10) target = $region8
  $region5: #{compliant_relu_forward.4} parent=0 // loop_body
    %s14 = ssub.s32 %s9, 1
    %s15 = ssub.s32 %s9, 2
    %s16 = sadd.s32 %s9, 1
    %s17 = ssub.s32 %s9, %s16
    %p18 = scmp.eq.s32.totalorder %s17, 0
    %s20 = sadd.s32 %s19, 1
    %s21 = scalar_select %p18, %s19, %s20
    %p24 = pneg %p18
    %p25 = scmp.eq.s32.totalorder %s9, 1
    %p26 = por %p24, %p25
    %p27 = scmp.ne.s32.totalorder %s19, %s22
    %p28 = scmp.eq.s32.totalorder %s9, 0
    %p29 = por %p27, %p28
    %p30 = scmp.ne.s32.totalorder %s19, %s22
    %p31 = scmp.eq.s32.totalorder %s14, 1
    %p32 = por %p30, %p31
    %p33 = scmp.ne.s32.totalorder %s22, %s23
    %p34 = scmp.eq.s32.totalorder %s14, 0
    %p35 = por %p33, %p34
    %p36 = scmp.ne.s32.totalorder %s22, %s23
    %p37 = scmp.eq.s32.totalorder %s15, 1
    %p38 = por %p36, %p37
    %p40 = scmp.ne.s32.totalorder %s23, %s39
    %p41 = scmp.eq.s32.totalorder %s15, 0
    %p42 = por %p40, %p41
    %s44 = sadd.s32 %s43, 1
    %p47 = scmp.eq.s32.totalorder %s9, 1
    %p48 = scmp.ne.s32.totalorder %s43, %s45
    %p49 = scmp.eq.s32.totalorder %s9, 0
    %p50 = por %p48, %p49
    %p51 = scmp.ne.s32.totalorder %s43, %s45
    %p52 = scmp.eq.s32.totalorder %s14, 1
    %p53 = por %p51, %p52
    %p54 = scmp.ne.s32.totalorder %s45, %s46
    %p55 = scmp.eq.s32.totalorder %s14, 0
    %p56 = por %p54, %p55
    %p57 = scmp.ne.s32.totalorder %s45, %s46
    %p58 = scmp.eq.s32.totalorder %s15, 1
    %p59 = por %p57, %p58
    %p61 = scmp.ne.s32.totalorder %s46, %s60
    %p62 = scmp.eq.s32.totalorder %s15, 0
    %p63 = por %p61, %p62
    %s65 = sadd.s32 %s64, 1
    %p68 = scmp.eq.s32.totalorder %s9, 1
    %p69 = scmp.ne.s32.totalorder %s64, %s66
    %p70 = scmp.eq.s32.totalorder %s9, 0
    %p71 = por %p69, %p70
    %p72 = scmp.ne.s32.totalorder %s64, %s66
    %p73 = scmp.eq.s32.totalorder %s14, 1
    %p74 = por %p72, %p73
    %p75 = scmp.ne.s32.totalorder %s66, %s67
    %p76 = scmp.eq.s32.totalorder %s14, 0
    %p77 = por %p75, %p76
    %p78 = scmp.ne.s32.totalorder %s66, %s67
    %p79 = scmp.eq.s32.totalorder %s15, 1
    %p80 = por %p78, %p79
    %p82 = scmp.ne.s32.totalorder %s67, %s81
    %p83 = scmp.eq.s32.totalorder %s15, 0
    %p84 = por %p82, %p83
    %s85 = ssub.s32 %s9, %s16
    %p86 = scmp.eq.s32.totalorder %s85, 0
    %s88 = sadd.s32 %s87, 1
    %s89 = scalar_select %p86, %s87, %s88
    %p92 = pneg %p86
    %p93 = scmp.eq.s32.totalorder %s9, 1
    %p94 = por %p92, %p93
    %p95 = scmp.ne.s32.totalorder %s87, %s90
    %p96 = scmp.eq.s32.totalorder %s9, 0
    %p97 = por %p95, %p96
    %p98 = scmp.ne.s32.totalorder %s87, %s90
    %p99 = scmp.eq.s32.totalorder %s14, 1
    %p100 = por %p98, %p99
    %p101 = scmp.ne.s32.totalorder %s90, %s91
    %p102 = scmp.eq.s32.totalorder %s14, 0
    %p103 = por %p101, %p102
    %p104 = scmp.ne.s32.totalorder %s90, %s91
    %p105 = scmp.eq.s32.totalorder %s15, 1
    %p106 = por %p104, %p105
    %p108 = scmp.ne.s32.totalorder %s91, %s107
    %p109 = scmp.eq.s32.totalorder %s15, 0
    %p110 = por %p108, %p109
    %p111 = scmp.le.s32.totalorder 1, %s9
    %p112 = scmp.lt.s32.totalorder %s9, 3
    %p113 = pnand %p111, %p112
    %p114 = pneg %p113
    // Predicated region
    $region9: #{compliant_relu_forward.4} parent=5 // pred_check
      _
    $region10: #{compliant_relu_forward.4} parent=5 // pred_check_branch
      %116 = sbr.rel (%p113) target = $region12
    $region11: #{compliant_relu_forward.4} parent=5 // pred_region
      %s117 = ssub.s32 %s9, 1
      // Predicated region
      $region13: #{compliant_relu_forward.4} parent=11 // pred_check
        %p118 = pneg %p56
      $region14: #{compliant_relu_forward.4} parent=11 // pred_check_branch
        %120 = sbr.rel (%p118) target = $region16
      $region15: #{compliant_relu_forward.4} parent=11 // pred_region
        _
      $region16: #{compliant_relu_forward.4} parent=11 // pred_fallthru
        _
      // Predicated region
      $region17: #{compliant_relu_forward.4} parent=11 // pred_check
        %p121 = pneg %p77
      $region18: #{compliant_relu_forward.4} parent=11 // pred_check_branch
        %123 = sbr.rel (%p121) target = $region20
      $region19: #{compliant_relu_forward.4} parent=11 // pred_region
        _
      $region20: #{compliant_relu_forward.4} parent=11 // pred_fallthru
        _
    $region12: #{compliant_relu_forward.4} parent=5 // pred_fallthru
      _
    %p124 = scmp.lt.s32.totalorder %s9, 2
    // Predicated region
    $region21: #{compliant_relu_forward.4} parent=5 // pred_check
      %p125 = pneg %p124
    $region22: #{compliant_relu_forward.4} parent=5 // pred_check_branch
      %127 = sbr.rel (%p125) target = $region24
    $region23: #{compliant_relu_forward.4} parent=5 // pred_region
      // Predicated region
      $region25: #{compliant_relu_forward.4} parent=23 // pred_check
        %p128 = pneg %p29
      $region26: #{compliant_relu_forward.4} parent=23 // pred_check_branch
        %130 = sbr.rel (%p128) target = $region28
      $region27: #{compliant_relu_forward.4} parent=23 // pred_region
        %p131 = scmp.lt.s32.totalorder %s9, 1
        %s132 = scalar_select %p131, %s9, 1
        %s133 = smul.addr %s132, 24
        %s134 = smul.addr %s133, 4
        %s135 = scalar_lea.vmem %s0, %s134
      $region28: #{compliant_relu_forward.4} parent=23 // pred_fallthru
        _
    $region24: #{compliant_relu_forward.4} parent=5 // pred_fallthru
      _
    %p136 = scmp.le.s32.totalorder 1, %s9
    %p137 = scmp.lt.s32.totalorder %s9, 3
    %p138 = pnand %p136, %p137
    %p139 = pneg %p138
    // Predicated region
    $region29: #{compliant_relu_forward.4} parent=5 // pred_check
      _
    $region30: #{compliant_relu_forward.4} parent=5 // pred_check_branch
      %141 = sbr.rel (%p138) target = $region32
    $region31: #{compliant_relu_forward.4} parent=5 // pred_region
      %s142 = ssub.s32 %s9, 1
      %p143 = scmp.lt.s32.totalorder %s14, 1
      %s144 = scalar_select %p143, %s14, 1
      %s145 = smul.addr %s144, 24
      %s146 = smul.addr %s145, 4
      %s147 = scalar_lea.vmem %s0, %s146
      %p148 = pneg %p35
      %p149 = pneg %p32
      %p150 = pneg %p56
      %p151 = pneg %p53
      %p152 = pneg %p77
      %p153 = pneg %p74
      %p154 = pneg %p103
      %p155 = pneg %p100
      %p156 = scmp.lt.s32.totalorder %s14, 1
      %s157 = scalar_select %p156, %s14, 1
      %s158 = smul.addr %s157, 2
      %s159 = smul.addr %s158, 4
      %s160 = scalar_lea.vmem %s3, %s159
      %p161 = scmp.lt.s32.totalorder %s14, 1
      %s162 = scalar_select %p161, %s14, 1
      %s163 = smul.addr %s162, 24
      %s164 = smul.addr %s163, 4
      %s165 = scalar_lea.vmem %s0, %s164
      %p166 = scmp.lt.s32.totalorder %s14, 1
      %s167 = scalar_select %p166, %s14, 1
      %s168 = smul.addr %s167, 2
      %s169 = smul.addr %s168, 4
      %s170 = scalar_lea.vmem %s3, %s169
      %v171 = vld [vmem:[%s165] sm:$0xf]
      %v172 = vld [vmem:[%s165 + $0x4] sm:$0x3]
      %v173 = vld [vmem:[%s165 + $0x8] sm:$0xf]
      %v174 = vld [vmem:[%s165 + $0xc] sm:$0x3]
      %v175 = vld [vmem:[%s165 + $0x10] sm:$0xf]
      %v176 = vld [vmem:[%s165 + $0x14] sm:$0x3]
      %v177 = vld [vmem:[%s165 + $0x18] sm:$0xf]
      %v178 = vld [vmem:[%s165 + $0x1c] sm:$0x3]
      %v179 = vld [vmem:[%s165 + $0x20] sm:$0xf]
      %v180 = vld [vmem:[%s165 + $0x24] sm:$0x3]
      %v181 = vld [vmem:[%s165 + $0x28] sm:$0xf]
      %v182 = vld [vmem:[%s165 + $0x2c] sm:$0x3]
      %v183 = vld [vmem:[%s165 + $0x30] sm:$0xf]
      %v184 = vld [vmem:[%s165 + $0x34] sm:$0x3]
      %v185 = vld [vmem:[%s165 + $0x38] sm:$0xf]
      %v186 = vld [vmem:[%s165 + $0x3c] sm:$0x3]
      %v187 = vld [vmem:[%s165 + $0x40] sm:$0xf]
      %v188 = vld [vmem:[%s165 + $0x44] sm:$0x3]
      %v189 = vld [vmem:[%s165 + $0x48] sm:$0xf]
      %v190 = vld [vmem:[%s165 + $0x4c] sm:$0x3]
      %v191 = vld [vmem:[%s165 + $0x50] sm:$0xf]
      %v192 = vld [vmem:[%s165 + $0x54] sm:$0x3]
      %v193 = vld [vmem:[%s165 + $0x58] sm:$0xf]
      %v194 = vld [vmem:[%s165 + $0x5c] sm:$0x3]
      %v195 = vunpack.c.l.bf16 %v171
      %v196 = vunpack.c.l.bf16 %v172
      %v197 = vunpack.c.l.bf16 %v173
      %v198 = vunpack.c.l.bf16 %v174
      %v199 = vunpack.c.l.bf16 %v175
      %v200 = vunpack.c.l.bf16 %v176
      %v201 = vunpack.c.l.bf16 %v177
      %v202 = vunpack.c.l.bf16 %v178
      %v203 = vunpack.c.l.bf16 %v179
      %v204 = vunpack.c.l.bf16 %v180
      %v205 = vunpack.c.l.bf16 %v181
      %v206 = vunpack.c.l.bf16 %v182
      %v207 = vunpack.c.l.bf16 %v183
      %v208 = vunpack.c.l.bf16 %v184
      %v209 = vunpack.c.l.bf16 %v185
      %v210 = vunpack.c.l.bf16 %v186
      %v211 = vunpack.c.l.bf16 %v187
      %v212 = vunpack.c.l.bf16 %v188
      %v213 = vunpack.c.l.bf16 %v189
      %v214 = vunpack.c.l.bf16 %v190
      %v215 = vunpack.c.l.bf16 %v191
      %v216 = vunpack.c.l.bf16 %v192
      %v217 = vunpack.c.l.bf16 %v193
      %v218 = vunpack.c.l.bf16 %v194
      %v219 = vpack.c.bf16 %v197, %v195
      %v220 = vpack.c.bf16 %v201, %v199
      %v221 = vpack.c.bf16 %v205, %v203
      %v222 = vpack.c.bf16 %v209, %v207
      %v223 = vld [vmem:[%s1] sm:$0xf]
      %v224 = vld [vmem:[%s1 + $0x4] sm:$0xf]
      %v225 = vld [vmem:[%s1 + $0x8] sm:$0xf]
      %v226 = vld [vmem:[%s1 + $0xc] sm:$0xf]
      %v227 = vld [vmem:[%s1 + $0x10] sm:$0xf]
      %v228 = vld [vmem:[%s1 + $0x14] sm:$0xf]
      %v229 = vld [vmem:[%s1 + $0x18] sm:$0xf]
      %v230 = vld [vmem:[%s1 + $0x1c] sm:$0xf]
      %v231 = vld [vmem:[%s1 + $0x20] sm:$0xf]
      %v232 = vld [vmem:[%s1 + $0x24] sm:$0xf]
      %v233 = vld [vmem:[%s1 + $0x28] sm:$0xf]
      %v234 = vld [vmem:[%s1 + $0x2c] sm:$0xf]
      %v235 = vld [vmem:[%s1 + $0x30] sm:$0xf]
      %v236 = vld [vmem:[%s1 + $0x34] sm:$0xf]
      %v237 = vld [vmem:[%s1 + $0x38] sm:$0xf]
      %v238 = vld [vmem:[%s1 + $0x3c] sm:$0xf]
      %vm255 = vcmask 1046528
      %v256 = vrot.slane %v195, 1
      %v257 = vrot.slane %v196, 1
      %v258 = vsel %vm255, %v256, %v257
      %v259 = vrot.slane %v197, 1
      %v260 = vrot.slane %v198, 1
      %v261 = vsel %vm255, %v259, %v260
      %v262 = vrot.slane %v199, 1
      %v263 = vrot.slane %v200, 1
      %v264 = vsel %vm255, %v262, %v263
      %v265 = vrot.slane %v201, 1
      %v266 = vrot.slane %v202, 1
      %v267 = vsel %vm255, %v265, %v266
      %v268 = vrot.slane %v203, 1
      %v269 = vrot.slane %v204, 1
      %v270 = vsel %vm255, %v268, %v269
      %v271 = vrot.slane %v205, 1
      %v272 = vrot.slane %v206, 1
      %v273 = vsel %vm255, %v271, %v272
      %v274 = vrot.slane %v207, 1
      %v275 = vrot.slane %v208, 1
      %v276 = vsel %vm255, %v274, %v275
      %v277 = vrot.slane %v209, 1
      %v278 = vrot.slane %v210, 1
      %v279 = vsel %vm255, %v277, %v278
      %v288 = vpack.c.bf16 %v261, %v258
      %v289 = vpack.c.bf16 %v267, %v264
      %v290 = vpack.c.bf16 %v273, %v270
      %v291 = vpack.c.bf16 %v279, %v276
      %v292 = vld [vmem:[%s1 + $0x40] sm:$0xf]
      %v293 = vld [vmem:[%s1 + $0x44] sm:$0xf]
      %v294 = vld [vmem:[%s1 + $0x48] sm:$0xf]
      %v295 = vld [vmem:[%s1 + $0x4c] sm:$0xf]
      %v296 = vld [vmem:[%s1 + $0x50] sm:$0xf]
      %v297 = vld [vmem:[%s1 + $0x54] sm:$0xf]
      %v298 = vld [vmem:[%s1 + $0x58] sm:$0xf]
      %v299 = vld [vmem:[%s1 + $0x5c] sm:$0xf]
      %v300 = vld [vmem:[%s1 + $0x60] sm:$0xf]
      %v301 = vld [vmem:[%s1 + $0x64] sm:$0xf]
      %v302 = vld [vmem:[%s1 + $0x68] sm:$0xf]
      %v303 = vld [vmem:[%s1 + $0x6c] sm:$0xf]
      %v304 = vld [vmem:[%s1 + $0x70] sm:$0xf]
      %v305 = vld [vmem:[%s1 + $0x74] sm:$0xf]
      %v306 = vld [vmem:[%s1 + $0x78] sm:$0xf]
      %v307 = vld [vmem:[%s1 + $0x7c] sm:$0xf]
      %v324 = vunpack.c.l.b16 %v292
      %v325 = vunpack.c.l.b16 %v293
      %v326 = vunpack.c.l.b16 %v294
      %v327 = vunpack.c.l.b16 %v295
      %v328 = vunpack.c.l.b16 %v296
      %v329 = vunpack.c.l.b16 %v297
      %v330 = vunpack.c.l.b16 %v298
      %v331 = vunpack.c.l.b16 %v299
      %v332 = vunpack.c.l.b16 %v300
      %v333 = vunpack.c.l.b16 %v301
      %v334 = vunpack.c.l.b16 %v302
      %v335 = vunpack.c.l.b16 %v303
      %v336 = vunpack.c.l.b16 %v304
      %v337 = vunpack.c.l.b16 %v305
      %v338 = vunpack.c.l.b16 %v306
      %v339 = vunpack.c.l.b16 %v307
      %v340 = vpack.c.b16 %v325, %v324
      %v341 = vpack.c.b16 %v327, %v326
      %v342 = vpack.c.b16 %v329, %v328
      %v343 = vpack.c.b16 %v331, %v330
      %v344 = vpack.c.b16 %v333, %v332
      %v345 = vpack.c.b16 %v335, %v334
      %v346 = vpack.c.b16 %v337, %v336
      %v347 = vpack.c.b16 %v339, %v338
      %356 = vmatpush.bf16.msra.mxu0 %v347
      %357 = vmatpush.bf16.msra.mxu0 %v346
      %358 = vmatpush.bf16.msra.mxu0 %v345
      %359 = vmatpush.bf16.msra.mxu0 %v344
      %360 = vmatpush.bf16.msra.mxu0 %v343
      %361 = vmatpush.bf16.msra.mxu0 %v342
      %362 = vmatpush.bf16.msra.mxu0 %v341
      %363 = vmatpush.bf16.msra.mxu0 %v340
      %364 = vmatmul.bf16.gmra.mxu0 %v288
      %v365 = vpop.f32.mrf.mxu0
      %v366 = vadd.f32 0.0, %v365
      %v367 = vpop.f32.mrf.mxu0
      %v368 = vadd.f32 0.0, %v367
      %369 = vmatmul.bf16.gmra.mxu0 %v289
      %v370 = vpop.f32.mrf.mxu0
      %v371 = vadd.f32 0.0, %v370
      %v372 = vpop.f32.mrf.mxu0
      %v373 = vadd.f32 0.0, %v372
      %374 = vmatmul.bf16.gmra.mxu0 %v290
      %v375 = vpop.f32.mrf.mxu0
      %v376 = vadd.f32 0.0, %v375
      %v377 = vpop.f32.mrf.mxu0
      %v378 = vadd.f32 0.0, %v377
      %379 = vmatmul.bf16.gmra.mxu0 %v291
      %v380 = vpop.f32.mrf.mxu0
      %v381 = vadd.f32 0.0, %v380
      %v382 = vpop.f32.mrf.mxu0
      %v383 = vadd.f32 0.0, %v382
      %384 = vdwg.mxu0
      %v401 = vunpack.c.l.b16 %v223
      %v402 = vunpack.c.l.b16 %v224
      %v403 = vunpack.c.l.b16 %v225
      %v404 = vunpack.c.l.b16 %v226
      %v405 = vunpack.c.l.b16 %v227
      %v406 = vunpack.c.l.b16 %v228
      %v407 = vunpack.c.l.b16 %v229
      %v408 = vunpack.c.l.b16 %v230
      %v409 = vunpack.c.l.b16 %v231
      %v410 = vunpack.c.l.b16 %v232
      %v411 = vunpack.c.l.b16 %v233
      %v412 = vunpack.c.l.b16 %v234
      %v413 = vunpack.c.l.b16 %v235
      %v414 = vunpack.c.l.b16 %v236
      %v415 = vunpack.c.l.b16 %v237
      %v416 = vunpack.c.l.b16 %v238
      %v417 = vpack.c.b16 %v402, %v401
      %v418 = vpack.c.b16 %v404, %v403
      %v419 = vpack.c.b16 %v406, %v405
      %v420 = vpack.c.b16 %v408, %v407
      %v421 = vpack.c.b16 %v410, %v409
      %v422 = vpack.c.b16 %v412, %v411
      %v423 = vpack.c.b16 %v414, %v413
      %v424 = vpack.c.b16 %v416, %v415
      %433 = vmatpush.bf16.msra.mxu0 %v424
      %434 = vmatpush.bf16.msra.mxu0 %v423
      %435 = vmatpush.bf16.msra.mxu0 %v422
      %436 = vmatpush.bf16.msra.mxu0 %v421
      %437 = vmatpush.bf16.msra.mxu0 %v420
      %438 = vmatpush.bf16.msra.mxu0 %v419
      %439 = vmatpush.bf16.msra.mxu0 %v418
      %440 = vmatpush.bf16.msra.mxu0 %v417
      %441 = vmatmul.bf16.gmra.mxu0 %v219
      %v442 = vpop.f32.mrf.mxu0
      %v443 = vadd.f32 %v366, %v442
      %v444 = vpop.f32.mrf.mxu0
      %v445 = vadd.f32 %v368, %v444
      %446 = vmatmul.bf16.gmra.mxu0 %v220
      %v447 = vpop.f32.mrf.mxu0
      %v448 = vadd.f32 %v371, %v447
      %v449 = vpop.f32.mrf.mxu0
      %v450 = vadd.f32 %v373, %v449
      %451 = vmatmul.bf16.gmra.mxu0 %v221
      %v452 = vpop.f32.mrf.mxu0
      %v453 = vadd.f32 %v376, %v452
      %v454 = vpop.f32.mrf.mxu0
      %v455 = vadd.f32 %v378, %v454
      %456 = vmatmul.bf16.gmra.mxu0 %v222
      %v457 = vpop.f32.mrf.mxu0
      %v458 = vadd.f32 %v381, %v457
      %v459 = vpop.f32.mrf.mxu0
      %v460 = vadd.f32 %v383, %v459
      %461 = vdwg.mxu0
      %vm462 = vcmask 1045504
      %v463 = vrot.slane %v195, 2
      %v464 = vrot.slane %v196, 2
      %v465 = vsel %vm462, %v463, %v464
      %v466 = vrot.slane %v197, 2
      %v467 = vrot.slane %v198, 2
      %v468 = vsel %vm462, %v466, %v467
      %v469 = vrot.slane %v199, 2
      %v470 = vrot.slane %v200, 2
      %v471 = vsel %vm462, %v469, %v470
      %v472 = vrot.slane %v201, 2
      %v473 = vrot.slane %v202, 2
      %v474 = vsel %vm462, %v472, %v473
      %v475 = vrot.slane %v203, 2
      %v476 = vrot.slane %v204, 2
      %v477 = vsel %vm462, %v475, %v476
      %v478 = vrot.slane %v205, 2
      %v479 = vrot.slane %v206, 2
      %v480 = vsel %vm462, %v478, %v479
      %v481 = vrot.slane %v207, 2
      %v482 = vrot.slane %v208, 2
      %v483 = vsel %vm462, %v481, %v482
      %v484 = vrot.slane %v209, 2
      %v485 = vrot.slane %v210, 2
      %v486 = vsel %vm462, %v484, %v485
      %v495 = vpack.c.bf16 %v468, %v465
      %v496 = vpack.c.bf16 %v474, %v471
      %v497 = vpack.c.bf16 %v480, %v477
      %v498 = vpack.c.bf16 %v486, %v483
      %v499 = vld [vmem:[%s1 + $0x80] sm:$0xf]
      %v500 = vld [vmem:[%s1 + $0x84] sm:$0xf]
      %v501 = vld [vmem:[%s1 + $0x88] sm:$0xf]
      %v502 = vld [vmem:[%s1 + $0x8c] sm:$0xf]
      %v503 = vld [vmem:[%s1 + $0x90] sm:$0xf]
      %v504 = vld [vmem:[%s1 + $0x94] sm:$0xf]
      %v505 = vld [vmem:[%s1 + $0x98] sm:$0xf]
      %v506 = vld [vmem:[%s1 + $0x9c] sm:$0xf]
      %v507 = vld [vmem:[%s1 + $0xa0] sm:$0xf]
      %v508 = vld [vmem:[%s1 + $0xa4] sm:$0xf]
      %v509 = vld [vmem:[%s1 + $0xa8] sm:$0xf]
      %v510 = vld [vmem:[%s1 + $0xac] sm:$0xf]
      %v511 = vld [vmem:[%s1 + $0xb0] sm:$0xf]
      %v512 = vld [vmem:[%s1 + $0xb4] sm:$0xf]
      %v513 = vld [vmem:[%s1 + $0xb8] sm:$0xf]
      %v514 = vld [vmem:[%s1 + $0xbc] sm:$0xf]
      %v531 = vunpack.c.l.b16 %v499
      %v532 = vunpack.c.l.b16 %v500
      %v533 = vunpack.c.l.b16 %v501
      %v534 = vunpack.c.l.b16 %v502
      %v535 = vunpack.c.l.b16 %v503
      %v536 = vunpack.c.l.b16 %v504
      %v537 = vunpack.c.l.b16 %v505
      %v538 = vunpack.c.l.b16 %v506
      %v539 = vunpack.c.l.b16 %v507
      %v540 = vunpack.c.l.b16 %v508
      %v541 = vunpack.c.l.b16 %v509
      %v542 = vunpack.c.l.b16 %v510
      %v543 = vunpack.c.l.b16 %v511
      %v544 = vunpack.c.l.b16 %v512
      %v545 = vunpack.c.l.b16 %v513
      %v546 = vunpack.c.l.b16 %v514
      %v547 = vpack.c.b16 %v532, %v531
      %v548 = vpack.c.b16 %v534, %v533
      %v549 = vpack.c.b16 %v536, %v535
      %v550 = vpack.c.b16 %v538, %v537
      %v551 = vpack.c.b16 %v540, %v539
      %v552 = vpack.c.b16 %v542, %v541
      %v553 = vpack.c.b16 %v544, %v543
      %v554 = vpack.c.b16 %v546, %v545
      %563 = vmatpush.bf16.msra.mxu0 %v554
      %564 = vmatpush.bf16.msra.mxu0 %v553
      %565 = vmatpush.bf16.msra.mxu0 %v552
      %566 = vmatpush.bf16.msra.mxu0 %v551
      %567 = vmatpush.bf16.msra.mxu0 %v550
      %568 = vmatpush.bf16.msra.mxu0 %v549
      %569 = vmatpush.bf16.msra.mxu0 %v548
      %570 = vmatpush.bf16.msra.mxu0 %v547
      %571 = vmatmul.bf16.gmra.mxu0 %v495
      %v572 = vpop.f32.mrf.mxu0
      %v573 = vadd.f32 0.0, %v572
      %v574 = vpop.f32.mrf.mxu0
      %v575 = vadd.f32 0.0, %v574
      %576 = vmatmul.bf16.gmra.mxu0 %v496
      %v577 = vpop.f32.mrf.mxu0
      %v578 = vadd.f32 0.0, %v577
      %v579 = vpop.f32.mrf.mxu0
      %v580 = vadd.f32 0.0, %v579
      %581 = vmatmul.bf16.gmra.mxu0 %v497
      %v582 = vpop.f32.mrf.mxu0
      %v583 = vadd.f32 0.0, %v582
      %v584 = vpop.f32.mrf.mxu0
      %v585 = vadd.f32 0.0, %v584
      %586 = vmatmul.bf16.gmra.mxu0 %v498
      %v587 = vpop.f32.mrf.mxu0
      %v588 = vadd.f32 0.0, %v587
      %v589 = vpop.f32.mrf.mxu0
      %v590 = vadd.f32 0.0, %v589
      %591 = vdwg.mxu0
      %v592 = vadd.f32 %v443, %v573
      %v593 = vadd.f32 %v445, %v575
      %v594 = vadd.f32 %v448, %v578
      %v595 = vadd.f32 %v450, %v580
      %v596 = vadd.f32 %v453, %v583
      %v597 = vadd.f32 %v455, %v585
      %v598 = vadd.f32 %v458, %v588
      %v599 = vadd.f32 %v460, %v590
      %vm600 = vcmask 1044480
      %v601 = vrot.slane %v195, 3
      %v602 = vrot.slane %v196, 3
      %v603 = vsel %vm600, %v601, %v602
      %v604 = vrot.slane %v197, 3
      %v605 = vrot.slane %v198, 3
      %v606 = vsel %vm600, %v604, %v605
      %v607 = vrot.slane %v199, 3
      %v608 = vrot.slane %v200, 3
      %v609 = vsel %vm600, %v607, %v608
      %v610 = vrot.slane %v201, 3
      %v611 = vrot.slane %v202, 3
      %v612 = vsel %vm600, %v610, %v611
      %v613 = vrot.slane %v203, 3
      %v614 = vrot.slane %v204, 3
      %v615 = vsel %vm600, %v613, %v614
      %v616 = vrot.slane %v205, 3
      %v617 = vrot.slane %v206, 3
      %v618 = vsel %vm600, %v616, %v617
      %v619 = vrot.slane %v207, 3
      %v620 = vrot.slane %v208, 3
      %v621 = vsel %vm600, %v619, %v620
      %v622 = vrot.slane %v209, 3
      %v623 = vrot.slane %v210, 3
      %v624 = vsel %vm600, %v622, %v623
      %v633 = vpack.c.bf16 %v606, %v603
      %v634 = vpack.c.bf16 %v612, %v609
      %v635 = vpack.c.bf16 %v618, %v615
      %v636 = vpack.c.bf16 %v624, %v621
      %v637 = vld [vmem:[%s1 + $0xc0] sm:$0xf]
      %v638 = vld [vmem:[%s1 + $0xc4] sm:$0xf]
      %v639 = vld [vmem:[%s1 + $0xc8] sm:$0xf]
      %v640 = vld [vmem:[%s1 + $0xcc] sm:$0xf]
      %v641 = vld [vmem:[%s1 + $0xd0] sm:$0xf]
      %v642 = vld [vmem:[%s1 + $0xd4] sm:$0xf]
      %v643 = vld [vmem:[%s1 + $0xd8] sm:$0xf]
      %v644 = vld [vmem:[%s1 + $0xdc] sm:$0xf]
      %v645 = vld [vmem:[%s1 + $0xe0] sm:$0xf]
      %v646 = vld [vmem:[%s1 + $0xe4] sm:$0xf]
      %v647 = vld [vmem:[%s1 + $0xe8] sm:$0xf]
      %v648 = vld [vmem:[%s1 + $0xec] sm:$0xf]
      %v649 = vld [vmem:[%s1 + $0xf0] sm:$0xf]
      %v650 = vld [vmem:[%s1 + $0xf4] sm:$0xf]
      %v651 = vld [vmem:[%s1 + $0xf8] sm:$0xf]
      %v652 = vld [vmem:[%s1 + $0xfc] sm:$0xf]
      %v669 = vunpack.c.l.b16 %v637
      %v670 = vunpack.c.l.b16 %v638
      %v671 = vunpack.c.l.b16 %v639
      %v672 = vunpack.c.l.b16 %v640
      %v673 = vunpack.c.l.b16 %v641
      %v674 = vunpack.c.l.b16 %v642
      %v675 = vunpack.c.l.b16 %v643
      %v676 = vunpack.c.l.b16 %v644
      %v677 = vunpack.c.l.b16 %v645
      %v678 = vunpack.c.l.b16 %v646
      %v679 = vunpack.c.l.b16 %v647
      %v680 = vunpack.c.l.b16 %v648
      %v681 = vunpack.c.l.b16 %v649
      %v682 = vunpack.c.l.b16 %v650
      %v683 = vunpack.c.l.b16 %v651
      %v684 = vunpack.c.l.b16 %v652
      %v685 = vpack.c.b16 %v670, %v669
      %v686 = vpack.c.b16 %v672, %v671
      %v687 = vpack.c.b16 %v674, %v673
      %v688 = vpack.c.b16 %v676, %v675
      %v689 = vpack.c.b16 %v678, %v677
      %v690 = vpack.c.b16 %v680, %v679
      %v691 = vpack.c.b16 %v682, %v681
      %v692 = vpack.c.b16 %v684, %v683
      %701 = vmatpush.bf16.msra.mxu0 %v692
      %702 = vmatpush.bf16.msra.mxu0 %v691
      %703 = vmatpush.bf16.msra.mxu0 %v690
      %704 = vmatpush.bf16.msra.mxu0 %v689
      %705 = vmatpush.bf16.msra.mxu0 %v688
      %706 = vmatpush.bf16.msra.mxu0 %v687
      %707 = vmatpush.bf16.msra.mxu0 %v686
      %708 = vmatpush.bf16.msra.mxu0 %v685
      %709 = vmatmul.bf16.gmra.mxu0 %v633
      %v710 = vpop.f32.mrf.mxu0
      %v711 = vadd.f32 0.0, %v710
      %v712 = vpop.f32.mrf.mxu0
      %v713 = vadd.f32 0.0, %v712
      %714 = vmatmul.bf16.gmra.mxu0 %v634
      %v715 = vpop.f32.mrf.mxu0
      %v716 = vadd.f32 0.0, %v715
      %v717 = vpop.f32.mrf.mxu0
      %v718 = vadd.f32 0.0, %v717
      %719 = vmatmul.bf16.gmra.mxu0 %v635
      %v720 = vpop.f32.mrf.mxu0
      %v721 = vadd.f32 0.0, %v720
      %v722 = vpop.f32.mrf.mxu0
      %v723 = vadd.f32 0.0, %v722
      %724 = vmatmul.bf16.gmra.mxu0 %v636
      %v725 = vpop.f32.mrf.mxu0
      %v726 = vadd.f32 0.0, %v725
      %v727 = vpop.f32.mrf.mxu0
      %v728 = vadd.f32 0.0, %v727
      %729 = vdwg.mxu0
      %v730 = vadd.f32 %v592, %v711
      %v731 = vadd.f32 %v593, %v713
      %v732 = vadd.f32 %v594, %v716
      %v733 = vadd.f32 %v595, %v718
      %v734 = vadd.f32 %v596, %v721
      %v735 = vadd.f32 %v597, %v723
      %v736 = vadd.f32 %v598, %v726
      %v737 = vadd.f32 %v599, %v728
      %vm738 = vcmask 1043456
      %v739 = vrot.slane %v195, 4
      %v740 = vrot.slane %v196, 4
      %v741 = vsel %vm738, %v739, %v740
      %v742 = vrot.slane %v197, 4
      %v743 = vrot.slane %v198, 4
      %v744 = vsel %vm738, %v742, %v743
      %v745 = vrot.slane %v199, 4
      %v746 = vrot.slane %v200, 4
      %v747 = vsel %vm738, %v745, %v746
      %v748 = vrot.slane %v201, 4
      %v749 = vrot.slane %v202, 4
      %v750 = vsel %vm738, %v748, %v749
      %v751 = vrot.slane %v203, 4
      %v752 = vrot.slane %v204, 4
      %v753 = vsel %vm738, %v751, %v752
      %v754 = vrot.slane %v205, 4
      %v755 = vrot.slane %v206, 4
      %v756 = vsel %vm738, %v754, %v755
      %v757 = vrot.slane %v207, 4
      %v758 = vrot.slane %v208, 4
      %v759 = vsel %vm738, %v757, %v758
      %v760 = vrot.slane %v209, 4
      %v761 = vrot.slane %v210, 4
      %v762 = vsel %vm738, %v760, %v761
      %v771 = vpack.c.bf16 %v744, %v741
      %v772 = vpack.c.bf16 %v750, %v747
      %v773 = vpack.c.bf16 %v756, %v753
      %v774 = vpack.c.bf16 %v762, %v759
      %v775 = vld [vmem:[%s1 + $0x100] sm:$0xf]
      %v776 = vld [vmem:[%s1 + $0x104] sm:$0xf]
      %v777 = vld [vmem:[%s1 + $0x108] sm:$0xf]
      %v778 = vld [vmem:[%s1 + $0x10c] sm:$0xf]
      %v779 = vld [vmem:[%s1 + $0x110] sm:$0xf]
      %v780 = vld [vmem:[%s1 + $0x114] sm:$0xf]
      %v781 = vld [vmem:[%s1 + $0x118] sm:$0xf]
      %v782 = vld [vmem:[%s1 + $0x11c] sm:$0xf]
      %v783 = vld [vmem:[%s1 + $0x120] sm:$0xf]
      %v784 = vld [vmem:[%s1 + $0x124] sm:$0xf]
      %v785 = vld [vmem:[%s1 + $0x128] sm:$0xf]
      %v786 = vld [vmem:[%s1 + $0x12c] sm:$0xf]
      %v787 = vld [vmem:[%s1 + $0x130] sm:$0xf]
      %v788 = vld [vmem:[%s1 + $0x134] sm:$0xf]
      %v789 = vld [vmem:[%s1 + $0x138] sm:$0xf]
      %v790 = vld [vmem:[%s1 + $0x13c] sm:$0xf]
      %v807 = vunpack.c.l.b16 %v775
      %v808 = vunpack.c.l.b16 %v776
      %v809 = vunpack.c.l.b16 %v777
      %v810 = vunpack.c.l.b16 %v778
      %v811 = vunpack.c.l.b16 %v779
      %v812 = vunpack.c.l.b16 %v780
      %v813 = vunpack.c.l.b16 %v781
      %v814 = vunpack.c.l.b16 %v782
      %v815 = vunpack.c.l.b16 %v783
      %v816 = vunpack.c.l.b16 %v784
      %v817 = vunpack.c.l.b16 %v785
      %v818 = vunpack.c.l.b16 %v786
      %v819 = vunpack.c.l.b16 %v787
      %v820 = vunpack.c.l.b16 %v788
      %v821 = vunpack.c.l.b16 %v789
      %v822 = vunpack.c.l.b16 %v790
      %v823 = vpack.c.b16 %v808, %v807
      %v824 = vpack.c.b16 %v810, %v809
      %v825 = vpack.c.b16 %v812, %v811
      %v826 = vpack.c.b16 %v814, %v813
      %v827 = vpack.c.b16 %v816, %v815
      %v828 = vpack.c.b16 %v818, %v817
      %v829 = vpack.c.b16 %v820, %v819
      %v830 = vpack.c.b16 %v822, %v821
      %839 = vmatpush.bf16.msra.mxu0 %v830
      %840 = vmatpush.bf16.msra.mxu0 %v829
      %841 = vmatpush.bf16.msra.mxu0 %v828
      %842 = vmatpush.bf16.msra.mxu0 %v827
      %843 = vmatpush.bf16.msra.mxu0 %v826
      %844 = vmatpush.bf16.msra.mxu0 %v825
      %845 = vmatpush.bf16.msra.mxu0 %v824
      %846 = vmatpush.bf16.msra.mxu0 %v823
      %847 = vmatmul.bf16.gmra.mxu0 %v771
      %v848 = vpop.f32.mrf.mxu0
      %v849 = vadd.f32 0.0, %v848
      %v850 = vpop.f32.mrf.mxu0
      %v851 = vadd.f32 0.0, %v850
      %852 = vmatmul.bf16.gmra.mxu0 %v772
      %v853 = vpop.f32.mrf.mxu0
      %v854 = vadd.f32 0.0, %v853
      %v855 = vpop.f32.mrf.mxu0
      %v856 = vadd.f32 0.0, %v855
      %857 = vmatmul.bf16.gmra.mxu0 %v773
      %v858 = vpop.f32.mrf.mxu0
      %v859 = vadd.f32 0.0, %v858
      %v860 = vpop.f32.mrf.mxu0
      %v861 = vadd.f32 0.0, %v860
      %862 = vmatmul.bf16.gmra.mxu0 %v774
      %v863 = vpop.f32.mrf.mxu0
      %v864 = vadd.f32 0.0, %v863
      %v865 = vpop.f32.mrf.mxu0
      %v866 = vadd.f32 0.0, %v865
      %867 = vdwg.mxu0
      %v868 = vadd.f32 %v730, %v849
      %v869 = vadd.f32 %v731, %v851
      %v870 = vadd.f32 %v732, %v854
      %v871 = vadd.f32 %v733, %v856
      %v872 = vadd.f32 %v734, %v859
      %v873 = vadd.f32 %v735, %v861
      %v874 = vadd.f32 %v736, %v864
      %v875 = vadd.f32 %v737, %v866
      %v876 = vpack.c.bf16 %v199, %v197
      %v877 = vpack.c.bf16 %v203, %v201
      %v878 = vpack.c.bf16 %v207, %v205
      %v879 = vpack.c.bf16 %v211, %v209
      %v880 = vld [vmem:[%s1 + $0x140] sm:$0xf]
      %v881 = vld [vmem:[%s1 + $0x144] sm:$0xf]
      %v882 = vld [vmem:[%s1 + $0x148] sm:$0xf]
      %v883 = vld [vmem:[%s1 + $0x14c] sm:$0xf]
      %v884 = vld [vmem:[%s1 + $0x150] sm:$0xf]
      %v885 = vld [vmem:[%s1 + $0x154] sm:$0xf]
      %v886 = vld [vmem:[%s1 + $0x158] sm:$0xf]
      %v887 = vld [vmem:[%s1 + $0x15c] sm:$0xf]
      %v888 = vld [vmem:[%s1 + $0x160] sm:$0xf]
      %v889 = vld [vmem:[%s1 + $0x164] sm:$0xf]
      %v890 = vld [vmem:[%s1 + $0x168] sm:$0xf]
      %v891 = vld [vmem:[%s1 + $0x16c] sm:$0xf]
      %v892 = vld [vmem:[%s1 + $0x170] sm:$0xf]
      %v893 = vld [vmem:[%s1 + $0x174] sm:$0xf]
      %v894 = vld [vmem:[%s1 + $0x178] sm:$0xf]
      %v895 = vld [vmem:[%s1 + $0x17c] sm:$0xf]
      %v912 = vunpack.c.l.b16 %v880
      %v913 = vunpack.c.l.b16 %v881
      %v914 = vunpack.c.l.b16 %v882
      %v915 = vunpack.c.l.b16 %v883
      %v916 = vunpack.c.l.b16 %v884
      %v917 = vunpack.c.l.b16 %v885
      %v918 = vunpack.c.l.b16 %v886
      %v919 = vunpack.c.l.b16 %v887
      %v920 = vunpack.c.l.b16 %v888
      %v921 = vunpack.c.l.b16 %v889
      %v922 = vunpack.c.l.b16 %v890
      %v923 = vunpack.c.l.b16 %v891
      %v924 = vunpack.c.l.b16 %v892
      %v925 = vunpack.c.l.b16 %v893
      %v926 = vunpack.c.l.b16 %v894
      %v927 = vunpack.c.l.b16 %v895
      %v928 = vpack.c.b16 %v913, %v912
      %v929 = vpack.c.b16 %v915, %v914
      %v930 = vpack.c.b16 %v917, %v916
      %v931 = vpack.c.b16 %v919, %v918
      %v932 = vpack.c.b16 %v921, %v920
      %v933 = vpack.c.b16 %v923, %v922
      %v934 = vpack.c.b16 %v925, %v924
      %v935 = vpack.c.b16 %v927, %v926
      %944 = vmatpush.bf16.msra.mxu0 %v935
      %945 = vmatpush.bf16.msra.mxu0 %v934
      %946 = vmatpush.bf16.msra.mxu0 %v933
      %947 = vmatpush.bf16.msra.mxu0 %v932
      %948 = vmatpush.bf16.msra.mxu0 %v931
      %949 = vmatpush.bf16.msra.mxu0 %v930
      %950 = vmatpush.bf16.msra.mxu0 %v929
      %951 = vmatpush.bf16.msra.mxu0 %v928
      %952 = vmatmul.bf16.gmra.mxu0 %v876
      %v953 = vpop.f32.mrf.mxu0
      %v954 = vadd.f32 0.0, %v953
      %v955 = vpop.f32.mrf.mxu0
      %v956 = vadd.f32 0.0, %v955
      %957 = vmatmul.bf16.gmra.mxu0 %v877
      %v958 = vpop.f32.mrf.mxu0
      %v959 = vadd.f32 0.0, %v958
      %v960 = vpop.f32.mrf.mxu0
      %v961 = vadd.f32 0.0, %v960
      %962 = vmatmul.bf16.gmra.mxu0 %v878
      %v963 = vpop.f32.mrf.mxu0
      %v964 = vadd.f32 0.0, %v963
      %v965 = vpop.f32.mrf.mxu0
      %v966 = vadd.f32 0.0, %v965
      %967 = vmatmul.bf16.gmra.mxu0 %v879
      %v968 = vpop.f32.mrf.mxu0
      %v969 = vadd.f32 0.0, %v968
      %v970 = vpop.f32.mrf.mxu0
      %v971 = vadd.f32 0.0, %v970
      %972 = vdwg.mxu0
      %v973 = vadd.f32 %v868, %v954
      %v974 = vadd.f32 %v869, %v956
      %v975 = vadd.f32 %v870, %v959
      %v976 = vadd.f32 %v871, %v961
      %v977 = vadd.f32 %v872, %v964
      %v978 = vadd.f32 %v873, %v966
      %v979 = vadd.f32 %v874, %v969
      %v980 = vadd.f32 %v875, %v971
      %v983 = vrot.slane %v211, 1
      %v984 = vrot.slane %v212, 1
      %v985 = vsel %vm255, %v983, %v984
      %v987 = vpack.c.bf16 %v264, %v261
      %v988 = vpack.c.bf16 %v270, %v267
      %v989 = vpack.c.bf16 %v276, %v273
      %v990 = vpack.c.bf16 %v985, %v279
      %v991 = vld [vmem:[%s1 + $0x180] sm:$0xf]
      %v992 = vld [vmem:[%s1 + $0x184] sm:$0xf]
      %v993 = vld [vmem:[%s1 + $0x188] sm:$0xf]
      %v994 = vld [vmem:[%s1 + $0x18c] sm:$0xf]
      %v995 = vld [vmem:[%s1 + $0x190] sm:$0xf]
      %v996 = vld [vmem:[%s1 + $0x194] sm:$0xf]
      %v997 = vld [vmem:[%s1 + $0x198] sm:$0xf]
      %v998 = vld [vmem:[%s1 + $0x19c] sm:$0xf]
      %v999 = vld [vmem:[%s1 + $0x1a0] sm:$0xf]
      %v1000 = vld [vmem:[%s1 + $0x1a4] sm:$0xf]
      %v1001 = vld [vmem:[%s1 + $0x1a8] sm:$0xf]
      %v1002 = vld [vmem:[%s1 + $0x1ac] sm:$0xf]
      %v1003 = vld [vmem:[%s1 + $0x1b0] sm:$0xf]
      %v1004 = vld [vmem:[%s1 + $0x1b4] sm:$0xf]
      %v1005 = vld [vmem:[%s1 + $0x1b8] sm:$0xf]
      %v1006 = vld [vmem:[%s1 + $0x1bc] sm:$0xf]
      %v1023 = vunpack.c.l.b16 %v991
      %v1024 = vunpack.c.l.b16 %v992
      %v1025 = vunpack.c.l.b16 %v993
      %v1026 = vunpack.c.l.b16 %v994
      %v1027 = vunpack.c.l.b16 %v995
      %v1028 = vunpack.c.l.b16 %v996
      %v1029 = vunpack.c.l.b16 %v997
      %v1030 = vunpack.c.l.b16 %v998
      %v1031 = vunpack.c.l.b16 %v999
      %v1032 = vunpack.c.l.b16 %v1000
      %v1033 = vunpack.c.l.b16 %v1001
      %v1034 = vunpack.c.l.b16 %v1002
      %v1035 = vunpack.c.l.b16 %v1003
      %v1036 = vunpack.c.l.b16 %v1004
      %v1037 = vunpack.c.l.b16 %v1005
      %v1038 = vunpack.c.l.b16 %v1006
      %v1039 = vpack.c.b16 %v1024, %v1023
      %v1040 = vpack.c.b16 %v1026, %v1025
      %v1041 = vpack.c.b16 %v1028, %v1027
      %v1042 = vpack.c.b16 %v1030, %v1029
      %v1043 = vpack.c.b16 %v1032, %v1031
      %v1044 = vpack.c.b16 %v1034, %v1033
      %v1045 = vpack.c.b16 %v1036, %v1035
      %v1046 = vpack.c.b16 %v1038, %v1037
      %1055 = vmatpush.bf16.msra.mxu0 %v1046
      %1056 = vmatpush.bf16.msra.mxu0 %v1045
      %1057 = vmatpush.bf16.msra.mxu0 %v1044
      %1058 = vmatpush.bf16.msra.mxu0 %v1043
      %1059 = vmatpush.bf16.msra.mxu0 %v1042
      %1060 = vmatpush.bf16.msra.mxu0 %v1041
      %1061 = vmatpush.bf16.msra.mxu0 %v1040
      %1062 = vmatpush.bf16.msra.mxu0 %v1039
      %1063 = vmatmul.bf16.gmra.mxu0 %v987
      %v1064 = vpop.f32.mrf.mxu0
      %v1065 = vadd.f32 0.0, %v1064
      %v1066 = vpop.f32.mrf.mxu0
      %v1067 = vadd.f32 0.0, %v1066
      %1068 = vmatmul.bf16.gmra.mxu0 %v988
      %v1069 = vpop.f32.mrf.mxu0
      %v1070 = vadd.f32 0.0, %v1069
      %v1071 = vpop.f32.mrf.mxu0
      %v1072 = vadd.f32 0.0, %v1071
      %1073 = vmatmul.bf16.gmra.mxu0 %v989
      %v1074 = vpop.f32.mrf.mxu0
      %v1075 = vadd.f32 0.0, %v1074
      %v1076 = vpop.f32.mrf.mxu0
      %v1077 = vadd.f32 0.0, %v1076
      %1078 = vmatmul.bf16.gmra.mxu0 %v990
      %v1079 = vpop.f32.mrf.mxu0
      %v1080 = vadd.f32 0.0, %v1079
      %v1081 = vpop.f32.mrf.mxu0
      %v1082 = vadd.f32 0.0, %v1081
      %1083 = vdwg.mxu0
      %v1084 = vadd.f32 %v973, %v1065
      %v1085 = vadd.f32 %v974, %v1067
      %v1086 = vadd.f32 %v975, %v1070
      %v1087 = vadd.f32 %v976, %v1072
      %v1088 = vadd.f32 %v977, %v1075
      %v1089 = vadd.f32 %v978, %v1077
      %v1090 = vadd.f32 %v979, %v1080
      %v1091 = vadd.f32 %v980, %v1082
      %v1092 = vrot.slane %v211, 2
      %v1093 = vrot.slane %v212, 2
      %v1094 = vsel %vm462, %v1092, %v1093
      %v1096 = vpack.c.bf16 %v471, %v468
      %v1097 = vpack.c.bf16 %v477, %v474
      %v1098 = vpack.c.bf16 %v483, %v480
      %v1099 = vpack.c.bf16 %v1094, %v486
      %v1100 = vld [vmem:[%s1 + $0x1c0] sm:$0xf]
      %v1101 = vld [vmem:[%s1 + $0x1c4] sm:$0xf]
      %v1102 = vld [vmem:[%s1 + $0x1c8] sm:$0xf]
      %v1103 = vld [vmem:[%s1 + $0x1cc] sm:$0xf]
      %v1104 = vld [vmem:[%s1 + $0x1d0] sm:$0xf]
      %v1105 = vld [vmem:[%s1 + $0x1d4] sm:$0xf]
      %v1106 = vld [vmem:[%s1 + $0x1d8] sm:$0xf]
      %v1107 = vld [vmem:[%s1 + $0x1dc] sm:$0xf]
      %v1108 = vld [vmem:[%s1 + $0x1e0] sm:$0xf]
      %v1109 = vld [vmem:[%s1 + $0x1e4] sm:$0xf]
      %v1110 = vld [vmem:[%s1 + $0x1e8] sm:$0xf]
      %v1111 = vld [vmem:[%s1 + $0x1ec] sm:$0xf]
      %v1112 = vld [vmem:[%s1 + $0x1f0] sm:$0xf]
      %v1113 = vld [vmem:[%s1 + $0x1f4] sm:$0xf]
      %v1114 = vld [vmem:[%s1 + $0x1f8] sm:$0xf]
      %v1115 = vld [vmem:[%s1 + $0x1fc] sm:$0xf]
      %v1132 = vunpack.c.l.b16 %v1100
      %v1133 = vunpack.c.l.b16 %v1101
      %v1134 = vunpack.c.l.b16 %v1102
      %v1135 = vunpack.c.l.b16 %v1103
      %v1136 = vunpack.c.l.b16 %v1104
      %v1137 = vunpack.c.l.b16 %v1105
      %v1138 = vunpack.c.l.b16 %v1106
      %v1139 = vunpack.c.l.b16 %v1107
      %v1140 = vunpack.c.l.b16 %v1108
      %v1141 = vunpack.c.l.b16 %v1109
      %v1142 = vunpack.c.l.b16 %v1110
      %v1143 = vunpack.c.l.b16 %v1111
      %v1144 = vunpack.c.l.b16 %v1112
      %v1145 = vunpack.c.l.b16 %v1113
      %v1146 = vunpack.c.l.b16 %v1114
      %v1147 = vunpack.c.l.b16 %v1115
      %v1148 = vpack.c.b16 %v1133, %v1132
      %v1149 = vpack.c.b16 %v1135, %v1134
      %v1150 = vpack.c.b16 %v1137, %v1136
      %v1151 = vpack.c.b16 %v1139, %v1138
      %v1152 = vpack.c.b16 %v1141, %v1140
      %v1153 = vpack.c.b16 %v1143, %v1142
      %v1154 = vpack.c.b16 %v1145, %v1144
      %v1155 = vpack.c.b16 %v1147, %v1146
      %1164 = vmatpush.bf16.msra.mxu0 %v1155
      %1165 = vmatpush.bf16.msra.mxu0 %v1154
      %1166 = vmatpush.bf16.msra.mxu0 %v1153
      %1167 = vmatpush.bf16.msra.mxu0 %v1152
      %1168 = vmatpush.bf16.msra.mxu0 %v1151
      %1169 = vmatpush.bf16.msra.mxu0 %v1150
      %1170 = vmatpush.bf16.msra.mxu0 %v1149
      %1171 = vmatpush.bf16.msra.mxu0 %v1148
      %1172 = vmatmul.bf16.gmra.mxu0 %v1096
      %v1173 = vpop.f32.mrf.mxu0
      %v1174 = vadd.f32 0.0, %v1173
      %v1175 = vpop.f32.mrf.mxu0
      %v1176 = vadd.f32 0.0, %v1175
      %1177 = vmatmul.bf16.gmra.mxu0 %v1097
      %v1178 = vpop.f32.mrf.mxu0
      %v1179 = vadd.f32 0.0, %v1178
      %v1180 = vpop.f32.mrf.mxu0
      %v1181 = vadd.f32 0.0, %v1180
      %1182 = vmatmul.bf16.gmra.mxu0 %v1098
      %v1183 = vpop.f32.mrf.mxu0
      %v1184 = vadd.f32 0.0, %v1183
      %v1185 = vpop.f32.mrf.mxu0
      %v1186 = vadd.f32 0.0, %v1185
      %1187 = vmatmul.bf16.gmra.mxu0 %v1099
      %v1188 = vpop.f32.mrf.mxu0
      %v1189 = vadd.f32 0.0, %v1188
      %v1190 = vpop.f32.mrf.mxu0
      %v1191 = vadd.f32 0.0, %v1190
      %1192 = vdwg.mxu0
      %v1193 = vadd.f32 %v1084, %v1174
      %v1194 = vadd.f32 %v1085, %v1176
      %v1195 = vadd.f32 %v1086, %v1179
      %v1196 = vadd.f32 %v1087, %v1181
      %v1197 = vadd.f32 %v1088, %v1184
      %v1198 = vadd.f32 %v1089, %v1186
      %v1199 = vadd.f32 %v1090, %v1189
      %v1200 = vadd.f32 %v1091, %v1191
      %v1201 = vrot.slane %v211, 3
      %v1202 = vrot.slane %v212, 3
      %v1203 = vsel %vm600, %v1201, %v1202
      %v1205 = vpack.c.bf16 %v609, %v606
      %v1206 = vpack.c.bf16 %v615, %v612
      %v1207 = vpack.c.bf16 %v621, %v618
      %v1208 = vpack.c.bf16 %v1203, %v624
      %v1209 = vld [vmem:[%s1 + $0x200] sm:$0xf]
      %v1210 = vld [vmem:[%s1 + $0x204] sm:$0xf]
      %v1211 = vld [vmem:[%s1 + $0x208] sm:$0xf]
      %v1212 = vld [vmem:[%s1 + $0x20c] sm:$0xf]
      %v1213 = vld [vmem:[%s1 + $0x210] sm:$0xf]
      %v1214 = vld [vmem:[%s1 + $0x214] sm:$0xf]
      %v1215 = vld [vmem:[%s1 + $0x218] sm:$0xf]
      %v1216 = vld [vmem:[%s1 + $0x21c] sm:$0xf]
      %v1217 = vld [vmem:[%s1 + $0x220] sm:$0xf]
      %v1218 = vld [vmem:[%s1 + $0x224] sm:$0xf]
      %v1219 = vld [vmem:[%s1 + $0x228] sm:$0xf]
      %v1220 = vld [vmem:[%s1 + $0x22c] sm:$0xf]
      %v1221 = vld [vmem:[%s1 + $0x230] sm:$0xf]
      %v1222 = vld [vmem:[%s1 + $0x234] sm:$0xf]
      %v1223 = vld [vmem:[%s1 + $0x238] sm:$0xf]
      %v1224 = vld [vmem:[%s1 + $0x23c] sm:$0xf]
      %v1241 = vunpack.c.l.b16 %v1209
      %v1242 = vunpack.c.l.b16 %v1210
      %v1243 = vunpack.c.l.b16 %v1211
      %v1244 = vunpack.c.l.b16 %v1212
      %v1245 = vunpack.c.l.b16 %v1213
      %v1246 = vunpack.c.l.b16 %v1214
      %v1247 = vunpack.c.l.b16 %v1215
      %v1248 = vunpack.c.l.b16 %v1216
      %v1249 = vunpack.c.l.b16 %v1217
      %v1250 = vunpack.c.l.b16 %v1218
      %v1251 = vunpack.c.l.b16 %v1219
      %v1252 = vunpack.c.l.b16 %v1220
      %v1253 = vunpack.c.l.b16 %v1221
      %v1254 = vunpack.c.l.b16 %v1222
      %v1255 = vunpack.c.l.b16 %v1223
      %v1256 = vunpack.c.l.b16 %v1224
      %v1257 = vpack.c.b16 %v1242, %v1241
      %v1258 = vpack.c.b16 %v1244, %v1243
      %v1259 = vpack.c.b16 %v1246, %v1245
      %v1260 = vpack.c.b16 %v1248, %v1247
      %v1261 = vpack.c.b16 %v1250, %v1249
      %v1262 = vpack.c.b16 %v1252, %v1251
      %v1263 = vpack.c.b16 %v1254, %v1253
      %v1264 = vpack.c.b16 %v1256, %v1255
      %1273 = vmatpush.bf16.msra.mxu0 %v1264
      %1274 = vmatpush.bf16.msra.mxu0 %v1263
      %1275 = vmatpush.bf16.msra.mxu0 %v1262
      %1276 = vmatpush.bf16.msra.mxu0 %v1261
      %1277 = vmatpush.bf16.msra.mxu0 %v1260
      %1278 = vmatpush.bf16.msra.mxu0 %v1259
      %1279 = vmatpush.bf16.msra.mxu0 %v1258
      %1280 = vmatpush.bf16.msra.mxu0 %v1257
      %1281 = vmatmul.bf16.gmra.mxu0 %v1205
      %v1282 = vpop.f32.mrf.mxu0
      %v1283 = vadd.f32 0.0, %v1282
      %v1284 = vpop.f32.mrf.mxu0
      %v1285 = vadd.f32 0.0, %v1284
      %1286 = vmatmul.bf16.gmra.mxu0 %v1206
      %v1287 = vpop.f32.mrf.mxu0
      %v1288 = vadd.f32 0.0, %v1287
      %v1289 = vpop.f32.mrf.mxu0
      %v1290 = vadd.f32 0.0, %v1289
      %1291 = vmatmul.bf16.gmra.mxu0 %v1207
      %v1292 = vpop.f32.mrf.mxu0
      %v1293 = vadd.f32 0.0, %v1292
      %v1294 = vpop.f32.mrf.mxu0
      %v1295 = vadd.f32 0.0, %v1294
      %1296 = vmatmul.bf16.gmra.mxu0 %v1208
      %v1297 = vpop.f32.mrf.mxu0
      %v1298 = vadd.f32 0.0, %v1297
      %v1299 = vpop.f32.mrf.mxu0
      %v1300 = vadd.f32 0.0, %v1299
      %1301 = vdwg.mxu0
      %v1302 = vadd.f32 %v1193, %v1283
      %v1303 = vadd.f32 %v1194, %v1285
      %v1304 = vadd.f32 %v1195, %v1288
      %v1305 = vadd.f32 %v1196, %v1290
      %v1306 = vadd.f32 %v1197, %v1293
      %v1307 = vadd.f32 %v1198, %v1295
      %v1308 = vadd.f32 %v1199, %v1298
      %v1309 = vadd.f32 %v1200, %v1300
      %v1310 = vrot.slane %v211, 4
      %v1311 = vrot.slane %v212, 4
      %v1312 = vsel %vm738, %v1310, %v1311
      %v1314 = vpack.c.bf16 %v747, %v744
      %v1315 = vpack.c.bf16 %v753, %v750
      %v1316 = vpack.c.bf16 %v759, %v756
      %v1317 = vpack.c.bf16 %v1312, %v762
      %v1318 = vld [vmem:[%s1 + $0x240] sm:$0xf]
      %v1319 = vld [vmem:[%s1 + $0x244] sm:$0xf]
      %v1320 = vld [vmem:[%s1 + $0x248] sm:$0xf]
      %v1321 = vld [vmem:[%s1 + $0x24c] sm:$0xf]
      %v1322 = vld [vmem:[%s1 + $0x250] sm:$0xf]
      %v1323 = vld [vmem:[%s1 + $0x254] sm:$0xf]
      %v1324 = vld [vmem:[%s1 + $0x258] sm:$0xf]
      %v1325 = vld [vmem:[%s1 + $0x25c] sm:$0xf]
      %v1326 = vld [vmem:[%s1 + $0x260] sm:$0xf]
      %v1327 = vld [vmem:[%s1 + $0x264] sm:$0xf]
      %v1328 = vld [vmem:[%s1 + $0x268] sm:$0xf]
      %v1329 = vld [vmem:[%s1 + $0x26c] sm:$0xf]
      %v1330 = vld [vmem:[%s1 + $0x270] sm:$0xf]
      %v1331 = vld [vmem:[%s1 + $0x274] sm:$0xf]
      %v1332 = vld [vmem:[%s1 + $0x278] sm:$0xf]
      %v1333 = vld [vmem:[%s1 + $0x27c] sm:$0xf]
      %v1350 = vunpack.c.l.b16 %v1318
      %v1351 = vunpack.c.l.b16 %v1319
      %v1352 = vunpack.c.l.b16 %v1320
      %v1353 = vunpack.c.l.b16 %v1321
      %v1354 = vunpack.c.l.b16 %v1322
      %v1355 = vunpack.c.l.b16 %v1323
      %v1356 = vunpack.c.l.b16 %v1324
      %v1357 = vunpack.c.l.b16 %v1325
      %v1358 = vunpack.c.l.b16 %v1326
      %v1359 = vunpack.c.l.b16 %v1327
      %v1360 = vunpack.c.l.b16 %v1328
      %v1361 = vunpack.c.l.b16 %v1329
      %v1362 = vunpack.c.l.b16 %v1330
      %v1363 = vunpack.c.l.b16 %v1331
      %v1364 = vunpack.c.l.b16 %v1332
      %v1365 = vunpack.c.l.b16 %v1333
      %v1366 = vpack.c.b16 %v1351, %v1350
      %v1367 = vpack.c.b16 %v1353, %v1352
      %v1368 = vpack.c.b16 %v1355, %v1354
      %v1369 = vpack.c.b16 %v1357, %v1356
      %v1370 = vpack.c.b16 %v1359, %v1358
      %v1371 = vpack.c.b16 %v1361, %v1360
      %v1372 = vpack.c.b16 %v1363, %v1362
      %v1373 = vpack.c.b16 %v1365, %v1364
      %1382 = vmatpush.bf16.msra.mxu0 %v1373
      %1383 = vmatpush.bf16.msra.mxu0 %v1372
      %1384 = vmatpush.bf16.msra.mxu0 %v1371
      %1385 = vmatpush.bf16.msra.mxu0 %v1370
      %1386 = vmatpush.bf16.msra.mxu0 %v1369
      %1387 = vmatpush.bf16.msra.mxu0 %v1368
      %1388 = vmatpush.bf16.msra.mxu0 %v1367
      %1389 = vmatpush.bf16.msra.mxu0 %v1366
      %1390 = vmatmul.bf16.gmra.mxu0 %v1314
      %v1391 = vpop.f32.mrf.mxu0
      %v1392 = vadd.f32 0.0, %v1391
      %v1393 = vpop.f32.mrf.mxu0
      %v1394 = vadd.f32 0.0, %v1393
      %1395 = vmatmul.bf16.gmra.mxu0 %v1315
      %v1396 = vpop.f32.mrf.mxu0
      %v1397 = vadd.f32 0.0, %v1396
      %v1398 = vpop.f32.mrf.mxu0
      %v1399 = vadd.f32 0.0, %v1398
      %1400 = vmatmul.bf16.gmra.mxu0 %v1316
      %v1401 = vpop.f32.mrf.mxu0
      %v1402 = vadd.f32 0.0, %v1401
      %v1403 = vpop.f32.mrf.mxu0
      %v1404 = vadd.f32 0.0, %v1403
      %1405 = vmatmul.bf16.gmra.mxu0 %v1317
      %v1406 = vpop.f32.mrf.mxu0
      %v1407 = vadd.f32 0.0, %v1406
      %v1408 = vpop.f32.mrf.mxu0
      %v1409 = vadd.f32 0.0, %v1408
      %1410 = vdwg.mxu0
      %v1411 = vadd.f32 %v1302, %v1392
      %v1412 = vadd.f32 %v1303, %v1394
      %v1413 = vadd.f32 %v1304, %v1397
      %v1414 = vadd.f32 %v1305, %v1399
      %v1415 = vadd.f32 %v1306, %v1402
      %v1416 = vadd.f32 %v1307, %v1404
      %v1417 = vadd.f32 %v1308, %v1407
      %v1418 = vadd.f32 %v1309, %v1409
      %v1419 = vpack.c.bf16 %v213, %v211
      %v1420 = vld [vmem:[%s1 + $0x280] sm:$0xf]
      %v1421 = vld [vmem:[%s1 + $0x284] sm:$0xf]
      %v1422 = vld [vmem:[%s1 + $0x288] sm:$0xf]
      %v1423 = vld [vmem:[%s1 + $0x28c] sm:$0xf]
      %v1424 = vld [vmem:[%s1 + $0x290] sm:$0xf]
      %v1425 = vld [vmem:[%s1 + $0x294] sm:$0xf]
      %v1426 = vld [vmem:[%s1 + $0x298] sm:$0xf]
      %v1427 = vld [vmem:[%s1 + $0x29c] sm:$0xf]
      %v1428 = vld [vmem:[%s1 + $0x2a0] sm:$0xf]
      %v1429 = vld [vmem:[%s1 + $0x2a4] sm:$0xf]
      %v1430 = vld [vmem:[%s1 + $0x2a8] sm:$0xf]
      %v1431 = vld [vmem:[%s1 + $0x2ac] sm:$0xf]
      %v1432 = vld [vmem:[%s1 + $0x2b0] sm:$0xf]
      %v1433 = vld [vmem:[%s1 + $0x2b4] sm:$0xf]
      %v1434 = vld [vmem:[%s1 + $0x2b8] sm:$0xf]
      %v1435 = vld [vmem:[%s1 + $0x2bc] sm:$0xf]
      %v1452 = vunpack.c.l.b16 %v1420
      %v1453 = vunpack.c.l.b16 %v1421
      %v1454 = vunpack.c.l.b16 %v1422
      %v1455 = vunpack.c.l.b16 %v1423
      %v1456 = vunpack.c.l.b16 %v1424
      %v1457 = vunpack.c.l.b16 %v1425
      %v1458 = vunpack.c.l.b16 %v1426
      %v1459 = vunpack.c.l.b16 %v1427
      %v1460 = vunpack.c.l.b16 %v1428
      %v1461 = vunpack.c.l.b16 %v1429
      %v1462 = vunpack.c.l.b16 %v1430
      %v1463 = vunpack.c.l.b16 %v1431
      %v1464 = vunpack.c.l.b16 %v1432
      %v1465 = vunpack.c.l.b16 %v1433
      %v1466 = vunpack.c.l.b16 %v1434
      %v1467 = vunpack.c.l.b16 %v1435
      %v1468 = vpack.c.b16 %v1453, %v1452
      %v1469 = vpack.c.b16 %v1455, %v1454
      %v1470 = vpack.c.b16 %v1457, %v1456
      %v1471 = vpack.c.b16 %v1459, %v1458
      %v1472 = vpack.c.b16 %v1461, %v1460
      %v1473 = vpack.c.b16 %v1463, %v1462
      %v1474 = vpack.c.b16 %v1465, %v1464
      %v1475 = vpack.c.b16 %v1467, %v1466
      %1484 = vmatpush.bf16.msra.mxu0 %v1475
      %1485 = vmatpush.bf16.msra.mxu0 %v1474
      %1486 = vmatpush.bf16.msra.mxu0 %v1473
      %1487 = vmatpush.bf16.msra.mxu0 %v1472
      %1488 = vmatpush.bf16.msra.mxu0 %v1471
      %1489 = vmatpush.bf16.msra.mxu0 %v1470
      %1490 = vmatpush.bf16.msra.mxu0 %v1469
      %1491 = vmatpush.bf16.msra.mxu0 %v1468
      %1492 = vmatmul.bf16.gmra.mxu0 %v220
      %v1493 = vpop.f32.mrf.mxu0
      %v1494 = vadd.f32 0.0, %v1493
      %v1495 = vpop.f32.mrf.mxu0
      %v1496 = vadd.f32 0.0, %v1495
      %1497 = vmatmul.bf16.gmra.mxu0 %v221
      %v1498 = vpop.f32.mrf.mxu0
      %v1499 = vadd.f32 0.0, %v1498
      %v1500 = vpop.f32.mrf.mxu0
      %v1501 = vadd.f32 0.0, %v1500
      %1502 = vmatmul.bf16.gmra.mxu0 %v222
      %v1503 = vpop.f32.mrf.mxu0
      %v1504 = vadd.f32 0.0, %v1503
      %v1505 = vpop.f32.mrf.mxu0
      %v1506 = vadd.f32 0.0, %v1505
      %1507 = vmatmul.bf16.gmra.mxu0 %v1419
      %v1508 = vpop.f32.mrf.mxu0
      %v1509 = vadd.f32 0.0, %v1508
      %v1510 = vpop.f32.mrf.mxu0
      %v1511 = vadd.f32 0.0, %v1510
      %1512 = vdwg.mxu0
      %v1513 = vadd.f32 %v1411, %v1494
      %v1514 = vadd.f32 %v1412, %v1496
      %v1515 = vadd.f32 %v1413, %v1499
      %v1516 = vadd.f32 %v1414, %v1501
      %v1517 = vadd.f32 %v1415, %v1504
      %v1518 = vadd.f32 %v1416, %v1506
      %v1519 = vadd.f32 %v1417, %v1509
      %v1520 = vadd.f32 %v1418, %v1511
      %v1523 = vrot.slane %v213, 1
      %v1524 = vrot.slane %v214, 1
      %v1525 = vsel %vm255, %v1523, %v1524
      %v1527 = vpack.c.bf16 %v1525, %v985
      %v1528 = vld [vmem:[%s1 + $0x2c0] sm:$0xf]
      %v1529 = vld [vmem:[%s1 + $0x2c4] sm:$0xf]
      %v1530 = vld [vmem:[%s1 + $0x2c8] sm:$0xf]
      %v1531 = vld [vmem:[%s1 + $0x2cc] sm:$0xf]
      %v1532 = vld [vmem:[%s1 + $0x2d0] sm:$0xf]
      %v1533 = vld [vmem:[%s1 + $0x2d4] sm:$0xf]
      %v1534 = vld [vmem:[%s1 + $0x2d8] sm:$0xf]
      %v1535 = vld [vmem:[%s1 + $0x2dc] sm:$0xf]
      %v1536 = vld [vmem:[%s1 + $0x2e0] sm:$0xf]
      %v1537 = vld [vmem:[%s1 + $0x2e4] sm:$0xf]
      %v1538 = vld [vmem:[%s1 + $0x2e8] sm:$0xf]
      %v1539 = vld [vmem:[%s1 + $0x2ec] sm:$0xf]
      %v1540 = vld [vmem:[%s1 + $0x2f0] sm:$0xf]
      %v1541 = vld [vmem:[%s1 + $0x2f4] sm:$0xf]
      %v1542 = vld [vmem:[%s1 + $0x2f8] sm:$0xf]
      %v1543 = vld [vmem:[%s1 + $0x2fc] sm:$0xf]
      %v1560 = vunpack.c.l.b16 %v1528
      %v1561 = vunpack.c.l.b16 %v1529
      %v1562 = vunpack.c.l.b16 %v1530
      %v1563 = vunpack.c.l.b16 %v1531
      %v1564 = vunpack.c.l.b16 %v1532
      %v1565 = vunpack.c.l.b16 %v1533
      %v1566 = vunpack.c.l.b16 %v1534
      %v1567 = vunpack.c.l.b16 %v1535
      %v1568 = vunpack.c.l.b16 %v1536
      %v1569 = vunpack.c.l.b16 %v1537
      %v1570 = vunpack.c.l.b16 %v1538
      %v1571 = vunpack.c.l.b16 %v1539
      %v1572 = vunpack.c.l.b16 %v1540
      %v1573 = vunpack.c.l.b16 %v1541
      %v1574 = vunpack.c.l.b16 %v1542
      %v1575 = vunpack.c.l.b16 %v1543
      %v1576 = vpack.c.b16 %v1561, %v1560
      %v1577 = vpack.c.b16 %v1563, %v1562
      %v1578 = vpack.c.b16 %v1565, %v1564
      %v1579 = vpack.c.b16 %v1567, %v1566
      %v1580 = vpack.c.b16 %v1569, %v1568
      %v1581 = vpack.c.b16 %v1571, %v1570
      %v1582 = vpack.c.b16 %v1573, %v1572
      %v1583 = vpack.c.b16 %v1575, %v1574
      %1592 = vmatpush.bf16.msra.mxu0 %v1583
      %1593 = vmatpush.bf16.msra.mxu0 %v1582
      %1594 = vmatpush.bf16.msra.mxu0 %v1581
      %1595 = vmatpush.bf16.msra.mxu0 %v1580
      %1596 = vmatpush.bf16.msra.mxu0 %v1579
      %1597 = vmatpush.bf16.msra.mxu0 %v1578
      %1598 = vmatpush.bf16.msra.mxu0 %v1577
      %1599 = vmatpush.bf16.msra.mxu0 %v1576
      %1600 = vmatmul.bf16.gmra.mxu0 %v289
      %v1601 = vpop.f32.mrf.mxu0
      %v1602 = vadd.f32 0.0, %v1601
      %v1603 = vpop.f32.mrf.mxu0
      %v1604 = vadd.f32 0.0, %v1603
      %1605 = vmatmul.bf16.gmra.mxu0 %v290
      %v1606 = vpop.f32.mrf.mxu0
      %v1607 = vadd.f32 0.0, %v1606
      %v1608 = vpop.f32.mrf.mxu0
      %v1609 = vadd.f32 0.0, %v1608
      %1610 = vmatmul.bf16.gmra.mxu0 %v291
      %v1611 = vpop.f32.mrf.mxu0
      %v1612 = vadd.f32 0.0, %v1611
      %v1613 = vpop.f32.mrf.mxu0
      %v1614 = vadd.f32 0.0, %v1613
      %1615 = vmatmul.bf16.gmra.mxu0 %v1527
      %v1616 = vpop.f32.mrf.mxu0
      %v1617 = vadd.f32 0.0, %v1616
      %v1618 = vpop.f32.mrf.mxu0
      %v1619 = vadd.f32 0.0, %v1618
      %1620 = vdwg.mxu0
      %v1621 = vadd.f32 %v1513, %v1602
      %v1622 = vadd.f32 %v1514, %v1604
      %v1623 = vadd.f32 %v1515, %v1607
      %v1624 = vadd.f32 %v1516, %v1609
      %v1625 = vadd.f32 %v1517, %v1612
      %v1626 = vadd.f32 %v1518, %v1614
      %v1627 = vadd.f32 %v1519, %v1617
      %v1628 = vadd.f32 %v1520, %v1619
      %v1629 = vrot.slane %v213, 2
      %v1630 = vrot.slane %v214, 2
      %v1631 = vsel %vm462, %v1629, %v1630
      %v1633 = vpack.c.bf16 %v1631, %v1094
      %v1634 = vld [vmem:[%s1 + $0x300] sm:$0xf]
      %v1635 = vld [vmem:[%s1 + $0x304] sm:$0xf]
      %v1636 = vld [vmem:[%s1 + $0x308] sm:$0xf]
      %v1637 = vld [vmem:[%s1 + $0x30c] sm:$0xf]
      %v1638 = vld [vmem:[%s1 + $0x310] sm:$0xf]
      %v1639 = vld [vmem:[%s1 + $0x314] sm:$0xf]
      %v1640 = vld [vmem:[%s1 + $0x318] sm:$0xf]
      %v1641 = vld [vmem:[%s1 + $0x31c] sm:$0xf]
      %v1642 = vld [vmem:[%s1 + $0x320] sm:$0xf]
      %v1643 = vld [vmem:[%s1 + $0x324] sm:$0xf]
      %v1644 = vld [vmem:[%s1 + $0x328] sm:$0xf]
      %v1645 = vld [vmem:[%s1 + $0x32c] sm:$0xf]
      %v1646 = vld [vmem:[%s1 + $0x330] sm:$0xf]
      %v1647 = vld [vmem:[%s1 + $0x334] sm:$0xf]
      %v1648 = vld [vmem:[%s1 + $0x338] sm:$0xf]
      %v1649 = vld [vmem:[%s1 + $0x33c] sm:$0xf]
      %v1666 = vunpack.c.l.b16 %v1634
      %v1667 = vunpack.c.l.b16 %v1635
      %v1668 = vunpack.c.l.b16 %v1636
      %v1669 = vunpack.c.l.b16 %v1637
      %v1670 = vunpack.c.l.b16 %v1638
      %v1671 = vunpack.c.l.b16 %v1639
      %v1672 = vunpack.c.l.b16 %v1640
      %v1673 = vunpack.c.l.b16 %v1641
      %v1674 = vunpack.c.l.b16 %v1642
      %v1675 = vunpack.c.l.b16 %v1643
      %v1676 = vunpack.c.l.b16 %v1644
      %v1677 = vunpack.c.l.b16 %v1645
      %v1678 = vunpack.c.l.b16 %v1646
      %v1679 = vunpack.c.l.b16 %v1647
      %v1680 = vunpack.c.l.b16 %v1648
      %v1681 = vunpack.c.l.b16 %v1649
      %v1682 = vpack.c.b16 %v1667, %v1666
      %v1683 = vpack.c.b16 %v1669, %v1668
      %v1684 = vpack.c.b16 %v1671, %v1670
      %v1685 = vpack.c.b16 %v1673, %v1672
      %v1686 = vpack.c.b16 %v1675, %v1674
      %v1687 = vpack.c.b16 %v1677, %v1676
      %v1688 = vpack.c.b16 %v1679, %v1678
      %v1689 = vpack.c.b16 %v1681, %v1680
      %1698 = vmatpush.bf16.msra.mxu0 %v1689
      %1699 = vmatpush.bf16.msra.mxu0 %v1688
      %1700 = vmatpush.bf16.msra.mxu0 %v1687
      %1701 = vmatpush.bf16.msra.mxu0 %v1686
      %1702 = vmatpush.bf16.msra.mxu0 %v1685
      %1703 = vmatpush.bf16.msra.mxu0 %v1684
      %1704 = vmatpush.bf16.msra.mxu0 %v1683
      %1705 = vmatpush.bf16.msra.mxu0 %v1682
      %1706 = vmatmul.bf16.gmra.mxu0 %v496
      %v1707 = vpop.f32.mrf.mxu0
      %v1708 = vadd.f32 0.0, %v1707
      %v1709 = vpop.f32.mrf.mxu0
      %v1710 = vadd.f32 0.0, %v1709
      %1711 = vmatmul.bf16.gmra.mxu0 %v497
      %v1712 = vpop.f32.mrf.mxu0
      %v1713 = vadd.f32 0.0, %v1712
      %v1714 = vpop.f32.mrf.mxu0
      %v1715 = vadd.f32 0.0, %v1714
      %1716 = vmatmul.bf16.gmra.mxu0 %v498
      %v1717 = vpop.f32.mrf.mxu0
      %v1718 = vadd.f32 0.0, %v1717
      %v1719 = vpop.f32.mrf.mxu0
      %v1720 = vadd.f32 0.0, %v1719
      %1721 = vmatmul.bf16.gmra.mxu0 %v1633
      %v1722 = vpop.f32.mrf.mxu0
      %v1723 = vadd.f32 0.0, %v1722
      %v1724 = vpop.f32.mrf.mxu0
      %v1725 = vadd.f32 0.0, %v1724
      %1726 = vdwg.mxu0
      %v1727 = vadd.f32 %v1621, %v1708
      %v1728 = vadd.f32 %v1622, %v1710
      %v1729 = vadd.f32 %v1623, %v1713
      %v1730 = vadd.f32 %v1624, %v1715
      %v1731 = vadd.f32 %v1625, %v1718
      %v1732 = vadd.f32 %v1626, %v1720
      %v1733 = vadd.f32 %v1627, %v1723
      %v1734 = vadd.f32 %v1628, %v1725
      %v1735 = vrot.slane %v213, 3
      %v1736 = vrot.slane %v214, 3
      %v1737 = vsel %vm600, %v1735, %v1736
      %v1739 = vpack.c.bf16 %v1737, %v1203
      %v1740 = vld [vmem:[%s1 + $0x340] sm:$0xf]
      %v1741 = vld [vmem:[%s1 + $0x344] sm:$0xf]
      %v1742 = vld [vmem:[%s1 + $0x348] sm:$0xf]
      %v1743 = vld [vmem:[%s1 + $0x34c] sm:$0xf]
      %v1744 = vld [vmem:[%s1 + $0x350] sm:$0xf]
      %v1745 = vld [vmem:[%s1 + $0x354] sm:$0xf]
      %v1746 = vld [vmem:[%s1 + $0x358] sm:$0xf]
      %v1747 = vld [vmem:[%s1 + $0x35c] sm:$0xf]
      %v1748 = vld [vmem:[%s1 + $0x360] sm:$0xf]
      %v1749 = vld [vmem:[%s1 + $0x364] sm:$0xf]
      %v1750 = vld [vmem:[%s1 + $0x368] sm:$0xf]
      %v1751 = vld [vmem:[%s1 + $0x36c] sm:$0xf]
      %v1752 = vld [vmem:[%s1 + $0x370] sm:$0xf]
      %v1753 = vld [vmem:[%s1 + $0x374] sm:$0xf]
      %v1754 = vld [vmem:[%s1 + $0x378] sm:$0xf]
      %v1755 = vld [vmem:[%s1 + $0x37c] sm:$0xf]
      %v1772 = vunpack.c.l.b16 %v1740
      %v1773 = vunpack.c.l.b16 %v1741
      %v1774 = vunpack.c.l.b16 %v1742
      %v1775 = vunpack.c.l.b16 %v1743
      %v1776 = vunpack.c.l.b16 %v1744
      %v1777 = vunpack.c.l.b16 %v1745
      %v1778 = vunpack.c.l.b16 %v1746
      %v1779 = vunpack.c.l.b16 %v1747
      %v1780 = vunpack.c.l.b16 %v1748
      %v1781 = vunpack.c.l.b16 %v1749
      %v1782 = vunpack.c.l.b16 %v1750
      %v1783 = vunpack.c.l.b16 %v1751
      %v1784 = vunpack.c.l.b16 %v1752
      %v1785 = vunpack.c.l.b16 %v1753
      %v1786 = vunpack.c.l.b16 %v1754
      %v1787 = vunpack.c.l.b16 %v1755
      %v1788 = vpack.c.b16 %v1773, %v1772
      %v1789 = vpack.c.b16 %v1775, %v1774
      %v1790 = vpack.c.b16 %v1777, %v1776
      %v1791 = vpack.c.b16 %v1779, %v1778
      %v1792 = vpack.c.b16 %v1781, %v1780
      %v1793 = vpack.c.b16 %v1783, %v1782
      %v1794 = vpack.c.b16 %v1785, %v1784
      %v1795 = vpack.c.b16 %v1787, %v1786
      %1804 = vmatpush.bf16.msra.mxu0 %v1795
      %1805 = vmatpush.bf16.msra.mxu0 %v1794
      %1806 = vmatpush.bf16.msra.mxu0 %v1793
      %1807 = vmatpush.bf16.msra.mxu0 %v1792
      %1808 = vmatpush.bf16.msra.mxu0 %v1791
      %1809 = vmatpush.bf16.msra.mxu0 %v1790
      %1810 = vmatpush.bf16.msra.mxu0 %v1789
      %1811 = vmatpush.bf16.msra.mxu0 %v1788
      %1812 = vmatmul.bf16.gmra.mxu0 %v634
      %v1813 = vpop.f32.mrf.mxu0
      %v1814 = vadd.f32 0.0, %v1813
      %v1815 = vpop.f32.mrf.mxu0
      %v1816 = vadd.f32 0.0, %v1815
      %1817 = vmatmul.bf16.gmra.mxu0 %v635
      %v1818 = vpop.f32.mrf.mxu0
      %v1819 = vadd.f32 0.0, %v1818
      %v1820 = vpop.f32.mrf.mxu0
      %v1821 = vadd.f32 0.0, %v1820
      %1822 = vmatmul.bf16.gmra.mxu0 %v636
      %v1823 = vpop.f32.mrf.mxu0
      %v1824 = vadd.f32 0.0, %v1823
      %v1825 = vpop.f32.mrf.mxu0
      %v1826 = vadd.f32 0.0, %v1825
      %1827 = vmatmul.bf16.gmra.mxu0 %v1739
      %v1828 = vpop.f32.mrf.mxu0
      %v1829 = vadd.f32 0.0, %v1828
      %v1830 = vpop.f32.mrf.mxu0
      %v1831 = vadd.f32 0.0, %v1830
      %1832 = vdwg.mxu0
      %v1833 = vadd.f32 %v1727, %v1814
      %v1834 = vadd.f32 %v1728, %v1816
      %v1835 = vadd.f32 %v1729, %v1819
      %v1836 = vadd.f32 %v1730, %v1821
      %v1837 = vadd.f32 %v1731, %v1824
      %v1838 = vadd.f32 %v1732, %v1826
      %v1839 = vadd.f32 %v1733, %v1829
      %v1840 = vadd.f32 %v1734, %v1831
      %v1841 = vrot.slane %v213, 4
      %v1842 = vrot.slane %v214, 4
      %v1843 = vsel %vm738, %v1841, %v1842
      %v1845 = vpack.c.bf16 %v1843, %v1312
      %v1846 = vld [vmem:[%s1 + $0x380] sm:$0xf]
      %v1847 = vld [vmem:[%s1 + $0x384] sm:$0xf]
      %v1848 = vld [vmem:[%s1 + $0x388] sm:$0xf]
      %v1849 = vld [vmem:[%s1 + $0x38c] sm:$0xf]
      %v1850 = vld [vmem:[%s1 + $0x390] sm:$0xf]
      %v1851 = vld [vmem:[%s1 + $0x394] sm:$0xf]
      %v1852 = vld [vmem:[%s1 + $0x398] sm:$0xf]
      %v1853 = vld [vmem:[%s1 + $0x39c] sm:$0xf]
      %v1854 = vld [vmem:[%s1 + $0x3a0] sm:$0xf]
      %v1855 = vld [vmem:[%s1 + $0x3a4] sm:$0xf]
      %v1856 = vld [vmem:[%s1 + $0x3a8] sm:$0xf]
      %v1857 = vld [vmem:[%s1 + $0x3ac] sm:$0xf]
      %v1858 = vld [vmem:[%s1 + $0x3b0] sm:$0xf]
      %v1859 = vld [vmem:[%s1 + $0x3b4] sm:$0xf]
      %v1860 = vld [vmem:[%s1 + $0x3b8] sm:$0xf]
      %v1861 = vld [vmem:[%s1 + $0x3bc] sm:$0xf]
      %v1878 = vunpack.c.l.b16 %v1846
      %v1879 = vunpack.c.l.b16 %v1847
      %v1880 = vunpack.c.l.b16 %v1848
      %v1881 = vunpack.c.l.b16 %v1849
      %v1882 = vunpack.c.l.b16 %v1850
      %v1883 = vunpack.c.l.b16 %v1851
      %v1884 = vunpack.c.l.b16 %v1852
      %v1885 = vunpack.c.l.b16 %v1853
      %v1886 = vunpack.c.l.b16 %v1854
      %v1887 = vunpack.c.l.b16 %v1855
      %v1888 = vunpack.c.l.b16 %v1856
      %v1889 = vunpack.c.l.b16 %v1857
      %v1890 = vunpack.c.l.b16 %v1858
      %v1891 = vunpack.c.l.b16 %v1859
      %v1892 = vunpack.c.l.b16 %v1860
      %v1893 = vunpack.c.l.b16 %v1861
      %v1894 = vpack.c.b16 %v1879, %v1878
      %v1895 = vpack.c.b16 %v1881, %v1880
      %v1896 = vpack.c.b16 %v1883, %v1882
      %v1897 = vpack.c.b16 %v1885, %v1884
      %v1898 = vpack.c.b16 %v1887, %v1886
      %v1899 = vpack.c.b16 %v1889, %v1888
      %v1900 = vpack.c.b16 %v1891, %v1890
      %v1901 = vpack.c.b16 %v1893, %v1892
      %1910 = vmatpush.bf16.msra.mxu0 %v1901
      %1911 = vmatpush.bf16.msra.mxu0 %v1900
      %1912 = vmatpush.bf16.msra.mxu0 %v1899
      %1913 = vmatpush.bf16.msra.mxu0 %v1898
      %1914 = vmatpush.bf16.msra.mxu0 %v1897
      %1915 = vmatpush.bf16.msra.mxu0 %v1896
      %1916 = vmatpush.bf16.msra.mxu0 %v1895
      %1917 = vmatpush.bf16.msra.mxu0 %v1894
      %1918 = vmatmul.bf16.gmra.mxu0 %v772
      %v1919 = vpop.f32.mrf.mxu0
      %v1920 = vadd.f32 0.0, %v1919
      %v1921 = vpop.f32.mrf.mxu0
      %v1922 = vadd.f32 0.0, %v1921
      %1923 = vmatmul.bf16.gmra.mxu0 %v773
      %v1924 = vpop.f32.mrf.mxu0
      %v1925 = vadd.f32 0.0, %v1924
      %v1926 = vpop.f32.mrf.mxu0
      %v1927 = vadd.f32 0.0, %v1926
      %1928 = vmatmul.bf16.gmra.mxu0 %v774
      %v1929 = vpop.f32.mrf.mxu0
      %v1930 = vadd.f32 0.0, %v1929
      %v1931 = vpop.f32.mrf.mxu0
      %v1932 = vadd.f32 0.0, %v1931
      %1933 = vmatmul.bf16.gmra.mxu0 %v1845
      %v1934 = vpop.f32.mrf.mxu0
      %v1935 = vadd.f32 0.0, %v1934
      %v1936 = vpop.f32.mrf.mxu0
      %v1937 = vadd.f32 0.0, %v1936
      %1938 = vdwg.mxu0
      %v1939 = vadd.f32 %v1833, %v1920
      %v1940 = vadd.f32 %v1834, %v1922
      %v1941 = vadd.f32 %v1835, %v1925
      %v1942 = vadd.f32 %v1836, %v1927
      %v1943 = vadd.f32 %v1837, %v1930
      %v1944 = vadd.f32 %v1838, %v1932
      %v1945 = vadd.f32 %v1839, %v1935
      %v1946 = vadd.f32 %v1840, %v1937
      %v1947 = vpack.c.bf16 %v215, %v213
      %v1948 = vld [vmem:[%s1 + $0x3c0] sm:$0xf]
      %v1949 = vld [vmem:[%s1 + $0x3c4] sm:$0xf]
      %v1950 = vld [vmem:[%s1 + $0x3c8] sm:$0xf]
      %v1951 = vld [vmem:[%s1 + $0x3cc] sm:$0xf]
      %v1952 = vld [vmem:[%s1 + $0x3d0] sm:$0xf]
      %v1953 = vld [vmem:[%s1 + $0x3d4] sm:$0xf]
      %v1954 = vld [vmem:[%s1 + $0x3d8] sm:$0xf]
      %v1955 = vld [vmem:[%s1 + $0x3dc] sm:$0xf]
      %v1956 = vld [vmem:[%s1 + $0x3e0] sm:$0xf]
      %v1957 = vld [vmem:[%s1 + $0x3e4] sm:$0xf]
      %v1958 = vld [vmem:[%s1 + $0x3e8] sm:$0xf]
      %v1959 = vld [vmem:[%s1 + $0x3ec] sm:$0xf]
      %v1960 = vld [vmem:[%s1 + $0x3f0] sm:$0xf]
      %v1961 = vld [vmem:[%s1 + $0x3f4] sm:$0xf]
      %v1962 = vld [vmem:[%s1 + $0x3f8] sm:$0xf]
      %v1963 = vld [vmem:[%s1 + $0x3fc] sm:$0xf]
      %v1980 = vunpack.c.l.b16 %v1948
      %v1981 = vunpack.c.l.b16 %v1949
      %v1982 = vunpack.c.l.b16 %v1950
      %v1983 = vunpack.c.l.b16 %v1951
      %v1984 = vunpack.c.l.b16 %v1952
      %v1985 = vunpack.c.l.b16 %v1953
      %v1986 = vunpack.c.l.b16 %v1954
      %v1987 = vunpack.c.l.b16 %v1955
      %v1988 = vunpack.c.l.b16 %v1956
      %v1989 = vunpack.c.l.b16 %v1957
      %v1990 = vunpack.c.l.b16 %v1958
      %v1991 = vunpack.c.l.b16 %v1959
      %v1992 = vunpack.c.l.b16 %v1960
      %v1993 = vunpack.c.l.b16 %v1961
      %v1994 = vunpack.c.l.b16 %v1962
      %v1995 = vunpack.c.l.b16 %v1963
      %v1996 = vpack.c.b16 %v1981, %v1980
      %v1997 = vpack.c.b16 %v1983, %v1982
      %v1998 = vpack.c.b16 %v1985, %v1984
      %v1999 = vpack.c.b16 %v1987, %v1986
      %v2000 = vpack.c.b16 %v1989, %v1988
      %v2001 = vpack.c.b16 %v1991, %v1990
      %v2002 = vpack.c.b16 %v1993, %v1992
      %v2003 = vpack.c.b16 %v1995, %v1994
      %2012 = vmatpush.bf16.msra.mxu0 %v2003
      %2013 = vmatpush.bf16.msra.mxu0 %v2002
      %2014 = vmatpush.bf16.msra.mxu0 %v2001
      %2015 = vmatpush.bf16.msra.mxu0 %v2000
      %2016 = vmatpush.bf16.msra.mxu0 %v1999
      %2017 = vmatpush.bf16.msra.mxu0 %v1998
      %2018 = vmatpush.bf16.msra.mxu0 %v1997
      %2019 = vmatpush.bf16.msra.mxu0 %v1996
      %2020 = vmatmul.bf16.gmra.mxu0 %v877
      %v2021 = vpop.f32.mrf.mxu0
      %v2022 = vadd.f32 0.0, %v2021
      %v2023 = vpop.f32.mrf.mxu0
      %v2024 = vadd.f32 0.0, %v2023
      %2025 = vmatmul.bf16.gmra.mxu0 %v878
      %v2026 = vpop.f32.mrf.mxu0
      %v2027 = vadd.f32 0.0, %v2026
      %v2028 = vpop.f32.mrf.mxu0
      %v2029 = vadd.f32 0.0, %v2028
      %2030 = vmatmul.bf16.gmra.mxu0 %v879
      %v2031 = vpop.f32.mrf.mxu0
      %v2032 = vadd.f32 0.0, %v2031
      %v2033 = vpop.f32.mrf.mxu0
      %v2034 = vadd.f32 0.0, %v2033
      %2035 = vmatmul.bf16.gmra.mxu0 %v1947
      %v2036 = vpop.f32.mrf.mxu0
      %v2037 = vadd.f32 0.0, %v2036
      %v2038 = vpop.f32.mrf.mxu0
      %v2039 = vadd.f32 0.0, %v2038
      %2040 = vdwg.mxu0
      %v2041 = vadd.f32 %v1939, %v2022
      %v2042 = vadd.f32 %v1940, %v2024
      %v2043 = vadd.f32 %v1941, %v2027
      %v2044 = vadd.f32 %v1942, %v2029
      %v2045 = vadd.f32 %v1943, %v2032
      %v2046 = vadd.f32 %v1944, %v2034
      %v2047 = vadd.f32 %v1945, %v2037
      %v2048 = vadd.f32 %v1946, %v2039
      %v2051 = vrot.slane %v215, 1
      %v2052 = vrot.slane %v216, 1
      %v2053 = vsel %vm255, %v2051, %v2052
      %v2055 = vpack.c.bf16 %v2053, %v1525
      %v2056 = vld [vmem:[%s1 + $0x400] sm:$0xf]
      %v2057 = vld [vmem:[%s1 + $0x404] sm:$0xf]
      %v2058 = vld [vmem:[%s1 + $0x408] sm:$0xf]
      %v2059 = vld [vmem:[%s1 + $0x40c] sm:$0xf]
      %v2060 = vld [vmem:[%s1 + $0x410] sm:$0xf]
      %v2061 = vld [vmem:[%s1 + $0x414] sm:$0xf]
      %v2062 = vld [vmem:[%s1 + $0x418] sm:$0xf]
      %v2063 = vld [vmem:[%s1 + $0x41c] sm:$0xf]
      %v2064 = vld [vmem:[%s1 + $0x420] sm:$0xf]
      %v2065 = vld [vmem:[%s1 + $0x424] sm:$0xf]
      %v2066 = vld [vmem:[%s1 + $0x428] sm:$0xf]
      %v2067 = vld [vmem:[%s1 + $0x42c] sm:$0xf]
      %v2068 = vld [vmem:[%s1 + $0x430] sm:$0xf]
      %v2069 = vld [vmem:[%s1 + $0x434] sm:$0xf]
      %v2070 = vld [vmem:[%s1 + $0x438] sm:$0xf]
      %v2071 = vld [vmem:[%s1 + $0x43c] sm:$0xf]
      %v2088 = vunpack.c.l.b16 %v2056
      %v2089 = vunpack.c.l.b16 %v2057
      %v2090 = vunpack.c.l.b16 %v2058
      %v2091 = vunpack.c.l.b16 %v2059
      %v2092 = vunpack.c.l.b16 %v2060
      %v2093 = vunpack.c.l.b16 %v2061
      %v2094 = vunpack.c.l.b16 %v2062
      %v2095 = vunpack.c.l.b16 %v2063
      %v2096 = vunpack.c.l.b16 %v2064
      %v2097 = vunpack.c.l.b16 %v2065
      %v2098 = vunpack.c.l.b16 %v2066
      %v2099 = vunpack.c.l.b16 %v2067
      %v2100 = vunpack.c.l.b16 %v2068
      %v2101 = vunpack.c.l.b16 %v2069
      %v2102 = vunpack.c.l.b16 %v2070
      %v2103 = vunpack.c.l.b16 %v2071
      %v2104 = vpack.c.b16 %v2089, %v2088
      %v2105 = vpack.c.b16 %v2091, %v2090
      %v2106 = vpack.c.b16 %v2093, %v2092
      %v2107 = vpack.c.b16 %v2095, %v2094
      %v2108 = vpack.c.b16 %v2097, %v2096
      %v2109 = vpack.c.b16 %v2099, %v2098
      %v2110 = vpack.c.b16 %v2101, %v2100
      %v2111 = vpack.c.b16 %v2103, %v2102
      %2120 = vmatpush.bf16.msra.mxu0 %v2111
      %2121 = vmatpush.bf16.msra.mxu0 %v2110
      %2122 = vmatpush.bf16.msra.mxu0 %v2109
      %2123 = vmatpush.bf16.msra.mxu0 %v2108
      %2124 = vmatpush.bf16.msra.mxu0 %v2107
      %2125 = vmatpush.bf16.msra.mxu0 %v2106
      %2126 = vmatpush.bf16.msra.mxu0 %v2105
      %2127 = vmatpush.bf16.msra.mxu0 %v2104
      %2128 = vmatmul.bf16.gmra.mxu0 %v988
      %v2129 = vpop.f32.mrf.mxu0
      %v2130 = vadd.f32 0.0, %v2129
      %v2131 = vpop.f32.mrf.mxu0
      %v2132 = vadd.f32 0.0, %v2131
      %2133 = vmatmul.bf16.gmra.mxu0 %v989
      %v2134 = vpop.f32.mrf.mxu0
      %v2135 = vadd.f32 0.0, %v2134
      %v2136 = vpop.f32.mrf.mxu0
      %v2137 = vadd.f32 0.0, %v2136
      %2138 = vmatmul.bf16.gmra.mxu0 %v990
      %v2139 = vpop.f32.mrf.mxu0
      %v2140 = vadd.f32 0.0, %v2139
      %v2141 = vpop.f32.mrf.mxu0
      %v2142 = vadd.f32 0.0, %v2141
      %2143 = vmatmul.bf16.gmra.mxu0 %v2055
      %v2144 = vpop.f32.mrf.mxu0
      %v2145 = vadd.f32 0.0, %v2144
      %v2146 = vpop.f32.mrf.mxu0
      %v2147 = vadd.f32 0.0, %v2146
      %2148 = vdwg.mxu0
      %v2149 = vadd.f32 %v2041, %v2130
      %v2150 = vadd.f32 %v2042, %v2132
      %v2151 = vadd.f32 %v2043, %v2135
      %v2152 = vadd.f32 %v2044, %v2137
      %v2153 = vadd.f32 %v2045, %v2140
      %v2154 = vadd.f32 %v2046, %v2142
      %v2155 = vadd.f32 %v2047, %v2145
      %v2156 = vadd.f32 %v2048, %v2147
      %v2157 = vrot.slane %v215, 2
      %v2158 = vrot.slane %v216, 2
      %v2159 = vsel %vm462, %v2157, %v2158
      %v2161 = vpack.c.bf16 %v2159, %v1631
      %v2162 = vld [vmem:[%s1 + $0x440] sm:$0xf]
      %v2163 = vld [vmem:[%s1 + $0x444] sm:$0xf]
      %v2164 = vld [vmem:[%s1 + $0x448] sm:$0xf]
      %v2165 = vld [vmem:[%s1 + $0x44c] sm:$0xf]
      %v2166 = vld [vmem:[%s1 + $0x450] sm:$0xf]
      %v2167 = vld [vmem:[%s1 + $0x454] sm:$0xf]
      %v2168 = vld [vmem:[%s1 + $0x458] sm:$0xf]
      %v2169 = vld [vmem:[%s1 + $0x45c] sm:$0xf]
      %v2170 = vld [vmem:[%s1 + $0x460] sm:$0xf]
      %v2171 = vld [vmem:[%s1 + $0x464] sm:$0xf]
      %v2172 = vld [vmem:[%s1 + $0x468] sm:$0xf]
      %v2173 = vld [vmem:[%s1 + $0x46c] sm:$0xf]
      %v2174 = vld [vmem:[%s1 + $0x470] sm:$0xf]
      %v2175 = vld [vmem:[%s1 + $0x474] sm:$0xf]
      %v2176 = vld [vmem:[%s1 + $0x478] sm:$0xf]
      %v2177 = vld [vmem:[%s1 + $0x47c] sm:$0xf]
      %v2194 = vunpack.c.l.b16 %v2162
      %v2195 = vunpack.c.l.b16 %v2163
      %v2196 = vunpack.c.l.b16 %v2164
      %v2197 = vunpack.c.l.b16 %v2165
      %v2198 = vunpack.c.l.b16 %v2166
      %v2199 = vunpack.c.l.b16 %v2167
      %v2200 = vunpack.c.l.b16 %v2168
      %v2201 = vunpack.c.l.b16 %v2169
      %v2202 = vunpack.c.l.b16 %v2170
      %v2203 = vunpack.c.l.b16 %v2171
      %v2204 = vunpack.c.l.b16 %v2172
      %v2205 = vunpack.c.l.b16 %v2173
      %v2206 = vunpack.c.l.b16 %v2174
      %v2207 = vunpack.c.l.b16 %v2175
      %v2208 = vunpack.c.l.b16 %v2176
      %v2209 = vunpack.c.l.b16 %v2177
      %v2210 = vpack.c.b16 %v2195, %v2194
      %v2211 = vpack.c.b16 %v2197, %v2196
      %v2212 = vpack.c.b16 %v2199, %v2198
      %v2213 = vpack.c.b16 %v2201, %v2200
      %v2214 = vpack.c.b16 %v2203, %v2202
      %v2215 = vpack.c.b16 %v2205, %v2204
      %v2216 = vpack.c.b16 %v2207, %v2206
      %v2217 = vpack.c.b16 %v2209, %v2208
      %2226 = vmatpush.bf16.msra.mxu0 %v2217
      %2227 = vmatpush.bf16.msra.mxu0 %v2216
      %2228 = vmatpush.bf16.msra.mxu0 %v2215
      %2229 = vmatpush.bf16.msra.mxu0 %v2214
      %2230 = vmatpush.bf16.msra.mxu0 %v2213
      %2231 = vmatpush.bf16.msra.mxu0 %v2212
      %2232 = vmatpush.bf16.msra.mxu0 %v2211
      %2233 = vmatpush.bf16.msra.mxu0 %v2210
      %2234 = vmatmul.bf16.gmra.mxu0 %v1097
      %v2235 = vpop.f32.mrf.mxu0
      %v2236 = vadd.f32 0.0, %v2235
      %v2237 = vpop.f32.mrf.mxu0
      %v2238 = vadd.f32 0.0, %v2237
      %2239 = vmatmul.bf16.gmra.mxu0 %v1098
      %v2240 = vpop.f32.mrf.mxu0
      %v2241 = vadd.f32 0.0, %v2240
      %v2242 = vpop.f32.mrf.mxu0
      %v2243 = vadd.f32 0.0, %v2242
      %2244 = vmatmul.bf16.gmra.mxu0 %v1099
      %v2245 = vpop.f32.mrf.mxu0
      %v2246 = vadd.f32 0.0, %v2245
      %v2247 = vpop.f32.mrf.mxu0
      %v2248 = vadd.f32 0.0, %v2247
      %2249 = vmatmul.bf16.gmra.mxu0 %v2161
      %v2250 = vpop.f32.mrf.mxu0
      %v2251 = vadd.f32 0.0, %v2250
      %v2252 = vpop.f32.mrf.mxu0
      %v2253 = vadd.f32 0.0, %v2252
      %2254 = vdwg.mxu0
      %v2255 = vadd.f32 %v2149, %v2236
      %v2256 = vadd.f32 %v2150, %v2238
      %v2257 = vadd.f32 %v2151, %v2241
      %v2258 = vadd.f32 %v2152, %v2243
      %v2259 = vadd.f32 %v2153, %v2246
      %v2260 = vadd.f32 %v2154, %v2248
      %v2261 = vadd.f32 %v2155, %v2251
      %v2262 = vadd.f32 %v2156, %v2253
      %v2263 = vrot.slane %v215, 3
      %v2264 = vrot.slane %v216, 3
      %v2265 = vsel %vm600, %v2263, %v2264
      %v2267 = vpack.c.bf16 %v2265, %v1737
      %v2268 = vld [vmem:[%s1 + $0x480] sm:$0xf]
      %v2269 = vld [vmem:[%s1 + $0x484] sm:$0xf]
      %v2270 = vld [vmem:[%s1 + $0x488] sm:$0xf]
      %v2271 = vld [vmem:[%s1 + $0x48c] sm:$0xf]
      %v2272 = vld [vmem:[%s1 + $0x490] sm:$0xf]
      %v2273 = vld [vmem:[%s1 + $0x494] sm:$0xf]
      %v2274 = vld [vmem:[%s1 + $0x498] sm:$0xf]
      %v2275 = vld [vmem:[%s1 + $0x49c] sm:$0xf]
      %v2276 = vld [vmem:[%s1 + $0x4a0] sm:$0xf]
      %v2277 = vld [vmem:[%s1 + $0x4a4] sm:$0xf]
      %v2278 = vld [vmem:[%s1 + $0x4a8] sm:$0xf]
      %v2279 = vld [vmem:[%s1 + $0x4ac] sm:$0xf]
      %v2280 = vld [vmem:[%s1 + $0x4b0] sm:$0xf]
      %v2281 = vld [vmem:[%s1 + $0x4b4] sm:$0xf]
      %v2282 = vld [vmem:[%s1 + $0x4b8] sm:$0xf]
      %v2283 = vld [vmem:[%s1 + $0x4bc] sm:$0xf]
      %v2300 = vunpack.c.l.b16 %v2268
      %v2301 = vunpack.c.l.b16 %v2269
      %v2302 = vunpack.c.l.b16 %v2270
      %v2303 = vunpack.c.l.b16 %v2271
      %v2304 = vunpack.c.l.b16 %v2272
      %v2305 = vunpack.c.l.b16 %v2273
      %v2306 = vunpack.c.l.b16 %v2274
      %v2307 = vunpack.c.l.b16 %v2275
      %v2308 = vunpack.c.l.b16 %v2276
      %v2309 = vunpack.c.l.b16 %v2277
      %v2310 = vunpack.c.l.b16 %v2278
      %v2311 = vunpack.c.l.b16 %v2279
      %v2312 = vunpack.c.l.b16 %v2280
      %v2313 = vunpack.c.l.b16 %v2281
      %v2314 = vunpack.c.l.b16 %v2282
      %v2315 = vunpack.c.l.b16 %v2283
      %v2316 = vpack.c.b16 %v2301, %v2300
      %v2317 = vpack.c.b16 %v2303, %v2302
      %v2318 = vpack.c.b16 %v2305, %v2304
      %v2319 = vpack.c.b16 %v2307, %v2306
      %v2320 = vpack.c.b16 %v2309, %v2308
      %v2321 = vpack.c.b16 %v2311, %v2310
      %v2322 = vpack.c.b16 %v2313, %v2312
      %v2323 = vpack.c.b16 %v2315, %v2314
      %2332 = vmatpush.bf16.msra.mxu0 %v2323
      %2333 = vmatpush.bf16.msra.mxu0 %v2322
      %2334 = vmatpush.bf16.msra.mxu0 %v2321
      %2335 = vmatpush.bf16.msra.mxu0 %v2320
      %2336 = vmatpush.bf16.msra.mxu0 %v2319
      %2337 = vmatpush.bf16.msra.mxu0 %v2318
      %2338 = vmatpush.bf16.msra.mxu0 %v2317
      %2339 = vmatpush.bf16.msra.mxu0 %v2316
      %2340 = vmatmul.bf16.gmra.mxu0 %v1206
      %v2341 = vpop.f32.mrf.mxu0
      %v2342 = vadd.f32 0.0, %v2341
      %v2343 = vpop.f32.mrf.mxu0
      %v2344 = vadd.f32 0.0, %v2343
      %2345 = vmatmul.bf16.gmra.mxu0 %v1207
      %v2346 = vpop.f32.mrf.mxu0
      %v2347 = vadd.f32 0.0, %v2346
      %v2348 = vpop.f32.mrf.mxu0
      %v2349 = vadd.f32 0.0, %v2348
      %2350 = vmatmul.bf16.gmra.mxu0 %v1208
      %v2351 = vpop.f32.mrf.mxu0
      %v2352 = vadd.f32 0.0, %v2351
      %v2353 = vpop.f32.mrf.mxu0
      %v2354 = vadd.f32 0.0, %v2353
      %2355 = vmatmul.bf16.gmra.mxu0 %v2267
      %v2356 = vpop.f32.mrf.mxu0
      %v2357 = vadd.f32 0.0, %v2356
      %v2358 = vpop.f32.mrf.mxu0
      %v2359 = vadd.f32 0.0, %v2358
      %2360 = vdwg.mxu0
      %v2361 = vadd.f32 %v2255, %v2342
      %v2362 = vadd.f32 %v2256, %v2344
      %v2363 = vadd.f32 %v2257, %v2347
      %v2364 = vadd.f32 %v2258, %v2349
      %v2365 = vadd.f32 %v2259, %v2352
      %v2366 = vadd.f32 %v2260, %v2354
      %v2367 = vadd.f32 %v2261, %v2357
      %v2368 = vadd.f32 %v2262, %v2359
      %v2369 = vrot.slane %v215, 4
      %v2370 = vrot.slane %v216, 4
      %v2371 = vsel %vm738, %v2369, %v2370
      %v2373 = vpack.c.bf16 %v2371, %v1843
      %v2374 = vld [vmem:[%s1 + $0x4c0] sm:$0xf]
      %v2375 = vld [vmem:[%s1 + $0x4c4] sm:$0xf]
      %v2376 = vld [vmem:[%s1 + $0x4c8] sm:$0xf]
      %v2377 = vld [vmem:[%s1 + $0x4cc] sm:$0xf]
      %v2378 = vld [vmem:[%s1 + $0x4d0] sm:$0xf]
      %v2379 = vld [vmem:[%s1 + $0x4d4] sm:$0xf]
      %v2380 = vld [vmem:[%s1 + $0x4d8] sm:$0xf]
      %v2381 = vld [vmem:[%s1 + $0x4dc] sm:$0xf]
      %v2382 = vld [vmem:[%s1 + $0x4e0] sm:$0xf]
      %v2383 = vld [vmem:[%s1 + $0x4e4] sm:$0xf]
      %v2384 = vld [vmem:[%s1 + $0x4e8] sm:$0xf]
      %v2385 = vld [vmem:[%s1 + $0x4ec] sm:$0xf]
      %v2386 = vld [vmem:[%s1 + $0x4f0] sm:$0xf]
      %v2387 = vld [vmem:[%s1 + $0x4f4] sm:$0xf]
      %v2388 = vld [vmem:[%s1 + $0x4f8] sm:$0xf]
      %v2389 = vld [vmem:[%s1 + $0x4fc] sm:$0xf]
      %v2406 = vunpack.c.l.b16 %v2374
      %v2407 = vunpack.c.l.b16 %v2375
      %v2408 = vunpack.c.l.b16 %v2376
      %v2409 = vunpack.c.l.b16 %v2377
      %v2410 = vunpack.c.l.b16 %v2378
      %v2411 = vunpack.c.l.b16 %v2379
      %v2412 = vunpack.c.l.b16 %v2380
      %v2413 = vunpack.c.l.b16 %v2381
      %v2414 = vunpack.c.l.b16 %v2382
      %v2415 = vunpack.c.l.b16 %v2383
      %v2416 = vunpack.c.l.b16 %v2384
      %v2417 = vunpack.c.l.b16 %v2385
      %v2418 = vunpack.c.l.b16 %v2386
      %v2419 = vunpack.c.l.b16 %v2387
      %v2420 = vunpack.c.l.b16 %v2388
      %v2421 = vunpack.c.l.b16 %v2389
      %v2422 = vpack.c.b16 %v2407, %v2406
      %v2423 = vpack.c.b16 %v2409, %v2408
      %v2424 = vpack.c.b16 %v2411, %v2410
      %v2425 = vpack.c.b16 %v2413, %v2412
      %v2426 = vpack.c.b16 %v2415, %v2414
      %v2427 = vpack.c.b16 %v2417, %v2416
      %v2428 = vpack.c.b16 %v2419, %v2418
      %v2429 = vpack.c.b16 %v2421, %v2420
      %2438 = vmatpush.bf16.msra.mxu0 %v2429
      %2439 = vmatpush.bf16.msra.mxu0 %v2428
      %2440 = vmatpush.bf16.msra.mxu0 %v2427
      %2441 = vmatpush.bf16.msra.mxu0 %v2426
      %2442 = vmatpush.bf16.msra.mxu0 %v2425
      %2443 = vmatpush.bf16.msra.mxu0 %v2424
      %2444 = vmatpush.bf16.msra.mxu0 %v2423
      %2445 = vmatpush.bf16.msra.mxu0 %v2422
      %2446 = vmatmul.bf16.gmra.mxu0 %v1315
      %v2447 = vpop.f32.mrf.mxu0
      %v2448 = vadd.f32 0.0, %v2447
      %v2449 = vpop.f32.mrf.mxu0
      %v2450 = vadd.f32 0.0, %v2449
      %2451 = vmatmul.bf16.gmra.mxu0 %v1316
      %v2452 = vpop.f32.mrf.mxu0
      %v2453 = vadd.f32 0.0, %v2452
      %v2454 = vpop.f32.mrf.mxu0
      %v2455 = vadd.f32 0.0, %v2454
      %2456 = vmatmul.bf16.gmra.mxu0 %v1317
      %v2457 = vpop.f32.mrf.mxu0
      %v2458 = vadd.f32 0.0, %v2457
      %v2459 = vpop.f32.mrf.mxu0
      %v2460 = vadd.f32 0.0, %v2459
      %2461 = vmatmul.bf16.gmra.mxu0 %v2373
      %v2462 = vpop.f32.mrf.mxu0
      %v2463 = vadd.f32 0.0, %v2462
      %v2464 = vpop.f32.mrf.mxu0
      %v2465 = vadd.f32 0.0, %v2464
      %2466 = vdwg.mxu0
      %v2467 = vadd.f32 %v2361, %v2448
      %v2468 = vadd.f32 %v2362, %v2450
      %v2469 = vadd.f32 %v2363, %v2453
      %v2470 = vadd.f32 %v2364, %v2455
      %v2471 = vadd.f32 %v2365, %v2458
      %v2472 = vadd.f32 %v2366, %v2460
      %v2473 = vadd.f32 %v2367, %v2463
      %v2474 = vadd.f32 %v2368, %v2465
      %v2475 = vpack.c.bf16 %v217, %v215
      %v2476 = vld [vmem:[%s1 + $0x500] sm:$0xf]
      %v2477 = vld [vmem:[%s1 + $0x504] sm:$0xf]
      %v2478 = vld [vmem:[%s1 + $0x508] sm:$0xf]
      %v2479 = vld [vmem:[%s1 + $0x50c] sm:$0xf]
      %v2480 = vld [vmem:[%s1 + $0x510] sm:$0xf]
      %v2481 = vld [vmem:[%s1 + $0x514] sm:$0xf]
      %v2482 = vld [vmem:[%s1 + $0x518] sm:$0xf]
      %v2483 = vld [vmem:[%s1 + $0x51c] sm:$0xf]
      %v2484 = vld [vmem:[%s1 + $0x520] sm:$0xf]
      %v2485 = vld [vmem:[%s1 + $0x524] sm:$0xf]
      %v2486 = vld [vmem:[%s1 + $0x528] sm:$0xf]
      %v2487 = vld [vmem:[%s1 + $0x52c] sm:$0xf]
      %v2488 = vld [vmem:[%s1 + $0x530] sm:$0xf]
      %v2489 = vld [vmem:[%s1 + $0x534] sm:$0xf]
      %v2490 = vld [vmem:[%s1 + $0x538] sm:$0xf]
      %v2491 = vld [vmem:[%s1 + $0x53c] sm:$0xf]
      %v2508 = vunpack.c.l.b16 %v2476
      %v2509 = vunpack.c.l.b16 %v2477
      %v2510 = vunpack.c.l.b16 %v2478
      %v2511 = vunpack.c.l.b16 %v2479
      %v2512 = vunpack.c.l.b16 %v2480
      %v2513 = vunpack.c.l.b16 %v2481
      %v2514 = vunpack.c.l.b16 %v2482
      %v2515 = vunpack.c.l.b16 %v2483
      %v2516 = vunpack.c.l.b16 %v2484
      %v2517 = vunpack.c.l.b16 %v2485
      %v2518 = vunpack.c.l.b16 %v2486
      %v2519 = vunpack.c.l.b16 %v2487
      %v2520 = vunpack.c.l.b16 %v2488
      %v2521 = vunpack.c.l.b16 %v2489
      %v2522 = vunpack.c.l.b16 %v2490
      %v2523 = vunpack.c.l.b16 %v2491
      %v2524 = vpack.c.b16 %v2509, %v2508
      %v2525 = vpack.c.b16 %v2511, %v2510
      %v2526 = vpack.c.b16 %v2513, %v2512
      %v2527 = vpack.c.b16 %v2515, %v2514
      %v2528 = vpack.c.b16 %v2517, %v2516
      %v2529 = vpack.c.b16 %v2519, %v2518
      %v2530 = vpack.c.b16 %v2521, %v2520
      %v2531 = vpack.c.b16 %v2523, %v2522
      %2540 = vmatpush.bf16.msra.mxu0 %v2531
      %2541 = vmatpush.bf16.msra.mxu0 %v2530
      %2542 = vmatpush.bf16.msra.mxu0 %v2529
      %2543 = vmatpush.bf16.msra.mxu0 %v2528
      %2544 = vmatpush.bf16.msra.mxu0 %v2527
      %2545 = vmatpush.bf16.msra.mxu0 %v2526
      %2546 = vmatpush.bf16.msra.mxu0 %v2525
      %2547 = vmatpush.bf16.msra.mxu0 %v2524
      %2548 = vmatmul.bf16.gmra.mxu0 %v221
      %v2549 = vpop.f32.mrf.mxu0
      %v2550 = vadd.f32 0.0, %v2549
      %v2551 = vpop.f32.mrf.mxu0
      %v2552 = vadd.f32 0.0, %v2551
      %2553 = vmatmul.bf16.gmra.mxu0 %v222
      %v2554 = vpop.f32.mrf.mxu0
      %v2555 = vadd.f32 0.0, %v2554
      %v2556 = vpop.f32.mrf.mxu0
      %v2557 = vadd.f32 0.0, %v2556
      %2558 = vmatmul.bf16.gmra.mxu0 %v1419
      %v2559 = vpop.f32.mrf.mxu0
      %v2560 = vadd.f32 0.0, %v2559
      %v2561 = vpop.f32.mrf.mxu0
      %v2562 = vadd.f32 0.0, %v2561
      %2563 = vmatmul.bf16.gmra.mxu0 %v2475
      %v2564 = vpop.f32.mrf.mxu0
      %v2565 = vadd.f32 0.0, %v2564
      %v2566 = vpop.f32.mrf.mxu0
      %v2567 = vadd.f32 0.0, %v2566
      %2568 = vdwg.mxu0
      %v2569 = vadd.f32 %v2467, %v2550
      %v2570 = vadd.f32 %v2468, %v2552
      %v2571 = vadd.f32 %v2469, %v2555
      %v2572 = vadd.f32 %v2470, %v2557
      %v2573 = vadd.f32 %v2471, %v2560
      %v2574 = vadd.f32 %v2472, %v2562
      %v2575 = vadd.f32 %v2473, %v2565
      %v2576 = vadd.f32 %v2474, %v2567
      %v2579 = vrot.slane %v217, 1
      %v2580 = vrot.slane %v218, 1
      %v2581 = vsel %vm255, %v2579, %v2580
      %v2583 = vpack.c.bf16 %v2581, %v2053
      %v2584 = vld [vmem:[%s1 + $0x540] sm:$0xf]
      %v2585 = vld [vmem:[%s1 + $0x544] sm:$0xf]
      %v2586 = vld [vmem:[%s1 + $0x548] sm:$0xf]
      %v2587 = vld [vmem:[%s1 + $0x54c] sm:$0xf]
      %v2588 = vld [vmem:[%s1 + $0x550] sm:$0xf]
      %v2589 = vld [vmem:[%s1 + $0x554] sm:$0xf]
      %v2590 = vld [vmem:[%s1 + $0x558] sm:$0xf]
      %v2591 = vld [vmem:[%s1 + $0x55c] sm:$0xf]
      %v2592 = vld [vmem:[%s1 + $0x560] sm:$0xf]
      %v2593 = vld [vmem:[%s1 + $0x564] sm:$0xf]
      %v2594 = vld [vmem:[%s1 + $0x568] sm:$0xf]
      %v2595 = vld [vmem:[%s1 + $0x56c] sm:$0xf]
      %v2596 = vld [vmem:[%s1 + $0x570] sm:$0xf]
      %v2597 = vld [vmem:[%s1 + $0x574] sm:$0xf]
      %v2598 = vld [vmem:[%s1 + $0x578] sm:$0xf]
      %v2599 = vld [vmem:[%s1 + $0x57c] sm:$0xf]
      %v2616 = vunpack.c.l.b16 %v2584
      %v2617 = vunpack.c.l.b16 %v2585
      %v2618 = vunpack.c.l.b16 %v2586
      %v2619 = vunpack.c.l.b16 %v2587
      %v2620 = vunpack.c.l.b16 %v2588
      %v2621 = vunpack.c.l.b16 %v2589
      %v2622 = vunpack.c.l.b16 %v2590
      %v2623 = vunpack.c.l.b16 %v2591
      %v2624 = vunpack.c.l.b16 %v2592
      %v2625 = vunpack.c.l.b16 %v2593
      %v2626 = vunpack.c.l.b16 %v2594
      %v2627 = vunpack.c.l.b16 %v2595
      %v2628 = vunpack.c.l.b16 %v2596
      %v2629 = vunpack.c.l.b16 %v2597
      %v2630 = vunpack.c.l.b16 %v2598
      %v2631 = vunpack.c.l.b16 %v2599
      %v2632 = vpack.c.b16 %v2617, %v2616
      %v2633 = vpack.c.b16 %v2619, %v2618
      %v2634 = vpack.c.b16 %v2621, %v2620
      %v2635 = vpack.c.b16 %v2623, %v2622
      %v2636 = vpack.c.b16 %v2625, %v2624
      %v2637 = vpack.c.b16 %v2627, %v2626
      %v2638 = vpack.c.b16 %v2629, %v2628
      %v2639 = vpack.c.b16 %v2631, %v2630
      %2648 = vmatpush.bf16.msra.mxu0 %v2639
      %2649 = vmatpush.bf16.msra.mxu0 %v2638
      %2650 = vmatpush.bf16.msra.mxu0 %v2637
      %2651 = vmatpush.bf16.msra.mxu0 %v2636
      %2652 = vmatpush.bf16.msra.mxu0 %v2635
      %2653 = vmatpush.bf16.msra.mxu0 %v2634
      %2654 = vmatpush.bf16.msra.mxu0 %v2633
      %2655 = vmatpush.bf16.msra.mxu0 %v2632
      %2656 = vmatmul.bf16.gmra.mxu0 %v290
      %v2657 = vpop.f32.mrf.mxu0
      %v2658 = vadd.f32 0.0, %v2657
      %v2659 = vpop.f32.mrf.mxu0
      %v2660 = vadd.f32 0.0, %v2659
      %2661 = vmatmul.bf16.gmra.mxu0 %v291
      %v2662 = vpop.f32.mrf.mxu0
      %v2663 = vadd.f32 0.0, %v2662
      %v2664 = vpop.f32.mrf.mxu0
      %v2665 = vadd.f32 0.0, %v2664
      %2666 = vmatmul.bf16.gmra.mxu0 %v1527
      %v2667 = vpop.f32.mrf.mxu0
      %v2668 = vadd.f32 0.0, %v2667
      %v2669 = vpop.f32.mrf.mxu0
      %v2670 = vadd.f32 0.0, %v2669
      %2671 = vmatmul.bf16.gmra.mxu0 %v2583
      %v2672 = vpop.f32.mrf.mxu0
      %v2673 = vadd.f32 0.0, %v2672
      %v2674 = vpop.f32.mrf.mxu0
      %v2675 = vadd.f32 0.0, %v2674
      %2676 = vdwg.mxu0
      %v2677 = vadd.f32 %v2569, %v2658
      %v2678 = vadd.f32 %v2570, %v2660
      %v2679 = vadd.f32 %v2571, %v2663
      %v2680 = vadd.f32 %v2572, %v2665
      %v2681 = vadd.f32 %v2573, %v2668
      %v2682 = vadd.f32 %v2574, %v2670
      %v2683 = vadd.f32 %v2575, %v2673
      %v2684 = vadd.f32 %v2576, %v2675
      %v2685 = vrot.slane %v217, 2
      %v2686 = vrot.slane %v218, 2
      %v2687 = vsel %vm462, %v2685, %v2686
      %v2689 = vpack.c.bf16 %v2687, %v2159
      %v2690 = vld [vmem:[%s1 + $0x580] sm:$0xf]
      %v2691 = vld [vmem:[%s1 + $0x584] sm:$0xf]
      %v2692 = vld [vmem:[%s1 + $0x588] sm:$0xf]
      %v2693 = vld [vmem:[%s1 + $0x58c] sm:$0xf]
      %v2694 = vld [vmem:[%s1 + $0x590] sm:$0xf]
      %v2695 = vld [vmem:[%s1 + $0x594] sm:$0xf]
      %v2696 = vld [vmem:[%s1 + $0x598] sm:$0xf]
      %v2697 = vld [vmem:[%s1 + $0x59c] sm:$0xf]
      %v2698 = vld [vmem:[%s1 + $0x5a0] sm:$0xf]
      %v2699 = vld [vmem:[%s1 + $0x5a4] sm:$0xf]
      %v2700 = vld [vmem:[%s1 + $0x5a8] sm:$0xf]
      %v2701 = vld [vmem:[%s1 + $0x5ac] sm:$0xf]
      %v2702 = vld [vmem:[%s1 + $0x5b0] sm:$0xf]
      %v2703 = vld [vmem:[%s1 + $0x5b4] sm:$0xf]
      %v2704 = vld [vmem:[%s1 + $0x5b8] sm:$0xf]
      %v2705 = vld [vmem:[%s1 + $0x5bc] sm:$0xf]
      %v2722 = vunpack.c.l.b16 %v2690
      %v2723 = vunpack.c.l.b16 %v2691
      %v2724 = vunpack.c.l.b16 %v2692
      %v2725 = vunpack.c.l.b16 %v2693
      %v2726 = vunpack.c.l.b16 %v2694
      %v2727 = vunpack.c.l.b16 %v2695
      %v2728 = vunpack.c.l.b16 %v2696
      %v2729 = vunpack.c.l.b16 %v2697
      %v2730 = vunpack.c.l.b16 %v2698
      %v2731 = vunpack.c.l.b16 %v2699
      %v2732 = vunpack.c.l.b16 %v2700
      %v2733 = vunpack.c.l.b16 %v2701
      %v2734 = vunpack.c.l.b16 %v2702
      %v2735 = vunpack.c.l.b16 %v2703
      %v2736 = vunpack.c.l.b16 %v2704
      %v2737 = vunpack.c.l.b16 %v2705
      %v2738 = vpack.c.b16 %v2723, %v2722
      %v2739 = vpack.c.b16 %v2725, %v2724
      %v2740 = vpack.c.b16 %v2727, %v2726
      %v2741 = vpack.c.b16 %v2729, %v2728
      %v2742 = vpack.c.b16 %v2731, %v2730
      %v2743 = vpack.c.b16 %v2733, %v2732
      %v2744 = vpack.c.b16 %v2735, %v2734
      %v2745 = vpack.c.b16 %v2737, %v2736
      %2754 = vmatpush.bf16.msra.mxu0 %v2745
      %2755 = vmatpush.bf16.msra.mxu0 %v2744
      %2756 = vmatpush.bf16.msra.mxu0 %v2743
      %2757 = vmatpush.bf16.msra.mxu0 %v2742
      %2758 = vmatpush.bf16.msra.mxu0 %v2741
      %2759 = vmatpush.bf16.msra.mxu0 %v2740
      %2760 = vmatpush.bf16.msra.mxu0 %v2739
      %2761 = vmatpush.bf16.msra.mxu0 %v2738
      %2762 = vmatmul.bf16.gmra.mxu0 %v497
      %v2763 = vpop.f32.mrf.mxu0
      %v2764 = vadd.f32 0.0, %v2763
      %v2765 = vpop.f32.mrf.mxu0
      %v2766 = vadd.f32 0.0, %v2765
      %2767 = vmatmul.bf16.gmra.mxu0 %v498
      %v2768 = vpop.f32.mrf.mxu0
      %v2769 = vadd.f32 0.0, %v2768
      %v2770 = vpop.f32.mrf.mxu0
      %v2771 = vadd.f32 0.0, %v2770
      %2772 = vmatmul.bf16.gmra.mxu0 %v1633
      %v2773 = vpop.f32.mrf.mxu0
      %v2774 = vadd.f32 0.0, %v2773
      %v2775 = vpop.f32.mrf.mxu0
      %v2776 = vadd.f32 0.0, %v2775
      %2777 = vmatmul.bf16.gmra.mxu0 %v2689
      %v2778 = vpop.f32.mrf.mxu0
      %v2779 = vadd.f32 0.0, %v2778
      %v2780 = vpop.f32.mrf.mxu0
      %v2781 = vadd.f32 0.0, %v2780
      %2782 = vdwg.mxu0
      %v2783 = vadd.f32 %v2677, %v2764
      %v2784 = vadd.f32 %v2678, %v2766
      %v2785 = vadd.f32 %v2679, %v2769
      %v2786 = vadd.f32 %v2680, %v2771
      %v2787 = vadd.f32 %v2681, %v2774
      %v2788 = vadd.f32 %v2682, %v2776
      %v2789 = vadd.f32 %v2683, %v2779
      %v2790 = vadd.f32 %v2684, %v2781
      %v2791 = vrot.slane %v217, 3
      %v2792 = vrot.slane %v218, 3
      %v2793 = vsel %vm600, %v2791, %v2792
      %v2795 = vpack.c.bf16 %v2793, %v2265
      %v2796 = vld [vmem:[%s1 + $0x5c0] sm:$0xf]
      %v2797 = vld [vmem:[%s1 + $0x5c4] sm:$0xf]
      %v2798 = vld [vmem:[%s1 + $0x5c8] sm:$0xf]
      %v2799 = vld [vmem:[%s1 + $0x5cc] sm:$0xf]
      %v2800 = vld [vmem:[%s1 + $0x5d0] sm:$0xf]
      %v2801 = vld [vmem:[%s1 + $0x5d4] sm:$0xf]
      %v2802 = vld [vmem:[%s1 + $0x5d8] sm:$0xf]
      %v2803 = vld [vmem:[%s1 + $0x5dc] sm:$0xf]
      %v2804 = vld [vmem:[%s1 + $0x5e0] sm:$0xf]
      %v2805 = vld [vmem:[%s1 + $0x5e4] sm:$0xf]
      %v2806 = vld [vmem:[%s1 + $0x5e8] sm:$0xf]
      %v2807 = vld [vmem:[%s1 + $0x5ec] sm:$0xf]
      %v2808 = vld [vmem:[%s1 + $0x5f0] sm:$0xf]
      %v2809 = vld [vmem:[%s1 + $0x5f4] sm:$0xf]
      %v2810 = vld [vmem:[%s1 + $0x5f8] sm:$0xf]
      %v2811 = vld [vmem:[%s1 + $0x5fc] sm:$0xf]
      %v2828 = vunpack.c.l.b16 %v2796
      %v2829 = vunpack.c.l.b16 %v2797
      %v2830 = vunpack.c.l.b16 %v2798
      %v2831 = vunpack.c.l.b16 %v2799
      %v2832 = vunpack.c.l.b16 %v2800
      %v2833 = vunpack.c.l.b16 %v2801
      %v2834 = vunpack.c.l.b16 %v2802
      %v2835 = vunpack.c.l.b16 %v2803
      %v2836 = vunpack.c.l.b16 %v2804
      %v2837 = vunpack.c.l.b16 %v2805
      %v2838 = vunpack.c.l.b16 %v2806
      %v2839 = vunpack.c.l.b16 %v2807
      %v2840 = vunpack.c.l.b16 %v2808
      %v2841 = vunpack.c.l.b16 %v2809
      %v2842 = vunpack.c.l.b16 %v2810
      %v2843 = vunpack.c.l.b16 %v2811
      %v2844 = vpack.c.b16 %v2829, %v2828
      %v2845 = vpack.c.b16 %v2831, %v2830
      %v2846 = vpack.c.b16 %v2833, %v2832
      %v2847 = vpack.c.b16 %v2835, %v2834
      %v2848 = vpack.c.b16 %v2837, %v2836
      %v2849 = vpack.c.b16 %v2839, %v2838
      %v2850 = vpack.c.b16 %v2841, %v2840
      %v2851 = vpack.c.b16 %v2843, %v2842
      %2860 = vmatpush.bf16.msra.mxu0 %v2851
      %2861 = vmatpush.bf16.msra.mxu0 %v2850
      %2862 = vmatpush.bf16.msra.mxu0 %v2849
      %2863 = vmatpush.bf16.msra.mxu0 %v2848
      %2864 = vmatpush.bf16.msra.mxu0 %v2847
      %2865 = vmatpush.bf16.msra.mxu0 %v2846
      %2866 = vmatpush.bf16.msra.mxu0 %v2845
      %2867 = vmatpush.bf16.msra.mxu0 %v2844
      %2868 = vmatmul.bf16.gmra.mxu0 %v635
      %v2869 = vpop.f32.mrf.mxu0
      %v2870 = vadd.f32 0.0, %v2869
      %v2871 = vpop.f32.mrf.mxu0
      %v2872 = vadd.f32 0.0, %v2871
      %2873 = vmatmul.bf16.gmra.mxu0 %v636
      %v2874 = vpop.f32.mrf.mxu0
      %v2875 = vadd.f32 0.0, %v2874
      %v2876 = vpop.f32.mrf.mxu0
      %v2877 = vadd.f32 0.0, %v2876
      %2878 = vmatmul.bf16.gmra.mxu0 %v1739
      %v2879 = vpop.f32.mrf.mxu0
      %v2880 = vadd.f32 0.0, %v2879
      %v2881 = vpop.f32.mrf.mxu0
      %v2882 = vadd.f32 0.0, %v2881
      %2883 = vmatmul.bf16.gmra.mxu0 %v2795
      %v2884 = vpop.f32.mrf.mxu0
      %v2885 = vadd.f32 0.0, %v2884
      %v2886 = vpop.f32.mrf.mxu0
      %v2887 = vadd.f32 0.0, %v2886
      %2888 = vdwg.mxu0
      %v2889 = vadd.f32 %v2783, %v2870
      %v2890 = vadd.f32 %v2784, %v2872
      %v2891 = vadd.f32 %v2785, %v2875
      %v2892 = vadd.f32 %v2786, %v2877
      %v2893 = vadd.f32 %v2787, %v2880
      %v2894 = vadd.f32 %v2788, %v2882
      %v2895 = vadd.f32 %v2789, %v2885
      %v2896 = vadd.f32 %v2790, %v2887
      %v2897 = vrot.slane %v217, 4
      %v2898 = vrot.slane %v218, 4
      %v2899 = vsel %vm738, %v2897, %v2898
      %v2901 = vpack.c.bf16 %v2899, %v2371
      %v2902 = vld [vmem:[%s1 + $0x600] sm:$0xf]
      %v2903 = vld [vmem:[%s1 + $0x604] sm:$0xf]
      %v2904 = vld [vmem:[%s1 + $0x608] sm:$0xf]
      %v2905 = vld [vmem:[%s1 + $0x60c] sm:$0xf]
      %v2906 = vld [vmem:[%s1 + $0x610] sm:$0xf]
      %v2907 = vld [vmem:[%s1 + $0x614] sm:$0xf]
      %v2908 = vld [vmem:[%s1 + $0x618] sm:$0xf]
      %v2909 = vld [vmem:[%s1 + $0x61c] sm:$0xf]
      %v2910 = vld [vmem:[%s1 + $0x620] sm:$0xf]
      %v2911 = vld [vmem:[%s1 + $0x624] sm:$0xf]
      %v2912 = vld [vmem:[%s1 + $0x628] sm:$0xf]
      %v2913 = vld [vmem:[%s1 + $0x62c] sm:$0xf]
      %v2914 = vld [vmem:[%s1 + $0x630] sm:$0xf]
      %v2915 = vld [vmem:[%s1 + $0x634] sm:$0xf]
      %v2916 = vld [vmem:[%s1 + $0x638] sm:$0xf]
      %v2917 = vld [vmem:[%s1 + $0x63c] sm:$0xf]
      %v2934 = vunpack.c.l.b16 %v2902
      %v2935 = vunpack.c.l.b16 %v2903
      %v2936 = vunpack.c.l.b16 %v2904
      %v2937 = vunpack.c.l.b16 %v2905
      %v2938 = vunpack.c.l.b16 %v2906
      %v2939 = vunpack.c.l.b16 %v2907
      %v2940 = vunpack.c.l.b16 %v2908
      %v2941 = vunpack.c.l.b16 %v2909
      %v2942 = vunpack.c.l.b16 %v2910
      %v2943 = vunpack.c.l.b16 %v2911
      %v2944 = vunpack.c.l.b16 %v2912
      %v2945 = vunpack.c.l.b16 %v2913
      %v2946 = vunpack.c.l.b16 %v2914
      %v2947 = vunpack.c.l.b16 %v2915
      %v2948 = vunpack.c.l.b16 %v2916
      %v2949 = vunpack.c.l.b16 %v2917
      %v2950 = vpack.c.b16 %v2935, %v2934
      %v2951 = vpack.c.b16 %v2937, %v2936
      %v2952 = vpack.c.b16 %v2939, %v2938
      %v2953 = vpack.c.b16 %v2941, %v2940
      %v2954 = vpack.c.b16 %v2943, %v2942
      %v2955 = vpack.c.b16 %v2945, %v2944
      %v2956 = vpack.c.b16 %v2947, %v2946
      %v2957 = vpack.c.b16 %v2949, %v2948
      %2966 = vmatpush.bf16.msra.mxu0 %v2957
      %2967 = vmatpush.bf16.msra.mxu0 %v2956
      %2968 = vmatpush.bf16.msra.mxu0 %v2955
      %2969 = vmatpush.bf16.msra.mxu0 %v2954
      %2970 = vmatpush.bf16.msra.mxu0 %v2953
      %2971 = vmatpush.bf16.msra.mxu0 %v2952
      %2972 = vmatpush.bf16.msra.mxu0 %v2951
      %2973 = vmatpush.bf16.msra.mxu0 %v2950
      %2974 = vmatmul.bf16.gmra.mxu0 %v773
      %v2975 = vpop.f32.mrf.mxu0
      %v2976 = vadd.f32 0.0, %v2975
      %v2977 = vpop.f32.mrf.mxu0
      %v2978 = vadd.f32 0.0, %v2977
      %2979 = vmatmul.bf16.gmra.mxu0 %v774
      %v2980 = vpop.f32.mrf.mxu0
      %v2981 = vadd.f32 0.0, %v2980
      %v2982 = vpop.f32.mrf.mxu0
      %v2983 = vadd.f32 0.0, %v2982
      %2984 = vmatmul.bf16.gmra.mxu0 %v1845
      %v2985 = vpop.f32.mrf.mxu0
      %v2986 = vadd.f32 0.0, %v2985
      %v2987 = vpop.f32.mrf.mxu0
      %v2988 = vadd.f32 0.0, %v2987
      %2989 = vmatmul.bf16.gmra.mxu0 %v2901
      %v2990 = vpop.f32.mrf.mxu0
      %v2991 = vadd.f32 0.0, %v2990
      %v2992 = vpop.f32.mrf.mxu0
      %v2993 = vadd.f32 0.0, %v2992
      %2994 = vdwg.mxu0
      %v2995 = vadd.f32 %v2889, %v2976
      %v2996 = vadd.f32 %v2890, %v2978
      %v2997 = vadd.f32 %v2891, %v2981
      %v2998 = vadd.f32 %v2892, %v2983
      %v2999 = vadd.f32 %v2893, %v2986
      %v3000 = vadd.f32 %v2894, %v2988
      %v3001 = vadd.f32 %v2895, %v2991
      %v3002 = vadd.f32 %v2896, %v2993
      %v3003 = vld [vmem:[%s2] sm:$0x1]
      %v3005 = vperm.slane %v3003, 0
      %v3007 = vadd.f32 %v2995, %v3005
      %v3008 = vadd.f32 %v2996, %v3005
      %v3009 = vadd.f32 %v2997, %v3005
      %v3010 = vadd.f32 %v2998, %v3005
      %v3011 = vadd.f32 %v2999, %v3005
      %v3012 = vadd.f32 %v3000, %v3005
      %v3013 = vadd.f32 %v3001, %v3005
      %v3014 = vadd.f32 %v3002, %v3005
      %v3015 = vmax.f32 %v3007, %v3008
      %v3016 = vmax.f32 %v3009, %v3010
      %v3017 = vmax.f32 %v3011, %v3012
      %v3018 = vmax.f32 %v3013, %v3014
      %3019 = vst [vmem:[#allocation2] sm:$0xff] %v3015
      %3020 = vst [vmem:[#allocation2 + $0x8] sm:$0xff] %v3016
      %3021 = vst [vmem:[#allocation2 + $0x10] sm:$0xff] %v3017
      %3022 = vst [vmem:[#allocation2 + $0x18] sm:$0xff] %v3018
      %v3023 = vld [vmem:[#allocation2] ss:$2 sm:$0xff]
      %s3024 = scalar_lea.vmem [#allocation2], 16
      %v3025 = vld [vmem:[%s3024] ss:$2 sm:$0xff]
      %s3026 = scalar_lea.vmem [#allocation2], 1
      %v3027 = vld [vmem:[%s3026] ss:$2 sm:$0xff]
      %s3028 = scalar_lea.vmem [#allocation2], 17
      %v3029 = vld [vmem:[%s3028] ss:$2 sm:$0xff]
      %v3030 = vmax.f32 %v3023, %v3027
      %v3031 = vmax.f32 %v3025, %v3029
      %v3032 = vmax.f32 %v3030, 0.0
      %v3033 = vmax.f32 %v3031, 0.0
      %v3034 = vpack.c.bf16 %v3032, %v3032
      %v3035 = vpack.c.bf16 %v3033, %v3033
      %3036 = vst [vmem:[%s170] sm:$0xf] %v3034
      %3037 = vst [vmem:[%s170 + $0x4] sm:$0xf] %v3035
      %p3038 = scmp.lt.s32.totalorder %s14, 1
      %s3039 = scalar_select %p3038, %s14, 1
      %s3040 = smul.addr %s3039, 2
      %s3041 = smul.addr %s3040, 4
      %s3042 = scalar_lea.vmem %s3, %s3041
      // Predicated region
      $region33: #{compliant_relu_forward.4} parent=31 // pred_check
        %p3043 = pneg %p100
      $region34: #{compliant_relu_forward.4} parent=31 // pred_check_branch
        %3045 = sbr.rel (%p3043) target = $region36
      $region35: #{compliant_relu_forward.4} parent=31 // pred_region
        _
      $region36: #{compliant_relu_forward.4} parent=31 // pred_fallthru
        _
    $region32: #{compliant_relu_forward.4} parent=5 // pred_fallthru
      _
    %p3046 = scmp.le.s32.totalorder 2, %s9
    // Predicated region
    $region37: #{compliant_relu_forward.4} parent=5 // pred_check
      %p3047 = pneg %p3046
    $region38: #{compliant_relu_forward.4} parent=5 // pred_check_branch
      %3049 = sbr.rel (%p3047) target = $region40
    $region39: #{compliant_relu_forward.4} parent=5 // pred_region
      %s3050 = ssub.s32 %s9, 2
      // Predicated region
      $region41: #{compliant_relu_forward.4} parent=39 // pred_check
        %p3051 = pneg %p106
      $region42: #{compliant_relu_forward.4} parent=39 // pred_check_branch
        %3053 = sbr.rel (%p3051) target = $region44
      $region43: #{compliant_relu_forward.4} parent=39 // pred_region
        %p3054 = scmp.lt.s32.totalorder %s15, 1
        %s3055 = scalar_select %p3054, %s15, 1
        %s3056 = smul.addr %s3055, 2
        %s3057 = smul.addr %s3056, 4
        %s3058 = scalar_lea.vmem %s3, %s3057
      $region44: #{compliant_relu_forward.4} parent=39 // pred_fallthru
        _
    $region40: #{compliant_relu_forward.4} parent=5 // pred_fallthru
      _
  $region6: #{compliant_relu_forward.4} parent=0 // loop_footer
    %s13 = sadd.s32 1, %s9
  $region7: #{compliant_relu_forward.4} parent=0 // loop_footer_branch
    %8 = sbr.rel target = $region3
  $region8: #{compliant_relu_forward.4} parent=0 // loop_exit
    _

// kernel: compliant_relu_forward.3
$region0: #{compliant_relu_forward.3}
  #allocation0 [shape = 'u32[]', space=smem, size = 0x4, offset = 0x4, fixed_abs, tag = 'smem constant byte address 0x4 - core index']
  #allocation1 [shape = 'u32[72,128]{1,0:T(1,128)}', space=vmem, size = 0x9000, scoped, tag = 'internal scratch']
  #allocation2 [shape = 'f32[288,128]{1,0:T(8,128)}', space=vmem, size = 0x24000, scoped, tag = 'scratch operand']
  %s0 = inlined_call_operand.vmem [shape: f32[2,28,28,1], index: 0, kind: input, shape index: {}]
  %s1 = inlined_call_operand.vmem [shape: bf16[25,128], index: 1, kind: input, shape index: {}]
  %s2 = inlined_call_operand.vmem [shape: f32[1,128], index: 2, kind: input, shape index: {}]
  %s3 = inlined_call_operand.vmem [shape: bf16[2,144,128], index: 3, kind: output, shape index: {}]
  %s4 = sld [smem:[#allocation0]]
  $region45: #{compliant_relu_forward.3} parent=0
    _
  %s6 = ssub.s32 1, %s4
  %s7 = scalar_select 0, %s6, %s4
  loop: start=0, step=1, limit=4
  $region2: #{compliant_relu_forward.3} parent=0 // loop_pre_header
    _
  $region3: #{compliant_relu_forward.3} parent=0 // loop_header
    %s9 = sphi 0, %s13
    %p10 = scmp.ge.s32.totalorder %s9, 4
    %s19 = sphi 0, %s21
    %s22 = sphi 0, %s19
    %s23 = sphi 0, %s22
    %s39 = sphi 0, %s23
    %s43 = sphi 0, %s43
    %s45 = sphi 0, %s43
    %s46 = sphi 0, %s45
    %s60 = sphi 0, %s46
    %s64 = sphi 0, %s64
    %s66 = sphi 0, %s64
    %s67 = sphi 0, %s66
    %s81 = sphi 0, %s67
    %s87 = sphi 0, %s89
    %s90 = sphi 0, %s87
    %s91 = sphi 0, %s90
    %s107 = sphi 0, %s91
  $region4: #{compliant_relu_forward.3} parent=0 // loop_header_branch
    %12 = sbr.rel (%p10) target = $region8
  $region5: #{compliant_relu_forward.3} parent=0 // loop_body
    %s14 = ssub.s32 %s9, 1
    %s15 = ssub.s32 %s9, 2
    %s16 = sadd.s32 %s9, 1
    %s17 = ssub.s32 %s9, %s16
    %p18 = scmp.eq.s32.totalorder %s17, 0
    %s20 = sadd.s32 %s19, 1
    %s21 = scalar_select %p18, %s19, %s20
    %p24 = pneg %p18
    %p25 = scmp.eq.s32.totalorder %s9, 1
    %p26 = por %p24, %p25
    %p27 = scmp.ne.s32.totalorder %s19, %s22
    %p28 = scmp.eq.s32.totalorder %s9, 0
    %p29 = por %p27, %p28
    %p30 = scmp.ne.s32.totalorder %s19, %s22
    %p31 = scmp.eq.s32.totalorder %s14, 1
    %p32 = por %p30, %p31
    %p33 = scmp.ne.s32.totalorder %s22, %s23
    %p34 = scmp.eq.s32.totalorder %s14, 0
    %p35 = por %p33, %p34
    %p36 = scmp.ne.s32.totalorder %s22, %s23
    %p37 = scmp.eq.s32.totalorder %s15, 1
    %p38 = por %p36, %p37
    %p40 = scmp.ne.s32.totalorder %s23, %s39
    %p41 = scmp.eq.s32.totalorder %s15, 0
    %p42 = por %p40, %p41
    %s44 = sadd.s32 %s43, 1
    %p47 = scmp.eq.s32.totalorder %s9, 1
    %p48 = scmp.ne.s32.totalorder %s43, %s45
    %p49 = scmp.eq.s32.totalorder %s9, 0
    %p50 = por %p48, %p49
    %p51 = scmp.ne.s32.totalorder %s43, %s45
    %p52 = scmp.eq.s32.totalorder %s14, 1
    %p53 = por %p51, %p52
    %p54 = scmp.ne.s32.totalorder %s45, %s46
    %p55 = scmp.eq.s32.totalorder %s14, 0
    %p56 = por %p54, %p55
    %p57 = scmp.ne.s32.totalorder %s45, %s46
    %p58 = scmp.eq.s32.totalorder %s15, 1
    %p59 = por %p57, %p58
    %p61 = scmp.ne.s32.totalorder %s46, %s60
    %p62 = scmp.eq.s32.totalorder %s15, 0
    %p63 = por %p61, %p62
    %s65 = sadd.s32 %s64, 1
    %p68 = scmp.eq.s32.totalorder %s9, 1
    %p69 = scmp.ne.s32.totalorder %s64, %s66
    %p70 = scmp.eq.s32.totalorder %s9, 0
    %p71 = por %p69, %p70
    %p72 = scmp.ne.s32.totalorder %s64, %s66
    %p73 = scmp.eq.s32.totalorder %s14, 1
    %p74 = por %p72, %p73
    %p75 = scmp.ne.s32.totalorder %s66, %s67
    %p76 = scmp.eq.s32.totalorder %s14, 0
    %p77 = por %p75, %p76
    %p78 = scmp.ne.s32.totalorder %s66, %s67
    %p79 = scmp.eq.s32.totalorder %s15, 1
    %p80 = por %p78, %p79
    %p82 = scmp.ne.s32.totalorder %s67, %s81
    %p83 = scmp.eq.s32.totalorder %s15, 0
    %p84 = por %p82, %p83
    %s85 = ssub.s32 %s9, %s16
    %p86 = scmp.eq.s32.totalorder %s85, 0
    %s88 = sadd.s32 %s87, 1
    %s89 = scalar_select %p86, %s87, %s88
    %p92 = pneg %p86
    %p93 = scmp.eq.s32.totalorder %s9, 1
    %p94 = por %p92, %p93
    %p95 = scmp.ne.s32.totalorder %s87, %s90
    %p96 = scmp.eq.s32.totalorder %s9, 0
    %p97 = por %p95, %p96
    %p98 = scmp.ne.s32.totalorder %s87, %s90
    %p99 = scmp.eq.s32.totalorder %s14, 1
    %p100 = por %p98, %p99
    %p101 = scmp.ne.s32.totalorder %s90, %s91
    %p102 = scmp.eq.s32.totalorder %s14, 0
    %p103 = por %p101, %p102
    %p104 = scmp.ne.s32.totalorder %s90, %s91
    %p105 = scmp.eq.s32.totalorder %s15, 1
    %p106 = por %p104, %p105
    %p108 = scmp.ne.s32.totalorder %s91, %s107
    %p109 = scmp.eq.s32.totalorder %s15, 0
    %p110 = por %p108, %p109
    %p111 = scmp.le.s32.totalorder 1, %s9
    %p112 = scmp.lt.s32.totalorder %s9, 3
    %p113 = pnand %p111, %p112
    %p114 = pneg %p113
    // Predicated region
    $region9: #{compliant_relu_forward.3} parent=5 // pred_check
      _
    $region10: #{compliant_relu_forward.3} parent=5 // pred_check_branch
      %116 = sbr.rel (%p113) target = $region12
    $region11: #{compliant_relu_forward.3} parent=5 // pred_region
      %s117 = ssub.s32 %s9, 1
      // Predicated region
      $region13: #{compliant_relu_forward.3} parent=11 // pred_check
        %p118 = pneg %p56
      $region14: #{compliant_relu_forward.3} parent=11 // pred_check_branch
        %120 = sbr.rel (%p118) target = $region16
      $region15: #{compliant_relu_forward.3} parent=11 // pred_region
        _
      $region16: #{compliant_relu_forward.3} parent=11 // pred_fallthru
        _
      // Predicated region
      $region17: #{compliant_relu_forward.3} parent=11 // pred_check
        %p121 = pneg %p77
      $region18: #{compliant_relu_forward.3} parent=11 // pred_check_branch
        %123 = sbr.rel (%p121) target = $region20
      $region19: #{compliant_relu_forward.3} parent=11 // pred_region
        _
      $region20: #{compliant_relu_forward.3} parent=11 // pred_fallthru
        _
    $region12: #{compliant_relu_forward.3} parent=5 // pred_fallthru
      _
    %p124 = scmp.lt.s32.totalorder %s9, 2
    // Predicated region
    $region21: #{compliant_relu_forward.3} parent=5 // pred_check
      %p125 = pneg %p124
    $region22: #{compliant_relu_forward.3} parent=5 // pred_check_branch
      %127 = sbr.rel (%p125) target = $region24
    $region23: #{compliant_relu_forward.3} parent=5 // pred_region
      // Predicated region
      $region25: #{compliant_relu_forward.3} parent=23 // pred_check
        %p128 = pneg %p29
      $region26: #{compliant_relu_forward.3} parent=23 // pred_check_branch
        %130 = sbr.rel (%p128) target = $region28
      $region27: #{compliant_relu_forward.3} parent=23 // pred_region
        %p131 = scmp.lt.s32.totalorder %s9, 1
        %s132 = scalar_select %p131, %s9, 1
        %s133 = smul.addr %s132, 112
        %s134 = smul.addr %s133, 8
        %s135 = scalar_lea.vmem %s0, %s134
      $region28: #{compliant_relu_forward.3} parent=23 // pred_fallthru
        _
    $region24: #{compliant_relu_forward.3} parent=5 // pred_fallthru
      _
    %p136 = scmp.le.s32.totalorder 1, %s9
    %p137 = scmp.lt.s32.totalorder %s9, 3
    %p138 = pnand %p136, %p137
    %p139 = pneg %p138
    // Predicated region
    $region29: #{compliant_relu_forward.3} parent=5 // pred_check
      _
    $region30: #{compliant_relu_forward.3} parent=5 // pred_check_branch
      %141 = sbr.rel (%p138) target = $region32
    $region31: #{compliant_relu_forward.3} parent=5 // pred_region
      %s142 = ssub.s32 %s9, 1
      %p143 = scmp.lt.s32.totalorder %s14, 1
      %s144 = scalar_select %p143, %s14, 1
      %s145 = smul.addr %s144, 112
      %s146 = smul.addr %s145, 8
      %s147 = scalar_lea.vmem %s0, %s146
      %p148 = pneg %p35
      %p149 = pneg %p32
      %p150 = pneg %p56
      %p151 = pneg %p53
      %p152 = pneg %p77
      %p153 = pneg %p74
      %p154 = pneg %p103
      %p155 = pneg %p100
      %p156 = scmp.lt.s32.totalorder %s14, 1
      %s157 = scalar_select %p156, %s14, 1
      %s158 = smul.addr %s157, 18
      %s159 = smul.addr %s158, 4
      %s160 = scalar_lea.vmem %s3, %s159
      %p161 = scmp.lt.s32.totalorder %s14, 1
      %s162 = scalar_select %p161, %s14, 1
      %s163 = smul.addr %s162, 112
      %s164 = smul.addr %s163, 8
      %s165 = scalar_lea.vmem %s0, %s164
      %p166 = scmp.lt.s32.totalorder %s14, 1
      %s167 = scalar_select %p166, %s14, 1
      %s168 = smul.addr %s167, 18
      %s169 = smul.addr %s168, 4
      %s170 = scalar_lea.vmem %s3, %s169
      %v171 = vld [vmem:[%s165] sm:$0xff]
      %v172 = vld [vmem:[%s165 + $0x8] sm:$0xff]
      %v173 = vld [vmem:[%s165 + $0x10] sm:$0xff]
      %v174 = vld [vmem:[%s165 + $0x18] sm:$0xf]
      %v175 = vld [vmem:[%s165 + $0x20] sm:$0xff]
      %v176 = vld [vmem:[%s165 + $0x28] sm:$0xff]
      %v177 = vld [vmem:[%s165 + $0x30] sm:$0xff]
      %v178 = vld [vmem:[%s165 + $0x38] sm:$0xf]
      %v179 = vld [vmem:[%s165 + $0x40] sm:$0xff]
      %v180 = vld [vmem:[%s165 + $0x48] sm:$0xff]
      %v181 = vld [vmem:[%s165 + $0x50] sm:$0xff]
      %v182 = vld [vmem:[%s165 + $0x58] sm:$0xf]
      %v183 = vld [vmem:[%s165 + $0x60] sm:$0xff]
      %v184 = vld [vmem:[%s165 + $0x68] sm:$0xff]
      %v185 = vld [vmem:[%s165 + $0x70] sm:$0xff]
      %v186 = vld [vmem:[%s165 + $0x78] sm:$0xf]
      %v187 = vld [vmem:[%s165 + $0x80] sm:$0xff]
      %v188 = vld [vmem:[%s165 + $0x88] sm:$0xff]
      %v189 = vld [vmem:[%s165 + $0x90] sm:$0xff]
      %v190 = vld [vmem:[%s165 + $0x98] sm:$0xf]
      %v191 = vld [vmem:[%s165 + $0xa0] sm:$0xff]
      %v192 = vld [vmem:[%s165 + $0xa8] sm:$0xff]
      %v193 = vld [vmem:[%s165 + $0xb0] sm:$0xff]
      %v194 = vld [vmem:[%s165 + $0xb8] sm:$0xf]
      %v195 = vld [vmem:[%s165 + $0xc0] sm:$0xff]
      %v196 = vld [vmem:[%s165 + $0xc8] sm:$0xff]
      %v197 = vld [vmem:[%s165 + $0xd0] sm:$0xff]
      %v198 = vld [vmem:[%s165 + $0xd8] sm:$0xf]
      %v199 = vld [vmem:[%s165 + $0xe0] sm:$0xff]
      %v200 = vld [vmem:[%s165 + $0xe8] sm:$0xff]
      %v201 = vld [vmem:[%s165 + $0xf0] sm:$0xff]
      %v202 = vld [vmem:[%s165 + $0xf8] sm:$0xf]
      %v203 = vld [vmem:[%s165 + $0x100] sm:$0xff]
      %v204 = vld [vmem:[%s165 + $0x108] sm:$0xff]
      %v205 = vld [vmem:[%s165 + $0x110] sm:$0xff]
      %v206 = vld [vmem:[%s165 + $0x118] sm:$0xf]
      %v207 = vld [vmem:[%s165 + $0x120] sm:$0xff]
      %v208 = vld [vmem:[%s165 + $0x128] sm:$0xff]
      %v209 = vld [vmem:[%s165 + $0x130] sm:$0xff]
      %v210 = vld [vmem:[%s165 + $0x138] sm:$0xf]
      %v211 = vld [vmem:[%s165 + $0x140] sm:$0xff]
      %v212 = vld [vmem:[%s165 + $0x148] sm:$0xff]
      %v213 = vld [vmem:[%s165 + $0x150] sm:$0xff]
      %v214 = vld [vmem:[%s165 + $0x158] sm:$0xf]
      %v215 = vld [vmem:[%s165 + $0x160] sm:$0xff]
      %v216 = vld [vmem:[%s165 + $0x168] sm:$0xff]
      %v217 = vld [vmem:[%s165 + $0x170] sm:$0xff]
      %v218 = vld [vmem:[%s165 + $0x178] sm:$0xf]
      %v219 = vld [vmem:[%s165 + $0x180] sm:$0xff]
      %v220 = vld [vmem:[%s165 + $0x188] sm:$0xff]
      %v221 = vld [vmem:[%s165 + $0x190] sm:$0xff]
      %v222 = vld [vmem:[%s165 + $0x198] sm:$0xf]
      %v223 = vld [vmem:[%s165 + $0x1a0] sm:$0xff]
      %v224 = vld [vmem:[%s165 + $0x1a8] sm:$0xff]
      %v225 = vld [vmem:[%s165 + $0x1b0] sm:$0xff]
      %v226 = vld [vmem:[%s165 + $0x1b8] sm:$0xf]
      %v227 = vld [vmem:[%s165 + $0x1c0] sm:$0xff]
      %v228 = vld [vmem:[%s165 + $0x1c8] sm:$0xff]
      %v229 = vld [vmem:[%s165 + $0x1d0] sm:$0xff]
      %v230 = vld [vmem:[%s165 + $0x1d8] sm:$0xf]
      %v231 = vld [vmem:[%s165 + $0x1e0] sm:$0xff]
      %v232 = vld [vmem:[%s165 + $0x1e8] sm:$0xff]
      %v233 = vld [vmem:[%s165 + $0x1f0] sm:$0xff]
      %v234 = vld [vmem:[%s165 + $0x1f8] sm:$0xf]
      %v235 = vld [vmem:[%s165 + $0x200] sm:$0xff]
      %v236 = vld [vmem:[%s165 + $0x208] sm:$0xff]
      %v237 = vld [vmem:[%s165 + $0x210] sm:$0xff]
      %v238 = vld [vmem:[%s165 + $0x218] sm:$0xf]
      %v239 = vld [vmem:[%s165 + $0x220] sm:$0xff]
      %v240 = vld [vmem:[%s165 + $0x228] sm:$0xff]
      %v241 = vld [vmem:[%s165 + $0x230] sm:$0xff]
      %v242 = vld [vmem:[%s165 + $0x238] sm:$0xf]
      %v243 = vld [vmem:[%s165 + $0x240] sm:$0xff]
      %v244 = vld [vmem:[%s165 + $0x248] sm:$0xff]
      %v245 = vld [vmem:[%s165 + $0x250] sm:$0xff]
      %v246 = vld [vmem:[%s165 + $0x258] sm:$0xf]
      %v247 = vld [vmem:[%s165 + $0x260] sm:$0xff]
      %v248 = vld [vmem:[%s165 + $0x268] sm:$0xff]
      %v249 = vld [vmem:[%s165 + $0x270] sm:$0xff]
      %v250 = vld [vmem:[%s165 + $0x278] sm:$0xf]
      %v251 = vld [vmem:[%s165 + $0x280] sm:$0xff]
      %v252 = vld [vmem:[%s165 + $0x288] sm:$0xff]
      %v253 = vld [vmem:[%s165 + $0x290] sm:$0xff]
      %v254 = vld [vmem:[%s165 + $0x298] sm:$0xf]
      %v255 = vld [vmem:[%s165 + $0x2a0] sm:$0xff]
      %v256 = vld [vmem:[%s165 + $0x2a8] sm:$0xff]
      %v257 = vld [vmem:[%s165 + $0x2b0] sm:$0xff]
      %v258 = vld [vmem:[%s165 + $0x2b8] sm:$0xf]
      %v259 = vld [vmem:[%s165 + $0x2c0] sm:$0xff]
      %v260 = vld [vmem:[%s165 + $0x2c8] sm:$0xff]
      %v261 = vld [vmem:[%s165 + $0x2d0] sm:$0xff]
      %v262 = vld [vmem:[%s165 + $0x2d8] sm:$0xf]
      %v263 = vld [vmem:[%s165 + $0x2e0] sm:$0xff]
      %v264 = vld [vmem:[%s165 + $0x2e8] sm:$0xff]
      %v265 = vld [vmem:[%s165 + $0x2f0] sm:$0xff]
      %v266 = vld [vmem:[%s165 + $0x2f8] sm:$0xf]
      %v267 = vld [vmem:[%s165 + $0x300] sm:$0xff]
      %v268 = vld [vmem:[%s165 + $0x308] sm:$0xff]
      %v269 = vld [vmem:[%s165 + $0x310] sm:$0xff]
      %v270 = vld [vmem:[%s165 + $0x318] sm:$0xf]
      %v271 = vld [vmem:[%s165 + $0x320] sm:$0xff]
      %v272 = vld [vmem:[%s165 + $0x328] sm:$0xff]
      %v273 = vld [vmem:[%s165 + $0x330] sm:$0xff]
      %v274 = vld [vmem:[%s165 + $0x338] sm:$0xf]
      %v275 = vld [vmem:[%s165 + $0x340] sm:$0xff]
      %v276 = vld [vmem:[%s165 + $0x348] sm:$0xff]
      %v277 = vld [vmem:[%s165 + $0x350] sm:$0xff]
      %v278 = vld [vmem:[%s165 + $0x358] sm:$0xf]
      %v279 = vld [vmem:[%s165 + $0x360] sm:$0xff]
      %v280 = vld [vmem:[%s165 + $0x368] sm:$0xff]
      %v281 = vld [vmem:[%s165 + $0x370] sm:$0xff]
      %v282 = vld [vmem:[%s165 + $0x378] sm:$0xf]
      %v283 = vld [vmem:[%s1] sm:$0x1]
      %v284 = vunpack.c.l.bf16 %v283
      %286 = vset.pattern.permute.xlu0 0
      %287 = vperm.xlu0 %286, %v171
      %v288 = vpop.permute.xlu0 %287
      %291 = vset.pattern.permute.xlu0 0
      %292 = vperm.xlu0 %291, %v172
      %v293 = vpop.permute.xlu0 %292
      %296 = vset.pattern.permute.xlu0 0
      %297 = vperm.xlu0 %296, %v173
      %v298 = vpop.permute.xlu0 %297
      %301 = vset.pattern.permute.xlu0 0
      %302 = vperm.xlu0 %301, %v175
      %v303 = vpop.permute.xlu0 %302
      %306 = vset.pattern.permute.xlu0 0
      %307 = vperm.xlu0 %306, %v176
      %v308 = vpop.permute.xlu0 %307
      %311 = vset.pattern.permute.xlu0 0
      %312 = vperm.xlu0 %311, %v177
      %v313 = vpop.permute.xlu0 %312
      %316 = vset.pattern.permute.xlu0 0
      %317 = vperm.xlu0 %316, %v179
      %v318 = vpop.permute.xlu0 %317
      %321 = vset.pattern.permute.xlu0 0
      %322 = vperm.xlu0 %321, %v180
      %v323 = vpop.permute.xlu0 %322
      %326 = vset.pattern.permute.xlu0 0
      %327 = vperm.xlu0 %326, %v181
      %v328 = vpop.permute.xlu0 %327
      %331 = vset.pattern.permute.xlu0 0
      %332 = vperm.xlu0 %331, %v183
      %v333 = vpop.permute.xlu0 %332
      %336 = vset.pattern.permute.xlu0 0
      %337 = vperm.xlu0 %336, %v184
      %v338 = vpop.permute.xlu0 %337
      %341 = vset.pattern.permute.xlu0 0
      %342 = vperm.xlu0 %341, %v185
      %v343 = vpop.permute.xlu0 %342
      %346 = vset.pattern.permute.xlu0 0
      %347 = vperm.xlu0 %346, %v187
      %v348 = vpop.permute.xlu0 %347
      %351 = vset.pattern.permute.xlu0 0
      %352 = vperm.xlu0 %351, %v188
      %v353 = vpop.permute.xlu0 %352
      %356 = vset.pattern.permute.xlu0 0
      %357 = vperm.xlu0 %356, %v189
      %v358 = vpop.permute.xlu0 %357
      %361 = vset.pattern.permute.xlu0 0
      %362 = vperm.xlu0 %361, %v191
      %v363 = vpop.permute.xlu0 %362
      %366 = vset.pattern.permute.xlu0 0
      %367 = vperm.xlu0 %366, %v192
      %v368 = vpop.permute.xlu0 %367
      %371 = vset.pattern.permute.xlu0 0
      %372 = vperm.xlu0 %371, %v193
      %v373 = vpop.permute.xlu0 %372
      %376 = vset.pattern.permute.xlu0 0
      %377 = vperm.xlu0 %376, %v195
      %v378 = vpop.permute.xlu0 %377
      %381 = vset.pattern.permute.xlu0 0
      %382 = vperm.xlu0 %381, %v196
      %v383 = vpop.permute.xlu0 %382
      %386 = vset.pattern.permute.xlu0 0
      %387 = vperm.xlu0 %386, %v197
      %v388 = vpop.permute.xlu0 %387
      %391 = vset.pattern.permute.xlu0 0
      %392 = vperm.xlu0 %391, %v199
      %v393 = vpop.permute.xlu0 %392
      %396 = vset.pattern.permute.xlu0 0
      %397 = vperm.xlu0 %396, %v200
      %v398 = vpop.permute.xlu0 %397
      %401 = vset.pattern.permute.xlu0 0
      %402 = vperm.xlu0 %401, %v201
      %v403 = vpop.permute.xlu0 %402
      %406 = vset.pattern.permute.xlu0 0
      %407 = vperm.xlu0 %406, %v203
      %v408 = vpop.permute.xlu0 %407
      %411 = vset.pattern.permute.xlu0 0
      %412 = vperm.xlu0 %411, %v204
      %v413 = vpop.permute.xlu0 %412
      %416 = vset.pattern.permute.xlu0 0
      %417 = vperm.xlu0 %416, %v205
      %v418 = vpop.permute.xlu0 %417
      %421 = vset.pattern.permute.xlu0 0
      %422 = vperm.xlu0 %421, %v207
      %v423 = vpop.permute.xlu0 %422
      %426 = vset.pattern.permute.xlu0 0
      %427 = vperm.xlu0 %426, %v208
      %v428 = vpop.permute.xlu0 %427
      %431 = vset.pattern.permute.xlu0 0
      %432 = vperm.xlu0 %431, %v209
      %v433 = vpop.permute.xlu0 %432
      %436 = vset.pattern.permute.xlu0 0
      %437 = vperm.xlu0 %436, %v211
      %v438 = vpop.permute.xlu0 %437
      %441 = vset.pattern.permute.xlu0 0
      %442 = vperm.xlu0 %441, %v212
      %v443 = vpop.permute.xlu0 %442
      %446 = vset.pattern.permute.xlu0 0
      %447 = vperm.xlu0 %446, %v213
      %v448 = vpop.permute.xlu0 %447
      %451 = vset.pattern.permute.xlu0 0
      %452 = vperm.xlu0 %451, %v215
      %v453 = vpop.permute.xlu0 %452
      %456 = vset.pattern.permute.xlu0 0
      %457 = vperm.xlu0 %456, %v216
      %v458 = vpop.permute.xlu0 %457
      %461 = vset.pattern.permute.xlu0 0
      %462 = vperm.xlu0 %461, %v217
      %v463 = vpop.permute.xlu0 %462
      %466 = vset.pattern.permute.xlu0 0
      %467 = vperm.xlu0 %466, %v219
      %v468 = vpop.permute.xlu0 %467
      %471 = vset.pattern.permute.xlu0 0
      %472 = vperm.xlu0 %471, %v220
      %v473 = vpop.permute.xlu0 %472
      %476 = vset.pattern.permute.xlu0 0
      %477 = vperm.xlu0 %476, %v221
      %v478 = vpop.permute.xlu0 %477
      %481 = vset.pattern.permute.xlu0 0
      %482 = vperm.xlu0 %481, %v223
      %v483 = vpop.permute.xlu0 %482
      %486 = vset.pattern.permute.xlu0 0
      %487 = vperm.xlu0 %486, %v224
      %v488 = vpop.permute.xlu0 %487
      %491 = vset.pattern.permute.xlu0 0
      %492 = vperm.xlu0 %491, %v225
      %v493 = vpop.permute.xlu0 %492
      %496 = vset.pattern.permute.xlu0 0
      %497 = vperm.xlu0 %496, %v227
      %v498 = vpop.permute.xlu0 %497
      %501 = vset.pattern.permute.xlu0 0
      %502 = vperm.xlu0 %501, %v228
      %v503 = vpop.permute.xlu0 %502
      %506 = vset.pattern.permute.xlu0 0
      %507 = vperm.xlu0 %506, %v229
      %v508 = vpop.permute.xlu0 %507
      %511 = vset.pattern.permute.xlu0 0
      %512 = vperm.xlu0 %511, %v231
      %v513 = vpop.permute.xlu0 %512
      %516 = vset.pattern.permute.xlu0 0
      %517 = vperm.xlu0 %516, %v232
      %v518 = vpop.permute.xlu0 %517
      %521 = vset.pattern.permute.xlu0 0
      %522 = vperm.xlu0 %521, %v233
      %v523 = vpop.permute.xlu0 %522
      %526 = vset.pattern.permute.xlu0 0
      %527 = vperm.xlu0 %526, %v235
      %v528 = vpop.permute.xlu0 %527
      %531 = vset.pattern.permute.xlu0 0
      %532 = vperm.xlu0 %531, %v236
      %v533 = vpop.permute.xlu0 %532
      %536 = vset.pattern.permute.xlu0 0
      %537 = vperm.xlu0 %536, %v237
      %v538 = vpop.permute.xlu0 %537
      %541 = vset.pattern.permute.xlu0 0
      %542 = vperm.xlu0 %541, %v239
      %v543 = vpop.permute.xlu0 %542
      %546 = vset.pattern.permute.xlu0 0
      %547 = vperm.xlu0 %546, %v240
      %v548 = vpop.permute.xlu0 %547
      %551 = vset.pattern.permute.xlu0 0
      %552 = vperm.xlu0 %551, %v241
      %v553 = vpop.permute.xlu0 %552
      %556 = vset.pattern.permute.xlu0 0
      %557 = vperm.xlu0 %556, %v243
      %v558 = vpop.permute.xlu0 %557
      %561 = vset.pattern.permute.xlu0 0
      %562 = vperm.xlu0 %561, %v244
      %v563 = vpop.permute.xlu0 %562
      %566 = vset.pattern.permute.xlu0 0
      %567 = vperm.xlu0 %566, %v245
      %v568 = vpop.permute.xlu0 %567
      %571 = vset.pattern.permute.xlu0 0
      %572 = vperm.xlu0 %571, %v247
      %v573 = vpop.permute.xlu0 %572
      %576 = vset.pattern.permute.xlu0 0
      %577 = vperm.xlu0 %576, %v248
      %v578 = vpop.permute.xlu0 %577
      %581 = vset.pattern.permute.xlu0 0
      %582 = vperm.xlu0 %581, %v249
      %v583 = vpop.permute.xlu0 %582
      %586 = vset.pattern.permute.xlu0 0
      %587 = vperm.xlu0 %586, %v251
      %v588 = vpop.permute.xlu0 %587
      %591 = vset.pattern.permute.xlu0 0
      %592 = vperm.xlu0 %591, %v252
      %v593 = vpop.permute.xlu0 %592
      %596 = vset.pattern.permute.xlu0 0
      %597 = vperm.xlu0 %596, %v253
      %v598 = vpop.permute.xlu0 %597
      %601 = vset.pattern.permute.xlu0 0
      %602 = vperm.xlu0 %601, %v255
      %v603 = vpop.permute.xlu0 %602
      %606 = vset.pattern.permute.xlu0 0
      %607 = vperm.xlu0 %606, %v256
      %v608 = vpop.permute.xlu0 %607
      %611 = vset.pattern.permute.xlu0 0
      %612 = vperm.xlu0 %611, %v257
      %v613 = vpop.permute.xlu0 %612
      %616 = vset.pattern.permute.xlu0 0
      %617 = vperm.xlu0 %616, %v259
      %v618 = vpop.permute.xlu0 %617
      %621 = vset.pattern.permute.xlu0 0
      %622 = vperm.xlu0 %621, %v260
      %v623 = vpop.permute.xlu0 %622
      %626 = vset.pattern.permute.xlu0 0
      %627 = vperm.xlu0 %626, %v261
      %v628 = vpop.permute.xlu0 %627
      %631 = vset.pattern.permute.xlu0 0
      %632 = vperm.xlu0 %631, %v263
      %v633 = vpop.permute.xlu0 %632
      %636 = vset.pattern.permute.xlu0 0
      %637 = vperm.xlu0 %636, %v264
      %v638 = vpop.permute.xlu0 %637
      %641 = vset.pattern.permute.xlu0 0
      %642 = vperm.xlu0 %641, %v265
      %v643 = vpop.permute.xlu0 %642
      %v645 = vperm.slane %v284, 0
      %v646 = vmul.f32 %v288, %v645
      %v647 = vmul.f32 %v293, %v645
      %v648 = vmul.f32 %v298, %v645
      %v649 = vmul.f32 %v303, %v645
      %v650 = vmul.f32 %v308, %v645
      %v651 = vmul.f32 %v313, %v645
      %v652 = vmul.f32 %v318, %v645
      %v653 = vmul.f32 %v323, %v645
      %v654 = vmul.f32 %v328, %v645
      %v655 = vmul.f32 %v333, %v645
      %v656 = vmul.f32 %v338, %v645
      %v657 = vmul.f32 %v343, %v645
      %v658 = vmul.f32 %v348, %v645
      %v659 = vmul.f32 %v353, %v645
      %v660 = vmul.f32 %v358, %v645
      %v661 = vmul.f32 %v363, %v645
      %v662 = vmul.f32 %v368, %v645
      %v663 = vmul.f32 %v373, %v645
      %v664 = vmul.f32 %v378, %v645
      %v665 = vmul.f32 %v383, %v645
      %v666 = vmul.f32 %v388, %v645
      %v667 = vmul.f32 %v393, %v645
      %v668 = vmul.f32 %v398, %v645
      %v669 = vmul.f32 %v403, %v645
      %v670 = vmul.f32 %v408, %v645
      %v671 = vmul.f32 %v413, %v645
      %v672 = vmul.f32 %v418, %v645
      %v673 = vmul.f32 %v423, %v645
      %v674 = vmul.f32 %v428, %v645
      %v675 = vmul.f32 %v433, %v645
      %v676 = vmul.f32 %v438, %v645
      %v677 = vmul.f32 %v443, %v645
      %v678 = vmul.f32 %v448, %v645
      %v679 = vmul.f32 %v453, %v645
      %v680 = vmul.f32 %v458, %v645
      %v681 = vmul.f32 %v463, %v645
      %v682 = vmul.f32 %v468, %v645
      %v683 = vmul.f32 %v473, %v645
      %v684 = vmul.f32 %v478, %v645
      %v685 = vmul.f32 %v483, %v645
      %v686 = vmul.f32 %v488, %v645
      %v687 = vmul.f32 %v493, %v645
      %v688 = vmul.f32 %v498, %v645
      %v689 = vmul.f32 %v503, %v645
      %v690 = vmul.f32 %v508, %v645
      %v691 = vmul.f32 %v513, %v645
      %v692 = vmul.f32 %v518, %v645
      %v693 = vmul.f32 %v523, %v645
      %v694 = vmul.f32 %v528, %v645
      %v695 = vmul.f32 %v533, %v645
      %v696 = vmul.f32 %v538, %v645
      %v697 = vmul.f32 %v543, %v645
      %v698 = vmul.f32 %v548, %v645
      %v699 = vmul.f32 %v553, %v645
      %v700 = vmul.f32 %v558, %v645
      %v701 = vmul.f32 %v563, %v645
      %v702 = vmul.f32 %v568, %v645
      %v703 = vmul.f32 %v573, %v645
      %v704 = vmul.f32 %v578, %v645
      %v705 = vmul.f32 %v583, %v645
      %v706 = vmul.f32 %v588, %v645
      %v707 = vmul.f32 %v593, %v645
      %v708 = vmul.f32 %v598, %v645
      %v709 = vmul.f32 %v603, %v645
      %v710 = vmul.f32 %v608, %v645
      %v711 = vmul.f32 %v613, %v645
      %v712 = vmul.f32 %v618, %v645
      %v713 = vmul.f32 %v623, %v645
      %v714 = vmul.f32 %v628, %v645
      %v715 = vmul.f32 %v633, %v645
      %v716 = vmul.f32 %v638, %v645
      %v717 = vmul.f32 %v643, %v645
      %v718 = vadd.f32 %v646, 0.0
      %v719 = vadd.f32 %v647, 0.0
      %v720 = vadd.f32 %v648, 0.0
      %v721 = vadd.f32 %v649, 0.0
      %v722 = vadd.f32 %v650, 0.0
      %v723 = vadd.f32 %v651, 0.0
      %v724 = vadd.f32 %v652, 0.0
      %v725 = vadd.f32 %v653, 0.0
      %v726 = vadd.f32 %v654, 0.0
      %v727 = vadd.f32 %v655, 0.0
      %v728 = vadd.f32 %v656, 0.0
      %v729 = vadd.f32 %v657, 0.0
      %v730 = vadd.f32 %v658, 0.0
      %v731 = vadd.f32 %v659, 0.0
      %v732 = vadd.f32 %v660, 0.0
      %v733 = vadd.f32 %v661, 0.0
      %v734 = vadd.f32 %v662, 0.0
      %v735 = vadd.f32 %v663, 0.0
      %v736 = vadd.f32 %v664, 0.0
      %v737 = vadd.f32 %v665, 0.0
      %v738 = vadd.f32 %v666, 0.0
      %v739 = vadd.f32 %v667, 0.0
      %v740 = vadd.f32 %v668, 0.0
      %v741 = vadd.f32 %v669, 0.0
      %v742 = vadd.f32 %v670, 0.0
      %v743 = vadd.f32 %v671, 0.0
      %v744 = vadd.f32 %v672, 0.0
      %v745 = vadd.f32 %v673, 0.0
      %v746 = vadd.f32 %v674, 0.0
      %v747 = vadd.f32 %v675, 0.0
      %v748 = vadd.f32 %v676, 0.0
      %v749 = vadd.f32 %v677, 0.0
      %v750 = vadd.f32 %v678, 0.0
      %v751 = vadd.f32 %v679, 0.0
      %v752 = vadd.f32 %v680, 0.0
      %v753 = vadd.f32 %v681, 0.0
      %v754 = vadd.f32 %v682, 0.0
      %v755 = vadd.f32 %v683, 0.0
      %v756 = vadd.f32 %v684, 0.0
      %v757 = vadd.f32 %v685, 0.0
      %v758 = vadd.f32 %v686, 0.0
      %v759 = vadd.f32 %v687, 0.0
      %v760 = vadd.f32 %v688, 0.0
      %v761 = vadd.f32 %v689, 0.0
      %v762 = vadd.f32 %v690, 0.0
      %v763 = vadd.f32 %v691, 0.0
      %v764 = vadd.f32 %v692, 0.0
      %v765 = vadd.f32 %v693, 0.0
      %v766 = vadd.f32 %v694, 0.0
      %v767 = vadd.f32 %v695, 0.0
      %v768 = vadd.f32 %v696, 0.0
      %v769 = vadd.f32 %v697, 0.0
      %v770 = vadd.f32 %v698, 0.0
      %v771 = vadd.f32 %v699, 0.0
      %v772 = vadd.f32 %v700, 0.0
      %v773 = vadd.f32 %v701, 0.0
      %v774 = vadd.f32 %v702, 0.0
      %v775 = vadd.f32 %v703, 0.0
      %v776 = vadd.f32 %v704, 0.0
      %v777 = vadd.f32 %v705, 0.0
      %v778 = vadd.f32 %v706, 0.0
      %v779 = vadd.f32 %v707, 0.0
      %v780 = vadd.f32 %v708, 0.0
      %v781 = vadd.f32 %v709, 0.0
      %v782 = vadd.f32 %v710, 0.0
      %v783 = vadd.f32 %v711, 0.0
      %v784 = vadd.f32 %v712, 0.0
      %v785 = vadd.f32 %v713, 0.0
      %v786 = vadd.f32 %v714, 0.0
      %v787 = vadd.f32 %v715, 0.0
      %v788 = vadd.f32 %v716, 0.0
      %v789 = vadd.f32 %v717, 0.0
      %vm814 = vcmask 1046528
      %v815 = vrot.slane %v171, 1
      %v816 = vrot.slane %v172, 1
      %v817 = vsel %vm814, %v815, %v816
      %v818 = vrot.slane %v173, 1
      %v819 = vsel %vm814, %v816, %v818
      %v820 = vrot.slane %v174, 1
      %v821 = vsel %vm814, %v818, %v820
      %v822 = vrot.slane %v175, 1
      %v823 = vrot.slane %v176, 1
      %v824 = vsel %vm814, %v822, %v823
      %v825 = vrot.slane %v177, 1
      %v826 = vsel %vm814, %v823, %v825
      %v827 = vrot.slane %v178, 1
      %v828 = vsel %vm814, %v825, %v827
      %v829 = vrot.slane %v179, 1
      %v830 = vrot.slane %v180, 1
      %v831 = vsel %vm814, %v829, %v830
      %v832 = vrot.slane %v181, 1
      %v833 = vsel %vm814, %v830, %v832
      %v834 = vrot.slane %v182, 1
      %v835 = vsel %vm814, %v832, %v834
      %v836 = vrot.slane %v183, 1
      %v837 = vrot.slane %v184, 1
      %v838 = vsel %vm814, %v836, %v837
      %v839 = vrot.slane %v185, 1
      %v840 = vsel %vm814, %v837, %v839
      %v841 = vrot.slane %v186, 1
      %v842 = vsel %vm814, %v839, %v841
      %v843 = vrot.slane %v187, 1
      %v844 = vrot.slane %v188, 1
      %v845 = vsel %vm814, %v843, %v844
      %v846 = vrot.slane %v189, 1
      %v847 = vsel %vm814, %v844, %v846
      %v848 = vrot.slane %v190, 1
      %v849 = vsel %vm814, %v846, %v848
      %v850 = vrot.slane %v191, 1
      %v851 = vrot.slane %v192, 1
      %v852 = vsel %vm814, %v850, %v851
      %v853 = vrot.slane %v193, 1
      %v854 = vsel %vm814, %v851, %v853
      %v855 = vrot.slane %v194, 1
      %v856 = vsel %vm814, %v853, %v855
      %v857 = vrot.slane %v195, 1
      %v858 = vrot.slane %v196, 1
      %v859 = vsel %vm814, %v857, %v858
      %v860 = vrot.slane %v197, 1
      %v861 = vsel %vm814, %v858, %v860
      %v862 = vrot.slane %v198, 1
      %v863 = vsel %vm814, %v860, %v862
      %v864 = vrot.slane %v199, 1
      %v865 = vrot.slane %v200, 1
      %v866 = vsel %vm814, %v864, %v865
      %v867 = vrot.slane %v201, 1
      %v868 = vsel %vm814, %v865, %v867
      %v869 = vrot.slane %v202, 1
      %v870 = vsel %vm814, %v867, %v869
      %v871 = vrot.slane %v203, 1
      %v872 = vrot.slane %v204, 1
      %v873 = vsel %vm814, %v871, %v872
      %v874 = vrot.slane %v205, 1
      %v875 = vsel %vm814, %v872, %v874
      %v876 = vrot.slane %v206, 1
      %v877 = vsel %vm814, %v874, %v876
      %v878 = vrot.slane %v207, 1
      %v879 = vrot.slane %v208, 1
      %v880 = vsel %vm814, %v878, %v879
      %v881 = vrot.slane %v209, 1
      %v882 = vsel %vm814, %v879, %v881
      %v883 = vrot.slane %v210, 1
      %v884 = vsel %vm814, %v881, %v883
      %v885 = vrot.slane %v211, 1
      %v886 = vrot.slane %v212, 1
      %v887 = vsel %vm814, %v885, %v886
      %v888 = vrot.slane %v213, 1
      %v889 = vsel %vm814, %v886, %v888
      %v890 = vrot.slane %v214, 1
      %v891 = vsel %vm814, %v888, %v890
      %v892 = vrot.slane %v215, 1
      %v893 = vrot.slane %v216, 1
      %v894 = vsel %vm814, %v892, %v893
      %v895 = vrot.slane %v217, 1
      %v896 = vsel %vm814, %v893, %v895
      %v897 = vrot.slane %v218, 1
      %v898 = vsel %vm814, %v895, %v897
      %v899 = vrot.slane %v219, 1
      %v900 = vrot.slane %v220, 1
      %v901 = vsel %vm814, %v899, %v900
      %v902 = vrot.slane %v221, 1
      %v903 = vsel %vm814, %v900, %v902
      %v904 = vrot.slane %v222, 1
      %v905 = vsel %vm814, %v902, %v904
      %v906 = vrot.slane %v223, 1
      %v907 = vrot.slane %v224, 1
      %v908 = vsel %vm814, %v906, %v907
      %v909 = vrot.slane %v225, 1
      %v910 = vsel %vm814, %v907, %v909
      %v911 = vrot.slane %v226, 1
      %v912 = vsel %vm814, %v909, %v911
      %v913 = vrot.slane %v227, 1
      %v914 = vrot.slane %v228, 1
      %v915 = vsel %vm814, %v913, %v914
      %v916 = vrot.slane %v229, 1
      %v917 = vsel %vm814, %v914, %v916
      %v918 = vrot.slane %v230, 1
      %v919 = vsel %vm814, %v916, %v918
      %v920 = vrot.slane %v231, 1
      %v921 = vrot.slane %v232, 1
      %v922 = vsel %vm814, %v920, %v921
      %v923 = vrot.slane %v233, 1
      %v924 = vsel %vm814, %v921, %v923
      %v925 = vrot.slane %v234, 1
      %v926 = vsel %vm814, %v923, %v925
      %v927 = vrot.slane %v235, 1
      %v928 = vrot.slane %v236, 1
      %v929 = vsel %vm814, %v927, %v928
      %v930 = vrot.slane %v237, 1
      %v931 = vsel %vm814, %v928, %v930
      %v932 = vrot.slane %v238, 1
      %v933 = vsel %vm814, %v930, %v932
      %v934 = vrot.slane %v239, 1
      %v935 = vrot.slane %v240, 1
      %v936 = vsel %vm814, %v934, %v935
      %v937 = vrot.slane %v241, 1
      %v938 = vsel %vm814, %v935, %v937
      %v939 = vrot.slane %v242, 1
      %v940 = vsel %vm814, %v937, %v939
      %v941 = vrot.slane %v243, 1
      %v942 = vrot.slane %v244, 1
      %v943 = vsel %vm814, %v941, %v942
      %v944 = vrot.slane %v245, 1
      %v945 = vsel %vm814, %v942, %v944
      %v946 = vrot.slane %v246, 1
      %v947 = vsel %vm814, %v944, %v946
      %v948 = vrot.slane %v247, 1
      %v949 = vrot.slane %v248, 1
      %v950 = vsel %vm814, %v948, %v949
      %v951 = vrot.slane %v249, 1
      %v952 = vsel %vm814, %v949, %v951
      %v953 = vrot.slane %v250, 1
      %v954 = vsel %vm814, %v951, %v953
      %v955 = vrot.slane %v251, 1
      %v956 = vrot.slane %v252, 1
      %v957 = vsel %vm814, %v955, %v956
      %v958 = vrot.slane %v253, 1
      %v959 = vsel %vm814, %v956, %v958
      %v960 = vrot.slane %v254, 1
      %v961 = vsel %vm814, %v958, %v960
      %v962 = vrot.slane %v255, 1
      %v963 = vrot.slane %v256, 1
      %v964 = vsel %vm814, %v962, %v963
      %v965 = vrot.slane %v257, 1
      %v966 = vsel %vm814, %v963, %v965
      %v967 = vrot.slane %v258, 1
      %v968 = vsel %vm814, %v965, %v967
      %v969 = vrot.slane %v259, 1
      %v970 = vrot.slane %v260, 1
      %v971 = vsel %vm814, %v969, %v970
      %v972 = vrot.slane %v261, 1
      %v973 = vsel %vm814, %v970, %v972
      %v974 = vrot.slane %v262, 1
      %v975 = vsel %vm814, %v972, %v974
      %v976 = vrot.slane %v263, 1
      %v977 = vrot.slane %v264, 1
      %v978 = vsel %vm814, %v976, %v977
      %v979 = vrot.slane %v265, 1
      %v980 = vsel %vm814, %v977, %v979
      %v981 = vrot.slane %v266, 1
      %v982 = vsel %vm814, %v979, %v981
      %983 = vset.pattern.permute.xlu0 0
      %984 = vperm.xlu0 %983, %v817
      %v985 = vpop.permute.xlu0 %984
      %987 = vset.pattern.permute.xlu0 0
      %988 = vperm.xlu0 %987, %v819
      %v989 = vpop.permute.xlu0 %988
      %991 = vset.pattern.permute.xlu0 0
      %992 = vperm.xlu0 %991, %v821
      %v993 = vpop.permute.xlu0 %992
      %995 = vset.pattern.permute.xlu0 0
      %996 = vperm.xlu0 %995, %v824
      %v997 = vpop.permute.xlu0 %996
      %999 = vset.pattern.permute.xlu0 0
      %1000 = vperm.xlu0 %999, %v826
      %v1001 = vpop.permute.xlu0 %1000
      %1003 = vset.pattern.permute.xlu0 0
      %1004 = vperm.xlu0 %1003, %v828
      %v1005 = vpop.permute.xlu0 %1004
      %1007 = vset.pattern.permute.xlu0 0
      %1008 = vperm.xlu0 %1007, %v831
      %v1009 = vpop.permute.xlu0 %1008
      %1011 = vset.pattern.permute.xlu0 0
      %1012 = vperm.xlu0 %1011, %v833
      %v1013 = vpop.permute.xlu0 %1012
      %1015 = vset.pattern.permute.xlu0 0
      %1016 = vperm.xlu0 %1015, %v835
      %v1017 = vpop.permute.xlu0 %1016
      %1019 = vset.pattern.permute.xlu0 0
      %1020 = vperm.xlu0 %1019, %v838
      %v1021 = vpop.permute.xlu0 %1020
      %1023 = vset.pattern.permute.xlu0 0
      %1024 = vperm.xlu0 %1023, %v840
      %v1025 = vpop.permute.xlu0 %1024
      %1027 = vset.pattern.permute.xlu0 0
      %1028 = vperm.xlu0 %1027, %v842
      %v1029 = vpop.permute.xlu0 %1028
      %1031 = vset.pattern.permute.xlu0 0
      %1032 = vperm.xlu0 %1031, %v845
      %v1033 = vpop.permute.xlu0 %1032
      %1035 = vset.pattern.permute.xlu0 0
      %1036 = vperm.xlu0 %1035, %v847
      %v1037 = vpop.permute.xlu0 %1036
      %1039 = vset.pattern.permute.xlu0 0
      %1040 = vperm.xlu0 %1039, %v849
      %v1041 = vpop.permute.xlu0 %1040
      %1043 = vset.pattern.permute.xlu0 0
      %1044 = vperm.xlu0 %1043, %v852
      %v1045 = vpop.permute.xlu0 %1044
      %1047 = vset.pattern.permute.xlu0 0
      %1048 = vperm.xlu0 %1047, %v854
      %v1049 = vpop.permute.xlu0 %1048
      %1051 = vset.pattern.permute.xlu0 0
      %1052 = vperm.xlu0 %1051, %v856
      %v1053 = vpop.permute.xlu0 %1052
      %1055 = vset.pattern.permute.xlu0 0
      %1056 = vperm.xlu0 %1055, %v859
      %v1057 = vpop.permute.xlu0 %1056
      %1059 = vset.pattern.permute.xlu0 0
      %1060 = vperm.xlu0 %1059, %v861
      %v1061 = vpop.permute.xlu0 %1060
      %1063 = vset.pattern.permute.xlu0 0
      %1064 = vperm.xlu0 %1063, %v863
      %v1065 = vpop.permute.xlu0 %1064
      %1067 = vset.pattern.permute.xlu0 0
      %1068 = vperm.xlu0 %1067, %v866
      %v1069 = vpop.permute.xlu0 %1068
      %1071 = vset.pattern.permute.xlu0 0
      %1072 = vperm.xlu0 %1071, %v868
      %v1073 = vpop.permute.xlu0 %1072
      %1075 = vset.pattern.permute.xlu0 0
      %1076 = vperm.xlu0 %1075, %v870
      %v1077 = vpop.permute.xlu0 %1076
      %1079 = vset.pattern.permute.xlu0 0
      %1080 = vperm.xlu0 %1079, %v873
      %v1081 = vpop.permute.xlu0 %1080
      %1083 = vset.pattern.permute.xlu0 0
      %1084 = vperm.xlu0 %1083, %v875
      %v1085 = vpop.permute.xlu0 %1084
      %1087 = vset.pattern.permute.xlu0 0
      %1088 = vperm.xlu0 %1087, %v877
      %v1089 = vpop.permute.xlu0 %1088
      %1091 = vset.pattern.permute.xlu0 0
      %1092 = vperm.xlu0 %1091, %v880
      %v1093 = vpop.permute.xlu0 %1092
      %1095 = vset.pattern.permute.xlu0 0
      %1096 = vperm.xlu0 %1095, %v882
      %v1097 = vpop.permute.xlu0 %1096
      %1099 = vset.pattern.permute.xlu0 0
      %1100 = vperm.xlu0 %1099, %v884
      %v1101 = vpop.permute.xlu0 %1100
      %1103 = vset.pattern.permute.xlu0 0
      %1104 = vperm.xlu0 %1103, %v887
      %v1105 = vpop.permute.xlu0 %1104
      %1107 = vset.pattern.permute.xlu0 0
      %1108 = vperm.xlu0 %1107, %v889
      %v1109 = vpop.permute.xlu0 %1108
      %1111 = vset.pattern.permute.xlu0 0
      %1112 = vperm.xlu0 %1111, %v891
      %v1113 = vpop.permute.xlu0 %1112
      %1115 = vset.pattern.permute.xlu0 0
      %1116 = vperm.xlu0 %1115, %v894
      %v1117 = vpop.permute.xlu0 %1116
      %1119 = vset.pattern.permute.xlu0 0
      %1120 = vperm.xlu0 %1119, %v896
      %v1121 = vpop.permute.xlu0 %1120
      %1123 = vset.pattern.permute.xlu0 0
      %1124 = vperm.xlu0 %1123, %v898
      %v1125 = vpop.permute.xlu0 %1124
      %1127 = vset.pattern.permute.xlu0 0
      %1128 = vperm.xlu0 %1127, %v901
      %v1129 = vpop.permute.xlu0 %1128
      %1131 = vset.pattern.permute.xlu0 0
      %1132 = vperm.xlu0 %1131, %v903
      %v1133 = vpop.permute.xlu0 %1132
      %1135 = vset.pattern.permute.xlu0 0
      %1136 = vperm.xlu0 %1135, %v905
      %v1137 = vpop.permute.xlu0 %1136
      %1139 = vset.pattern.permute.xlu0 0
      %1140 = vperm.xlu0 %1139, %v908
      %v1141 = vpop.permute.xlu0 %1140
      %1143 = vset.pattern.permute.xlu0 0
      %1144 = vperm.xlu0 %1143, %v910
      %v1145 = vpop.permute.xlu0 %1144
      %1147 = vset.pattern.permute.xlu0 0
      %1148 = vperm.xlu0 %1147, %v912
      %v1149 = vpop.permute.xlu0 %1148
      %1151 = vset.pattern.permute.xlu0 0
      %1152 = vperm.xlu0 %1151, %v915
      %v1153 = vpop.permute.xlu0 %1152
      %1155 = vset.pattern.permute.xlu0 0
      %1156 = vperm.xlu0 %1155, %v917
      %v1157 = vpop.permute.xlu0 %1156
      %1159 = vset.pattern.permute.xlu0 0
      %1160 = vperm.xlu0 %1159, %v919
      %v1161 = vpop.permute.xlu0 %1160
      %1163 = vset.pattern.permute.xlu0 0
      %1164 = vperm.xlu0 %1163, %v922
      %v1165 = vpop.permute.xlu0 %1164
      %1167 = vset.pattern.permute.xlu0 0
      %1168 = vperm.xlu0 %1167, %v924
      %v1169 = vpop.permute.xlu0 %1168
      %1171 = vset.pattern.permute.xlu0 0
      %1172 = vperm.xlu0 %1171, %v926
      %v1173 = vpop.permute.xlu0 %1172
      %1175 = vset.pattern.permute.xlu0 0
      %1176 = vperm.xlu0 %1175, %v929
      %v1177 = vpop.permute.xlu0 %1176
      %1179 = vset.pattern.permute.xlu0 0
      %1180 = vperm.xlu0 %1179, %v931
      %v1181 = vpop.permute.xlu0 %1180
      %1183 = vset.pattern.permute.xlu0 0
      %1184 = vperm.xlu0 %1183, %v933
      %v1185 = vpop.permute.xlu0 %1184
      %1187 = vset.pattern.permute.xlu0 0
      %1188 = vperm.xlu0 %1187, %v936
      %v1189 = vpop.permute.xlu0 %1188
      %1191 = vset.pattern.permute.xlu0 0
      %1192 = vperm.xlu0 %1191, %v938
      %v1193 = vpop.permute.xlu0 %1192
      %1195 = vset.pattern.permute.xlu0 0
      %1196 = vperm.xlu0 %1195, %v940
      %v1197 = vpop.permute.xlu0 %1196
      %1199 = vset.pattern.permute.xlu0 0
      %1200 = vperm.xlu0 %1199, %v943
      %v1201 = vpop.permute.xlu0 %1200
      %1203 = vset.pattern.permute.xlu0 0
      %1204 = vperm.xlu0 %1203, %v945
      %v1205 = vpop.permute.xlu0 %1204
      %1207 = vset.pattern.permute.xlu0 0
      %1208 = vperm.xlu0 %1207, %v947
      %v1209 = vpop.permute.xlu0 %1208
      %1211 = vset.pattern.permute.xlu0 0
      %1212 = vperm.xlu0 %1211, %v950
      %v1213 = vpop.permute.xlu0 %1212
      %1215 = vset.pattern.permute.xlu0 0
      %1216 = vperm.xlu0 %1215, %v952
      %v1217 = vpop.permute.xlu0 %1216
      %1219 = vset.pattern.permute.xlu0 0
      %1220 = vperm.xlu0 %1219, %v954
      %v1221 = vpop.permute.xlu0 %1220
      %1223 = vset.pattern.permute.xlu0 0
      %1224 = vperm.xlu0 %1223, %v957
      %v1225 = vpop.permute.xlu0 %1224
      %1227 = vset.pattern.permute.xlu0 0
      %1228 = vperm.xlu0 %1227, %v959
      %v1229 = vpop.permute.xlu0 %1228
      %1231 = vset.pattern.permute.xlu0 0
      %1232 = vperm.xlu0 %1231, %v961
      %v1233 = vpop.permute.xlu0 %1232
      %1235 = vset.pattern.permute.xlu0 0
      %1236 = vperm.xlu0 %1235, %v964
      %v1237 = vpop.permute.xlu0 %1236
      %1239 = vset.pattern.permute.xlu0 0
      %1240 = vperm.xlu0 %1239, %v966
      %v1241 = vpop.permute.xlu0 %1240
      %1243 = vset.pattern.permute.xlu0 0
      %1244 = vperm.xlu0 %1243, %v968
      %v1245 = vpop.permute.xlu0 %1244
      %1247 = vset.pattern.permute.xlu0 0
      %1248 = vperm.xlu0 %1247, %v971
      %v1249 = vpop.permute.xlu0 %1248
      %1251 = vset.pattern.permute.xlu0 0
      %1252 = vperm.xlu0 %1251, %v973
      %v1253 = vpop.permute.xlu0 %1252
      %1255 = vset.pattern.permute.xlu0 0
      %1256 = vperm.xlu0 %1255, %v975
      %v1257 = vpop.permute.xlu0 %1256
      %1259 = vset.pattern.permute.xlu0 0
      %1260 = vperm.xlu0 %1259, %v978
      %v1261 = vpop.permute.xlu0 %1260
      %1263 = vset.pattern.permute.xlu0 0
      %1264 = vperm.xlu0 %1263, %v980
      %v1265 = vpop.permute.xlu0 %1264
      %1267 = vset.pattern.permute.xlu0 0
      %1268 = vperm.xlu0 %1267, %v982
      %v1269 = vpop.permute.xlu0 %1268
      %v1271 = vperm.slane %v284, 1
      %v1272 = vmul.f32 %v985, %v1271
      %v1273 = vmul.f32 %v989, %v1271
      %v1274 = vmul.f32 %v993, %v1271
      %v1275 = vmul.f32 %v997, %v1271
      %v1276 = vmul.f32 %v1001, %v1271
      %v1277 = vmul.f32 %v1005, %v1271
      %v1278 = vmul.f32 %v1009, %v1271
      %v1279 = vmul.f32 %v1013, %v1271
      %v1280 = vmul.f32 %v1017, %v1271
      %v1281 = vmul.f32 %v1021, %v1271
      %v1282 = vmul.f32 %v1025, %v1271
      %v1283 = vmul.f32 %v1029, %v1271
      %v1284 = vmul.f32 %v1033, %v1271
      %v1285 = vmul.f32 %v1037, %v1271
      %v1286 = vmul.f32 %v1041, %v1271
      %v1287 = vmul.f32 %v1045, %v1271
      %v1288 = vmul.f32 %v1049, %v1271
      %v1289 = vmul.f32 %v1053, %v1271
      %v1290 = vmul.f32 %v1057, %v1271
      %v1291 = vmul.f32 %v1061, %v1271
      %v1292 = vmul.f32 %v1065, %v1271
      %v1293 = vmul.f32 %v1069, %v1271
      %v1294 = vmul.f32 %v1073, %v1271
      %v1295 = vmul.f32 %v1077, %v1271
      %v1296 = vmul.f32 %v1081, %v1271
      %v1297 = vmul.f32 %v1085, %v1271
      %v1298 = vmul.f32 %v1089, %v1271
      %v1299 = vmul.f32 %v1093, %v1271
      %v1300 = vmul.f32 %v1097, %v1271
      %v1301 = vmul.f32 %v1101, %v1271
      %v1302 = vmul.f32 %v1105, %v1271
      %v1303 = vmul.f32 %v1109, %v1271
      %v1304 = vmul.f32 %v1113, %v1271
      %v1305 = vmul.f32 %v1117, %v1271
      %v1306 = vmul.f32 %v1121, %v1271
      %v1307 = vmul.f32 %v1125, %v1271
      %v1308 = vmul.f32 %v1129, %v1271
      %v1309 = vmul.f32 %v1133, %v1271
      %v1310 = vmul.f32 %v1137, %v1271
      %v1311 = vmul.f32 %v1141, %v1271
      %v1312 = vmul.f32 %v1145, %v1271
      %v1313 = vmul.f32 %v1149, %v1271
      %v1314 = vmul.f32 %v1153, %v1271
      %v1315 = vmul.f32 %v1157, %v1271
      %v1316 = vmul.f32 %v1161, %v1271
      %v1317 = vmul.f32 %v1165, %v1271
      %v1318 = vmul.f32 %v1169, %v1271
      %v1319 = vmul.f32 %v1173, %v1271
      %v1320 = vmul.f32 %v1177, %v1271
      %v1321 = vmul.f32 %v1181, %v1271
      %v1322 = vmul.f32 %v1185, %v1271
      %v1323 = vmul.f32 %v1189, %v1271
      %v1324 = vmul.f32 %v1193, %v1271
      %v1325 = vmul.f32 %v1197, %v1271
      %v1326 = vmul.f32 %v1201, %v1271
      %v1327 = vmul.f32 %v1205, %v1271
      %v1328 = vmul.f32 %v1209, %v1271
      %v1329 = vmul.f32 %v1213, %v1271
      %v1330 = vmul.f32 %v1217, %v1271
      %v1331 = vmul.f32 %v1221, %v1271
      %v1332 = vmul.f32 %v1225, %v1271
      %v1333 = vmul.f32 %v1229, %v1271
      %v1334 = vmul.f32 %v1233, %v1271
      %v1335 = vmul.f32 %v1237, %v1271
      %v1336 = vmul.f32 %v1241, %v1271
      %v1337 = vmul.f32 %v1245, %v1271
      %v1338 = vmul.f32 %v1249, %v1271
      %v1339 = vmul.f32 %v1253, %v1271
      %v1340 = vmul.f32 %v1257, %v1271
      %v1341 = vmul.f32 %v1261, %v1271
      %v1342 = vmul.f32 %v1265, %v1271
      %v1343 = vmul.f32 %v1269, %v1271
      %v1344 = vadd.f32 %v718, %v1272
      %v1345 = vadd.f32 %v719, %v1273
      %v1346 = vadd.f32 %v720, %v1274
      %v1347 = vadd.f32 %v721, %v1275
      %v1348 = vadd.f32 %v722, %v1276
      %v1349 = vadd.f32 %v723, %v1277
      %v1350 = vadd.f32 %v724, %v1278
      %v1351 = vadd.f32 %v725, %v1279
      %v1352 = vadd.f32 %v726, %v1280
      %v1353 = vadd.f32 %v727, %v1281
      %v1354 = vadd.f32 %v728, %v1282
      %v1355 = vadd.f32 %v729, %v1283
      %v1356 = vadd.f32 %v730, %v1284
      %v1357 = vadd.f32 %v731, %v1285
      %v1358 = vadd.f32 %v732, %v1286
      %v1359 = vadd.f32 %v733, %v1287
      %v1360 = vadd.f32 %v734, %v1288
      %v1361 = vadd.f32 %v735, %v1289
      %v1362 = vadd.f32 %v736, %v1290
      %v1363 = vadd.f32 %v737, %v1291
      %v1364 = vadd.f32 %v738, %v1292
      %v1365 = vadd.f32 %v739, %v1293
      %v1366 = vadd.f32 %v740, %v1294
      %v1367 = vadd.f32 %v741, %v1295
      %v1368 = vadd.f32 %v742, %v1296
      %v1369 = vadd.f32 %v743, %v1297
      %v1370 = vadd.f32 %v744, %v1298
      %v1371 = vadd.f32 %v745, %v1299
      %v1372 = vadd.f32 %v746, %v1300
      %v1373 = vadd.f32 %v747, %v1301
      %v1374 = vadd.f32 %v748, %v1302
      %v1375 = vadd.f32 %v749, %v1303
      %v1376 = vadd.f32 %v750, %v1304
      %v1377 = vadd.f32 %v751, %v1305
      %v1378 = vadd.f32 %v752, %v1306
      %v1379 = vadd.f32 %v753, %v1307
      %v1380 = vadd.f32 %v754, %v1308
      %v1381 = vadd.f32 %v755, %v1309
      %v1382 = vadd.f32 %v756, %v1310
      %v1383 = vadd.f32 %v757, %v1311
      %v1384 = vadd.f32 %v758, %v1312
      %v1385 = vadd.f32 %v759, %v1313
      %v1386 = vadd.f32 %v760, %v1314
      %v1387 = vadd.f32 %v761, %v1315
      %v1388 = vadd.f32 %v762, %v1316
      %v1389 = vadd.f32 %v763, %v1317
      %v1390 = vadd.f32 %v764, %v1318
      %v1391 = vadd.f32 %v765, %v1319
      %v1392 = vadd.f32 %v766, %v1320
      %v1393 = vadd.f32 %v767, %v1321
      %v1394 = vadd.f32 %v768, %v1322
      %v1395 = vadd.f32 %v769, %v1323
      %v1396 = vadd.f32 %v770, %v1324
      %v1397 = vadd.f32 %v771, %v1325
      %v1398 = vadd.f32 %v772, %v1326
      %v1399 = vadd.f32 %v773, %v1327
      %v1400 = vadd.f32 %v774, %v1328
      %v1401 = vadd.f32 %v775, %v1329
      %v1402 = vadd.f32 %v776, %v1330
      %v1403 = vadd.f32 %v777, %v1331
      %v1404 = vadd.f32 %v778, %v1332
      %v1405 = vadd.f32 %v779, %v1333
      %v1406 = vadd.f32 %v780, %v1334
      %v1407 = vadd.f32 %v781, %v1335
      %v1408 = vadd.f32 %v782, %v1336
      %v1409 = vadd.f32 %v783, %v1337
      %v1410 = vadd.f32 %v784, %v1338
      %v1411 = vadd.f32 %v785, %v1339
      %v1412 = vadd.f32 %v786, %v1340
      %v1413 = vadd.f32 %v787, %v1341
      %v1414 = vadd.f32 %v788, %v1342
      %v1415 = vadd.f32 %v789, %v1343
      %vm1416 = vcmask 1045504
      %v1417 = vrot.slane %v171, 2
      %v1418 = vrot.slane %v172, 2
      %v1419 = vsel %vm1416, %v1417, %v1418
      %v1420 = vrot.slane %v173, 2
      %v1421 = vsel %vm1416, %v1418, %v1420
      %v1422 = vrot.slane %v174, 2
      %v1423 = vsel %vm1416, %v1420, %v1422
      %v1424 = vrot.slane %v175, 2
      %v1425 = vrot.slane %v176, 2
      %v1426 = vsel %vm1416, %v1424, %v1425
      %v1427 = vrot.slane %v177, 2
      %v1428 = vsel %vm1416, %v1425, %v1427
      %v1429 = vrot.slane %v178, 2
      %v1430 = vsel %vm1416, %v1427, %v1429
      %v1431 = vrot.slane %v179, 2
      %v1432 = vrot.slane %v180, 2
      %v1433 = vsel %vm1416, %v1431, %v1432
      %v1434 = vrot.slane %v181, 2
      %v1435 = vsel %vm1416, %v1432, %v1434
      %v1436 = vrot.slane %v182, 2
      %v1437 = vsel %vm1416, %v1434, %v1436
      %v1438 = vrot.slane %v183, 2
      %v1439 = vrot.slane %v184, 2
      %v1440 = vsel %vm1416, %v1438, %v1439
      %v1441 = vrot.slane %v185, 2
      %v1442 = vsel %vm1416, %v1439, %v1441
      %v1443 = vrot.slane %v186, 2
      %v1444 = vsel %vm1416, %v1441, %v1443
      %v1445 = vrot.slane %v187, 2
      %v1446 = vrot.slane %v188, 2
      %v1447 = vsel %vm1416, %v1445, %v1446
      %v1448 = vrot.slane %v189, 2
      %v1449 = vsel %vm1416, %v1446, %v1448
      %v1450 = vrot.slane %v190, 2
      %v1451 = vsel %vm1416, %v1448, %v1450
      %v1452 = vrot.slane %v191, 2
      %v1453 = vrot.slane %v192, 2
      %v1454 = vsel %vm1416, %v1452, %v1453
      %v1455 = vrot.slane %v193, 2
      %v1456 = vsel %vm1416, %v1453, %v1455
      %v1457 = vrot.slane %v194, 2
      %v1458 = vsel %vm1416, %v1455, %v1457
      %v1459 = vrot.slane %v195, 2
      %v1460 = vrot.slane %v196, 2
      %v1461 = vsel %vm1416, %v1459, %v1460
      %v1462 = vrot.slane %v197, 2
      %v1463 = vsel %vm1416, %v1460, %v1462
      %v1464 = vrot.slane %v198, 2
      %v1465 = vsel %vm1416, %v1462, %v1464
      %v1466 = vrot.slane %v199, 2
      %v1467 = vrot.slane %v200, 2
      %v1468 = vsel %vm1416, %v1466, %v1467
      %v1469 = vrot.slane %v201, 2
      %v1470 = vsel %vm1416, %v1467, %v1469
      %v1471 = vrot.slane %v202, 2
      %v1472 = vsel %vm1416, %v1469, %v1471
      %v1473 = vrot.slane %v203, 2
      %v1474 = vrot.slane %v204, 2
      %v1475 = vsel %vm1416, %v1473, %v1474
      %v1476 = vrot.slane %v205, 2
      %v1477 = vsel %vm1416, %v1474, %v1476
      %v1478 = vrot.slane %v206, 2
      %v1479 = vsel %vm1416, %v1476, %v1478
      %v1480 = vrot.slane %v207, 2
      %v1481 = vrot.slane %v208, 2
      %v1482 = vsel %vm1416, %v1480, %v1481
      %v1483 = vrot.slane %v209, 2
      %v1484 = vsel %vm1416, %v1481, %v1483
      %v1485 = vrot.slane %v210, 2
      %v1486 = vsel %vm1416, %v1483, %v1485
      %v1487 = vrot.slane %v211, 2
      %v1488 = vrot.slane %v212, 2
      %v1489 = vsel %vm1416, %v1487, %v1488
      %v1490 = vrot.slane %v213, 2
      %v1491 = vsel %vm1416, %v1488, %v1490
      %v1492 = vrot.slane %v214, 2
      %v1493 = vsel %vm1416, %v1490, %v1492
      %v1494 = vrot.slane %v215, 2
      %v1495 = vrot.slane %v216, 2
      %v1496 = vsel %vm1416, %v1494, %v1495
      %v1497 = vrot.slane %v217, 2
      %v1498 = vsel %vm1416, %v1495, %v1497
      %v1499 = vrot.slane %v218, 2
      %v1500 = vsel %vm1416, %v1497, %v1499
      %v1501 = vrot.slane %v219, 2
      %v1502 = vrot.slane %v220, 2
      %v1503 = vsel %vm1416, %v1501, %v1502
      %v1504 = vrot.slane %v221, 2
      %v1505 = vsel %vm1416, %v1502, %v1504
      %v1506 = vrot.slane %v222, 2
      %v1507 = vsel %vm1416, %v1504, %v1506
      %v1508 = vrot.slane %v223, 2
      %v1509 = vrot.slane %v224, 2
      %v1510 = vsel %vm1416, %v1508, %v1509
      %v1511 = vrot.slane %v225, 2
      %v1512 = vsel %vm1416, %v1509, %v1511
      %v1513 = vrot.slane %v226, 2
      %v1514 = vsel %vm1416, %v1511, %v1513
      %v1515 = vrot.slane %v227, 2
      %v1516 = vrot.slane %v228, 2
      %v1517 = vsel %vm1416, %v1515, %v1516
      %v1518 = vrot.slane %v229, 2
      %v1519 = vsel %vm1416, %v1516, %v1518
      %v1520 = vrot.slane %v230, 2
      %v1521 = vsel %vm1416, %v1518, %v1520
      %v1522 = vrot.slane %v231, 2
      %v1523 = vrot.slane %v232, 2
      %v1524 = vsel %vm1416, %v1522, %v1523
      %v1525 = vrot.slane %v233, 2
      %v1526 = vsel %vm1416, %v1523, %v1525
      %v1527 = vrot.slane %v234, 2
      %v1528 = vsel %vm1416, %v1525, %v1527
      %v1529 = vrot.slane %v235, 2
      %v1530 = vrot.slane %v236, 2
      %v1531 = vsel %vm1416, %v1529, %v1530
      %v1532 = vrot.slane %v237, 2
      %v1533 = vsel %vm1416, %v1530, %v1532
      %v1534 = vrot.slane %v238, 2
      %v1535 = vsel %vm1416, %v1532, %v1534
      %v1536 = vrot.slane %v239, 2
      %v1537 = vrot.slane %v240, 2
      %v1538 = vsel %vm1416, %v1536, %v1537
      %v1539 = vrot.slane %v241, 2
      %v1540 = vsel %vm1416, %v1537, %v1539
      %v1541 = vrot.slane %v242, 2
      %v1542 = vsel %vm1416, %v1539, %v1541
      %v1543 = vrot.slane %v243, 2
      %v1544 = vrot.slane %v244, 2
      %v1545 = vsel %vm1416, %v1543, %v1544
      %v1546 = vrot.slane %v245, 2
      %v1547 = vsel %vm1416, %v1544, %v1546
      %v1548 = vrot.slane %v246, 2
      %v1549 = vsel %vm1416, %v1546, %v1548
      %v1550 = vrot.slane %v247, 2
      %v1551 = vrot.slane %v248, 2
      %v1552 = vsel %vm1416, %v1550, %v1551
      %v1553 = vrot.slane %v249, 2
      %v1554 = vsel %vm1416, %v1551, %v1553
      %v1555 = vrot.slane %v250, 2
      %v1556 = vsel %vm1416, %v1553, %v1555
      %v1557 = vrot.slane %v251, 2
      %v1558 = vrot.slane %v252, 2
      %v1559 = vsel %vm1416, %v1557, %v1558
      %v1560 = vrot.slane %v253, 2
      %v1561 = vsel %vm1416, %v1558, %v1560
      %v1562 = vrot.slane %v254, 2
      %v1563 = vsel %vm1416, %v1560, %v1562
      %v1564 = vrot.slane %v255, 2
      %v1565 = vrot.slane %v256, 2
      %v1566 = vsel %vm1416, %v1564, %v1565
      %v1567 = vrot.slane %v257, 2
      %v1568 = vsel %vm1416, %v1565, %v1567
      %v1569 = vrot.slane %v258, 2
      %v1570 = vsel %vm1416, %v1567, %v1569
      %v1571 = vrot.slane %v259, 2
      %v1572 = vrot.slane %v260, 2
      %v1573 = vsel %vm1416, %v1571, %v1572
      %v1574 = vrot.slane %v261, 2
      %v1575 = vsel %vm1416, %v1572, %v1574
      %v1576 = vrot.slane %v262, 2
      %v1577 = vsel %vm1416, %v1574, %v1576
      %v1578 = vrot.slane %v263, 2
      %v1579 = vrot.slane %v264, 2
      %v1580 = vsel %vm1416, %v1578, %v1579
      %v1581 = vrot.slane %v265, 2
      %v1582 = vsel %vm1416, %v1579, %v1581
      %v1583 = vrot.slane %v266, 2
      %v1584 = vsel %vm1416, %v1581, %v1583
      %v1585 = vld [vmem:[%s1] sm:$0x2]
      %v1586 = vunpack.c.l.bf16 %v1585
      %1587 = vset.pattern.permute.xlu0 0
      %1588 = vperm.xlu0 %1587, %v1419
      %v1589 = vpop.permute.xlu0 %1588
      %1591 = vset.pattern.permute.xlu0 0
      %1592 = vperm.xlu0 %1591, %v1421
      %v1593 = vpop.permute.xlu0 %1592
      %1595 = vset.pattern.permute.xlu0 0
      %1596 = vperm.xlu0 %1595, %v1423
      %v1597 = vpop.permute.xlu0 %1596
      %1599 = vset.pattern.permute.xlu0 0
      %1600 = vperm.xlu0 %1599, %v1426
      %v1601 = vpop.permute.xlu0 %1600
      %1603 = vset.pattern.permute.xlu0 0
      %1604 = vperm.xlu0 %1603, %v1428
      %v1605 = vpop.permute.xlu0 %1604
      %1607 = vset.pattern.permute.xlu0 0
      %1608 = vperm.xlu0 %1607, %v1430
      %v1609 = vpop.permute.xlu0 %1608
      %1611 = vset.pattern.permute.xlu0 0
      %1612 = vperm.xlu0 %1611, %v1433
      %v1613 = vpop.permute.xlu0 %1612
      %1615 = vset.pattern.permute.xlu0 0
      %1616 = vperm.xlu0 %1615, %v1435
      %v1617 = vpop.permute.xlu0 %1616
      %1619 = vset.pattern.permute.xlu0 0
      %1620 = vperm.xlu0 %1619, %v1437
      %v1621 = vpop.permute.xlu0 %1620
      %1623 = vset.pattern.permute.xlu0 0
      %1624 = vperm.xlu0 %1623, %v1440
      %v1625 = vpop.permute.xlu0 %1624
      %1627 = vset.pattern.permute.xlu0 0
      %1628 = vperm.xlu0 %1627, %v1442
      %v1629 = vpop.permute.xlu0 %1628
      %1631 = vset.pattern.permute.xlu0 0
      %1632 = vperm.xlu0 %1631, %v1444
      %v1633 = vpop.permute.xlu0 %1632
      %1635 = vset.pattern.permute.xlu0 0
      %1636 = vperm.xlu0 %1635, %v1447
      %v1637 = vpop.permute.xlu0 %1636
      %1639 = vset.pattern.permute.xlu0 0
      %1640 = vperm.xlu0 %1639, %v1449
      %v1641 = vpop.permute.xlu0 %1640
      %1643 = vset.pattern.permute.xlu0 0
      %1644 = vperm.xlu0 %1643, %v1451
      %v1645 = vpop.permute.xlu0 %1644
      %1647 = vset.pattern.permute.xlu0 0
      %1648 = vperm.xlu0 %1647, %v1454
      %v1649 = vpop.permute.xlu0 %1648
      %1651 = vset.pattern.permute.xlu0 0
      %1652 = vperm.xlu0 %1651, %v1456
      %v1653 = vpop.permute.xlu0 %1652
      %1655 = vset.pattern.permute.xlu0 0
      %1656 = vperm.xlu0 %1655, %v1458
      %v1657 = vpop.permute.xlu0 %1656
      %1659 = vset.pattern.permute.xlu0 0
      %1660 = vperm.xlu0 %1659, %v1461
      %v1661 = vpop.permute.xlu0 %1660
      %1663 = vset.pattern.permute.xlu0 0
      %1664 = vperm.xlu0 %1663, %v1463
      %v1665 = vpop.permute.xlu0 %1664
      %1667 = vset.pattern.permute.xlu0 0
      %1668 = vperm.xlu0 %1667, %v1465
      %v1669 = vpop.permute.xlu0 %1668
      %1671 = vset.pattern.permute.xlu0 0
      %1672 = vperm.xlu0 %1671, %v1468
      %v1673 = vpop.permute.xlu0 %1672
      %1675 = vset.pattern.permute.xlu0 0
      %1676 = vperm.xlu0 %1675, %v1470
      %v1677 = vpop.permute.xlu0 %1676
      %1679 = vset.pattern.permute.xlu0 0
      %1680 = vperm.xlu0 %1679, %v1472
      %v1681 = vpop.permute.xlu0 %1680
      %1683 = vset.pattern.permute.xlu0 0
      %1684 = vperm.xlu0 %1683, %v1475
      %v1685 = vpop.permute.xlu0 %1684
      %1687 = vset.pattern.permute.xlu0 0
      %1688 = vperm.xlu0 %1687, %v1477
      %v1689 = vpop.permute.xlu0 %1688
      %1691 = vset.pattern.permute.xlu0 0
      %1692 = vperm.xlu0 %1691, %v1479
      %v1693 = vpop.permute.xlu0 %1692
      %1695 = vset.pattern.permute.xlu0 0
      %1696 = vperm.xlu0 %1695, %v1482
      %v1697 = vpop.permute.xlu0 %1696
      %1699 = vset.pattern.permute.xlu0 0
      %1700 = vperm.xlu0 %1699, %v1484
      %v1701 = vpop.permute.xlu0 %1700
      %1703 = vset.pattern.permute.xlu0 0
      %1704 = vperm.xlu0 %1703, %v1486
      %v1705 = vpop.permute.xlu0 %1704
      %1707 = vset.pattern.permute.xlu0 0
      %1708 = vperm.xlu0 %1707, %v1489
      %v1709 = vpop.permute.xlu0 %1708
      %1711 = vset.pattern.permute.xlu0 0
      %1712 = vperm.xlu0 %1711, %v1491
      %v1713 = vpop.permute.xlu0 %1712
      %1715 = vset.pattern.permute.xlu0 0
      %1716 = vperm.xlu0 %1715, %v1493
      %v1717 = vpop.permute.xlu0 %1716
      %1719 = vset.pattern.permute.xlu0 0
      %1720 = vperm.xlu0 %1719, %v1496
      %v1721 = vpop.permute.xlu0 %1720
      %1723 = vset.pattern.permute.xlu0 0
      %1724 = vperm.xlu0 %1723, %v1498
      %v1725 = vpop.permute.xlu0 %1724
      %1727 = vset.pattern.permute.xlu0 0
      %1728 = vperm.xlu0 %1727, %v1500
      %v1729 = vpop.permute.xlu0 %1728
      %1731 = vset.pattern.permute.xlu0 0
      %1732 = vperm.xlu0 %1731, %v1503
      %v1733 = vpop.permute.xlu0 %1732
      %1735 = vset.pattern.permute.xlu0 0
      %1736 = vperm.xlu0 %1735, %v1505
      %v1737 = vpop.permute.xlu0 %1736
      %1739 = vset.pattern.permute.xlu0 0
      %1740 = vperm.xlu0 %1739, %v1507
      %v1741 = vpop.permute.xlu0 %1740
      %1743 = vset.pattern.permute.xlu0 0
      %1744 = vperm.xlu0 %1743, %v1510
      %v1745 = vpop.permute.xlu0 %1744
      %1747 = vset.pattern.permute.xlu0 0
      %1748 = vperm.xlu0 %1747, %v1512
      %v1749 = vpop.permute.xlu0 %1748
      %1751 = vset.pattern.permute.xlu0 0
      %1752 = vperm.xlu0 %1751, %v1514
      %v1753 = vpop.permute.xlu0 %1752
      %1755 = vset.pattern.permute.xlu0 0
      %1756 = vperm.xlu0 %1755, %v1517
      %v1757 = vpop.permute.xlu0 %1756
      %1759 = vset.pattern.permute.xlu0 0
      %1760 = vperm.xlu0 %1759, %v1519
      %v1761 = vpop.permute.xlu0 %1760
      %1763 = vset.pattern.permute.xlu0 0
      %1764 = vperm.xlu0 %1763, %v1521
      %v1765 = vpop.permute.xlu0 %1764
      %1767 = vset.pattern.permute.xlu0 0
      %1768 = vperm.xlu0 %1767, %v1524
      %v1769 = vpop.permute.xlu0 %1768
      %1771 = vset.pattern.permute.xlu0 0
      %1772 = vperm.xlu0 %1771, %v1526
      %v1773 = vpop.permute.xlu0 %1772
      %1775 = vset.pattern.permute.xlu0 0
      %1776 = vperm.xlu0 %1775, %v1528
      %v1777 = vpop.permute.xlu0 %1776
      %1779 = vset.pattern.permute.xlu0 0
      %1780 = vperm.xlu0 %1779, %v1531
      %v1781 = vpop.permute.xlu0 %1780
      %1783 = vset.pattern.permute.xlu0 0
      %1784 = vperm.xlu0 %1783, %v1533
      %v1785 = vpop.permute.xlu0 %1784
      %1787 = vset.pattern.permute.xlu0 0
      %1788 = vperm.xlu0 %1787, %v1535
      %v1789 = vpop.permute.xlu0 %1788
      %1791 = vset.pattern.permute.xlu0 0
      %1792 = vperm.xlu0 %1791, %v1538
      %v1793 = vpop.permute.xlu0 %1792
      %1795 = vset.pattern.permute.xlu0 0
      %1796 = vperm.xlu0 %1795, %v1540
      %v1797 = vpop.permute.xlu0 %1796
      %1799 = vset.pattern.permute.xlu0 0
      %1800 = vperm.xlu0 %1799, %v1542
      %v1801 = vpop.permute.xlu0 %1800
      %1803 = vset.pattern.permute.xlu0 0
      %1804 = vperm.xlu0 %1803, %v1545
      %v1805 = vpop.permute.xlu0 %1804
      %1807 = vset.pattern.permute.xlu0 0
      %1808 = vperm.xlu0 %1807, %v1547
      %v1809 = vpop.permute.xlu0 %1808
      %1811 = vset.pattern.permute.xlu0 0
      %1812 = vperm.xlu0 %1811, %v1549
      %v1813 = vpop.permute.xlu0 %1812
      %1815 = vset.pattern.permute.xlu0 0
      %1816 = vperm.xlu0 %1815, %v1552
      %v1817 = vpop.permute.xlu0 %1816
      %1819 = vset.pattern.permute.xlu0 0
      %1820 = vperm.xlu0 %1819, %v1554
      %v1821 = vpop.permute.xlu0 %1820
      %1823 = vset.pattern.permute.xlu0 0
      %1824 = vperm.xlu0 %1823, %v1556
      %v1825 = vpop.permute.xlu0 %1824
      %1827 = vset.pattern.permute.xlu0 0
      %1828 = vperm.xlu0 %1827, %v1559
      %v1829 = vpop.permute.xlu0 %1828
      %1831 = vset.pattern.permute.xlu0 0
      %1832 = vperm.xlu0 %1831, %v1561
      %v1833 = vpop.permute.xlu0 %1832
      %1835 = vset.pattern.permute.xlu0 0
      %1836 = vperm.xlu0 %1835, %v1563
      %v1837 = vpop.permute.xlu0 %1836
      %1839 = vset.pattern.permute.xlu0 0
      %1840 = vperm.xlu0 %1839, %v1566
      %v1841 = vpop.permute.xlu0 %1840
      %1843 = vset.pattern.permute.xlu0 0
      %1844 = vperm.xlu0 %1843, %v1568
      %v1845 = vpop.permute.xlu0 %1844
      %1847 = vset.pattern.permute.xlu0 0
      %1848 = vperm.xlu0 %1847, %v1570
      %v1849 = vpop.permute.xlu0 %1848
      %1851 = vset.pattern.permute.xlu0 0
      %1852 = vperm.xlu0 %1851, %v1573
      %v1853 = vpop.permute.xlu0 %1852
      %1855 = vset.pattern.permute.xlu0 0
      %1856 = vperm.xlu0 %1855, %v1575
      %v1857 = vpop.permute.xlu0 %1856
      %1859 = vset.pattern.permute.xlu0 0
      %1860 = vperm.xlu0 %1859, %v1577
      %v1861 = vpop.permute.xlu0 %1860
      %1863 = vset.pattern.permute.xlu0 0
      %1864 = vperm.xlu0 %1863, %v1580
      %v1865 = vpop.permute.xlu0 %1864
      %1867 = vset.pattern.permute.xlu0 0
      %1868 = vperm.xlu0 %1867, %v1582
      %v1869 = vpop.permute.xlu0 %1868
      %1871 = vset.pattern.permute.xlu0 0
      %1872 = vperm.xlu0 %1871, %v1584
      %v1873 = vpop.permute.xlu0 %1872
      %v1875 = vperm.slane %v1586, 2
      %v1876 = vmul.f32 %v1589, %v1875
      %v1877 = vmul.f32 %v1593, %v1875
      %v1878 = vmul.f32 %v1597, %v1875
      %v1879 = vmul.f32 %v1601, %v1875
      %v1880 = vmul.f32 %v1605, %v1875
      %v1881 = vmul.f32 %v1609, %v1875
      %v1882 = vmul.f32 %v1613, %v1875
      %v1883 = vmul.f32 %v1617, %v1875
      %v1884 = vmul.f32 %v1621, %v1875
      %v1885 = vmul.f32 %v1625, %v1875
      %v1886 = vmul.f32 %v1629, %v1875
      %v1887 = vmul.f32 %v1633, %v1875
      %v1888 = vmul.f32 %v1637, %v1875
      %v1889 = vmul.f32 %v1641, %v1875
      %v1890 = vmul.f32 %v1645, %v1875
      %v1891 = vmul.f32 %v1649, %v1875
      %v1892 = vmul.f32 %v1653, %v1875
      %v1893 = vmul.f32 %v1657, %v1875
      %v1894 = vmul.f32 %v1661, %v1875
      %v1895 = vmul.f32 %v1665, %v1875
      %v1896 = vmul.f32 %v1669, %v1875
      %v1897 = vmul.f32 %v1673, %v1875
      %v1898 = vmul.f32 %v1677, %v1875
      %v1899 = vmul.f32 %v1681, %v1875
      %v1900 = vmul.f32 %v1685, %v1875
      %v1901 = vmul.f32 %v1689, %v1875
      %v1902 = vmul.f32 %v1693, %v1875
      %v1903 = vmul.f32 %v1697, %v1875
      %v1904 = vmul.f32 %v1701, %v1875
      %v1905 = vmul.f32 %v1705, %v1875
      %v1906 = vmul.f32 %v1709, %v1875
      %v1907 = vmul.f32 %v1713, %v1875
      %v1908 = vmul.f32 %v1717, %v1875
      %v1909 = vmul.f32 %v1721, %v1875
      %v1910 = vmul.f32 %v1725, %v1875
      %v1911 = vmul.f32 %v1729, %v1875
      %v1912 = vmul.f32 %v1733, %v1875
      %v1913 = vmul.f32 %v1737, %v1875
      %v1914 = vmul.f32 %v1741, %v1875
      %v1915 = vmul.f32 %v1745, %v1875
      %v1916 = vmul.f32 %v1749, %v1875
      %v1917 = vmul.f32 %v1753, %v1875
      %v1918 = vmul.f32 %v1757, %v1875
      %v1919 = vmul.f32 %v1761, %v1875
      %v1920 = vmul.f32 %v1765, %v1875
      %v1921 = vmul.f32 %v1769, %v1875
      %v1922 = vmul.f32 %v1773, %v1875
      %v1923 = vmul.f32 %v1777, %v1875
      %v1924 = vmul.f32 %v1781, %v1875
      %v1925 = vmul.f32 %v1785, %v1875
      %v1926 = vmul.f32 %v1789, %v1875
      %v1927 = vmul.f32 %v1793, %v1875
      %v1928 = vmul.f32 %v1797, %v1875
      %v1929 = vmul.f32 %v1801, %v1875
      %v1930 = vmul.f32 %v1805, %v1875
      %v1931 = vmul.f32 %v1809, %v1875
      %v1932 = vmul.f32 %v1813, %v1875
      %v1933 = vmul.f32 %v1817, %v1875
      %v1934 = vmul.f32 %v1821, %v1875
      %v1935 = vmul.f32 %v1825, %v1875
      %v1936 = vmul.f32 %v1829, %v1875
      %v1937 = vmul.f32 %v1833, %v1875
      %v1938 = vmul.f32 %v1837, %v1875
      %v1939 = vmul.f32 %v1841, %v1875
      %v1940 = vmul.f32 %v1845, %v1875
      %v1941 = vmul.f32 %v1849, %v1875
      %v1942 = vmul.f32 %v1853, %v1875
      %v1943 = vmul.f32 %v1857, %v1875
      %v1944 = vmul.f32 %v1861, %v1875
      %v1945 = vmul.f32 %v1865, %v1875
      %v1946 = vmul.f32 %v1869, %v1875
      %v1947 = vmul.f32 %v1873, %v1875
      %v1948 = vadd.f32 %v1344, %v1876
      %v1949 = vadd.f32 %v1345, %v1877
      %v1950 = vadd.f32 %v1346, %v1878
      %v1951 = vadd.f32 %v1347, %v1879
      %v1952 = vadd.f32 %v1348, %v1880
      %v1953 = vadd.f32 %v1349, %v1881
      %v1954 = vadd.f32 %v1350, %v1882
      %v1955 = vadd.f32 %v1351, %v1883
      %v1956 = vadd.f32 %v1352, %v1884
      %v1957 = vadd.f32 %v1353, %v1885
      %v1958 = vadd.f32 %v1354, %v1886
      %v1959 = vadd.f32 %v1355, %v1887
      %v1960 = vadd.f32 %v1356, %v1888
      %v1961 = vadd.f32 %v1357, %v1889
      %v1962 = vadd.f32 %v1358, %v1890
      %v1963 = vadd.f32 %v1359, %v1891
      %v1964 = vadd.f32 %v1360, %v1892
      %v1965 = vadd.f32 %v1361, %v1893
      %v1966 = vadd.f32 %v1362, %v1894
      %v1967 = vadd.f32 %v1363, %v1895
      %v1968 = vadd.f32 %v1364, %v1896
      %v1969 = vadd.f32 %v1365, %v1897
      %v1970 = vadd.f32 %v1366, %v1898
      %v1971 = vadd.f32 %v1367, %v1899
      %v1972 = vadd.f32 %v1368, %v1900
      %v1973 = vadd.f32 %v1369, %v1901
      %v1974 = vadd.f32 %v1370, %v1902
      %v1975 = vadd.f32 %v1371, %v1903
      %v1976 = vadd.f32 %v1372, %v1904
      %v1977 = vadd.f32 %v1373, %v1905
      %v1978 = vadd.f32 %v1374, %v1906
      %v1979 = vadd.f32 %v1375, %v1907
      %v1980 = vadd.f32 %v1376, %v1908
      %v1981 = vadd.f32 %v1377, %v1909
      %v1982 = vadd.f32 %v1378, %v1910
      %v1983 = vadd.f32 %v1379, %v1911
      %v1984 = vadd.f32 %v1380, %v1912
      %v1985 = vadd.f32 %v1381, %v1913
      %v1986 = vadd.f32 %v1382, %v1914
      %v1987 = vadd.f32 %v1383, %v1915
      %v1988 = vadd.f32 %v1384, %v1916
      %v1989 = vadd.f32 %v1385, %v1917
      %v1990 = vadd.f32 %v1386, %v1918
      %v1991 = vadd.f32 %v1387, %v1919
      %v1992 = vadd.f32 %v1388, %v1920
      %v1993 = vadd.f32 %v1389, %v1921
      %v1994 = vadd.f32 %v1390, %v1922
      %v1995 = vadd.f32 %v1391, %v1923
      %v1996 = vadd.f32 %v1392, %v1924
      %v1997 = vadd.f32 %v1393, %v1925
      %v1998 = vadd.f32 %v1394, %v1926
      %v1999 = vadd.f32 %v1395, %v1927
      %v2000 = vadd.f32 %v1396, %v1928
      %v2001 = vadd.f32 %v1397, %v1929
      %v2002 = vadd.f32 %v1398, %v1930
      %v2003 = vadd.f32 %v1399, %v1931
      %v2004 = vadd.f32 %v1400, %v1932
      %v2005 = vadd.f32 %v1401, %v1933
      %v2006 = vadd.f32 %v1402, %v1934
      %v2007 = vadd.f32 %v1403, %v1935
      %v2008 = vadd.f32 %v1404, %v1936
      %v2009 = vadd.f32 %v1405, %v1937
      %v2010 = vadd.f32 %v1406, %v1938
      %v2011 = vadd.f32 %v1407, %v1939
      %v2012 = vadd.f32 %v1408, %v1940
      %v2013 = vadd.f32 %v1409, %v1941
      %v2014 = vadd.f32 %v1410, %v1942
      %v2015 = vadd.f32 %v1411, %v1943
      %v2016 = vadd.f32 %v1412, %v1944
      %v2017 = vadd.f32 %v1413, %v1945
      %v2018 = vadd.f32 %v1414, %v1946
      %v2019 = vadd.f32 %v1415, %v1947
      %vm2020 = vcmask 1044480
      %v2021 = vrot.slane %v171, 3
      %v2022 = vrot.slane %v172, 3
      %v2023 = vsel %vm2020, %v2021, %v2022
      %v2024 = vrot.slane %v173, 3
      %v2025 = vsel %vm2020, %v2022, %v2024
      %v2026 = vrot.slane %v174, 3
      %v2027 = vsel %vm2020, %v2024, %v2026
      %v2028 = vrot.slane %v175, 3
      %v2029 = vrot.slane %v176, 3
      %v2030 = vsel %vm2020, %v2028, %v2029
      %v2031 = vrot.slane %v177, 3
      %v2032 = vsel %vm2020, %v2029, %v2031
      %v2033 = vrot.slane %v178, 3
      %v2034 = vsel %vm2020, %v2031, %v2033
      %v2035 = vrot.slane %v179, 3
      %v2036 = vrot.slane %v180, 3
      %v2037 = vsel %vm2020, %v2035, %v2036
      %v2038 = vrot.slane %v181, 3
      %v2039 = vsel %vm2020, %v2036, %v2038
      %v2040 = vrot.slane %v182, 3
      %v2041 = vsel %vm2020, %v2038, %v2040
      %v2042 = vrot.slane %v183, 3
      %v2043 = vrot.slane %v184, 3
      %v2044 = vsel %vm2020, %v2042, %v2043
      %v2045 = vrot.slane %v185, 3
      %v2046 = vsel %vm2020, %v2043, %v2045
      %v2047 = vrot.slane %v186, 3
      %v2048 = vsel %vm2020, %v2045, %v2047
      %v2049 = vrot.slane %v187, 3
      %v2050 = vrot.slane %v188, 3
      %v2051 = vsel %vm2020, %v2049, %v2050
      %v2052 = vrot.slane %v189, 3
      %v2053 = vsel %vm2020, %v2050, %v2052
      %v2054 = vrot.slane %v190, 3
      %v2055 = vsel %vm2020, %v2052, %v2054
      %v2056 = vrot.slane %v191, 3
      %v2057 = vrot.slane %v192, 3
      %v2058 = vsel %vm2020, %v2056, %v2057
      %v2059 = vrot.slane %v193, 3
      %v2060 = vsel %vm2020, %v2057, %v2059
      %v2061 = vrot.slane %v194, 3
      %v2062 = vsel %vm2020, %v2059, %v2061
      %v2063 = vrot.slane %v195, 3
      %v2064 = vrot.slane %v196, 3
      %v2065 = vsel %vm2020, %v2063, %v2064
      %v2066 = vrot.slane %v197, 3
      %v2067 = vsel %vm2020, %v2064, %v2066
      %v2068 = vrot.slane %v198, 3
      %v2069 = vsel %vm2020, %v2066, %v2068
      %v2070 = vrot.slane %v199, 3
      %v2071 = vrot.slane %v200, 3
      %v2072 = vsel %vm2020, %v2070, %v2071
      %v2073 = vrot.slane %v201, 3
      %v2074 = vsel %vm2020, %v2071, %v2073
      %v2075 = vrot.slane %v202, 3
      %v2076 = vsel %vm2020, %v2073, %v2075
      %v2077 = vrot.slane %v203, 3
      %v2078 = vrot.slane %v204, 3
      %v2079 = vsel %vm2020, %v2077, %v2078
      %v2080 = vrot.slane %v205, 3
      %v2081 = vsel %vm2020, %v2078, %v2080
      %v2082 = vrot.slane %v206, 3
      %v2083 = vsel %vm2020, %v2080, %v2082
      %v2084 = vrot.slane %v207, 3
      %v2085 = vrot.slane %v208, 3
      %v2086 = vsel %vm2020, %v2084, %v2085
      %v2087 = vrot.slane %v209, 3
      %v2088 = vsel %vm2020, %v2085, %v2087
      %v2089 = vrot.slane %v210, 3
      %v2090 = vsel %vm2020, %v2087, %v2089
      %v2091 = vrot.slane %v211, 3
      %v2092 = vrot.slane %v212, 3
      %v2093 = vsel %vm2020, %v2091, %v2092
      %v2094 = vrot.slane %v213, 3
      %v2095 = vsel %vm2020, %v2092, %v2094
      %v2096 = vrot.slane %v214, 3
      %v2097 = vsel %vm2020, %v2094, %v2096
      %v2098 = vrot.slane %v215, 3
      %v2099 = vrot.slane %v216, 3
      %v2100 = vsel %vm2020, %v2098, %v2099
      %v2101 = vrot.slane %v217, 3
      %v2102 = vsel %vm2020, %v2099, %v2101
      %v2103 = vrot.slane %v218, 3
      %v2104 = vsel %vm2020, %v2101, %v2103
      %v2105 = vrot.slane %v219, 3
      %v2106 = vrot.slane %v220, 3
      %v2107 = vsel %vm2020, %v2105, %v2106
      %v2108 = vrot.slane %v221, 3
      %v2109 = vsel %vm2020, %v2106, %v2108
      %v2110 = vrot.slane %v222, 3
      %v2111 = vsel %vm2020, %v2108, %v2110
      %v2112 = vrot.slane %v223, 3
      %v2113 = vrot.slane %v224, 3
      %v2114 = vsel %vm2020, %v2112, %v2113
      %v2115 = vrot.slane %v225, 3
      %v2116 = vsel %vm2020, %v2113, %v2115
      %v2117 = vrot.slane %v226, 3
      %v2118 = vsel %vm2020, %v2115, %v2117
      %v2119 = vrot.slane %v227, 3
      %v2120 = vrot.slane %v228, 3
      %v2121 = vsel %vm2020, %v2119, %v2120
      %v2122 = vrot.slane %v229, 3
      %v2123 = vsel %vm2020, %v2120, %v2122
      %v2124 = vrot.slane %v230, 3
      %v2125 = vsel %vm2020, %v2122, %v2124
      %v2126 = vrot.slane %v231, 3
      %v2127 = vrot.slane %v232, 3
      %v2128 = vsel %vm2020, %v2126, %v2127
      %v2129 = vrot.slane %v233, 3
      %v2130 = vsel %vm2020, %v2127, %v2129
      %v2131 = vrot.slane %v234, 3
      %v2132 = vsel %vm2020, %v2129, %v2131
      %v2133 = vrot.slane %v235, 3
      %v2134 = vrot.slane %v236, 3
      %v2135 = vsel %vm2020, %v2133, %v2134
      %v2136 = vrot.slane %v237, 3
      %v2137 = vsel %vm2020, %v2134, %v2136
      %v2138 = vrot.slane %v238, 3
      %v2139 = vsel %vm2020, %v2136, %v2138
      %v2140 = vrot.slane %v239, 3
      %v2141 = vrot.slane %v240, 3
      %v2142 = vsel %vm2020, %v2140, %v2141
      %v2143 = vrot.slane %v241, 3
      %v2144 = vsel %vm2020, %v2141, %v2143
      %v2145 = vrot.slane %v242, 3
      %v2146 = vsel %vm2020, %v2143, %v2145
      %v2147 = vrot.slane %v243, 3
      %v2148 = vrot.slane %v244, 3
      %v2149 = vsel %vm2020, %v2147, %v2148
      %v2150 = vrot.slane %v245, 3
      %v2151 = vsel %vm2020, %v2148, %v2150
      %v2152 = vrot.slane %v246, 3
      %v2153 = vsel %vm2020, %v2150, %v2152
      %v2154 = vrot.slane %v247, 3
      %v2155 = vrot.slane %v248, 3
      %v2156 = vsel %vm2020, %v2154, %v2155
      %v2157 = vrot.slane %v249, 3
      %v2158 = vsel %vm2020, %v2155, %v2157
      %v2159 = vrot.slane %v250, 3
      %v2160 = vsel %vm2020, %v2157, %v2159
      %v2161 = vrot.slane %v251, 3
      %v2162 = vrot.slane %v252, 3
      %v2163 = vsel %vm2020, %v2161, %v2162
      %v2164 = vrot.slane %v253, 3
      %v2165 = vsel %vm2020, %v2162, %v2164
      %v2166 = vrot.slane %v254, 3
      %v2167 = vsel %vm2020, %v2164, %v2166
      %v2168 = vrot.slane %v255, 3
      %v2169 = vrot.slane %v256, 3
      %v2170 = vsel %vm2020, %v2168, %v2169
      %v2171 = vrot.slane %v257, 3
      %v2172 = vsel %vm2020, %v2169, %v2171
      %v2173 = vrot.slane %v258, 3
      %v2174 = vsel %vm2020, %v2171, %v2173
      %v2175 = vrot.slane %v259, 3
      %v2176 = vrot.slane %v260, 3
      %v2177 = vsel %vm2020, %v2175, %v2176
      %v2178 = vrot.slane %v261, 3
      %v2179 = vsel %vm2020, %v2176, %v2178
      %v2180 = vrot.slane %v262, 3
      %v2181 = vsel %vm2020, %v2178, %v2180
      %v2182 = vrot.slane %v263, 3
      %v2183 = vrot.slane %v264, 3
      %v2184 = vsel %vm2020, %v2182, %v2183
      %v2185 = vrot.slane %v265, 3
      %v2186 = vsel %vm2020, %v2183, %v2185
      %v2187 = vrot.slane %v266, 3
      %v2188 = vsel %vm2020, %v2185, %v2187
      %2189 = vset.pattern.permute.xlu0 0
      %2190 = vperm.xlu0 %2189, %v2023
      %v2191 = vpop.permute.xlu0 %2190
      %2193 = vset.pattern.permute.xlu0 0
      %2194 = vperm.xlu0 %2193, %v2025
      %v2195 = vpop.permute.xlu0 %2194
      %2197 = vset.pattern.permute.xlu0 0
      %2198 = vperm.xlu0 %2197, %v2027
      %v2199 = vpop.permute.xlu0 %2198
      %2201 = vset.pattern.permute.xlu0 0
      %2202 = vperm.xlu0 %2201, %v2030
      %v2203 = vpop.permute.xlu0 %2202
      %2205 = vset.pattern.permute.xlu0 0
      %2206 = vperm.xlu0 %2205, %v2032
      %v2207 = vpop.permute.xlu0 %2206
      %2209 = vset.pattern.permute.xlu0 0
      %2210 = vperm.xlu0 %2209, %v2034
      %v2211 = vpop.permute.xlu0 %2210
      %2213 = vset.pattern.permute.xlu0 0
      %2214 = vperm.xlu0 %2213, %v2037
      %v2215 = vpop.permute.xlu0 %2214
      %2217 = vset.pattern.permute.xlu0 0
      %2218 = vperm.xlu0 %2217, %v2039
      %v2219 = vpop.permute.xlu0 %2218
      %2221 = vset.pattern.permute.xlu0 0
      %2222 = vperm.xlu0 %2221, %v2041
      %v2223 = vpop.permute.xlu0 %2222
      %2225 = vset.pattern.permute.xlu0 0
      %2226 = vperm.xlu0 %2225, %v2044
      %v2227 = vpop.permute.xlu0 %2226
      %2229 = vset.pattern.permute.xlu0 0
      %2230 = vperm.xlu0 %2229, %v2046
      %v2231 = vpop.permute.xlu0 %2230
      %2233 = vset.pattern.permute.xlu0 0
      %2234 = vperm.xlu0 %2233, %v2048
      %v2235 = vpop.permute.xlu0 %2234
      %2237 = vset.pattern.permute.xlu0 0
      %2238 = vperm.xlu0 %2237, %v2051
      %v2239 = vpop.permute.xlu0 %2238
      %2241 = vset.pattern.permute.xlu0 0
      %2242 = vperm.xlu0 %2241, %v2053
      %v2243 = vpop.permute.xlu0 %2242
      %2245 = vset.pattern.permute.xlu0 0
      %2246 = vperm.xlu0 %2245, %v2055
      %v2247 = vpop.permute.xlu0 %2246
      %2249 = vset.pattern.permute.xlu0 0
      %2250 = vperm.xlu0 %2249, %v2058
      %v2251 = vpop.permute.xlu0 %2250
      %2253 = vset.pattern.permute.xlu0 0
      %2254 = vperm.xlu0 %2253, %v2060
      %v2255 = vpop.permute.xlu0 %2254
      %2257 = vset.pattern.permute.xlu0 0
      %2258 = vperm.xlu0 %2257, %v2062
      %v2259 = vpop.permute.xlu0 %2258
      %2261 = vset.pattern.permute.xlu0 0
      %2262 = vperm.xlu0 %2261, %v2065
      %v2263 = vpop.permute.xlu0 %2262
      %2265 = vset.pattern.permute.xlu0 0
      %2266 = vperm.xlu0 %2265, %v2067
      %v2267 = vpop.permute.xlu0 %2266
      %2269 = vset.pattern.permute.xlu0 0
      %2270 = vperm.xlu0 %2269, %v2069
      %v2271 = vpop.permute.xlu0 %2270
      %2273 = vset.pattern.permute.xlu0 0
      %2274 = vperm.xlu0 %2273, %v2072
      %v2275 = vpop.permute.xlu0 %2274
      %2277 = vset.pattern.permute.xlu0 0
      %2278 = vperm.xlu0 %2277, %v2074
      %v2279 = vpop.permute.xlu0 %2278
      %2281 = vset.pattern.permute.xlu0 0
      %2282 = vperm.xlu0 %2281, %v2076
      %v2283 = vpop.permute.xlu0 %2282
      %2285 = vset.pattern.permute.xlu0 0
      %2286 = vperm.xlu0 %2285, %v2079
      %v2287 = vpop.permute.xlu0 %2286
      %2289 = vset.pattern.permute.xlu0 0
      %2290 = vperm.xlu0 %2289, %v2081
      %v2291 = vpop.permute.xlu0 %2290
      %2293 = vset.pattern.permute.xlu0 0
      %2294 = vperm.xlu0 %2293, %v2083
      %v2295 = vpop.permute.xlu0 %2294
      %2297 = vset.pattern.permute.xlu0 0
      %2298 = vperm.xlu0 %2297, %v2086
      %v2299 = vpop.permute.xlu0 %2298
      %2301 = vset.pattern.permute.xlu0 0
      %2302 = vperm.xlu0 %2301, %v2088
      %v2303 = vpop.permute.xlu0 %2302
      %2305 = vset.pattern.permute.xlu0 0
      %2306 = vperm.xlu0 %2305, %v2090
      %v2307 = vpop.permute.xlu0 %2306
      %2309 = vset.pattern.permute.xlu0 0
      %2310 = vperm.xlu0 %2309, %v2093
      %v2311 = vpop.permute.xlu0 %2310
      %2313 = vset.pattern.permute.xlu0 0
      %2314 = vperm.xlu0 %2313, %v2095
      %v2315 = vpop.permute.xlu0 %2314
      %2317 = vset.pattern.permute.xlu0 0
      %2318 = vperm.xlu0 %2317, %v2097
      %v2319 = vpop.permute.xlu0 %2318
      %2321 = vset.pattern.permute.xlu0 0
      %2322 = vperm.xlu0 %2321, %v2100
      %v2323 = vpop.permute.xlu0 %2322
      %2325 = vset.pattern.permute.xlu0 0
      %2326 = vperm.xlu0 %2325, %v2102
      %v2327 = vpop.permute.xlu0 %2326
      %2329 = vset.pattern.permute.xlu0 0
      %2330 = vperm.xlu0 %2329, %v2104
      %v2331 = vpop.permute.xlu0 %2330
      %2333 = vset.pattern.permute.xlu0 0
      %2334 = vperm.xlu0 %2333, %v2107
      %v2335 = vpop.permute.xlu0 %2334
      %2337 = vset.pattern.permute.xlu0 0
      %2338 = vperm.xlu0 %2337, %v2109
      %v2339 = vpop.permute.xlu0 %2338
      %2341 = vset.pattern.permute.xlu0 0
      %2342 = vperm.xlu0 %2341, %v2111
      %v2343 = vpop.permute.xlu0 %2342
      %2345 = vset.pattern.permute.xlu0 0
      %2346 = vperm.xlu0 %2345, %v2114
      %v2347 = vpop.permute.xlu0 %2346
      %2349 = vset.pattern.permute.xlu0 0
      %2350 = vperm.xlu0 %2349, %v2116
      %v2351 = vpop.permute.xlu0 %2350
      %2353 = vset.pattern.permute.xlu0 0
      %2354 = vperm.xlu0 %2353, %v2118
      %v2355 = vpop.permute.xlu0 %2354
      %2357 = vset.pattern.permute.xlu0 0
      %2358 = vperm.xlu0 %2357, %v2121
      %v2359 = vpop.permute.xlu0 %2358
      %2361 = vset.pattern.permute.xlu0 0
      %2362 = vperm.xlu0 %2361, %v2123
      %v2363 = vpop.permute.xlu0 %2362
      %2365 = vset.pattern.permute.xlu0 0
      %2366 = vperm.xlu0 %2365, %v2125
      %v2367 = vpop.permute.xlu0 %2366
      %2369 = vset.pattern.permute.xlu0 0
      %2370 = vperm.xlu0 %2369, %v2128
      %v2371 = vpop.permute.xlu0 %2370
      %2373 = vset.pattern.permute.xlu0 0
      %2374 = vperm.xlu0 %2373, %v2130
      %v2375 = vpop.permute.xlu0 %2374
      %2377 = vset.pattern.permute.xlu0 0
      %2378 = vperm.xlu0 %2377, %v2132
      %v2379 = vpop.permute.xlu0 %2378
      %2381 = vset.pattern.permute.xlu0 0
      %2382 = vperm.xlu0 %2381, %v2135
      %v2383 = vpop.permute.xlu0 %2382
      %2385 = vset.pattern.permute.xlu0 0
      %2386 = vperm.xlu0 %2385, %v2137
      %v2387 = vpop.permute.xlu0 %2386
      %2389 = vset.pattern.permute.xlu0 0
      %2390 = vperm.xlu0 %2389, %v2139
      %v2391 = vpop.permute.xlu0 %2390
      %2393 = vset.pattern.permute.xlu0 0
      %2394 = vperm.xlu0 %2393, %v2142
      %v2395 = vpop.permute.xlu0 %2394
      %2397 = vset.pattern.permute.xlu0 0
      %2398 = vperm.xlu0 %2397, %v2144
      %v2399 = vpop.permute.xlu0 %2398
      %2401 = vset.pattern.permute.xlu0 0
      %2402 = vperm.xlu0 %2401, %v2146
      %v2403 = vpop.permute.xlu0 %2402
      %2405 = vset.pattern.permute.xlu0 0
      %2406 = vperm.xlu0 %2405, %v2149
      %v2407 = vpop.permute.xlu0 %2406
      %2409 = vset.pattern.permute.xlu0 0
      %2410 = vperm.xlu0 %2409, %v2151
      %v2411 = vpop.permute.xlu0 %2410
      %2413 = vset.pattern.permute.xlu0 0
      %2414 = vperm.xlu0 %2413, %v2153
      %v2415 = vpop.permute.xlu0 %2414
      %2417 = vset.pattern.permute.xlu0 0
      %2418 = vperm.xlu0 %2417, %v2156
      %v2419 = vpop.permute.xlu0 %2418
      %2421 = vset.pattern.permute.xlu0 0
      %2422 = vperm.xlu0 %2421, %v2158
      %v2423 = vpop.permute.xlu0 %2422
      %2425 = vset.pattern.permute.xlu0 0
      %2426 = vperm.xlu0 %2425, %v2160
      %v2427 = vpop.permute.xlu0 %2426
      %2429 = vset.pattern.permute.xlu0 0
      %2430 = vperm.xlu0 %2429, %v2163
      %v2431 = vpop.permute.xlu0 %2430
      %2433 = vset.pattern.permute.xlu0 0
      %2434 = vperm.xlu0 %2433, %v2165
      %v2435 = vpop.permute.xlu0 %2434
      %2437 = vset.pattern.permute.xlu0 0
      %2438 = vperm.xlu0 %2437, %v2167
      %v2439 = vpop.permute.xlu0 %2438
      %2441 = vset.pattern.permute.xlu0 0
      %2442 = vperm.xlu0 %2441, %v2170
      %v2443 = vpop.permute.xlu0 %2442
      %2445 = vset.pattern.permute.xlu0 0
      %2446 = vperm.xlu0 %2445, %v2172
      %v2447 = vpop.permute.xlu0 %2446
      %2449 = vset.pattern.permute.xlu0 0
      %2450 = vperm.xlu0 %2449, %v2174
      %v2451 = vpop.permute.xlu0 %2450
      %2453 = vset.pattern.permute.xlu0 0
      %2454 = vperm.xlu0 %2453, %v2177
      %v2455 = vpop.permute.xlu0 %2454
      %2457 = vset.pattern.permute.xlu0 0
      %2458 = vperm.xlu0 %2457, %v2179
      %v2459 = vpop.permute.xlu0 %2458
      %2461 = vset.pattern.permute.xlu0 0
      %2462 = vperm.xlu0 %2461, %v2181
      %v2463 = vpop.permute.xlu0 %2462
      %2465 = vset.pattern.permute.xlu0 0
      %2466 = vperm.xlu0 %2465, %v2184
      %v2467 = vpop.permute.xlu0 %2466
      %2469 = vset.pattern.permute.xlu0 0
      %2470 = vperm.xlu0 %2469, %v2186
      %v2471 = vpop.permute.xlu0 %2470
      %2473 = vset.pattern.permute.xlu0 0
      %2474 = vperm.xlu0 %2473, %v2188
      %v2475 = vpop.permute.xlu0 %2474
      %v2477 = vperm.slane %v1586, 3
      %v2478 = vmul.f32 %v2191, %v2477
      %v2479 = vmul.f32 %v2195, %v2477
      %v2480 = vmul.f32 %v2199, %v2477
      %v2481 = vmul.f32 %v2203, %v2477
      %v2482 = vmul.f32 %v2207, %v2477
      %v2483 = vmul.f32 %v2211, %v2477
      %v2484 = vmul.f32 %v2215, %v2477
      %v2485 = vmul.f32 %v2219, %v2477
      %v2486 = vmul.f32 %v2223, %v2477
      %v2487 = vmul.f32 %v2227, %v2477
      %v2488 = vmul.f32 %v2231, %v2477
      %v2489 = vmul.f32 %v2235, %v2477
      %v2490 = vmul.f32 %v2239, %v2477
      %v2491 = vmul.f32 %v2243, %v2477
      %v2492 = vmul.f32 %v2247, %v2477
      %v2493 = vmul.f32 %v2251, %v2477
      %v2494 = vmul.f32 %v2255, %v2477
      %v2495 = vmul.f32 %v2259, %v2477
      %v2496 = vmul.f32 %v2263, %v2477
      %v2497 = vmul.f32 %v2267, %v2477
      %v2498 = vmul.f32 %v2271, %v2477
      %v2499 = vmul.f32 %v2275, %v2477
      %v2500 = vmul.f32 %v2279, %v2477
      %v2501 = vmul.f32 %v2283, %v2477
      %v2502 = vmul.f32 %v2287, %v2477
      %v2503 = vmul.f32 %v2291, %v2477
      %v2504 = vmul.f32 %v2295, %v2477
      %v2505 = vmul.f32 %v2299, %v2477
      %v2506 = vmul.f32 %v2303, %v2477
      %v2507 = vmul.f32 %v2307, %v2477
      %v2508 = vmul.f32 %v2311, %v2477
      %v2509 = vmul.f32 %v2315, %v2477
      %v2510 = vmul.f32 %v2319, %v2477
      %v2511 = vmul.f32 %v2323, %v2477
      %v2512 = vmul.f32 %v2327, %v2477
      %v2513 = vmul.f32 %v2331, %v2477
      %v2514 = vmul.f32 %v2335, %v2477
      %v2515 = vmul.f32 %v2339, %v2477
      %v2516 = vmul.f32 %v2343, %v2477
      %v2517 = vmul.f32 %v2347, %v2477
      %v2518 = vmul.f32 %v2351, %v2477
      %v2519 = vmul.f32 %v2355, %v2477
      %v2520 = vmul.f32 %v2359, %v2477
      %v2521 = vmul.f32 %v2363, %v2477
      %v2522 = vmul.f32 %v2367, %v2477
      %v2523 = vmul.f32 %v2371, %v2477
      %v2524 = vmul.f32 %v2375, %v2477
      %v2525 = vmul.f32 %v2379, %v2477
      %v2526 = vmul.f32 %v2383, %v2477
      %v2527 = vmul.f32 %v2387, %v2477
      %v2528 = vmul.f32 %v2391, %v2477
      %v2529 = vmul.f32 %v2395, %v2477
      %v2530 = vmul.f32 %v2399, %v2477
      %v2531 = vmul.f32 %v2403, %v2477
      %v2532 = vmul.f32 %v2407, %v2477
      %v2533 = vmul.f32 %v2411, %v2477
      %v2534 = vmul.f32 %v2415, %v2477
      %v2535 = vmul.f32 %v2419, %v2477
      %v2536 = vmul.f32 %v2423, %v2477
      %v2537 = vmul.f32 %v2427, %v2477
      %v2538 = vmul.f32 %v2431, %v2477
      %v2539 = vmul.f32 %v2435, %v2477
      %v2540 = vmul.f32 %v2439, %v2477
      %v2541 = vmul.f32 %v2443, %v2477
      %v2542 = vmul.f32 %v2447, %v2477
      %v2543 = vmul.f32 %v2451, %v2477
      %v2544 = vmul.f32 %v2455, %v2477
      %v2545 = vmul.f32 %v2459, %v2477
      %v2546 = vmul.f32 %v2463, %v2477
      %v2547 = vmul.f32 %v2467, %v2477
      %v2548 = vmul.f32 %v2471, %v2477
      %v2549 = vmul.f32 %v2475, %v2477
      %v2550 = vadd.f32 %v1948, %v2478
      %v2551 = vadd.f32 %v1949, %v2479
      %v2552 = vadd.f32 %v1950, %v2480
      %v2553 = vadd.f32 %v1951, %v2481
      %v2554 = vadd.f32 %v1952, %v2482
      %v2555 = vadd.f32 %v1953, %v2483
      %v2556 = vadd.f32 %v1954, %v2484
      %v2557 = vadd.f32 %v1955, %v2485
      %v2558 = vadd.f32 %v1956, %v2486
      %v2559 = vadd.f32 %v1957, %v2487
      %v2560 = vadd.f32 %v1958, %v2488
      %v2561 = vadd.f32 %v1959, %v2489
      %v2562 = vadd.f32 %v1960, %v2490
      %v2563 = vadd.f32 %v1961, %v2491
      %v2564 = vadd.f32 %v1962, %v2492
      %v2565 = vadd.f32 %v1963, %v2493
      %v2566 = vadd.f32 %v1964, %v2494
      %v2567 = vadd.f32 %v1965, %v2495
      %v2568 = vadd.f32 %v1966, %v2496
      %v2569 = vadd.f32 %v1967, %v2497
      %v2570 = vadd.f32 %v1968, %v2498
      %v2571 = vadd.f32 %v1969, %v2499
      %v2572 = vadd.f32 %v1970, %v2500
      %v2573 = vadd.f32 %v1971, %v2501
      %v2574 = vadd.f32 %v1972, %v2502
      %v2575 = vadd.f32 %v1973, %v2503
      %v2576 = vadd.f32 %v1974, %v2504
      %v2577 = vadd.f32 %v1975, %v2505
      %v2578 = vadd.f32 %v1976, %v2506
      %v2579 = vadd.f32 %v1977, %v2507
      %v2580 = vadd.f32 %v1978, %v2508
      %v2581 = vadd.f32 %v1979, %v2509
      %v2582 = vadd.f32 %v1980, %v2510
      %v2583 = vadd.f32 %v1981, %v2511
      %v2584 = vadd.f32 %v1982, %v2512
      %v2585 = vadd.f32 %v1983, %v2513
      %v2586 = vadd.f32 %v1984, %v2514
      %v2587 = vadd.f32 %v1985, %v2515
      %v2588 = vadd.f32 %v1986, %v2516
      %v2589 = vadd.f32 %v1987, %v2517
      %v2590 = vadd.f32 %v1988, %v2518
      %v2591 = vadd.f32 %v1989, %v2519
      %v2592 = vadd.f32 %v1990, %v2520
      %v2593 = vadd.f32 %v1991, %v2521
      %v2594 = vadd.f32 %v1992, %v2522
      %v2595 = vadd.f32 %v1993, %v2523
      %v2596 = vadd.f32 %v1994, %v2524
      %v2597 = vadd.f32 %v1995, %v2525
      %v2598 = vadd.f32 %v1996, %v2526
      %v2599 = vadd.f32 %v1997, %v2527
      %v2600 = vadd.f32 %v1998, %v2528
      %v2601 = vadd.f32 %v1999, %v2529
      %v2602 = vadd.f32 %v2000, %v2530
      %v2603 = vadd.f32 %v2001, %v2531
      %v2604 = vadd.f32 %v2002, %v2532
      %v2605 = vadd.f32 %v2003, %v2533
      %v2606 = vadd.f32 %v2004, %v2534
      %v2607 = vadd.f32 %v2005, %v2535
      %v2608 = vadd.f32 %v2006, %v2536
      %v2609 = vadd.f32 %v2007, %v2537
      %v2610 = vadd.f32 %v2008, %v2538
      %v2611 = vadd.f32 %v2009, %v2539
      %v2612 = vadd.f32 %v2010, %v2540
      %v2613 = vadd.f32 %v2011, %v2541
      %v2614 = vadd.f32 %v2012, %v2542
      %v2615 = vadd.f32 %v2013, %v2543
      %v2616 = vadd.f32 %v2014, %v2544
      %v2617 = vadd.f32 %v2015, %v2545
      %v2618 = vadd.f32 %v2016, %v2546
      %v2619 = vadd.f32 %v2017, %v2547
      %v2620 = vadd.f32 %v2018, %v2548
      %v2621 = vadd.f32 %v2019, %v2549
      %vm2622 = vcmask 1043456
      %v2623 = vrot.slane %v171, 4
      %v2624 = vrot.slane %v172, 4
      %v2625 = vsel %vm2622, %v2623, %v2624
      %v2626 = vrot.slane %v173, 4
      %v2627 = vsel %vm2622, %v2624, %v2626
      %v2628 = vrot.slane %v174, 4
      %v2629 = vsel %vm2622, %v2626, %v2628
      %v2630 = vrot.slane %v175, 4
      %v2631 = vrot.slane %v176, 4
      %v2632 = vsel %vm2622, %v2630, %v2631
      %v2633 = vrot.slane %v177, 4
      %v2634 = vsel %vm2622, %v2631, %v2633
      %v2635 = vrot.slane %v178, 4
      %v2636 = vsel %vm2622, %v2633, %v2635
      %v2637 = vrot.slane %v179, 4
      %v2638 = vrot.slane %v180, 4
      %v2639 = vsel %vm2622, %v2637, %v2638
      %v2640 = vrot.slane %v181, 4
      %v2641 = vsel %vm2622, %v2638, %v2640
      %v2642 = vrot.slane %v182, 4
      %v2643 = vsel %vm2622, %v2640, %v2642
      %v2644 = vrot.slane %v183, 4
      %v2645 = vrot.slane %v184, 4
      %v2646 = vsel %vm2622, %v2644, %v2645
      %v2647 = vrot.slane %v185, 4
      %v2648 = vsel %vm2622, %v2645, %v2647
      %v2649 = vrot.slane %v186, 4
      %v2650 = vsel %vm2622, %v2647, %v2649
      %v2651 = vrot.slane %v187, 4
      %v2652 = vrot.slane %v188, 4
      %v2653 = vsel %vm2622, %v2651, %v2652
      %v2654 = vrot.slane %v189, 4
      %v2655 = vsel %vm2622, %v2652, %v2654
      %v2656 = vrot.slane %v190, 4
      %v2657 = vsel %vm2622, %v2654, %v2656
      %v2658 = vrot.slane %v191, 4
      %v2659 = vrot.slane %v192, 4
      %v2660 = vsel %vm2622, %v2658, %v2659
      %v2661 = vrot.slane %v193, 4
      %v2662 = vsel %vm2622, %v2659, %v2661
      %v2663 = vrot.slane %v194, 4
      %v2664 = vsel %vm2622, %v2661, %v2663
      %v2665 = vrot.slane %v195, 4
      %v2666 = vrot.slane %v196, 4
      %v2667 = vsel %vm2622, %v2665, %v2666
      %v2668 = vrot.slane %v197, 4
      %v2669 = vsel %vm2622, %v2666, %v2668
      %v2670 = vrot.slane %v198, 4
      %v2671 = vsel %vm2622, %v2668, %v2670
      %v2672 = vrot.slane %v199, 4
      %v2673 = vrot.slane %v200, 4
      %v2674 = vsel %vm2622, %v2672, %v2673
      %v2675 = vrot.slane %v201, 4
      %v2676 = vsel %vm2622, %v2673, %v2675
      %v2677 = vrot.slane %v202, 4
      %v2678 = vsel %vm2622, %v2675, %v2677
      %v2679 = vrot.slane %v203, 4
      %v2680 = vrot.slane %v204, 4
      %v2681 = vsel %vm2622, %v2679, %v2680
      %v2682 = vrot.slane %v205, 4
      %v2683 = vsel %vm2622, %v2680, %v2682
      %v2684 = vrot.slane %v206, 4
      %v2685 = vsel %vm2622, %v2682, %v2684
      %v2686 = vrot.slane %v207, 4
      %v2687 = vrot.slane %v208, 4
      %v2688 = vsel %vm2622, %v2686, %v2687
      %v2689 = vrot.slane %v209, 4
      %v2690 = vsel %vm2622, %v2687, %v2689
      %v2691 = vrot.slane %v210, 4
      %v2692 = vsel %vm2622, %v2689, %v2691
      %v2693 = vrot.slane %v211, 4
      %v2694 = vrot.slane %v212, 4
      %v2695 = vsel %vm2622, %v2693, %v2694
      %v2696 = vrot.slane %v213, 4
      %v2697 = vsel %vm2622, %v2694, %v2696
      %v2698 = vrot.slane %v214, 4
      %v2699 = vsel %vm2622, %v2696, %v2698
      %v2700 = vrot.slane %v215, 4
      %v2701 = vrot.slane %v216, 4
      %v2702 = vsel %vm2622, %v2700, %v2701
      %v2703 = vrot.slane %v217, 4
      %v2704 = vsel %vm2622, %v2701, %v2703
      %v2705 = vrot.slane %v218, 4
      %v2706 = vsel %vm2622, %v2703, %v2705
      %v2707 = vrot.slane %v219, 4
      %v2708 = vrot.slane %v220, 4
      %v2709 = vsel %vm2622, %v2707, %v2708
      %v2710 = vrot.slane %v221, 4
      %v2711 = vsel %vm2622, %v2708, %v2710
      %v2712 = vrot.slane %v222, 4
      %v2713 = vsel %vm2622, %v2710, %v2712
      %v2714 = vrot.slane %v223, 4
      %v2715 = vrot.slane %v224, 4
      %v2716 = vsel %vm2622, %v2714, %v2715
      %v2717 = vrot.slane %v225, 4
      %v2718 = vsel %vm2622, %v2715, %v2717
      %v2719 = vrot.slane %v226, 4
      %v2720 = vsel %vm2622, %v2717, %v2719
      %v2721 = vrot.slane %v227, 4
      %v2722 = vrot.slane %v228, 4
      %v2723 = vsel %vm2622, %v2721, %v2722
      %v2724 = vrot.slane %v229, 4
      %v2725 = vsel %vm2622, %v2722, %v2724
      %v2726 = vrot.slane %v230, 4
      %v2727 = vsel %vm2622, %v2724, %v2726
      %v2728 = vrot.slane %v231, 4
      %v2729 = vrot.slane %v232, 4
      %v2730 = vsel %vm2622, %v2728, %v2729
      %v2731 = vrot.slane %v233, 4
      %v2732 = vsel %vm2622, %v2729, %v2731
      %v2733 = vrot.slane %v234, 4
      %v2734 = vsel %vm2622, %v2731, %v2733
      %v2735 = vrot.slane %v235, 4
      %v2736 = vrot.slane %v236, 4
      %v2737 = vsel %vm2622, %v2735, %v2736
      %v2738 = vrot.slane %v237, 4
      %v2739 = vsel %vm2622, %v2736, %v2738
      %v2740 = vrot.slane %v238, 4
      %v2741 = vsel %vm2622, %v2738, %v2740
      %v2742 = vrot.slane %v239, 4
      %v2743 = vrot.slane %v240, 4
      %v2744 = vsel %vm2622, %v2742, %v2743
      %v2745 = vrot.slane %v241, 4
      %v2746 = vsel %vm2622, %v2743, %v2745
      %v2747 = vrot.slane %v242, 4
      %v2748 = vsel %vm2622, %v2745, %v2747
      %v2749 = vrot.slane %v243, 4
      %v2750 = vrot.slane %v244, 4
      %v2751 = vsel %vm2622, %v2749, %v2750
      %v2752 = vrot.slane %v245, 4
      %v2753 = vsel %vm2622, %v2750, %v2752
      %v2754 = vrot.slane %v246, 4
      %v2755 = vsel %vm2622, %v2752, %v2754
      %v2756 = vrot.slane %v247, 4
      %v2757 = vrot.slane %v248, 4
      %v2758 = vsel %vm2622, %v2756, %v2757
      %v2759 = vrot.slane %v249, 4
      %v2760 = vsel %vm2622, %v2757, %v2759
      %v2761 = vrot.slane %v250, 4
      %v2762 = vsel %vm2622, %v2759, %v2761
      %v2763 = vrot.slane %v251, 4
      %v2764 = vrot.slane %v252, 4
      %v2765 = vsel %vm2622, %v2763, %v2764
      %v2766 = vrot.slane %v253, 4
      %v2767 = vsel %vm2622, %v2764, %v2766
      %v2768 = vrot.slane %v254, 4
      %v2769 = vsel %vm2622, %v2766, %v2768
      %v2770 = vrot.slane %v255, 4
      %v2771 = vrot.slane %v256, 4
      %v2772 = vsel %vm2622, %v2770, %v2771
      %v2773 = vrot.slane %v257, 4
      %v2774 = vsel %vm2622, %v2771, %v2773
      %v2775 = vrot.slane %v258, 4
      %v2776 = vsel %vm2622, %v2773, %v2775
      %v2777 = vrot.slane %v259, 4
      %v2778 = vrot.slane %v260, 4
      %v2779 = vsel %vm2622, %v2777, %v2778
      %v2780 = vrot.slane %v261, 4
      %v2781 = vsel %vm2622, %v2778, %v2780
      %v2782 = vrot.slane %v262, 4
      %v2783 = vsel %vm2622, %v2780, %v2782
      %v2784 = vrot.slane %v263, 4
      %v2785 = vrot.slane %v264, 4
      %v2786 = vsel %vm2622, %v2784, %v2785
      %v2787 = vrot.slane %v265, 4
      %v2788 = vsel %vm2622, %v2785, %v2787
      %v2789 = vrot.slane %v266, 4
      %v2790 = vsel %vm2622, %v2787, %v2789
      %v2791 = vld [vmem:[%s1] sm:$0x4]
      %v2792 = vunpack.c.l.bf16 %v2791
      %2793 = vset.pattern.permute.xlu0 0
      %2794 = vperm.xlu0 %2793, %v2625
      %v2795 = vpop.permute.xlu0 %2794
      %2797 = vset.pattern.permute.xlu0 0
      %2798 = vperm.xlu0 %2797, %v2627
      %v2799 = vpop.permute.xlu0 %2798
      %2801 = vset.pattern.permute.xlu0 0
      %2802 = vperm.xlu0 %2801, %v2629
      %v2803 = vpop.permute.xlu0 %2802
      %2805 = vset.pattern.permute.xlu0 0
      %2806 = vperm.xlu0 %2805, %v2632
      %v2807 = vpop.permute.xlu0 %2806
      %2809 = vset.pattern.permute.xlu0 0
      %2810 = vperm.xlu0 %2809, %v2634
      %v2811 = vpop.permute.xlu0 %2810
      %2813 = vset.pattern.permute.xlu0 0
      %2814 = vperm.xlu0 %2813, %v2636
      %v2815 = vpop.permute.xlu0 %2814
      %2817 = vset.pattern.permute.xlu0 0
      %2818 = vperm.xlu0 %2817, %v2639
      %v2819 = vpop.permute.xlu0 %2818
      %2821 = vset.pattern.permute.xlu0 0
      %2822 = vperm.xlu0 %2821, %v2641
      %v2823 = vpop.permute.xlu0 %2822
      %2825 = vset.pattern.permute.xlu0 0
      %2826 = vperm.xlu0 %2825, %v2643
      %v2827 = vpop.permute.xlu0 %2826
      %2829 = vset.pattern.permute.xlu0 0
      %2830 = vperm.xlu0 %2829, %v2646
      %v2831 = vpop.permute.xlu0 %2830
      %2833 = vset.pattern.permute.xlu0 0
      %2834 = vperm.xlu0 %2833, %v2648
      %v2835 = vpop.permute.xlu0 %2834
      %2837 = vset.pattern.permute.xlu0 0
      %2838 = vperm.xlu0 %2837, %v2650
      %v2839 = vpop.permute.xlu0 %2838
      %2841 = vset.pattern.permute.xlu0 0
      %2842 = vperm.xlu0 %2841, %v2653
      %v2843 = vpop.permute.xlu0 %2842
      %2845 = vset.pattern.permute.xlu0 0
      %2846 = vperm.xlu0 %2845, %v2655
      %v2847 = vpop.permute.xlu0 %2846
      %2849 = vset.pattern.permute.xlu0 0
      %2850 = vperm.xlu0 %2849, %v2657
      %v2851 = vpop.permute.xlu0 %2850
      %2853 = vset.pattern.permute.xlu0 0
      %2854 = vperm.xlu0 %2853, %v2660
      %v2855 = vpop.permute.xlu0 %2854
      %2857 = vset.pattern.permute.xlu0 0
      %2858 = vperm.xlu0 %2857, %v2662
      %v2859 = vpop.permute.xlu0 %2858
      %2861 = vset.pattern.permute.xlu0 0
      %2862 = vperm.xlu0 %2861, %v2664
      %v2863 = vpop.permute.xlu0 %2862
      %2865 = vset.pattern.permute.xlu0 0
      %2866 = vperm.xlu0 %2865, %v2667
      %v2867 = vpop.permute.xlu0 %2866
      %2869 = vset.pattern.permute.xlu0 0
      %2870 = vperm.xlu0 %2869, %v2669
      %v2871 = vpop.permute.xlu0 %2870
      %2873 = vset.pattern.permute.xlu0 0
      %2874 = vperm.xlu0 %2873, %v2671
      %v2875 = vpop.permute.xlu0 %2874
      %2877 = vset.pattern.permute.xlu0 0
      %2878 = vperm.xlu0 %2877, %v2674
      %v2879 = vpop.permute.xlu0 %2878
      %2881 = vset.pattern.permute.xlu0 0
      %2882 = vperm.xlu0 %2881, %v2676
      %v2883 = vpop.permute.xlu0 %2882
      %2885 = vset.pattern.permute.xlu0 0
      %2886 = vperm.xlu0 %2885, %v2678
      %v2887 = vpop.permute.xlu0 %2886
      %2889 = vset.pattern.permute.xlu0 0
      %2890 = vperm.xlu0 %2889, %v2681
      %v2891 = vpop.permute.xlu0 %2890
      %2893 = vset.pattern.permute.xlu0 0
      %2894 = vperm.xlu0 %2893, %v2683
      %v2895 = vpop.permute.xlu0 %2894
      %2897 = vset.pattern.permute.xlu0 0
      %2898 = vperm.xlu0 %2897, %v2685
      %v2899 = vpop.permute.xlu0 %2898
      %2901 = vset.pattern.permute.xlu0 0
      %2902 = vperm.xlu0 %2901, %v2688
      %v2903 = vpop.permute.xlu0 %2902
      %2905 = vset.pattern.permute.xlu0 0
      %2906 = vperm.xlu0 %2905, %v2690
      %v2907 = vpop.permute.xlu0 %2906
      %2909 = vset.pattern.permute.xlu0 0
      %2910 = vperm.xlu0 %2909, %v2692
      %v2911 = vpop.permute.xlu0 %2910
      %2913 = vset.pattern.permute.xlu0 0
      %2914 = vperm.xlu0 %2913, %v2695
      %v2915 = vpop.permute.xlu0 %2914
      %2917 = vset.pattern.permute.xlu0 0
      %2918 = vperm.xlu0 %2917, %v2697
      %v2919 = vpop.permute.xlu0 %2918
      %2921 = vset.pattern.permute.xlu0 0
      %2922 = vperm.xlu0 %2921, %v2699
      %v2923 = vpop.permute.xlu0 %2922
      %2925 = vset.pattern.permute.xlu0 0
      %2926 = vperm.xlu0 %2925, %v2702
      %v2927 = vpop.permute.xlu0 %2926
      %2929 = vset.pattern.permute.xlu0 0
      %2930 = vperm.xlu0 %2929, %v2704
      %v2931 = vpop.permute.xlu0 %2930
      %2933 = vset.pattern.permute.xlu0 0
      %2934 = vperm.xlu0 %2933, %v2706
      %v2935 = vpop.permute.xlu0 %2934
      %2937 = vset.pattern.permute.xlu0 0
      %2938 = vperm.xlu0 %2937, %v2709
      %v2939 = vpop.permute.xlu0 %2938
      %2941 = vset.pattern.permute.xlu0 0
      %2942 = vperm.xlu0 %2941, %v2711
      %v2943 = vpop.permute.xlu0 %2942
      %2945 = vset.pattern.permute.xlu0 0
      %2946 = vperm.xlu0 %2945, %v2713
      %v2947 = vpop.permute.xlu0 %2946
      %2949 = vset.pattern.permute.xlu0 0
      %2950 = vperm.xlu0 %2949, %v2716
      %v2951 = vpop.permute.xlu0 %2950
      %2953 = vset.pattern.permute.xlu0 0
      %2954 = vperm.xlu0 %2953, %v2718
      %v2955 = vpop.permute.xlu0 %2954
      %2957 = vset.pattern.permute.xlu0 0
      %2958 = vperm.xlu0 %2957, %v2720
      %v2959 = vpop.permute.xlu0 %2958
      %2961 = vset.pattern.permute.xlu0 0
      %2962 = vperm.xlu0 %2961, %v2723
      %v2963 = vpop.permute.xlu0 %2962
      %2965 = vset.pattern.permute.xlu0 0
      %2966 = vperm.xlu0 %2965, %v2725
      %v2967 = vpop.permute.xlu0 %2966
      %2969 = vset.pattern.permute.xlu0 0
      %2970 = vperm.xlu0 %2969, %v2727
      %v2971 = vpop.permute.xlu0 %2970
      %2973 = vset.pattern.permute.xlu0 0
      %2974 = vperm.xlu0 %2973, %v2730
      %v2975 = vpop.permute.xlu0 %2974
      %2977 = vset.pattern.permute.xlu0 0
      %2978 = vperm.xlu0 %2977, %v2732
      %v2979 = vpop.permute.xlu0 %2978
      %2981 = vset.pattern.permute.xlu0 0
      %2982 = vperm.xlu0 %2981, %v2734
      %v2983 = vpop.permute.xlu0 %2982
      %2985 = vset.pattern.permute.xlu0 0
      %2986 = vperm.xlu0 %2985, %v2737
      %v2987 = vpop.permute.xlu0 %2986
      %2989 = vset.pattern.permute.xlu0 0
      %2990 = vperm.xlu0 %2989, %v2739
      %v2991 = vpop.permute.xlu0 %2990
      %2993 = vset.pattern.permute.xlu0 0
      %2994 = vperm.xlu0 %2993, %v2741
      %v2995 = vpop.permute.xlu0 %2994
      %2997 = vset.pattern.permute.xlu0 0
      %2998 = vperm.xlu0 %2997, %v2744
      %v2999 = vpop.permute.xlu0 %2998
      %3001 = vset.pattern.permute.xlu0 0
      %3002 = vperm.xlu0 %3001, %v2746
      %v3003 = vpop.permute.xlu0 %3002
      %3005 = vset.pattern.permute.xlu0 0
      %3006 = vperm.xlu0 %3005, %v2748
      %v3007 = vpop.permute.xlu0 %3006
      %3009 = vset.pattern.permute.xlu0 0
      %3010 = vperm.xlu0 %3009, %v2751
      %v3011 = vpop.permute.xlu0 %3010
      %3013 = vset.pattern.permute.xlu0 0
      %3014 = vperm.xlu0 %3013, %v2753
      %v3015 = vpop.permute.xlu0 %3014
      %3017 = vset.pattern.permute.xlu0 0
      %3018 = vperm.xlu0 %3017, %v2755
      %v3019 = vpop.permute.xlu0 %3018
      %3021 = vset.pattern.permute.xlu0 0
      %3022 = vperm.xlu0 %3021, %v2758
      %v3023 = vpop.permute.xlu0 %3022
      %3025 = vset.pattern.permute.xlu0 0
      %3026 = vperm.xlu0 %3025, %v2760
      %v3027 = vpop.permute.xlu0 %3026
      %3029 = vset.pattern.permute.xlu0 0
      %3030 = vperm.xlu0 %3029, %v2762
      %v3031 = vpop.permute.xlu0 %3030
      %3033 = vset.pattern.permute.xlu0 0
      %3034 = vperm.xlu0 %3033, %v2765
      %v3035 = vpop.permute.xlu0 %3034
      %3037 = vset.pattern.permute.xlu0 0
      %3038 = vperm.xlu0 %3037, %v2767
      %v3039 = vpop.permute.xlu0 %3038
      %3041 = vset.pattern.permute.xlu0 0
      %3042 = vperm.xlu0 %3041, %v2769
      %v3043 = vpop.permute.xlu0 %3042
      %3045 = vset.pattern.permute.xlu0 0
      %3046 = vperm.xlu0 %3045, %v2772
      %v3047 = vpop.permute.xlu0 %3046
      %3049 = vset.pattern.permute.xlu0 0
      %3050 = vperm.xlu0 %3049, %v2774
      %v3051 = vpop.permute.xlu0 %3050
      %3053 = vset.pattern.permute.xlu0 0
      %3054 = vperm.xlu0 %3053, %v2776
      %v3055 = vpop.permute.xlu0 %3054
      %3057 = vset.pattern.permute.xlu0 0
      %3058 = vperm.xlu0 %3057, %v2779
      %v3059 = vpop.permute.xlu0 %3058
      %3061 = vset.pattern.permute.xlu0 0
      %3062 = vperm.xlu0 %3061, %v2781
      %v3063 = vpop.permute.xlu0 %3062
      %3065 = vset.pattern.permute.xlu0 0
      %3066 = vperm.xlu0 %3065, %v2783
      %v3067 = vpop.permute.xlu0 %3066
      %3069 = vset.pattern.permute.xlu0 0
      %3070 = vperm.xlu0 %3069, %v2786
      %v3071 = vpop.permute.xlu0 %3070
      %3073 = vset.pattern.permute.xlu0 0
      %3074 = vperm.xlu0 %3073, %v2788
      %v3075 = vpop.permute.xlu0 %3074
      %3077 = vset.pattern.permute.xlu0 0
      %3078 = vperm.xlu0 %3077, %v2790
      %v3079 = vpop.permute.xlu0 %3078
      %v3081 = vperm.slane %v2792, 4
      %v3082 = vmul.f32 %v2795, %v3081
      %v3083 = vmul.f32 %v2799, %v3081
      %v3084 = vmul.f32 %v2803, %v3081
      %v3085 = vmul.f32 %v2807, %v3081
      %v3086 = vmul.f32 %v2811, %v3081
      %v3087 = vmul.f32 %v2815, %v3081
      %v3088 = vmul.f32 %v2819, %v3081
      %v3089 = vmul.f32 %v2823, %v3081
      %v3090 = vmul.f32 %v2827, %v3081
      %v3091 = vmul.f32 %v2831, %v3081
      %v3092 = vmul.f32 %v2835, %v3081
      %v3093 = vmul.f32 %v2839, %v3081
      %v3094 = vmul.f32 %v2843, %v3081
      %v3095 = vmul.f32 %v2847, %v3081
      %v3096 = vmul.f32 %v2851, %v3081
      %v3097 = vmul.f32 %v2855, %v3081
      %v3098 = vmul.f32 %v2859, %v3081
      %v3099 = vmul.f32 %v2863, %v3081
      %v3100 = vmul.f32 %v2867, %v3081
      %v3101 = vmul.f32 %v2871, %v3081
      %v3102 = vmul.f32 %v2875, %v3081
      %v3103 = vmul.f32 %v2879, %v3081
      %v3104 = vmul.f32 %v2883, %v3081
      %v3105 = vmul.f32 %v2887, %v3081
      %v3106 = vmul.f32 %v2891, %v3081
      %v3107 = vmul.f32 %v2895, %v3081
      %v3108 = vmul.f32 %v2899, %v3081
      %v3109 = vmul.f32 %v2903, %v3081
      %v3110 = vmul.f32 %v2907, %v3081
      %v3111 = vmul.f32 %v2911, %v3081
      %v3112 = vmul.f32 %v2915, %v3081
      %v3113 = vmul.f32 %v2919, %v3081
      %v3114 = vmul.f32 %v2923, %v3081
      %v3115 = vmul.f32 %v2927, %v3081
      %v3116 = vmul.f32 %v2931, %v3081
      %v3117 = vmul.f32 %v2935, %v3081
      %v3118 = vmul.f32 %v2939, %v3081
      %v3119 = vmul.f32 %v2943, %v3081
      %v3120 = vmul.f32 %v2947, %v3081
      %v3121 = vmul.f32 %v2951, %v3081
      %v3122 = vmul.f32 %v2955, %v3081
      %v3123 = vmul.f32 %v2959, %v3081
      %v3124 = vmul.f32 %v2963, %v3081
      %v3125 = vmul.f32 %v2967, %v3081
      %v3126 = vmul.f32 %v2971, %v3081
      %v3127 = vmul.f32 %v2975, %v3081
      %v3128 = vmul.f32 %v2979, %v3081
      %v3129 = vmul.f32 %v2983, %v3081
      %v3130 = vmul.f32 %v2987, %v3081
      %v3131 = vmul.f32 %v2991, %v3081
      %v3132 = vmul.f32 %v2995, %v3081
      %v3133 = vmul.f32 %v2999, %v3081
      %v3134 = vmul.f32 %v3003, %v3081
      %v3135 = vmul.f32 %v3007, %v3081
      %v3136 = vmul.f32 %v3011, %v3081
      %v3137 = vmul.f32 %v3015, %v3081
      %v3138 = vmul.f32 %v3019, %v3081
      %v3139 = vmul.f32 %v3023, %v3081
      %v3140 = vmul.f32 %v3027, %v3081
      %v3141 = vmul.f32 %v3031, %v3081
      %v3142 = vmul.f32 %v3035, %v3081
      %v3143 = vmul.f32 %v3039, %v3081
      %v3144 = vmul.f32 %v3043, %v3081
      %v3145 = vmul.f32 %v3047, %v3081
      %v3146 = vmul.f32 %v3051, %v3081
      %v3147 = vmul.f32 %v3055, %v3081
      %v3148 = vmul.f32 %v3059, %v3081
      %v3149 = vmul.f32 %v3063, %v3081
      %v3150 = vmul.f32 %v3067, %v3081
      %v3151 = vmul.f32 %v3071, %v3081
      %v3152 = vmul.f32 %v3075, %v3081
      %v3153 = vmul.f32 %v3079, %v3081
      %v3154 = vadd.f32 %v2550, %v3082
      %v3155 = vadd.f32 %v2551, %v3083
      %v3156 = vadd.f32 %v2552, %v3084
      %v3157 = vadd.f32 %v2553, %v3085
      %v3158 = vadd.f32 %v2554, %v3086
      %v3159 = vadd.f32 %v2555, %v3087
      %v3160 = vadd.f32 %v2556, %v3088
      %v3161 = vadd.f32 %v2557, %v3089
      %v3162 = vadd.f32 %v2558, %v3090
      %v3163 = vadd.f32 %v2559, %v3091
      %v3164 = vadd.f32 %v2560, %v3092
      %v3165 = vadd.f32 %v2561, %v3093
      %v3166 = vadd.f32 %v2562, %v3094
      %v3167 = vadd.f32 %v2563, %v3095
      %v3168 = vadd.f32 %v2564, %v3096
      %v3169 = vadd.f32 %v2565, %v3097
      %v3170 = vadd.f32 %v2566, %v3098
      %v3171 = vadd.f32 %v2567, %v3099
      %v3172 = vadd.f32 %v2568, %v3100
      %v3173 = vadd.f32 %v2569, %v3101
      %v3174 = vadd.f32 %v2570, %v3102
      %v3175 = vadd.f32 %v2571, %v3103
      %v3176 = vadd.f32 %v2572, %v3104
      %v3177 = vadd.f32 %v2573, %v3105
      %v3178 = vadd.f32 %v2574, %v3106
      %v3179 = vadd.f32 %v2575, %v3107
      %v3180 = vadd.f32 %v2576, %v3108
      %v3181 = vadd.f32 %v2577, %v3109
      %v3182 = vadd.f32 %v2578, %v3110
      %v3183 = vadd.f32 %v2579, %v3111
      %v3184 = vadd.f32 %v2580, %v3112
      %v3185 = vadd.f32 %v2581, %v3113
      %v3186 = vadd.f32 %v2582, %v3114
      %v3187 = vadd.f32 %v2583, %v3115
      %v3188 = vadd.f32 %v2584, %v3116
      %v3189 = vadd.f32 %v2585, %v3117
      %v3190 = vadd.f32 %v2586, %v3118
      %v3191 = vadd.f32 %v2587, %v3119
      %v3192 = vadd.f32 %v2588, %v3120
      %v3193 = vadd.f32 %v2589, %v3121
      %v3194 = vadd.f32 %v2590, %v3122
      %v3195 = vadd.f32 %v2591, %v3123
      %v3196 = vadd.f32 %v2592, %v3124
      %v3197 = vadd.f32 %v2593, %v3125
      %v3198 = vadd.f32 %v2594, %v3126
      %v3199 = vadd.f32 %v2595, %v3127
      %v3200 = vadd.f32 %v2596, %v3128
      %v3201 = vadd.f32 %v2597, %v3129
      %v3202 = vadd.f32 %v2598, %v3130
      %v3203 = vadd.f32 %v2599, %v3131
      %v3204 = vadd.f32 %v2600, %v3132
      %v3205 = vadd.f32 %v2601, %v3133
      %v3206 = vadd.f32 %v2602, %v3134
      %v3207 = vadd.f32 %v2603, %v3135
      %v3208 = vadd.f32 %v2604, %v3136
      %v3209 = vadd.f32 %v2605, %v3137
      %v3210 = vadd.f32 %v2606, %v3138
      %v3211 = vadd.f32 %v2607, %v3139
      %v3212 = vadd.f32 %v2608, %v3140
      %v3213 = vadd.f32 %v2609, %v3141
      %v3214 = vadd.f32 %v2610, %v3142
      %v3215 = vadd.f32 %v2611, %v3143
      %v3216 = vadd.f32 %v2612, %v3144
      %v3217 = vadd.f32 %v2613, %v3145
      %v3218 = vadd.f32 %v2614, %v3146
      %v3219 = vadd.f32 %v2615, %v3147
      %v3220 = vadd.f32 %v2616, %v3148
      %v3221 = vadd.f32 %v2617, %v3149
      %v3222 = vadd.f32 %v2618, %v3150
      %v3223 = vadd.f32 %v2619, %v3151
      %v3224 = vadd.f32 %v2620, %v3152
      %v3225 = vadd.f32 %v2621, %v3153
      %3227 = vset.pattern.permute.xlu0 0
      %3228 = vperm.xlu0 %3227, %v267
      %v3229 = vpop.permute.xlu0 %3228
      %3232 = vset.pattern.permute.xlu0 0
      %3233 = vperm.xlu0 %3232, %v268
      %v3234 = vpop.permute.xlu0 %3233
      %3237 = vset.pattern.permute.xlu0 0
      %3238 = vperm.xlu0 %3237, %v269
      %v3239 = vpop.permute.xlu0 %3238
      %v3241 = vperm.slane %v2792, 5
      %v3242 = vmul.f32 %v303, %v3241
      %v3243 = vmul.f32 %v308, %v3241
      %v3244 = vmul.f32 %v313, %v3241
      %v3245 = vmul.f32 %v318, %v3241
      %v3246 = vmul.f32 %v323, %v3241
      %v3247 = vmul.f32 %v328, %v3241
      %v3248 = vmul.f32 %v333, %v3241
      %v3249 = vmul.f32 %v338, %v3241
      %v3250 = vmul.f32 %v343, %v3241
      %v3251 = vmul.f32 %v348, %v3241
      %v3252 = vmul.f32 %v353, %v3241
      %v3253 = vmul.f32 %v358, %v3241
      %v3254 = vmul.f32 %v363, %v3241
      %v3255 = vmul.f32 %v368, %v3241
      %v3256 = vmul.f32 %v373, %v3241
      %v3257 = vmul.f32 %v378, %v3241
      %v3258 = vmul.f32 %v383, %v3241
      %v3259 = vmul.f32 %v388, %v3241
      %v3260 = vmul.f32 %v393, %v3241
      %v3261 = vmul.f32 %v398, %v3241
      %v3262 = vmul.f32 %v403, %v3241
      %v3263 = vmul.f32 %v408, %v3241
      %v3264 = vmul.f32 %v413, %v3241
      %v3265 = vmul.f32 %v418, %v3241
      %v3266 = vmul.f32 %v423, %v3241
      %v3267 = vmul.f32 %v428, %v3241
      %v3268 = vmul.f32 %v433, %v3241
      %v3269 = vmul.f32 %v438, %v3241
      %v3270 = vmul.f32 %v443, %v3241
      %v3271 = vmul.f32 %v448, %v3241
      %v3272 = vmul.f32 %v453, %v3241
      %v3273 = vmul.f32 %v458, %v3241
      %v3274 = vmul.f32 %v463, %v3241
      %v3275 = vmul.f32 %v468, %v3241
      %v3276 = vmul.f32 %v473, %v3241
      %v3277 = vmul.f32 %v478, %v3241
      %v3278 = vmul.f32 %v483, %v3241
      %v3279 = vmul.f32 %v488, %v3241
      %v3280 = vmul.f32 %v493, %v3241
      %v3281 = vmul.f32 %v498, %v3241
      %v3282 = vmul.f32 %v503, %v3241
      %v3283 = vmul.f32 %v508, %v3241
      %v3284 = vmul.f32 %v513, %v3241
      %v3285 = vmul.f32 %v518, %v3241
      %v3286 = vmul.f32 %v523, %v3241
      %v3287 = vmul.f32 %v528, %v3241
      %v3288 = vmul.f32 %v533, %v3241
      %v3289 = vmul.f32 %v538, %v3241
      %v3290 = vmul.f32 %v543, %v3241
      %v3291 = vmul.f32 %v548, %v3241
      %v3292 = vmul.f32 %v553, %v3241
      %v3293 = vmul.f32 %v558, %v3241
      %v3294 = vmul.f32 %v563, %v3241
      %v3295 = vmul.f32 %v568, %v3241
      %v3296 = vmul.f32 %v573, %v3241
      %v3297 = vmul.f32 %v578, %v3241
      %v3298 = vmul.f32 %v583, %v3241
      %v3299 = vmul.f32 %v588, %v3241
      %v3300 = vmul.f32 %v593, %v3241
      %v3301 = vmul.f32 %v598, %v3241
      %v3302 = vmul.f32 %v603, %v3241
      %v3303 = vmul.f32 %v608, %v3241
      %v3304 = vmul.f32 %v613, %v3241
      %v3305 = vmul.f32 %v618, %v3241
      %v3306 = vmul.f32 %v623, %v3241
      %v3307 = vmul.f32 %v628, %v3241
      %v3308 = vmul.f32 %v633, %v3241
      %v3309 = vmul.f32 %v638, %v3241
      %v3310 = vmul.f32 %v643, %v3241
      %v3311 = vmul.f32 %v3229, %v3241
      %v3312 = vmul.f32 %v3234, %v3241
      %v3313 = vmul.f32 %v3239, %v3241
      %v3314 = vadd.f32 %v3154, %v3242
      %v3315 = vadd.f32 %v3155, %v3243
      %v3316 = vadd.f32 %v3156, %v3244
      %v3317 = vadd.f32 %v3157, %v3245
      %v3318 = vadd.f32 %v3158, %v3246
      %v3319 = vadd.f32 %v3159, %v3247
      %v3320 = vadd.f32 %v3160, %v3248
      %v3321 = vadd.f32 %v3161, %v3249
      %v3322 = vadd.f32 %v3162, %v3250
      %v3323 = vadd.f32 %v3163, %v3251
      %v3324 = vadd.f32 %v3164, %v3252
      %v3325 = vadd.f32 %v3165, %v3253
      %v3326 = vadd.f32 %v3166, %v3254
      %v3327 = vadd.f32 %v3167, %v3255
      %v3328 = vadd.f32 %v3168, %v3256
      %v3329 = vadd.f32 %v3169, %v3257
      %v3330 = vadd.f32 %v3170, %v3258
      %v3331 = vadd.f32 %v3171, %v3259
      %v3332 = vadd.f32 %v3172, %v3260
      %v3333 = vadd.f32 %v3173, %v3261
      %v3334 = vadd.f32 %v3174, %v3262
      %v3335 = vadd.f32 %v3175, %v3263
      %v3336 = vadd.f32 %v3176, %v3264
      %v3337 = vadd.f32 %v3177, %v3265
      %v3338 = vadd.f32 %v3178, %v3266
      %v3339 = vadd.f32 %v3179, %v3267
      %v3340 = vadd.f32 %v3180, %v3268
      %v3341 = vadd.f32 %v3181, %v3269
      %v3342 = vadd.f32 %v3182, %v3270
      %v3343 = vadd.f32 %v3183, %v3271
      %v3344 = vadd.f32 %v3184, %v3272
      %v3345 = vadd.f32 %v3185, %v3273
      %v3346 = vadd.f32 %v3186, %v3274
      %v3347 = vadd.f32 %v3187, %v3275
      %v3348 = vadd.f32 %v3188, %v3276
      %v3349 = vadd.f32 %v3189, %v3277
      %v3350 = vadd.f32 %v3190, %v3278
      %v3351 = vadd.f32 %v3191, %v3279
      %v3352 = vadd.f32 %v3192, %v3280
      %v3353 = vadd.f32 %v3193, %v3281
      %v3354 = vadd.f32 %v3194, %v3282
      %v3355 = vadd.f32 %v3195, %v3283
      %v3356 = vadd.f32 %v3196, %v3284
      %v3357 = vadd.f32 %v3197, %v3285
      %v3358 = vadd.f32 %v3198, %v3286
      %v3359 = vadd.f32 %v3199, %v3287
      %v3360 = vadd.f32 %v3200, %v3288
      %v3361 = vadd.f32 %v3201, %v3289
      %v3362 = vadd.f32 %v3202, %v3290
      %v3363 = vadd.f32 %v3203, %v3291
      %v3364 = vadd.f32 %v3204, %v3292
      %v3365 = vadd.f32 %v3205, %v3293
      %v3366 = vadd.f32 %v3206, %v3294
      %v3367 = vadd.f32 %v3207, %v3295
      %v3368 = vadd.f32 %v3208, %v3296
      %v3369 = vadd.f32 %v3209, %v3297
      %v3370 = vadd.f32 %v3210, %v3298
      %v3371 = vadd.f32 %v3211, %v3299
      %v3372 = vadd.f32 %v3212, %v3300
      %v3373 = vadd.f32 %v3213, %v3301
      %v3374 = vadd.f32 %v3214, %v3302
      %v3375 = vadd.f32 %v3215, %v3303
      %v3376 = vadd.f32 %v3216, %v3304
      %v3377 = vadd.f32 %v3217, %v3305
      %v3378 = vadd.f32 %v3218, %v3306
      %v3379 = vadd.f32 %v3219, %v3307
      %v3380 = vadd.f32 %v3220, %v3308
      %v3381 = vadd.f32 %v3221, %v3309
      %v3382 = vadd.f32 %v3222, %v3310
      %v3383 = vadd.f32 %v3223, %v3311
      %v3384 = vadd.f32 %v3224, %v3312
      %v3385 = vadd.f32 %v3225, %v3313
      %v3387 = vrot.slane %v267, 1
      %v3388 = vrot.slane %v268, 1
      %v3389 = vsel %vm814, %v3387, %v3388
      %v3390 = vrot.slane %v269, 1
      %v3391 = vsel %vm814, %v3388, %v3390
      %v3392 = vrot.slane %v270, 1
      %v3393 = vsel %vm814, %v3390, %v3392
      %v3394 = vld [vmem:[%s1] sm:$0x8]
      %v3395 = vunpack.c.l.bf16 %v3394
      %3396 = vset.pattern.permute.xlu0 0
      %3397 = vperm.xlu0 %3396, %v3389
      %v3398 = vpop.permute.xlu0 %3397
      %3400 = vset.pattern.permute.xlu0 0
      %3401 = vperm.xlu0 %3400, %v3391
      %v3402 = vpop.permute.xlu0 %3401
      %3404 = vset.pattern.permute.xlu0 0
      %3405 = vperm.xlu0 %3404, %v3393
      %v3406 = vpop.permute.xlu0 %3405
      %v3408 = vperm.slane %v3395, 6
      %v3409 = vmul.f32 %v997, %v3408
      %v3410 = vmul.f32 %v1001, %v3408
      %v3411 = vmul.f32 %v1005, %v3408
      %v3412 = vmul.f32 %v1009, %v3408
      %v3413 = vmul.f32 %v1013, %v3408
      %v3414 = vmul.f32 %v1017, %v3408
      %v3415 = vmul.f32 %v1021, %v3408
      %v3416 = vmul.f32 %v1025, %v3408
      %v3417 = vmul.f32 %v1029, %v3408
      %v3418 = vmul.f32 %v1033, %v3408
      %v3419 = vmul.f32 %v1037, %v3408
      %v3420 = vmul.f32 %v1041, %v3408
      %v3421 = vmul.f32 %v1045, %v3408
      %v3422 = vmul.f32 %v1049, %v3408
      %v3423 = vmul.f32 %v1053, %v3408
      %v3424 = vmul.f32 %v1057, %v3408
      %v3425 = vmul.f32 %v1061, %v3408
      %v3426 = vmul.f32 %v1065, %v3408
      %v3427 = vmul.f32 %v1069, %v3408
      %v3428 = vmul.f32 %v1073, %v3408
      %v3429 = vmul.f32 %v1077, %v3408
      %v3430 = vmul.f32 %v1081, %v3408
      %v3431 = vmul.f32 %v1085, %v3408
      %v3432 = vmul.f32 %v1089, %v3408
      %v3433 = vmul.f32 %v1093, %v3408
      %v3434 = vmul.f32 %v1097, %v3408
      %v3435 = vmul.f32 %v1101, %v3408
      %v3436 = vmul.f32 %v1105, %v3408
      %v3437 = vmul.f32 %v1109, %v3408
      %v3438 = vmul.f32 %v1113, %v3408
      %v3439 = vmul.f32 %v1117, %v3408
      %v3440 = vmul.f32 %v1121, %v3408
      %v3441 = vmul.f32 %v1125, %v3408
      %v3442 = vmul.f32 %v1129, %v3408
      %v3443 = vmul.f32 %v1133, %v3408
      %v3444 = vmul.f32 %v1137, %v3408
      %v3445 = vmul.f32 %v1141, %v3408
      %v3446 = vmul.f32 %v1145, %v3408
      %v3447 = vmul.f32 %v1149, %v3408
      %v3448 = vmul.f32 %v1153, %v3408
      %v3449 = vmul.f32 %v1157, %v3408
      %v3450 = vmul.f32 %v1161, %v3408
      %v3451 = vmul.f32 %v1165, %v3408
      %v3452 = vmul.f32 %v1169, %v3408
      %v3453 = vmul.f32 %v1173, %v3408
      %v3454 = vmul.f32 %v1177, %v3408
      %v3455 = vmul.f32 %v1181, %v3408
      %v3456 = vmul.f32 %v1185, %v3408
      %v3457 = vmul.f32 %v1189, %v3408
      %v3458 = vmul.f32 %v1193, %v3408
      %v3459 = vmul.f32 %v1197, %v3408
      %v3460 = vmul.f32 %v1201, %v3408
      %v3461 = vmul.f32 %v1205, %v3408
      %v3462 = vmul.f32 %v1209, %v3408
      %v3463 = vmul.f32 %v1213, %v3408
      %v3464 = vmul.f32 %v1217, %v3408
      %v3465 = vmul.f32 %v1221, %v3408
      %v3466 = vmul.f32 %v1225, %v3408
      %v3467 = vmul.f32 %v1229, %v3408
      %v3468 = vmul.f32 %v1233, %v3408
      %v3469 = vmul.f32 %v1237, %v3408
      %v3470 = vmul.f32 %v1241, %v3408
      %v3471 = vmul.f32 %v1245, %v3408
      %v3472 = vmul.f32 %v1249, %v3408
      %v3473 = vmul.f32 %v1253, %v3408
      %v3474 = vmul.f32 %v1257, %v3408
      %v3475 = vmul.f32 %v1261, %v3408
      %v3476 = vmul.f32 %v1265, %v3408
      %v3477 = vmul.f32 %v1269, %v3408
      %v3478 = vmul.f32 %v3398, %v3408
      %v3479 = vmul.f32 %v3402, %v3408
      %v3480 = vmul.f32 %v3406, %v3408
      %v3481 = vadd.f32 %v3314, %v3409
      %v3482 = vadd.f32 %v3315, %v3410
      %v3483 = vadd.f32 %v3316, %v3411
      %v3484 = vadd.f32 %v3317, %v3412
      %v3485 = vadd.f32 %v3318, %v3413
      %v3486 = vadd.f32 %v3319, %v3414
      %v3487 = vadd.f32 %v3320, %v3415
      %v3488 = vadd.f32 %v3321, %v3416
      %v3489 = vadd.f32 %v3322, %v3417
      %v3490 = vadd.f32 %v3323, %v3418
      %v3491 = vadd.f32 %v3324, %v3419
      %v3492 = vadd.f32 %v3325, %v3420
      %v3493 = vadd.f32 %v3326, %v3421
      %v3494 = vadd.f32 %v3327, %v3422
      %v3495 = vadd.f32 %v3328, %v3423
      %v3496 = vadd.f32 %v3329, %v3424
      %v3497 = vadd.f32 %v3330, %v3425
      %v3498 = vadd.f32 %v3331, %v3426
      %v3499 = vadd.f32 %v3332, %v3427
      %v3500 = vadd.f32 %v3333, %v3428
      %v3501 = vadd.f32 %v3334, %v3429
      %v3502 = vadd.f32 %v3335, %v3430
      %v3503 = vadd.f32 %v3336, %v3431
      %v3504 = vadd.f32 %v3337, %v3432
      %v3505 = vadd.f32 %v3338, %v3433
      %v3506 = vadd.f32 %v3339, %v3434
      %v3507 = vadd.f32 %v3340, %v3435
      %v3508 = vadd.f32 %v3341, %v3436
      %v3509 = vadd.f32 %v3342, %v3437
      %v3510 = vadd.f32 %v3343, %v3438
      %v3511 = vadd.f32 %v3344, %v3439
      %v3512 = vadd.f32 %v3345, %v3440
      %v3513 = vadd.f32 %v3346, %v3441
      %v3514 = vadd.f32 %v3347, %v3442
      %v3515 = vadd.f32 %v3348, %v3443
      %v3516 = vadd.f32 %v3349, %v3444
      %v3517 = vadd.f32 %v3350, %v3445
      %v3518 = vadd.f32 %v3351, %v3446
      %v3519 = vadd.f32 %v3352, %v3447
      %v3520 = vadd.f32 %v3353, %v3448
      %v3521 = vadd.f32 %v3354, %v3449
      %v3522 = vadd.f32 %v3355, %v3450
      %v3523 = vadd.f32 %v3356, %v3451
      %v3524 = vadd.f32 %v3357, %v3452
      %v3525 = vadd.f32 %v3358, %v3453
      %v3526 = vadd.f32 %v3359, %v3454
      %v3527 = vadd.f32 %v3360, %v3455
      %v3528 = vadd.f32 %v3361, %v3456
      %v3529 = vadd.f32 %v3362, %v3457
      %v3530 = vadd.f32 %v3363, %v3458
      %v3531 = vadd.f32 %v3364, %v3459
      %v3532 = vadd.f32 %v3365, %v3460
      %v3533 = vadd.f32 %v3366, %v3461
      %v3534 = vadd.f32 %v3367, %v3462
      %v3535 = vadd.f32 %v3368, %v3463
      %v3536 = vadd.f32 %v3369, %v3464
      %v3537 = vadd.f32 %v3370, %v3465
      %v3538 = vadd.f32 %v3371, %v3466
      %v3539 = vadd.f32 %v3372, %v3467
      %v3540 = vadd.f32 %v3373, %v3468
      %v3541 = vadd.f32 %v3374, %v3469
      %v3542 = vadd.f32 %v3375, %v3470
      %v3543 = vadd.f32 %v3376, %v3471
      %v3544 = vadd.f32 %v3377, %v3472
      %v3545 = vadd.f32 %v3378, %v3473
      %v3546 = vadd.f32 %v3379, %v3474
      %v3547 = vadd.f32 %v3380, %v3475
      %v3548 = vadd.f32 %v3381, %v3476
      %v3549 = vadd.f32 %v3382, %v3477
      %v3550 = vadd.f32 %v3383, %v3478
      %v3551 = vadd.f32 %v3384, %v3479
      %v3552 = vadd.f32 %v3385, %v3480
      %v3553 = vrot.slane %v267, 2
      %v3554 = vrot.slane %v268, 2
      %v3555 = vsel %vm1416, %v3553, %v3554
      %v3556 = vrot.slane %v269, 2
      %v3557 = vsel %vm1416, %v3554, %v3556
      %v3558 = vrot.slane %v270, 2
      %v3559 = vsel %vm1416, %v3556, %v3558
      %3560 = vset.pattern.permute.xlu0 0
      %3561 = vperm.xlu0 %3560, %v3555
      %v3562 = vpop.permute.xlu0 %3561
      %3564 = vset.pattern.permute.xlu0 0
      %3565 = vperm.xlu0 %3564, %v3557
      %v3566 = vpop.permute.xlu0 %3565
      %3568 = vset.pattern.permute.xlu0 0
      %3569 = vperm.xlu0 %3568, %v3559
      %v3570 = vpop.permute.xlu0 %3569
      %v3572 = vperm.slane %v3395, 7
      %v3573 = vmul.f32 %v1601, %v3572
      %v3574 = vmul.f32 %v1605, %v3572
      %v3575 = vmul.f32 %v1609, %v3572
      %v3576 = vmul.f32 %v1613, %v3572
      %v3577 = vmul.f32 %v1617, %v3572
      %v3578 = vmul.f32 %v1621, %v3572
      %v3579 = vmul.f32 %v1625, %v3572
      %v3580 = vmul.f32 %v1629, %v3572
      %v3581 = vmul.f32 %v1633, %v3572
      %v3582 = vmul.f32 %v1637, %v3572
      %v3583 = vmul.f32 %v1641, %v3572
      %v3584 = vmul.f32 %v1645, %v3572
      %v3585 = vmul.f32 %v1649, %v3572
      %v3586 = vmul.f32 %v1653, %v3572
      %v3587 = vmul.f32 %v1657, %v3572
      %v3588 = vmul.f32 %v1661, %v3572
      %v3589 = vmul.f32 %v1665, %v3572
      %v3590 = vmul.f32 %v1669, %v3572
      %v3591 = vmul.f32 %v1673, %v3572
      %v3592 = vmul.f32 %v1677, %v3572
      %v3593 = vmul.f32 %v1681, %v3572
      %v3594 = vmul.f32 %v1685, %v3572
      %v3595 = vmul.f32 %v1689, %v3572
      %v3596 = vmul.f32 %v1693, %v3572
      %v3597 = vmul.f32 %v1697, %v3572
      %v3598 = vmul.f32 %v1701, %v3572
      %v3599 = vmul.f32 %v1705, %v3572
      %v3600 = vmul.f32 %v1709, %v3572
      %v3601 = vmul.f32 %v1713, %v3572
      %v3602 = vmul.f32 %v1717, %v3572
      %v3603 = vmul.f32 %v1721, %v3572
      %v3604 = vmul.f32 %v1725, %v3572
      %v3605 = vmul.f32 %v1729, %v3572
      %v3606 = vmul.f32 %v1733, %v3572
      %v3607 = vmul.f32 %v1737, %v3572
      %v3608 = vmul.f32 %v1741, %v3572
      %v3609 = vmul.f32 %v1745, %v3572
      %v3610 = vmul.f32 %v1749, %v3572
      %v3611 = vmul.f32 %v1753, %v3572
      %v3612 = vmul.f32 %v1757, %v3572
      %v3613 = vmul.f32 %v1761, %v3572
      %v3614 = vmul.f32 %v1765, %v3572
      %v3615 = vmul.f32 %v1769, %v3572
      %v3616 = vmul.f32 %v1773, %v3572
      %v3617 = vmul.f32 %v1777, %v3572
      %v3618 = vmul.f32 %v1781, %v3572
      %v3619 = vmul.f32 %v1785, %v3572
      %v3620 = vmul.f32 %v1789, %v3572
      %v3621 = vmul.f32 %v1793, %v3572
      %v3622 = vmul.f32 %v1797, %v3572
      %v3623 = vmul.f32 %v1801, %v3572
      %v3624 = vmul.f32 %v1805, %v3572
      %v3625 = vmul.f32 %v1809, %v3572
      %v3626 = vmul.f32 %v1813, %v3572
      %v3627 = vmul.f32 %v1817, %v3572
      %v3628 = vmul.f32 %v1821, %v3572
      %v3629 = vmul.f32 %v1825, %v3572
      %v3630 = vmul.f32 %v1829, %v3572
      %v3631 = vmul.f32 %v1833, %v3572
      %v3632 = vmul.f32 %v1837, %v3572
      %v3633 = vmul.f32 %v1841, %v3572
      %v3634 = vmul.f32 %v1845, %v3572
      %v3635 = vmul.f32 %v1849, %v3572
      %v3636 = vmul.f32 %v1853, %v3572
      %v3637 = vmul.f32 %v1857, %v3572
      %v3638 = vmul.f32 %v1861, %v3572
      %v3639 = vmul.f32 %v1865, %v3572
      %v3640 = vmul.f32 %v1869, %v3572
      %v3641 = vmul.f32 %v1873, %v3572
      %v3642 = vmul.f32 %v3562, %v3572
      %v3643 = vmul.f32 %v3566, %v3572
      %v3644 = vmul.f32 %v3570, %v3572
      %v3645 = vadd.f32 %v3481, %v3573
      %v3646 = vadd.f32 %v3482, %v3574
      %v3647 = vadd.f32 %v3483, %v3575
      %v3648 = vadd.f32 %v3484, %v3576
      %v3649 = vadd.f32 %v3485, %v3577
      %v3650 = vadd.f32 %v3486, %v3578
      %v3651 = vadd.f32 %v3487, %v3579
      %v3652 = vadd.f32 %v3488, %v3580
      %v3653 = vadd.f32 %v3489, %v3581
      %v3654 = vadd.f32 %v3490, %v3582
      %v3655 = vadd.f32 %v3491, %v3583
      %v3656 = vadd.f32 %v3492, %v3584
      %v3657 = vadd.f32 %v3493, %v3585
      %v3658 = vadd.f32 %v3494, %v3586
      %v3659 = vadd.f32 %v3495, %v3587
      %v3660 = vadd.f32 %v3496, %v3588
      %v3661 = vadd.f32 %v3497, %v3589
      %v3662 = vadd.f32 %v3498, %v3590
      %v3663 = vadd.f32 %v3499, %v3591
      %v3664 = vadd.f32 %v3500, %v3592
      %v3665 = vadd.f32 %v3501, %v3593
      %v3666 = vadd.f32 %v3502, %v3594
      %v3667 = vadd.f32 %v3503, %v3595
      %v3668 = vadd.f32 %v3504, %v3596
      %v3669 = vadd.f32 %v3505, %v3597
      %v3670 = vadd.f32 %v3506, %v3598
      %v3671 = vadd.f32 %v3507, %v3599
      %v3672 = vadd.f32 %v3508, %v3600
      %v3673 = vadd.f32 %v3509, %v3601
      %v3674 = vadd.f32 %v3510, %v3602
      %v3675 = vadd.f32 %v3511, %v3603
      %v3676 = vadd.f32 %v3512, %v3604
      %v3677 = vadd.f32 %v3513, %v3605
      %v3678 = vadd.f32 %v3514, %v3606
      %v3679 = vadd.f32 %v3515, %v3607
      %v3680 = vadd.f32 %v3516, %v3608
      %v3681 = vadd.f32 %v3517, %v3609
      %v3682 = vadd.f32 %v3518, %v3610
      %v3683 = vadd.f32 %v3519, %v3611
      %v3684 = vadd.f32 %v3520, %v3612
      %v3685 = vadd.f32 %v3521, %v3613
      %v3686 = vadd.f32 %v3522, %v3614
      %v3687 = vadd.f32 %v3523, %v3615
      %v3688 = vadd.f32 %v3524, %v3616
      %v3689 = vadd.f32 %v3525, %v3617
      %v3690 = vadd.f32 %v3526, %v3618
      %v3691 = vadd.f32 %v3527, %v3619
      %v3692 = vadd.f32 %v3528, %v3620
      %v3693 = vadd.f32 %v3529, %v3621
      %v3694 = vadd.f32 %v3530, %v3622
      %v3695 = vadd.f32 %v3531, %v3623
      %v3696 = vadd.f32 %v3532, %v3624
      %v3697 = vadd.f32 %v3533, %v3625
      %v3698 = vadd.f32 %v3534, %v3626
      %v3699 = vadd.f32 %v3535, %v3627
      %v3700 = vadd.f32 %v3536, %v3628
      %v3701 = vadd.f32 %v3537, %v3629
      %v3702 = vadd.f32 %v3538, %v3630
      %v3703 = vadd.f32 %v3539, %v3631
      %v3704 = vadd.f32 %v3540, %v3632
      %v3705 = vadd.f32 %v3541, %v3633
      %v3706 = vadd.f32 %v3542, %v3634
      %v3707 = vadd.f32 %v3543, %v3635
      %v3708 = vadd.f32 %v3544, %v3636
      %v3709 = vadd.f32 %v3545, %v3637
      %v3710 = vadd.f32 %v3546, %v3638
      %v3711 = vadd.f32 %v3547, %v3639
      %v3712 = vadd.f32 %v3548, %v3640
      %v3713 = vadd.f32 %v3549, %v3641
      %v3714 = vadd.f32 %v3550, %v3642
      %v3715 = vadd.f32 %v3551, %v3643
      %v3716 = vadd.f32 %v3552, %v3644
      %v3717 = vrot.slane %v267, 3
      %v3718 = vrot.slane %v268, 3
      %v3719 = vsel %vm2020, %v3717, %v3718
      %v3720 = vrot.slane %v269, 3
      %v3721 = vsel %vm2020, %v3718, %v3720
      %v3722 = vrot.slane %v270, 3
      %v3723 = vsel %vm2020, %v3720, %v3722
      %v3724 = vld [vmem:[%s1 + $0x4] sm:$0x1]
      %v3725 = vunpack.c.l.bf16 %v3724
      %3726 = vset.pattern.permute.xlu0 0
      %3727 = vperm.xlu0 %3726, %v3719
      %v3728 = vpop.permute.xlu0 %3727
      %3730 = vset.pattern.permute.xlu0 0
      %3731 = vperm.xlu0 %3730, %v3721
      %v3732 = vpop.permute.xlu0 %3731
      %3734 = vset.pattern.permute.xlu0 0
      %3735 = vperm.xlu0 %3734, %v3723
      %v3736 = vpop.permute.xlu0 %3735
      %v3738 = vperm.slane %v3725, 0
      %v3739 = vmul.f32 %v2203, %v3738
      %v3740 = vmul.f32 %v2207, %v3738
      %v3741 = vmul.f32 %v2211, %v3738
      %v3742 = vmul.f32 %v2215, %v3738
      %v3743 = vmul.f32 %v2219, %v3738
      %v3744 = vmul.f32 %v2223, %v3738
      %v3745 = vmul.f32 %v2227, %v3738
      %v3746 = vmul.f32 %v2231, %v3738
      %v3747 = vmul.f32 %v2235, %v3738
      %v3748 = vmul.f32 %v2239, %v3738
      %v3749 = vmul.f32 %v2243, %v3738
      %v3750 = vmul.f32 %v2247, %v3738
      %v3751 = vmul.f32 %v2251, %v3738
      %v3752 = vmul.f32 %v2255, %v3738
      %v3753 = vmul.f32 %v2259, %v3738
      %v3754 = vmul.f32 %v2263, %v3738
      %v3755 = vmul.f32 %v2267, %v3738
      %v3756 = vmul.f32 %v2271, %v3738
      %v3757 = vmul.f32 %v2275, %v3738
      %v3758 = vmul.f32 %v2279, %v3738
      %v3759 = vmul.f32 %v2283, %v3738
      %v3760 = vmul.f32 %v2287, %v3738
      %v3761 = vmul.f32 %v2291, %v3738
      %v3762 = vmul.f32 %v2295, %v3738
      %v3763 = vmul.f32 %v2299, %v3738
      %v3764 = vmul.f32 %v2303, %v3738
      %v3765 = vmul.f32 %v2307, %v3738
      %v3766 = vmul.f32 %v2311, %v3738
      %v3767 = vmul.f32 %v2315, %v3738
      %v3768 = vmul.f32 %v2319, %v3738
      %v3769 = vmul.f32 %v2323, %v3738
      %v3770 = vmul.f32 %v2327, %v3738
      %v3771 = vmul.f32 %v2331, %v3738
      %v3772 = vmul.f32 %v2335, %v3738
      %v3773 = vmul.f32 %v2339, %v3738
      %v3774 = vmul.f32 %v2343, %v3738
      %v3775 = vmul.f32 %v2347, %v3738
      %v3776 = vmul.f32 %v2351, %v3738
      %v3777 = vmul.f32 %v2355, %v3738
      %v3778 = vmul.f32 %v2359, %v3738
      %v3779 = vmul.f32 %v2363, %v3738
      %v3780 = vmul.f32 %v2367, %v3738
      %v3781 = vmul.f32 %v2371, %v3738
      %v3782 = vmul.f32 %v2375, %v3738
      %v3783 = vmul.f32 %v2379, %v3738
      %v3784 = vmul.f32 %v2383, %v3738
      %v3785 = vmul.f32 %v2387, %v3738
      %v3786 = vmul.f32 %v2391, %v3738
      %v3787 = vmul.f32 %v2395, %v3738
      %v3788 = vmul.f32 %v2399, %v3738
      %v3789 = vmul.f32 %v2403, %v3738
      %v3790 = vmul.f32 %v2407, %v3738
      %v3791 = vmul.f32 %v2411, %v3738
      %v3792 = vmul.f32 %v2415, %v3738
      %v3793 = vmul.f32 %v2419, %v3738
      %v3794 = vmul.f32 %v2423, %v3738
      %v3795 = vmul.f32 %v2427, %v3738
      %v3796 = vmul.f32 %v2431, %v3738
      %v3797 = vmul.f32 %v2435, %v3738
      %v3798 = vmul.f32 %v2439, %v3738
      %v3799 = vmul.f32 %v2443, %v3738
      %v3800 = vmul.f32 %v2447, %v3738
      %v3801 = vmul.f32 %v2451, %v3738
      %v3802 = vmul.f32 %v2455, %v3738
      %v3803 = vmul.f32 %v2459, %v3738
      %v3804 = vmul.f32 %v2463, %v3738
      %v3805 = vmul.f32 %v2467, %v3738
      %v3806 = vmul.f32 %v2471, %v3738
      %v3807 = vmul.f32 %v2475, %v3738
      %v3808 = vmul.f32 %v3728, %v3738
      %v3809 = vmul.f32 %v3732, %v3738
      %v3810 = vmul.f32 %v3736, %v3738
      %v3811 = vadd.f32 %v3645, %v3739
      %v3812 = vadd.f32 %v3646, %v3740
      %v3813 = vadd.f32 %v3647, %v3741
      %v3814 = vadd.f32 %v3648, %v3742
      %v3815 = vadd.f32 %v3649, %v3743
      %v3816 = vadd.f32 %v3650, %v3744
      %v3817 = vadd.f32 %v3651, %v3745
      %v3818 = vadd.f32 %v3652, %v3746
      %v3819 = vadd.f32 %v3653, %v3747
      %v3820 = vadd.f32 %v3654, %v3748
      %v3821 = vadd.f32 %v3655, %v3749
      %v3822 = vadd.f32 %v3656, %v3750
      %v3823 = vadd.f32 %v3657, %v3751
      %v3824 = vadd.f32 %v3658, %v3752
      %v3825 = vadd.f32 %v3659, %v3753
      %v3826 = vadd.f32 %v3660, %v3754
      %v3827 = vadd.f32 %v3661, %v3755
      %v3828 = vadd.f32 %v3662, %v3756
      %v3829 = vadd.f32 %v3663, %v3757
      %v3830 = vadd.f32 %v3664, %v3758
      %v3831 = vadd.f32 %v3665, %v3759
      %v3832 = vadd.f32 %v3666, %v3760
      %v3833 = vadd.f32 %v3667, %v3761
      %v3834 = vadd.f32 %v3668, %v3762
      %v3835 = vadd.f32 %v3669, %v3763
      %v3836 = vadd.f32 %v3670, %v3764
      %v3837 = vadd.f32 %v3671, %v3765
      %v3838 = vadd.f32 %v3672, %v3766
      %v3839 = vadd.f32 %v3673, %v3767
      %v3840 = vadd.f32 %v3674, %v3768
      %v3841 = vadd.f32 %v3675, %v3769
      %v3842 = vadd.f32 %v3676, %v3770
      %v3843 = vadd.f32 %v3677, %v3771
      %v3844 = vadd.f32 %v3678, %v3772
      %v3845 = vadd.f32 %v3679, %v3773
      %v3846 = vadd.f32 %v3680, %v3774
      %v3847 = vadd.f32 %v3681, %v3775
      %v3848 = vadd.f32 %v3682, %v3776
      %v3849 = vadd.f32 %v3683, %v3777
      %v3850 = vadd.f32 %v3684, %v3778
      %v3851 = vadd.f32 %v3685, %v3779
      %v3852 = vadd.f32 %v3686, %v3780
      %v3853 = vadd.f32 %v3687, %v3781
      %v3854 = vadd.f32 %v3688, %v3782
      %v3855 = vadd.f32 %v3689, %v3783
      %v3856 = vadd.f32 %v3690, %v3784
      %v3857 = vadd.f32 %v3691, %v3785
      %v3858 = vadd.f32 %v3692, %v3786
      %v3859 = vadd.f32 %v3693, %v3787
      %v3860 = vadd.f32 %v3694, %v3788
      %v3861 = vadd.f32 %v3695, %v3789
      %v3862 = vadd.f32 %v3696, %v3790
      %v3863 = vadd.f32 %v3697, %v3791
      %v3864 = vadd.f32 %v3698, %v3792
      %v3865 = vadd.f32 %v3699, %v3793
      %v3866 = vadd.f32 %v3700, %v3794
      %v3867 = vadd.f32 %v3701, %v3795
      %v3868 = vadd.f32 %v3702, %v3796
      %v3869 = vadd.f32 %v3703, %v3797
      %v3870 = vadd.f32 %v3704, %v3798
      %v3871 = vadd.f32 %v3705, %v3799
      %v3872 = vadd.f32 %v3706, %v3800
      %v3873 = vadd.f32 %v3707, %v3801
      %v3874 = vadd.f32 %v3708, %v3802
      %v3875 = vadd.f32 %v3709, %v3803
      %v3876 = vadd.f32 %v3710, %v3804
      %v3877 = vadd.f32 %v3711, %v3805
      %v3878 = vadd.f32 %v3712, %v3806
      %v3879 = vadd.f32 %v3713, %v3807
      %v3880 = vadd.f32 %v3714, %v3808
      %v3881 = vadd.f32 %v3715, %v3809
      %v3882 = vadd.f32 %v3716, %v3810
      %v3883 = vrot.slane %v267, 4
      %v3884 = vrot.slane %v268, 4
      %v3885 = vsel %vm2622, %v3883, %v3884
      %v3886 = vrot.slane %v269, 4
      %v3887 = vsel %vm2622, %v3884, %v3886
      %v3888 = vrot.slane %v270, 4
      %v3889 = vsel %vm2622, %v3886, %v3888
      %3890 = vset.pattern.permute.xlu0 0
      %3891 = vperm.xlu0 %3890, %v3885
      %v3892 = vpop.permute.xlu0 %3891
      %3894 = vset.pattern.permute.xlu0 0
      %3895 = vperm.xlu0 %3894, %v3887
      %v3896 = vpop.permute.xlu0 %3895
      %3898 = vset.pattern.permute.xlu0 0
      %3899 = vperm.xlu0 %3898, %v3889
      %v3900 = vpop.permute.xlu0 %3899
      %v3902 = vperm.slane %v3725, 1
      %v3903 = vmul.f32 %v2807, %v3902
      %v3904 = vmul.f32 %v2811, %v3902
      %v3905 = vmul.f32 %v2815, %v3902
      %v3906 = vmul.f32 %v2819, %v3902
      %v3907 = vmul.f32 %v2823, %v3902
      %v3908 = vmul.f32 %v2827, %v3902
      %v3909 = vmul.f32 %v2831, %v3902
      %v3910 = vmul.f32 %v2835, %v3902
      %v3911 = vmul.f32 %v2839, %v3902
      %v3912 = vmul.f32 %v2843, %v3902
      %v3913 = vmul.f32 %v2847, %v3902
      %v3914 = vmul.f32 %v2851, %v3902
      %v3915 = vmul.f32 %v2855, %v3902
      %v3916 = vmul.f32 %v2859, %v3902
      %v3917 = vmul.f32 %v2863, %v3902
      %v3918 = vmul.f32 %v2867, %v3902
      %v3919 = vmul.f32 %v2871, %v3902
      %v3920 = vmul.f32 %v2875, %v3902
      %v3921 = vmul.f32 %v2879, %v3902
      %v3922 = vmul.f32 %v2883, %v3902
      %v3923 = vmul.f32 %v2887, %v3902
      %v3924 = vmul.f32 %v2891, %v3902
      %v3925 = vmul.f32 %v2895, %v3902
      %v3926 = vmul.f32 %v2899, %v3902
      %v3927 = vmul.f32 %v2903, %v3902
      %v3928 = vmul.f32 %v2907, %v3902
      %v3929 = vmul.f32 %v2911, %v3902
      %v3930 = vmul.f32 %v2915, %v3902
      %v3931 = vmul.f32 %v2919, %v3902
      %v3932 = vmul.f32 %v2923, %v3902
      %v3933 = vmul.f32 %v2927, %v3902
      %v3934 = vmul.f32 %v2931, %v3902
      %v3935 = vmul.f32 %v2935, %v3902
      %v3936 = vmul.f32 %v2939, %v3902
      %v3937 = vmul.f32 %v2943, %v3902
      %v3938 = vmul.f32 %v2947, %v3902
      %v3939 = vmul.f32 %v2951, %v3902
      %v3940 = vmul.f32 %v2955, %v3902
      %v3941 = vmul.f32 %v2959, %v3902
      %v3942 = vmul.f32 %v2963, %v3902
      %v3943 = vmul.f32 %v2967, %v3902
      %v3944 = vmul.f32 %v2971, %v3902
      %v3945 = vmul.f32 %v2975, %v3902
      %v3946 = vmul.f32 %v2979, %v3902
      %v3947 = vmul.f32 %v2983, %v3902
      %v3948 = vmul.f32 %v2987, %v3902
      %v3949 = vmul.f32 %v2991, %v3902
      %v3950 = vmul.f32 %v2995, %v3902
      %v3951 = vmul.f32 %v2999, %v3902
      %v3952 = vmul.f32 %v3003, %v3902
      %v3953 = vmul.f32 %v3007, %v3902
      %v3954 = vmul.f32 %v3011, %v3902
      %v3955 = vmul.f32 %v3015, %v3902
      %v3956 = vmul.f32 %v3019, %v3902
      %v3957 = vmul.f32 %v3023, %v3902
      %v3958 = vmul.f32 %v3027, %v3902
      %v3959 = vmul.f32 %v3031, %v3902
      %v3960 = vmul.f32 %v3035, %v3902
      %v3961 = vmul.f32 %v3039, %v3902
      %v3962 = vmul.f32 %v3043, %v3902
      %v3963 = vmul.f32 %v3047, %v3902
      %v3964 = vmul.f32 %v3051, %v3902
      %v3965 = vmul.f32 %v3055, %v3902
      %v3966 = vmul.f32 %v3059, %v3902
      %v3967 = vmul.f32 %v3063, %v3902
      %v3968 = vmul.f32 %v3067, %v3902
      %v3969 = vmul.f32 %v3071, %v3902
      %v3970 = vmul.f32 %v3075, %v3902
      %v3971 = vmul.f32 %v3079, %v3902
      %v3972 = vmul.f32 %v3892, %v3902
      %v3973 = vmul.f32 %v3896, %v3902
      %v3974 = vmul.f32 %v3900, %v3902
      %v3975 = vadd.f32 %v3811, %v3903
      %v3976 = vadd.f32 %v3812, %v3904
      %v3977 = vadd.f32 %v3813, %v3905
      %v3978 = vadd.f32 %v3814, %v3906
      %v3979 = vadd.f32 %v3815, %v3907
      %v3980 = vadd.f32 %v3816, %v3908
      %v3981 = vadd.f32 %v3817, %v3909
      %v3982 = vadd.f32 %v3818, %v3910
      %v3983 = vadd.f32 %v3819, %v3911
      %v3984 = vadd.f32 %v3820, %v3912
      %v3985 = vadd.f32 %v3821, %v3913
      %v3986 = vadd.f32 %v3822, %v3914
      %v3987 = vadd.f32 %v3823, %v3915
      %v3988 = vadd.f32 %v3824, %v3916
      %v3989 = vadd.f32 %v3825, %v3917
      %v3990 = vadd.f32 %v3826, %v3918
      %v3991 = vadd.f32 %v3827, %v3919
      %v3992 = vadd.f32 %v3828, %v3920
      %v3993 = vadd.f32 %v3829, %v3921
      %v3994 = vadd.f32 %v3830, %v3922
      %v3995 = vadd.f32 %v3831, %v3923
      %v3996 = vadd.f32 %v3832, %v3924
      %v3997 = vadd.f32 %v3833, %v3925
      %v3998 = vadd.f32 %v3834, %v3926
      %v3999 = vadd.f32 %v3835, %v3927
      %v4000 = vadd.f32 %v3836, %v3928
      %v4001 = vadd.f32 %v3837, %v3929
      %v4002 = vadd.f32 %v3838, %v3930
      %v4003 = vadd.f32 %v3839, %v3931
      %v4004 = vadd.f32 %v3840, %v3932
      %v4005 = vadd.f32 %v3841, %v3933
      %v4006 = vadd.f32 %v3842, %v3934
      %v4007 = vadd.f32 %v3843, %v3935
      %v4008 = vadd.f32 %v3844, %v3936
      %v4009 = vadd.f32 %v3845, %v3937
      %v4010 = vadd.f32 %v3846, %v3938
      %v4011 = vadd.f32 %v3847, %v3939
      %v4012 = vadd.f32 %v3848, %v3940
      %v4013 = vadd.f32 %v3849, %v3941
      %v4014 = vadd.f32 %v3850, %v3942
      %v4015 = vadd.f32 %v3851, %v3943
      %v4016 = vadd.f32 %v3852, %v3944
      %v4017 = vadd.f32 %v3853, %v3945
      %v4018 = vadd.f32 %v3854, %v3946
      %v4019 = vadd.f32 %v3855, %v3947
      %v4020 = vadd.f32 %v3856, %v3948
      %v4021 = vadd.f32 %v3857, %v3949
      %v4022 = vadd.f32 %v3858, %v3950
      %v4023 = vadd.f32 %v3859, %v3951
      %v4024 = vadd.f32 %v3860, %v3952
      %v4025 = vadd.f32 %v3861, %v3953
      %v4026 = vadd.f32 %v3862, %v3954
      %v4027 = vadd.f32 %v3863, %v3955
      %v4028 = vadd.f32 %v3864, %v3956
      %v4029 = vadd.f32 %v3865, %v3957
      %v4030 = vadd.f32 %v3866, %v3958
      %v4031 = vadd.f32 %v3867, %v3959
      %v4032 = vadd.f32 %v3868, %v3960
      %v4033 = vadd.f32 %v3869, %v3961
      %v4034 = vadd.f32 %v3870, %v3962
      %v4035 = vadd.f32 %v3871, %v3963
      %v4036 = vadd.f32 %v3872, %v3964
      %v4037 = vadd.f32 %v3873, %v3965
      %v4038 = vadd.f32 %v3874, %v3966
      %v4039 = vadd.f32 %v3875, %v3967
      %v4040 = vadd.f32 %v3876, %v3968
      %v4041 = vadd.f32 %v3877, %v3969
      %v4042 = vadd.f32 %v3878, %v3970
      %v4043 = vadd.f32 %v3879, %v3971
      %v4044 = vadd.f32 %v3880, %v3972
      %v4045 = vadd.f32 %v3881, %v3973
      %v4046 = vadd.f32 %v3882, %v3974
      %v4047 = vld [vmem:[%s1 + $0x4] sm:$0x2]
      %v4048 = vunpack.c.l.bf16 %v4047
      %4050 = vset.pattern.permute.xlu0 0
      %4051 = vperm.xlu0 %4050, %v271
      %v4052 = vpop.permute.xlu0 %4051
      %4055 = vset.pattern.permute.xlu0 0
      %4056 = vperm.xlu0 %4055, %v272
      %v4057 = vpop.permute.xlu0 %4056
      %4060 = vset.pattern.permute.xlu0 0
      %4061 = vperm.xlu0 %4060, %v273
      %v4062 = vpop.permute.xlu0 %4061
      %v4064 = vperm.slane %v4048, 2
      %v4065 = vmul.f32 %v318, %v4064
      %v4066 = vmul.f32 %v323, %v4064
      %v4067 = vmul.f32 %v328, %v4064
      %v4068 = vmul.f32 %v333, %v4064
      %v4069 = vmul.f32 %v338, %v4064
      %v4070 = vmul.f32 %v343, %v4064
      %v4071 = vmul.f32 %v348, %v4064
      %v4072 = vmul.f32 %v353, %v4064
      %v4073 = vmul.f32 %v358, %v4064
      %v4074 = vmul.f32 %v363, %v4064
      %v4075 = vmul.f32 %v368, %v4064
      %v4076 = vmul.f32 %v373, %v4064
      %v4077 = vmul.f32 %v378, %v4064
      %v4078 = vmul.f32 %v383, %v4064
      %v4079 = vmul.f32 %v388, %v4064
      %v4080 = vmul.f32 %v393, %v4064
      %v4081 = vmul.f32 %v398, %v4064
      %v4082 = vmul.f32 %v403, %v4064
      %v4083 = vmul.f32 %v408, %v4064
      %v4084 = vmul.f32 %v413, %v4064
      %v4085 = vmul.f32 %v418, %v4064
      %v4086 = vmul.f32 %v423, %v4064
      %v4087 = vmul.f32 %v428, %v4064
      %v4088 = vmul.f32 %v433, %v4064
      %v4089 = vmul.f32 %v438, %v4064
      %v4090 = vmul.f32 %v443, %v4064
      %v4091 = vmul.f32 %v448, %v4064
      %v4092 = vmul.f32 %v453, %v4064
      %v4093 = vmul.f32 %v458, %v4064
      %v4094 = vmul.f32 %v463, %v4064
      %v4095 = vmul.f32 %v468, %v4064
      %v4096 = vmul.f32 %v473, %v4064
      %v4097 = vmul.f32 %v478, %v4064
      %v4098 = vmul.f32 %v483, %v4064
      %v4099 = vmul.f32 %v488, %v4064
      %v4100 = vmul.f32 %v493, %v4064
      %v4101 = vmul.f32 %v498, %v4064
      %v4102 = vmul.f32 %v503, %v4064
      %v4103 = vmul.f32 %v508, %v4064
      %v4104 = vmul.f32 %v513, %v4064
      %v4105 = vmul.f32 %v518, %v4064
      %v4106 = vmul.f32 %v523, %v4064
      %v4107 = vmul.f32 %v528, %v4064
      %v4108 = vmul.f32 %v533, %v4064
      %v4109 = vmul.f32 %v538, %v4064
      %v4110 = vmul.f32 %v543, %v4064
      %v4111 = vmul.f32 %v548, %v4064
      %v4112 = vmul.f32 %v553, %v4064
      %v4113 = vmul.f32 %v558, %v4064
      %v4114 = vmul.f32 %v563, %v4064
      %v4115 = vmul.f32 %v568, %v4064
      %v4116 = vmul.f32 %v573, %v4064
      %v4117 = vmul.f32 %v578, %v4064
      %v4118 = vmul.f32 %v583, %v4064
      %v4119 = vmul.f32 %v588, %v4064
      %v4120 = vmul.f32 %v593, %v4064
      %v4121 = vmul.f32 %v598, %v4064
      %v4122 = vmul.f32 %v603, %v4064
      %v4123 = vmul.f32 %v608, %v4064
      %v4124 = vmul.f32 %v613, %v4064
      %v4125 = vmul.f32 %v618, %v4064
      %v4126 = vmul.f32 %v623, %v4064
      %v4127 = vmul.f32 %v628, %v4064
      %v4128 = vmul.f32 %v633, %v4064
      %v4129 = vmul.f32 %v638, %v4064
      %v4130 = vmul.f32 %v643, %v4064
      %v4131 = vmul.f32 %v3229, %v4064
      %v4132 = vmul.f32 %v3234, %v4064
      %v4133 = vmul.f32 %v3239, %v4064
      %v4134 = vmul.f32 %v4052, %v4064
      %v4135 = vmul.f32 %v4057, %v4064
      %v4136 = vmul.f32 %v4062, %v4064
      %v4137 = vadd.f32 %v3975, %v4065
      %v4138 = vadd.f32 %v3976, %v4066
      %v4139 = vadd.f32 %v3977, %v4067
      %v4140 = vadd.f32 %v3978, %v4068
      %v4141 = vadd.f32 %v3979, %v4069
      %v4142 = vadd.f32 %v3980, %v4070
      %v4143 = vadd.f32 %v3981, %v4071
      %v4144 = vadd.f32 %v3982, %v4072
      %v4145 = vadd.f32 %v3983, %v4073
      %v4146 = vadd.f32 %v3984, %v4074
      %v4147 = vadd.f32 %v3985, %v4075
      %v4148 = vadd.f32 %v3986, %v4076
      %v4149 = vadd.f32 %v3987, %v4077
      %v4150 = vadd.f32 %v3988, %v4078
      %v4151 = vadd.f32 %v3989, %v4079
      %v4152 = vadd.f32 %v3990, %v4080
      %v4153 = vadd.f32 %v3991, %v4081
      %v4154 = vadd.f32 %v3992, %v4082
      %v4155 = vadd.f32 %v3993, %v4083
      %v4156 = vadd.f32 %v3994, %v4084
      %v4157 = vadd.f32 %v3995, %v4085
      %v4158 = vadd.f32 %v3996, %v4086
      %v4159 = vadd.f32 %v3997, %v4087
      %v4160 = vadd.f32 %v3998, %v4088
      %v4161 = vadd.f32 %v3999, %v4089
      %v4162 = vadd.f32 %v4000, %v4090
      %v4163 = vadd.f32 %v4001, %v4091
      %v4164 = vadd.f32 %v4002, %v4092
      %v4165 = vadd.f32 %v4003, %v4093
      %v4166 = vadd.f32 %v4004, %v4094
      %v4167 = vadd.f32 %v4005, %v4095
      %v4168 = vadd.f32 %v4006, %v4096
      %v4169 = vadd.f32 %v4007, %v4097
      %v4170 = vadd.f32 %v4008, %v4098
      %v4171 = vadd.f32 %v4009, %v4099
      %v4172 = vadd.f32 %v4010, %v4100
      %v4173 = vadd.f32 %v4011, %v4101
      %v4174 = vadd.f32 %v4012, %v4102
      %v4175 = vadd.f32 %v4013, %v4103
      %v4176 = vadd.f32 %v4014, %v4104
      %v4177 = vadd.f32 %v4015, %v4105
      %v4178 = vadd.f32 %v4016, %v4106
      %v4179 = vadd.f32 %v4017, %v4107
      %v4180 = vadd.f32 %v4018, %v4108
      %v4181 = vadd.f32 %v4019, %v4109
      %v4182 = vadd.f32 %v4020, %v4110
      %v4183 = vadd.f32 %v4021, %v4111
      %v4184 = vadd.f32 %v4022, %v4112
      %v4185 = vadd.f32 %v4023, %v4113
      %v4186 = vadd.f32 %v4024, %v4114
      %v4187 = vadd.f32 %v4025, %v4115
      %v4188 = vadd.f32 %v4026, %v4116
      %v4189 = vadd.f32 %v4027, %v4117
      %v4190 = vadd.f32 %v4028, %v4118
      %v4191 = vadd.f32 %v4029, %v4119
      %v4192 = vadd.f32 %v4030, %v4120
      %v4193 = vadd.f32 %v4031, %v4121
      %v4194 = vadd.f32 %v4032, %v4122
      %v4195 = vadd.f32 %v4033, %v4123
      %v4196 = vadd.f32 %v4034, %v4124
      %v4197 = vadd.f32 %v4035, %v4125
      %v4198 = vadd.f32 %v4036, %v4126
      %v4199 = vadd.f32 %v4037, %v4127
      %v4200 = vadd.f32 %v4038, %v4128
      %v4201 = vadd.f32 %v4039, %v4129
      %v4202 = vadd.f32 %v4040, %v4130
      %v4203 = vadd.f32 %v4041, %v4131
      %v4204 = vadd.f32 %v4042, %v4132
      %v4205 = vadd.f32 %v4043, %v4133
      %v4206 = vadd.f32 %v4044, %v4134
      %v4207 = vadd.f32 %v4045, %v4135
      %v4208 = vadd.f32 %v4046, %v4136
      %v4210 = vrot.slane %v271, 1
      %v4211 = vrot.slane %v272, 1
      %v4212 = vsel %vm814, %v4210, %v4211
      %v4213 = vrot.slane %v273, 1
      %v4214 = vsel %vm814, %v4211, %v4213
      %v4215 = vrot.slane %v274, 1
      %v4216 = vsel %vm814, %v4213, %v4215
      %4217 = vset.pattern.permute.xlu0 0
      %4218 = vperm.xlu0 %4217, %v4212
      %v4219 = vpop.permute.xlu0 %4218
      %4221 = vset.pattern.permute.xlu0 0
      %4222 = vperm.xlu0 %4221, %v4214
      %v4223 = vpop.permute.xlu0 %4222
      %4225 = vset.pattern.permute.xlu0 0
      %4226 = vperm.xlu0 %4225, %v4216
      %v4227 = vpop.permute.xlu0 %4226
      %v4229 = vperm.slane %v4048, 3
      %v4230 = vmul.f32 %v1009, %v4229
      %v4231 = vmul.f32 %v1013, %v4229
      %v4232 = vmul.f32 %v1017, %v4229
      %v4233 = vmul.f32 %v1021, %v4229
      %v4234 = vmul.f32 %v1025, %v4229
      %v4235 = vmul.f32 %v1029, %v4229
      %v4236 = vmul.f32 %v1033, %v4229
      %v4237 = vmul.f32 %v1037, %v4229
      %v4238 = vmul.f32 %v1041, %v4229
      %v4239 = vmul.f32 %v1045, %v4229
      %v4240 = vmul.f32 %v1049, %v4229
      %v4241 = vmul.f32 %v1053, %v4229
      %v4242 = vmul.f32 %v1057, %v4229
      %v4243 = vmul.f32 %v1061, %v4229
      %v4244 = vmul.f32 %v1065, %v4229
      %v4245 = vmul.f32 %v1069, %v4229
      %v4246 = vmul.f32 %v1073, %v4229
      %v4247 = vmul.f32 %v1077, %v4229
      %v4248 = vmul.f32 %v1081, %v4229
      %v4249 = vmul.f32 %v1085, %v4229
      %v4250 = vmul.f32 %v1089, %v4229
      %v4251 = vmul.f32 %v1093, %v4229
      %v4252 = vmul.f32 %v1097, %v4229
      %v4253 = vmul.f32 %v1101, %v4229
      %v4254 = vmul.f32 %v1105, %v4229
      %v4255 = vmul.f32 %v1109, %v4229
      %v4256 = vmul.f32 %v1113, %v4229
      %v4257 = vmul.f32 %v1117, %v4229
      %v4258 = vmul.f32 %v1121, %v4229
      %v4259 = vmul.f32 %v1125, %v4229
      %v4260 = vmul.f32 %v1129, %v4229
      %v4261 = vmul.f32 %v1133, %v4229
      %v4262 = vmul.f32 %v1137, %v4229
      %v4263 = vmul.f32 %v1141, %v4229
      %v4264 = vmul.f32 %v1145, %v4229
      %v4265 = vmul.f32 %v1149, %v4229
      %v4266 = vmul.f32 %v1153, %v4229
      %v4267 = vmul.f32 %v1157, %v4229
      %v4268 = vmul.f32 %v1161, %v4229
      %v4269 = vmul.f32 %v1165, %v4229
      %v4270 = vmul.f32 %v1169, %v4229
      %v4271 = vmul.f32 %v1173, %v4229
      %v4272 = vmul.f32 %v1177, %v4229
      %v4273 = vmul.f32 %v1181, %v4229
      %v4274 = vmul.f32 %v1185, %v4229
      %v4275 = vmul.f32 %v1189, %v4229
      %v4276 = vmul.f32 %v1193, %v4229
      %v4277 = vmul.f32 %v1197, %v4229
      %v4278 = vmul.f32 %v1201, %v4229
      %v4279 = vmul.f32 %v1205, %v4229
      %v4280 = vmul.f32 %v1209, %v4229
      %v4281 = vmul.f32 %v1213, %v4229
      %v4282 = vmul.f32 %v1217, %v4229
      %v4283 = vmul.f32 %v1221, %v4229
      %v4284 = vmul.f32 %v1225, %v4229
      %v4285 = vmul.f32 %v1229, %v4229
      %v4286 = vmul.f32 %v1233, %v4229
      %v4287 = vmul.f32 %v1237, %v4229
      %v4288 = vmul.f32 %v1241, %v4229
      %v4289 = vmul.f32 %v1245, %v4229
      %v4290 = vmul.f32 %v1249, %v4229
      %v4291 = vmul.f32 %v1253, %v4229
      %v4292 = vmul.f32 %v1257, %v4229
      %v4293 = vmul.f32 %v1261, %v4229
      %v4294 = vmul.f32 %v1265, %v4229
      %v4295 = vmul.f32 %v1269, %v4229
      %v4296 = vmul.f32 %v3398, %v4229
      %v4297 = vmul.f32 %v3402, %v4229
      %v4298 = vmul.f32 %v3406, %v4229
      %v4299 = vmul.f32 %v4219, %v4229
      %v4300 = vmul.f32 %v4223, %v4229
      %v4301 = vmul.f32 %v4227, %v4229
      %v4302 = vadd.f32 %v4137, %v4230
      %v4303 = vadd.f32 %v4138, %v4231
      %v4304 = vadd.f32 %v4139, %v4232
      %v4305 = vadd.f32 %v4140, %v4233
      %v4306 = vadd.f32 %v4141, %v4234
      %v4307 = vadd.f32 %v4142, %v4235
      %v4308 = vadd.f32 %v4143, %v4236
      %v4309 = vadd.f32 %v4144, %v4237
      %v4310 = vadd.f32 %v4145, %v4238
      %v4311 = vadd.f32 %v4146, %v4239
      %v4312 = vadd.f32 %v4147, %v4240
      %v4313 = vadd.f32 %v4148, %v4241
      %v4314 = vadd.f32 %v4149, %v4242
      %v4315 = vadd.f32 %v4150, %v4243
      %v4316 = vadd.f32 %v4151, %v4244
      %v4317 = vadd.f32 %v4152, %v4245
      %v4318 = vadd.f32 %v4153, %v4246
      %v4319 = vadd.f32 %v4154, %v4247
      %v4320 = vadd.f32 %v4155, %v4248
      %v4321 = vadd.f32 %v4156, %v4249
      %v4322 = vadd.f32 %v4157, %v4250
      %v4323 = vadd.f32 %v4158, %v4251
      %v4324 = vadd.f32 %v4159, %v4252
      %v4325 = vadd.f32 %v4160, %v4253
      %v4326 = vadd.f32 %v4161, %v4254
      %v4327 = vadd.f32 %v4162, %v4255
      %v4328 = vadd.f32 %v4163, %v4256
      %v4329 = vadd.f32 %v4164, %v4257
      %v4330 = vadd.f32 %v4165, %v4258
      %v4331 = vadd.f32 %v4166, %v4259
      %v4332 = vadd.f32 %v4167, %v4260
      %v4333 = vadd.f32 %v4168, %v4261
      %v4334 = vadd.f32 %v4169, %v4262
      %v4335 = vadd.f32 %v4170, %v4263
      %v4336 = vadd.f32 %v4171, %v4264
      %v4337 = vadd.f32 %v4172, %v4265
      %v4338 = vadd.f32 %v4173, %v4266
      %v4339 = vadd.f32 %v4174, %v4267
      %v4340 = vadd.f32 %v4175, %v4268
      %v4341 = vadd.f32 %v4176, %v4269
      %v4342 = vadd.f32 %v4177, %v4270
      %v4343 = vadd.f32 %v4178, %v4271
      %v4344 = vadd.f32 %v4179, %v4272
      %v4345 = vadd.f32 %v4180, %v4273
      %v4346 = vadd.f32 %v4181, %v4274
      %v4347 = vadd.f32 %v4182, %v4275
      %v4348 = vadd.f32 %v4183, %v4276
      %v4349 = vadd.f32 %v4184, %v4277
      %v4350 = vadd.f32 %v4185, %v4278
      %v4351 = vadd.f32 %v4186, %v4279
      %v4352 = vadd.f32 %v4187, %v4280
      %v4353 = vadd.f32 %v4188, %v4281
      %v4354 = vadd.f32 %v4189, %v4282
      %v4355 = vadd.f32 %v4190, %v4283
      %v4356 = vadd.f32 %v4191, %v4284
      %v4357 = vadd.f32 %v4192, %v4285
      %v4358 = vadd.f32 %v4193, %v4286
      %v4359 = vadd.f32 %v4194, %v4287
      %v4360 = vadd.f32 %v4195, %v4288
      %v4361 = vadd.f32 %v4196, %v4289
      %v4362 = vadd.f32 %v4197, %v4290
      %v4363 = vadd.f32 %v4198, %v4291
      %v4364 = vadd.f32 %v4199, %v4292
      %v4365 = vadd.f32 %v4200, %v4293
      %v4366 = vadd.f32 %v4201, %v4294
      %v4367 = vadd.f32 %v4202, %v4295
      %v4368 = vadd.f32 %v4203, %v4296
      %v4369 = vadd.f32 %v4204, %v4297
      %v4370 = vadd.f32 %v4205, %v4298
      %v4371 = vadd.f32 %v4206, %v4299
      %v4372 = vadd.f32 %v4207, %v4300
      %v4373 = vadd.f32 %v4208, %v4301
      %v4374 = vrot.slane %v271, 2
      %v4375 = vrot.slane %v272, 2
      %v4376 = vsel %vm1416, %v4374, %v4375
      %v4377 = vrot.slane %v273, 2
      %v4378 = vsel %vm1416, %v4375, %v4377
      %v4379 = vrot.slane %v274, 2
      %v4380 = vsel %vm1416, %v4377, %v4379
      %v4381 = vld [vmem:[%s1 + $0x4] sm:$0x4]
      %v4382 = vunpack.c.l.bf16 %v4381
      %4383 = vset.pattern.permute.xlu0 0
      %4384 = vperm.xlu0 %4383, %v4376
      %v4385 = vpop.permute.xlu0 %4384
      %4387 = vset.pattern.permute.xlu0 0
      %4388 = vperm.xlu0 %4387, %v4378
      %v4389 = vpop.permute.xlu0 %4388
      %4391 = vset.pattern.permute.xlu0 0
      %4392 = vperm.xlu0 %4391, %v4380
      %v4393 = vpop.permute.xlu0 %4392
      %v4395 = vperm.slane %v4382, 4
      %v4396 = vmul.f32 %v1613, %v4395
      %v4397 = vmul.f32 %v1617, %v4395
      %v4398 = vmul.f32 %v1621, %v4395
      %v4399 = vmul.f32 %v1625, %v4395
      %v4400 = vmul.f32 %v1629, %v4395
      %v4401 = vmul.f32 %v1633, %v4395
      %v4402 = vmul.f32 %v1637, %v4395
      %v4403 = vmul.f32 %v1641, %v4395
      %v4404 = vmul.f32 %v1645, %v4395
      %v4405 = vmul.f32 %v1649, %v4395
      %v4406 = vmul.f32 %v1653, %v4395
      %v4407 = vmul.f32 %v1657, %v4395
      %v4408 = vmul.f32 %v1661, %v4395
      %v4409 = vmul.f32 %v1665, %v4395
      %v4410 = vmul.f32 %v1669, %v4395
      %v4411 = vmul.f32 %v1673, %v4395
      %v4412 = vmul.f32 %v1677, %v4395
      %v4413 = vmul.f32 %v1681, %v4395
      %v4414 = vmul.f32 %v1685, %v4395
      %v4415 = vmul.f32 %v1689, %v4395
      %v4416 = vmul.f32 %v1693, %v4395
      %v4417 = vmul.f32 %v1697, %v4395
      %v4418 = vmul.f32 %v1701, %v4395
      %v4419 = vmul.f32 %v1705, %v4395
      %v4420 = vmul.f32 %v1709, %v4395
      %v4421 = vmul.f32 %v1713, %v4395
      %v4422 = vmul.f32 %v1717, %v4395
      %v4423 = vmul.f32 %v1721, %v4395
      %v4424 = vmul.f32 %v1725, %v4395
      %v4425 = vmul.f32 %v1729, %v4395
      %v4426 = vmul.f32 %v1733, %v4395
      %v4427 = vmul.f32 %v1737, %v4395
      %v4428 = vmul.f32 %v1741, %v4395
      %v4429 = vmul.f32 %v1745, %v4395
      %v4430 = vmul.f32 %v1749, %v4395
      %v4431 = vmul.f32 %v1753, %v4395
      %v4432 = vmul.f32 %v1757, %v4395
      %v4433 = vmul.f32 %v1761, %v4395
      %v4434 = vmul.f32 %v1765, %v4395
      %v4435 = vmul.f32 %v1769, %v4395
      %v4436 = vmul.f32 %v1773, %v4395
      %v4437 = vmul.f32 %v1777, %v4395
      %v4438 = vmul.f32 %v1781, %v4395
      %v4439 = vmul.f32 %v1785, %v4395
      %v4440 = vmul.f32 %v1789, %v4395
      %v4441 = vmul.f32 %v1793, %v4395
      %v4442 = vmul.f32 %v1797, %v4395
      %v4443 = vmul.f32 %v1801, %v4395
      %v4444 = vmul.f32 %v1805, %v4395
      %v4445 = vmul.f32 %v1809, %v4395
      %v4446 = vmul.f32 %v1813, %v4395
      %v4447 = vmul.f32 %v1817, %v4395
      %v4448 = vmul.f32 %v1821, %v4395
      %v4449 = vmul.f32 %v1825, %v4395
      %v4450 = vmul.f32 %v1829, %v4395
      %v4451 = vmul.f32 %v1833, %v4395
      %v4452 = vmul.f32 %v1837, %v4395
      %v4453 = vmul.f32 %v1841, %v4395
      %v4454 = vmul.f32 %v1845, %v4395
      %v4455 = vmul.f32 %v1849, %v4395
      %v4456 = vmul.f32 %v1853, %v4395
      %v4457 = vmul.f32 %v1857, %v4395
      %v4458 = vmul.f32 %v1861, %v4395
      %v4459 = vmul.f32 %v1865, %v4395
      %v4460 = vmul.f32 %v1869, %v4395
      %v4461 = vmul.f32 %v1873, %v4395
      %v4462 = vmul.f32 %v3562, %v4395
      %v4463 = vmul.f32 %v3566, %v4395
      %v4464 = vmul.f32 %v3570, %v4395
      %v4465 = vmul.f32 %v4385, %v4395
      %v4466 = vmul.f32 %v4389, %v4395
      %v4467 = vmul.f32 %v4393, %v4395
      %v4468 = vadd.f32 %v4302, %v4396
      %v4469 = vadd.f32 %v4303, %v4397
      %v4470 = vadd.f32 %v4304, %v4398
      %v4471 = vadd.f32 %v4305, %v4399
      %v4472 = vadd.f32 %v4306, %v4400
      %v4473 = vadd.f32 %v4307, %v4401
      %v4474 = vadd.f32 %v4308, %v4402
      %v4475 = vadd.f32 %v4309, %v4403
      %v4476 = vadd.f32 %v4310, %v4404
      %v4477 = vadd.f32 %v4311, %v4405
      %v4478 = vadd.f32 %v4312, %v4406
      %v4479 = vadd.f32 %v4313, %v4407
      %v4480 = vadd.f32 %v4314, %v4408
      %v4481 = vadd.f32 %v4315, %v4409
      %v4482 = vadd.f32 %v4316, %v4410
      %v4483 = vadd.f32 %v4317, %v4411
      %v4484 = vadd.f32 %v4318, %v4412
      %v4485 = vadd.f32 %v4319, %v4413
      %v4486 = vadd.f32 %v4320, %v4414
      %v4487 = vadd.f32 %v4321, %v4415
      %v4488 = vadd.f32 %v4322, %v4416
      %v4489 = vadd.f32 %v4323, %v4417
      %v4490 = vadd.f32 %v4324, %v4418
      %v4491 = vadd.f32 %v4325, %v4419
      %v4492 = vadd.f32 %v4326, %v4420
      %v4493 = vadd.f32 %v4327, %v4421
      %v4494 = vadd.f32 %v4328, %v4422
      %v4495 = vadd.f32 %v4329, %v4423
      %v4496 = vadd.f32 %v4330, %v4424
      %v4497 = vadd.f32 %v4331, %v4425
      %v4498 = vadd.f32 %v4332, %v4426
      %v4499 = vadd.f32 %v4333, %v4427
      %v4500 = vadd.f32 %v4334, %v4428
      %v4501 = vadd.f32 %v4335, %v4429
      %v4502 = vadd.f32 %v4336, %v4430
      %v4503 = vadd.f32 %v4337, %v4431
      %v4504 = vadd.f32 %v4338, %v4432
      %v4505 = vadd.f32 %v4339, %v4433
      %v4506 = vadd.f32 %v4340, %v4434
      %v4507 = vadd.f32 %v4341, %v4435
      %v4508 = vadd.f32 %v4342, %v4436
      %v4509 = vadd.f32 %v4343, %v4437
      %v4510 = vadd.f32 %v4344, %v4438
      %v4511 = vadd.f32 %v4345, %v4439
      %v4512 = vadd.f32 %v4346, %v4440
      %v4513 = vadd.f32 %v4347, %v4441
      %v4514 = vadd.f32 %v4348, %v4442
      %v4515 = vadd.f32 %v4349, %v4443
      %v4516 = vadd.f32 %v4350, %v4444
      %v4517 = vadd.f32 %v4351, %v4445
      %v4518 = vadd.f32 %v4352, %v4446
      %v4519 = vadd.f32 %v4353, %v4447
      %v4520 = vadd.f32 %v4354, %v4448
      %v4521 = vadd.f32 %v4355, %v4449
      %v4522 = vadd.f32 %v4356, %v4450
      %v4523 = vadd.f32 %v4357, %v4451
      %v4524 = vadd.f32 %v4358, %v4452
      %v4525 = vadd.f32 %v4359, %v4453
      %v4526 = vadd.f32 %v4360, %v4454
      %v4527 = vadd.f32 %v4361, %v4455
      %v4528 = vadd.f32 %v4362, %v4456
      %v4529 = vadd.f32 %v4363, %v4457
      %v4530 = vadd.f32 %v4364, %v4458
      %v4531 = vadd.f32 %v4365, %v4459
      %v4532 = vadd.f32 %v4366, %v4460
      %v4533 = vadd.f32 %v4367, %v4461
      %v4534 = vadd.f32 %v4368, %v4462
      %v4535 = vadd.f32 %v4369, %v4463
      %v4536 = vadd.f32 %v4370, %v4464
      %v4537 = vadd.f32 %v4371, %v4465
      %v4538 = vadd.f32 %v4372, %v4466
      %v4539 = vadd.f32 %v4373, %v4467
      %v4540 = vrot.slane %v271, 3
      %v4541 = vrot.slane %v272, 3
      %v4542 = vsel %vm2020, %v4540, %v4541
      %v4543 = vrot.slane %v273, 3
      %v4544 = vsel %vm2020, %v4541, %v4543
      %v4545 = vrot.slane %v274, 3
      %v4546 = vsel %vm2020, %v4543, %v4545
      %4547 = vset.pattern.permute.xlu0 0
      %4548 = vperm.xlu0 %4547, %v4542
      %v4549 = vpop.permute.xlu0 %4548
      %4551 = vset.pattern.permute.xlu0 0
      %4552 = vperm.xlu0 %4551, %v4544
      %v4553 = vpop.permute.xlu0 %4552
      %4555 = vset.pattern.permute.xlu0 0
      %4556 = vperm.xlu0 %4555, %v4546
      %v4557 = vpop.permute.xlu0 %4556
      %v4559 = vperm.slane %v4382, 5
      %v4560 = vmul.f32 %v2215, %v4559
      %v4561 = vmul.f32 %v2219, %v4559
      %v4562 = vmul.f32 %v2223, %v4559
      %v4563 = vmul.f32 %v2227, %v4559
      %v4564 = vmul.f32 %v2231, %v4559
      %v4565 = vmul.f32 %v2235, %v4559
      %v4566 = vmul.f32 %v2239, %v4559
      %v4567 = vmul.f32 %v2243, %v4559
      %v4568 = vmul.f32 %v2247, %v4559
      %v4569 = vmul.f32 %v2251, %v4559
      %v4570 = vmul.f32 %v2255, %v4559
      %v4571 = vmul.f32 %v2259, %v4559
      %v4572 = vmul.f32 %v2263, %v4559
      %v4573 = vmul.f32 %v2267, %v4559
      %v4574 = vmul.f32 %v2271, %v4559
      %v4575 = vmul.f32 %v2275, %v4559
      %v4576 = vmul.f32 %v2279, %v4559
      %v4577 = vmul.f32 %v2283, %v4559
      %v4578 = vmul.f32 %v2287, %v4559
      %v4579 = vmul.f32 %v2291, %v4559
      %v4580 = vmul.f32 %v2295, %v4559
      %v4581 = vmul.f32 %v2299, %v4559
      %v4582 = vmul.f32 %v2303, %v4559
      %v4583 = vmul.f32 %v2307, %v4559
      %v4584 = vmul.f32 %v2311, %v4559
      %v4585 = vmul.f32 %v2315, %v4559
      %v4586 = vmul.f32 %v2319, %v4559
      %v4587 = vmul.f32 %v2323, %v4559
      %v4588 = vmul.f32 %v2327, %v4559
      %v4589 = vmul.f32 %v2331, %v4559
      %v4590 = vmul.f32 %v2335, %v4559
      %v4591 = vmul.f32 %v2339, %v4559
      %v4592 = vmul.f32 %v2343, %v4559
      %v4593 = vmul.f32 %v2347, %v4559
      %v4594 = vmul.f32 %v2351, %v4559
      %v4595 = vmul.f32 %v2355, %v4559
      %v4596 = vmul.f32 %v2359, %v4559
      %v4597 = vmul.f32 %v2363, %v4559
      %v4598 = vmul.f32 %v2367, %v4559
      %v4599 = vmul.f32 %v2371, %v4559
      %v4600 = vmul.f32 %v2375, %v4559
      %v4601 = vmul.f32 %v2379, %v4559
      %v4602 = vmul.f32 %v2383, %v4559
      %v4603 = vmul.f32 %v2387, %v4559
      %v4604 = vmul.f32 %v2391, %v4559
      %v4605 = vmul.f32 %v2395, %v4559
      %v4606 = vmul.f32 %v2399, %v4559
      %v4607 = vmul.f32 %v2403, %v4559
      %v4608 = vmul.f32 %v2407, %v4559
      %v4609 = vmul.f32 %v2411, %v4559
      %v4610 = vmul.f32 %v2415, %v4559
      %v4611 = vmul.f32 %v2419, %v4559
      %v4612 = vmul.f32 %v2423, %v4559
      %v4613 = vmul.f32 %v2427, %v4559
      %v4614 = vmul.f32 %v2431, %v4559
      %v4615 = vmul.f32 %v2435, %v4559
      %v4616 = vmul.f32 %v2439, %v4559
      %v4617 = vmul.f32 %v2443, %v4559
      %v4618 = vmul.f32 %v2447, %v4559
      %v4619 = vmul.f32 %v2451, %v4559
      %v4620 = vmul.f32 %v2455, %v4559
      %v4621 = vmul.f32 %v2459, %v4559
      %v4622 = vmul.f32 %v2463, %v4559
      %v4623 = vmul.f32 %v2467, %v4559
      %v4624 = vmul.f32 %v2471, %v4559
      %v4625 = vmul.f32 %v2475, %v4559
      %v4626 = vmul.f32 %v3728, %v4559
      %v4627 = vmul.f32 %v3732, %v4559
      %v4628 = vmul.f32 %v3736, %v4559
      %v4629 = vmul.f32 %v4549, %v4559
      %v4630 = vmul.f32 %v4553, %v4559
      %v4631 = vmul.f32 %v4557, %v4559
      %v4632 = vadd.f32 %v4468, %v4560
      %v4633 = vadd.f32 %v4469, %v4561
      %v4634 = vadd.f32 %v4470, %v4562
      %v4635 = vadd.f32 %v4471, %v4563
      %v4636 = vadd.f32 %v4472, %v4564
      %v4637 = vadd.f32 %v4473, %v4565
      %v4638 = vadd.f32 %v4474, %v4566
      %v4639 = vadd.f32 %v4475, %v4567
      %v4640 = vadd.f32 %v4476, %v4568
      %v4641 = vadd.f32 %v4477, %v4569
      %v4642 = vadd.f32 %v4478, %v4570
      %v4643 = vadd.f32 %v4479, %v4571
      %v4644 = vadd.f32 %v4480, %v4572
      %v4645 = vadd.f32 %v4481, %v4573
      %v4646 = vadd.f32 %v4482, %v4574
      %v4647 = vadd.f32 %v4483, %v4575
      %v4648 = vadd.f32 %v4484, %v4576
      %v4649 = vadd.f32 %v4485, %v4577
      %v4650 = vadd.f32 %v4486, %v4578
      %v4651 = vadd.f32 %v4487, %v4579
      %v4652 = vadd.f32 %v4488, %v4580
      %v4653 = vadd.f32 %v4489, %v4581
      %v4654 = vadd.f32 %v4490, %v4582
      %v4655 = vadd.f32 %v4491, %v4583
      %v4656 = vadd.f32 %v4492, %v4584
      %v4657 = vadd.f32 %v4493, %v4585
      %v4658 = vadd.f32 %v4494, %v4586
      %v4659 = vadd.f32 %v4495, %v4587
      %v4660 = vadd.f32 %v4496, %v4588
      %v4661 = vadd.f32 %v4497, %v4589
      %v4662 = vadd.f32 %v4498, %v4590
      %v4663 = vadd.f32 %v4499, %v4591
      %v4664 = vadd.f32 %v4500, %v4592
      %v4665 = vadd.f32 %v4501, %v4593
      %v4666 = vadd.f32 %v4502, %v4594
      %v4667 = vadd.f32 %v4503, %v4595
      %v4668 = vadd.f32 %v4504, %v4596
      %v4669 = vadd.f32 %v4505, %v4597
      %v4670 = vadd.f32 %v4506, %v4598
      %v4671 = vadd.f32 %v4507, %v4599
      %v4672 = vadd.f32 %v4508, %v4600
      %v4673 = vadd.f32 %v4509, %v4601
      %v4674 = vadd.f32 %v4510, %v4602
      %v4675 = vadd.f32 %v4511, %v4603
      %v4676 = vadd.f32 %v4512, %v4604
      %v4677 = vadd.f32 %v4513, %v4605
      %v4678 = vadd.f32 %v4514, %v4606
      %v4679 = vadd.f32 %v4515, %v4607
      %v4680 = vadd.f32 %v4516, %v4608
      %v4681 = vadd.f32 %v4517, %v4609
      %v4682 = vadd.f32 %v4518, %v4610
      %v4683 = vadd.f32 %v4519, %v4611
      %v4684 = vadd.f32 %v4520, %v4612
      %v4685 = vadd.f32 %v4521, %v4613
      %v4686 = vadd.f32 %v4522, %v4614
      %v4687 = vadd.f32 %v4523, %v4615
      %v4688 = vadd.f32 %v4524, %v4616
      %v4689 = vadd.f32 %v4525, %v4617
      %v4690 = vadd.f32 %v4526, %v4618
      %v4691 = vadd.f32 %v4527, %v4619
      %v4692 = vadd.f32 %v4528, %v4620
      %v4693 = vadd.f32 %v4529, %v4621
      %v4694 = vadd.f32 %v4530, %v4622
      %v4695 = vadd.f32 %v4531, %v4623
      %v4696 = vadd.f32 %v4532, %v4624
      %v4697 = vadd.f32 %v4533, %v4625
      %v4698 = vadd.f32 %v4534, %v4626
      %v4699 = vadd.f32 %v4535, %v4627
      %v4700 = vadd.f32 %v4536, %v4628
      %v4701 = vadd.f32 %v4537, %v4629
      %v4702 = vadd.f32 %v4538, %v4630
      %v4703 = vadd.f32 %v4539, %v4631
      %v4704 = vrot.slane %v271, 4
      %v4705 = vrot.slane %v272, 4
      %v4706 = vsel %vm2622, %v4704, %v4705
      %v4707 = vrot.slane %v273, 4
      %v4708 = vsel %vm2622, %v4705, %v4707
      %v4709 = vrot.slane %v274, 4
      %v4710 = vsel %vm2622, %v4707, %v4709
      %v4711 = vld [vmem:[%s1 + $0x4] sm:$0x8]
      %v4712 = vunpack.c.l.bf16 %v4711
      %4713 = vset.pattern.permute.xlu0 0
      %4714 = vperm.xlu0 %4713, %v4706
      %v4715 = vpop.permute.xlu0 %4714
      %4717 = vset.pattern.permute.xlu0 0
      %4718 = vperm.xlu0 %4717, %v4708
      %v4719 = vpop.permute.xlu0 %4718
      %4721 = vset.pattern.permute.xlu0 0
      %4722 = vperm.xlu0 %4721, %v4710
      %v4723 = vpop.permute.xlu0 %4722
      %v4725 = vperm.slane %v4712, 6
      %v4726 = vmul.f32 %v2819, %v4725
      %v4727 = vmul.f32 %v2823, %v4725
      %v4728 = vmul.f32 %v2827, %v4725
      %v4729 = vmul.f32 %v2831, %v4725
      %v4730 = vmul.f32 %v2835, %v4725
      %v4731 = vmul.f32 %v2839, %v4725
      %v4732 = vmul.f32 %v2843, %v4725
      %v4733 = vmul.f32 %v2847, %v4725
      %v4734 = vmul.f32 %v2851, %v4725
      %v4735 = vmul.f32 %v2855, %v4725
      %v4736 = vmul.f32 %v2859, %v4725
      %v4737 = vmul.f32 %v2863, %v4725
      %v4738 = vmul.f32 %v2867, %v4725
      %v4739 = vmul.f32 %v2871, %v4725
      %v4740 = vmul.f32 %v2875, %v4725
      %v4741 = vmul.f32 %v2879, %v4725
      %v4742 = vmul.f32 %v2883, %v4725
      %v4743 = vmul.f32 %v2887, %v4725
      %v4744 = vmul.f32 %v2891, %v4725
      %v4745 = vmul.f32 %v2895, %v4725
      %v4746 = vmul.f32 %v2899, %v4725
      %v4747 = vmul.f32 %v2903, %v4725
      %v4748 = vmul.f32 %v2907, %v4725
      %v4749 = vmul.f32 %v2911, %v4725
      %v4750 = vmul.f32 %v2915, %v4725
      %v4751 = vmul.f32 %v2919, %v4725
      %v4752 = vmul.f32 %v2923, %v4725
      %v4753 = vmul.f32 %v2927, %v4725
      %v4754 = vmul.f32 %v2931, %v4725
      %v4755 = vmul.f32 %v2935, %v4725
      %v4756 = vmul.f32 %v2939, %v4725
      %v4757 = vmul.f32 %v2943, %v4725
      %v4758 = vmul.f32 %v2947, %v4725
      %v4759 = vmul.f32 %v2951, %v4725
      %v4760 = vmul.f32 %v2955, %v4725
      %v4761 = vmul.f32 %v2959, %v4725
      %v4762 = vmul.f32 %v2963, %v4725
      %v4763 = vmul.f32 %v2967, %v4725
      %v4764 = vmul.f32 %v2971, %v4725
      %v4765 = vmul.f32 %v2975, %v4725
      %v4766 = vmul.f32 %v2979, %v4725
      %v4767 = vmul.f32 %v2983, %v4725
      %v4768 = vmul.f32 %v2987, %v4725
      %v4769 = vmul.f32 %v2991, %v4725
      %v4770 = vmul.f32 %v2995, %v4725
      %v4771 = vmul.f32 %v2999, %v4725
      %v4772 = vmul.f32 %v3003, %v4725
      %v4773 = vmul.f32 %v3007, %v4725
      %v4774 = vmul.f32 %v3011, %v4725
      %v4775 = vmul.f32 %v3015, %v4725
      %v4776 = vmul.f32 %v3019, %v4725
      %v4777 = vmul.f32 %v3023, %v4725
      %v4778 = vmul.f32 %v3027, %v4725
      %v4779 = vmul.f32 %v3031, %v4725
      %v4780 = vmul.f32 %v3035, %v4725
      %v4781 = vmul.f32 %v3039, %v4725
      %v4782 = vmul.f32 %v3043, %v4725
      %v4783 = vmul.f32 %v3047, %v4725
      %v4784 = vmul.f32 %v3051, %v4725
      %v4785 = vmul.f32 %v3055, %v4725
      %v4786 = vmul.f32 %v3059, %v4725
      %v4787 = vmul.f32 %v3063, %v4725
      %v4788 = vmul.f32 %v3067, %v4725
      %v4789 = vmul.f32 %v3071, %v4725
      %v4790 = vmul.f32 %v3075, %v4725
      %v4791 = vmul.f32 %v3079, %v4725
      %v4792 = vmul.f32 %v3892, %v4725
      %v4793 = vmul.f32 %v3896, %v4725
      %v4794 = vmul.f32 %v3900, %v4725
      %v4795 = vmul.f32 %v4715, %v4725
      %v4796 = vmul.f32 %v4719, %v4725
      %v4797 = vmul.f32 %v4723, %v4725
      %v4798 = vadd.f32 %v4632, %v4726
      %v4799 = vadd.f32 %v4633, %v4727
      %v4800 = vadd.f32 %v4634, %v4728
      %v4801 = vadd.f32 %v4635, %v4729
      %v4802 = vadd.f32 %v4636, %v4730
      %v4803 = vadd.f32 %v4637, %v4731
      %v4804 = vadd.f32 %v4638, %v4732
      %v4805 = vadd.f32 %v4639, %v4733
      %v4806 = vadd.f32 %v4640, %v4734
      %v4807 = vadd.f32 %v4641, %v4735
      %v4808 = vadd.f32 %v4642, %v4736
      %v4809 = vadd.f32 %v4643, %v4737
      %v4810 = vadd.f32 %v4644, %v4738
      %v4811 = vadd.f32 %v4645, %v4739
      %v4812 = vadd.f32 %v4646, %v4740
      %v4813 = vadd.f32 %v4647, %v4741
      %v4814 = vadd.f32 %v4648, %v4742
      %v4815 = vadd.f32 %v4649, %v4743
      %v4816 = vadd.f32 %v4650, %v4744
      %v4817 = vadd.f32 %v4651, %v4745
      %v4818 = vadd.f32 %v4652, %v4746
      %v4819 = vadd.f32 %v4653, %v4747
      %v4820 = vadd.f32 %v4654, %v4748
      %v4821 = vadd.f32 %v4655, %v4749
      %v4822 = vadd.f32 %v4656, %v4750
      %v4823 = vadd.f32 %v4657, %v4751
      %v4824 = vadd.f32 %v4658, %v4752
      %v4825 = vadd.f32 %v4659, %v4753
      %v4826 = vadd.f32 %v4660, %v4754
      %v4827 = vadd.f32 %v4661, %v4755
      %v4828 = vadd.f32 %v4662, %v4756
      %v4829 = vadd.f32 %v4663, %v4757
      %v4830 = vadd.f32 %v4664, %v4758
      %v4831 = vadd.f32 %v4665, %v4759
      %v4832 = vadd.f32 %v4666, %v4760
      %v4833 = vadd.f32 %v4667, %v4761
      %v4834 = vadd.f32 %v4668, %v4762
      %v4835 = vadd.f32 %v4669, %v4763
      %v4836 = vadd.f32 %v4670, %v4764
      %v4837 = vadd.f32 %v4671, %v4765
      %v4838 = vadd.f32 %v4672, %v4766
      %v4839 = vadd.f32 %v4673, %v4767
      %v4840 = vadd.f32 %v4674, %v4768
      %v4841 = vadd.f32 %v4675, %v4769
      %v4842 = vadd.f32 %v4676, %v4770
      %v4843 = vadd.f32 %v4677, %v4771
      %v4844 = vadd.f32 %v4678, %v4772
      %v4845 = vadd.f32 %v4679, %v4773
      %v4846 = vadd.f32 %v4680, %v4774
      %v4847 = vadd.f32 %v4681, %v4775
      %v4848 = vadd.f32 %v4682, %v4776
      %v4849 = vadd.f32 %v4683, %v4777
      %v4850 = vadd.f32 %v4684, %v4778
      %v4851 = vadd.f32 %v4685, %v4779
      %v4852 = vadd.f32 %v4686, %v4780
      %v4853 = vadd.f32 %v4687, %v4781
      %v4854 = vadd.f32 %v4688, %v4782
      %v4855 = vadd.f32 %v4689, %v4783
      %v4856 = vadd.f32 %v4690, %v4784
      %v4857 = vadd.f32 %v4691, %v4785
      %v4858 = vadd.f32 %v4692, %v4786
      %v4859 = vadd.f32 %v4693, %v4787
      %v4860 = vadd.f32 %v4694, %v4788
      %v4861 = vadd.f32 %v4695, %v4789
      %v4862 = vadd.f32 %v4696, %v4790
      %v4863 = vadd.f32 %v4697, %v4791
      %v4864 = vadd.f32 %v4698, %v4792
      %v4865 = vadd.f32 %v4699, %v4793
      %v4866 = vadd.f32 %v4700, %v4794
      %v4867 = vadd.f32 %v4701, %v4795
      %v4868 = vadd.f32 %v4702, %v4796
      %v4869 = vadd.f32 %v4703, %v4797
      %4871 = vset.pattern.permute.xlu0 0
      %4872 = vperm.xlu0 %4871, %v275
      %v4873 = vpop.permute.xlu0 %4872
      %4876 = vset.pattern.permute.xlu0 0
      %4877 = vperm.xlu0 %4876, %v276
      %v4878 = vpop.permute.xlu0 %4877
      %4881 = vset.pattern.permute.xlu0 0
      %4882 = vperm.xlu0 %4881, %v277
      %v4883 = vpop.permute.xlu0 %4882
      %v4885 = vperm.slane %v4712, 7
      %v4886 = vmul.f32 %v333, %v4885
      %v4887 = vmul.f32 %v338, %v4885
      %v4888 = vmul.f32 %v343, %v4885
      %v4889 = vmul.f32 %v348, %v4885
      %v4890 = vmul.f32 %v353, %v4885
      %v4891 = vmul.f32 %v358, %v4885
      %v4892 = vmul.f32 %v363, %v4885
      %v4893 = vmul.f32 %v368, %v4885
      %v4894 = vmul.f32 %v373, %v4885
      %v4895 = vmul.f32 %v378, %v4885
      %v4896 = vmul.f32 %v383, %v4885
      %v4897 = vmul.f32 %v388, %v4885
      %v4898 = vmul.f32 %v393, %v4885
      %v4899 = vmul.f32 %v398, %v4885
      %v4900 = vmul.f32 %v403, %v4885
      %v4901 = vmul.f32 %v408, %v4885
      %v4902 = vmul.f32 %v413, %v4885
      %v4903 = vmul.f32 %v418, %v4885
      %v4904 = vmul.f32 %v423, %v4885
      %v4905 = vmul.f32 %v428, %v4885
      %v4906 = vmul.f32 %v433, %v4885
      %v4907 = vmul.f32 %v438, %v4885
      %v4908 = vmul.f32 %v443, %v4885
      %v4909 = vmul.f32 %v448, %v4885
      %v4910 = vmul.f32 %v453, %v4885
      %v4911 = vmul.f32 %v458, %v4885
      %v4912 = vmul.f32 %v463, %v4885
      %v4913 = vmul.f32 %v468, %v4885
      %v4914 = vmul.f32 %v473, %v4885
      %v4915 = vmul.f32 %v478, %v4885
      %v4916 = vmul.f32 %v483, %v4885
      %v4917 = vmul.f32 %v488, %v4885
      %v4918 = vmul.f32 %v493, %v4885
      %v4919 = vmul.f32 %v498, %v4885
      %v4920 = vmul.f32 %v503, %v4885
      %v4921 = vmul.f32 %v508, %v4885
      %v4922 = vmul.f32 %v513, %v4885
      %v4923 = vmul.f32 %v518, %v4885
      %v4924 = vmul.f32 %v523, %v4885
      %v4925 = vmul.f32 %v528, %v4885
      %v4926 = vmul.f32 %v533, %v4885
      %v4927 = vmul.f32 %v538, %v4885
      %v4928 = vmul.f32 %v543, %v4885
      %v4929 = vmul.f32 %v548, %v4885
      %v4930 = vmul.f32 %v553, %v4885
      %v4931 = vmul.f32 %v558, %v4885
      %v4932 = vmul.f32 %v563, %v4885
      %v4933 = vmul.f32 %v568, %v4885
      %v4934 = vmul.f32 %v573, %v4885
      %v4935 = vmul.f32 %v578, %v4885
      %v4936 = vmul.f32 %v583, %v4885
      %v4937 = vmul.f32 %v588, %v4885
      %v4938 = vmul.f32 %v593, %v4885
      %v4939 = vmul.f32 %v598, %v4885
      %v4940 = vmul.f32 %v603, %v4885
      %v4941 = vmul.f32 %v608, %v4885
      %v4942 = vmul.f32 %v613, %v4885
      %v4943 = vmul.f32 %v618, %v4885
      %v4944 = vmul.f32 %v623, %v4885
      %v4945 = vmul.f32 %v628, %v4885
      %v4946 = vmul.f32 %v633, %v4885
      %v4947 = vmul.f32 %v638, %v4885
      %v4948 = vmul.f32 %v643, %v4885
      %v4949 = vmul.f32 %v3229, %v4885
      %v4950 = vmul.f32 %v3234, %v4885
      %v4951 = vmul.f32 %v3239, %v4885
      %v4952 = vmul.f32 %v4052, %v4885
      %v4953 = vmul.f32 %v4057, %v4885
      %v4954 = vmul.f32 %v4062, %v4885
      %v4955 = vmul.f32 %v4873, %v4885
      %v4956 = vmul.f32 %v4878, %v4885
      %v4957 = vmul.f32 %v4883, %v4885
      %v4958 = vadd.f32 %v4798, %v4886
      %v4959 = vadd.f32 %v4799, %v4887
      %v4960 = vadd.f32 %v4800, %v4888
      %v4961 = vadd.f32 %v4801, %v4889
      %v4962 = vadd.f32 %v4802, %v4890
      %v4963 = vadd.f32 %v4803, %v4891
      %v4964 = vadd.f32 %v4804, %v4892
      %v4965 = vadd.f32 %v4805, %v4893
      %v4966 = vadd.f32 %v4806, %v4894
      %v4967 = vadd.f32 %v4807, %v4895
      %v4968 = vadd.f32 %v4808, %v4896
      %v4969 = vadd.f32 %v4809, %v4897
      %v4970 = vadd.f32 %v4810, %v4898
      %v4971 = vadd.f32 %v4811, %v4899
      %v4972 = vadd.f32 %v4812, %v4900
      %v4973 = vadd.f32 %v4813, %v4901
      %v4974 = vadd.f32 %v4814, %v4902
      %v4975 = vadd.f32 %v4815, %v4903
      %v4976 = vadd.f32 %v4816, %v4904
      %v4977 = vadd.f32 %v4817, %v4905
      %v4978 = vadd.f32 %v4818, %v4906
      %v4979 = vadd.f32 %v4819, %v4907
      %v4980 = vadd.f32 %v4820, %v4908
      %v4981 = vadd.f32 %v4821, %v4909
      %v4982 = vadd.f32 %v4822, %v4910
      %v4983 = vadd.f32 %v4823, %v4911
      %v4984 = vadd.f32 %v4824, %v4912
      %v4985 = vadd.f32 %v4825, %v4913
      %v4986 = vadd.f32 %v4826, %v4914
      %v4987 = vadd.f32 %v4827, %v4915
      %v4988 = vadd.f32 %v4828, %v4916
      %v4989 = vadd.f32 %v4829, %v4917
      %v4990 = vadd.f32 %v4830, %v4918
      %v4991 = vadd.f32 %v4831, %v4919
      %v4992 = vadd.f32 %v4832, %v4920
      %v4993 = vadd.f32 %v4833, %v4921
      %v4994 = vadd.f32 %v4834, %v4922
      %v4995 = vadd.f32 %v4835, %v4923
      %v4996 = vadd.f32 %v4836, %v4924
      %v4997 = vadd.f32 %v4837, %v4925
      %v4998 = vadd.f32 %v4838, %v4926
      %v4999 = vadd.f32 %v4839, %v4927
      %v5000 = vadd.f32 %v4840, %v4928
      %v5001 = vadd.f32 %v4841, %v4929
      %v5002 = vadd.f32 %v4842, %v4930
      %v5003 = vadd.f32 %v4843, %v4931
      %v5004 = vadd.f32 %v4844, %v4932
      %v5005 = vadd.f32 %v4845, %v4933
      %v5006 = vadd.f32 %v4846, %v4934
      %v5007 = vadd.f32 %v4847, %v4935
      %v5008 = vadd.f32 %v4848, %v4936
      %v5009 = vadd.f32 %v4849, %v4937
      %v5010 = vadd.f32 %v4850, %v4938
      %v5011 = vadd.f32 %v4851, %v4939
      %v5012 = vadd.f32 %v4852, %v4940
      %v5013 = vadd.f32 %v4853, %v4941
      %v5014 = vadd.f32 %v4854, %v4942
      %v5015 = vadd.f32 %v4855, %v4943
      %v5016 = vadd.f32 %v4856, %v4944
      %v5017 = vadd.f32 %v4857, %v4945
      %v5018 = vadd.f32 %v4858, %v4946
      %v5019 = vadd.f32 %v4859, %v4947
      %v5020 = vadd.f32 %v4860, %v4948
      %v5021 = vadd.f32 %v4861, %v4949
      %v5022 = vadd.f32 %v4862, %v4950
      %v5023 = vadd.f32 %v4863, %v4951
      %v5024 = vadd.f32 %v4864, %v4952
      %v5025 = vadd.f32 %v4865, %v4953
      %v5026 = vadd.f32 %v4866, %v4954
      %v5027 = vadd.f32 %v4867, %v4955
      %v5028 = vadd.f32 %v4868, %v4956
      %v5029 = vadd.f32 %v4869, %v4957
      %v5031 = vrot.slane %v275, 1
      %v5032 = vrot.slane %v276, 1
      %v5033 = vsel %vm814, %v5031, %v5032
      %v5034 = vrot.slane %v277, 1
      %v5035 = vsel %vm814, %v5032, %v5034
      %v5036 = vrot.slane %v278, 1
      %v5037 = vsel %vm814, %v5034, %v5036
      %v5038 = vld [vmem:[%s1 + $0x8] sm:$0x1]
      %v5039 = vunpack.c.l.bf16 %v5038
      %5040 = vset.pattern.permute.xlu0 0
      %5041 = vperm.xlu0 %5040, %v5033
      %v5042 = vpop.permute.xlu0 %5041
      %5044 = vset.pattern.permute.xlu0 0
      %5045 = vperm.xlu0 %5044, %v5035
      %v5046 = vpop.permute.xlu0 %5045
      %5048 = vset.pattern.permute.xlu0 0
      %5049 = vperm.xlu0 %5048, %v5037
      %v5050 = vpop.permute.xlu0 %5049
      %v5052 = vperm.slane %v5039, 0
      %v5053 = vmul.f32 %v1021, %v5052
      %v5054 = vmul.f32 %v1025, %v5052
      %v5055 = vmul.f32 %v1029, %v5052
      %v5056 = vmul.f32 %v1033, %v5052
      %v5057 = vmul.f32 %v1037, %v5052
      %v5058 = vmul.f32 %v1041, %v5052
      %v5059 = vmul.f32 %v1045, %v5052
      %v5060 = vmul.f32 %v1049, %v5052
      %v5061 = vmul.f32 %v1053, %v5052
      %v5062 = vmul.f32 %v1057, %v5052
      %v5063 = vmul.f32 %v1061, %v5052
      %v5064 = vmul.f32 %v1065, %v5052
      %v5065 = vmul.f32 %v1069, %v5052
      %v5066 = vmul.f32 %v1073, %v5052
      %v5067 = vmul.f32 %v1077, %v5052
      %v5068 = vmul.f32 %v1081, %v5052
      %v5069 = vmul.f32 %v1085, %v5052
      %v5070 = vmul.f32 %v1089, %v5052
      %v5071 = vmul.f32 %v1093, %v5052
      %v5072 = vmul.f32 %v1097, %v5052
      %v5073 = vmul.f32 %v1101, %v5052
      %v5074 = vmul.f32 %v1105, %v5052
      %v5075 = vmul.f32 %v1109, %v5052
      %v5076 = vmul.f32 %v1113, %v5052
      %v5077 = vmul.f32 %v1117, %v5052
      %v5078 = vmul.f32 %v1121, %v5052
      %v5079 = vmul.f32 %v1125, %v5052
      %v5080 = vmul.f32 %v1129, %v5052
      %v5081 = vmul.f32 %v1133, %v5052
      %v5082 = vmul.f32 %v1137, %v5052
      %v5083 = vmul.f32 %v1141, %v5052
      %v5084 = vmul.f32 %v1145, %v5052
      %v5085 = vmul.f32 %v1149, %v5052
      %v5086 = vmul.f32 %v1153, %v5052
      %v5087 = vmul.f32 %v1157, %v5052
      %v5088 = vmul.f32 %v1161, %v5052
      %v5089 = vmul.f32 %v1165, %v5052
      %v5090 = vmul.f32 %v1169, %v5052
      %v5091 = vmul.f32 %v1173, %v5052
      %v5092 = vmul.f32 %v1177, %v5052
      %v5093 = vmul.f32 %v1181, %v5052
      %v5094 = vmul.f32 %v1185, %v5052
      %v5095 = vmul.f32 %v1189, %v5052
      %v5096 = vmul.f32 %v1193, %v5052
      %v5097 = vmul.f32 %v1197, %v5052
      %v5098 = vmul.f32 %v1201, %v5052
      %v5099 = vmul.f32 %v1205, %v5052
      %v5100 = vmul.f32 %v1209, %v5052
      %v5101 = vmul.f32 %v1213, %v5052
      %v5102 = vmul.f32 %v1217, %v5052
      %v5103 = vmul.f32 %v1221, %v5052
      %v5104 = vmul.f32 %v1225, %v5052
      %v5105 = vmul.f32 %v1229, %v5052
      %v5106 = vmul.f32 %v1233, %v5052
      %v5107 = vmul.f32 %v1237, %v5052
      %v5108 = vmul.f32 %v1241, %v5052
      %v5109 = vmul.f32 %v1245, %v5052
      %v5110 = vmul.f32 %v1249, %v5052
      %v5111 = vmul.f32 %v1253, %v5052
      %v5112 = vmul.f32 %v1257, %v5052
      %v5113 = vmul.f32 %v1261, %v5052
      %v5114 = vmul.f32 %v1265, %v5052
      %v5115 = vmul.f32 %v1269, %v5052
      %v5116 = vmul.f32 %v3398, %v5052
      %v5117 = vmul.f32 %v3402, %v5052
      %v5118 = vmul.f32 %v3406, %v5052
      %v5119 = vmul.f32 %v4219, %v5052
      %v5120 = vmul.f32 %v4223, %v5052
      %v5121 = vmul.f32 %v4227, %v5052
      %v5122 = vmul.f32 %v5042, %v5052
      %v5123 = vmul.f32 %v5046, %v5052
      %v5124 = vmul.f32 %v5050, %v5052
      %v5125 = vadd.f32 %v4958, %v5053
      %v5126 = vadd.f32 %v4959, %v5054
      %v5127 = vadd.f32 %v4960, %v5055
      %v5128 = vadd.f32 %v4961, %v5056
      %v5129 = vadd.f32 %v4962, %v5057
      %v5130 = vadd.f32 %v4963, %v5058
      %v5131 = vadd.f32 %v4964, %v5059
      %v5132 = vadd.f32 %v4965, %v5060
      %v5133 = vadd.f32 %v4966, %v5061
      %v5134 = vadd.f32 %v4967, %v5062
      %v5135 = vadd.f32 %v4968, %v5063
      %v5136 = vadd.f32 %v4969, %v5064
      %v5137 = vadd.f32 %v4970, %v5065
      %v5138 = vadd.f32 %v4971, %v5066
      %v5139 = vadd.f32 %v4972, %v5067
      %v5140 = vadd.f32 %v4973, %v5068
      %v5141 = vadd.f32 %v4974, %v5069
      %v5142 = vadd.f32 %v4975, %v5070
      %v5143 = vadd.f32 %v4976, %v5071
      %v5144 = vadd.f32 %v4977, %v5072
      %v5145 = vadd.f32 %v4978, %v5073
      %v5146 = vadd.f32 %v4979, %v5074
      %v5147 = vadd.f32 %v4980, %v5075
      %v5148 = vadd.f32 %v4981, %v5076
      %v5149 = vadd.f32 %v4982, %v5077
      %v5150 = vadd.f32 %v4983, %v5078
      %v5151 = vadd.f32 %v4984, %v5079
      %v5152 = vadd.f32 %v4985, %v5080
      %v5153 = vadd.f32 %v4986, %v5081
      %v5154 = vadd.f32 %v4987, %v5082
      %v5155 = vadd.f32 %v4988, %v5083
      %v5156 = vadd.f32 %v4989, %v5084
      %v5157 = vadd.f32 %v4990, %v5085
      %v5158 = vadd.f32 %v4991, %v5086
      %v5159 = vadd.f32 %v4992, %v5087
      %v5160 = vadd.f32 %v4993, %v5088
      %v5161 = vadd.f32 %v4994, %v5089
      %v5162 = vadd.f32 %v4995, %v5090
      %v5163 = vadd.f32 %v4996, %v5091
      %v5164 = vadd.f32 %v4997, %v5092
      %v5165 = vadd.f32 %v4998, %v5093
      %v5166 = vadd.f32 %v4999, %v5094
      %v5167 = vadd.f32 %v5000, %v5095
      %v5168 = vadd.f32 %v5001, %v5096
      %v5169 = vadd.f32 %v5002, %v5097
      %v5170 = vadd.f32 %v5003, %v5098
      %v5171 = vadd.f32 %v5004, %v5099
      %v5172 = vadd.f32 %v5005, %v5100
      %v5173 = vadd.f32 %v5006, %v5101
      %v5174 = vadd.f32 %v5007, %v5102
      %v5175 = vadd.f32 %v5008, %v5103
      %v5176 = vadd.f32 %v5009, %v5104
      %v5177 = vadd.f32 %v5010, %v5105
      %v5178 = vadd.f32 %v5011, %v5106
      %v5179 = vadd.f32 %v5012, %v5107
      %v5180 = vadd.f32 %v5013, %v5108
      %v5181 = vadd.f32 %v5014, %v5109
      %v5182 = vadd.f32 %v5015, %v5110
      %v5183 = vadd.f32 %v5016, %v5111
      %v5184 = vadd.f32 %v5017, %v5112
      %v5185 = vadd.f32 %v5018, %v5113
      %v5186 = vadd.f32 %v5019, %v5114
      %v5187 = vadd.f32 %v5020, %v5115
      %v5188 = vadd.f32 %v5021, %v5116
      %v5189 = vadd.f32 %v5022, %v5117
      %v5190 = vadd.f32 %v5023, %v5118
      %v5191 = vadd.f32 %v5024, %v5119
      %v5192 = vadd.f32 %v5025, %v5120
      %v5193 = vadd.f32 %v5026, %v5121
      %v5194 = vadd.f32 %v5027, %v5122
      %v5195 = vadd.f32 %v5028, %v5123
      %v5196 = vadd.f32 %v5029, %v5124
      %v5197 = vrot.slane %v275, 2
      %v5198 = vrot.slane %v276, 2
      %v5199 = vsel %vm1416, %v5197, %v5198
      %v5200 = vrot.slane %v277, 2
      %v5201 = vsel %vm1416, %v5198, %v5200
      %v5202 = vrot.slane %v278, 2
      %v5203 = vsel %vm1416, %v5200, %v5202
      %5204 = vset.pattern.permute.xlu0 0
      %5205 = vperm.xlu0 %5204, %v5199
      %v5206 = vpop.permute.xlu0 %5205
      %5208 = vset.pattern.permute.xlu0 0
      %5209 = vperm.xlu0 %5208, %v5201
      %v5210 = vpop.permute.xlu0 %5209
      %5212 = vset.pattern.permute.xlu0 0
      %5213 = vperm.xlu0 %5212, %v5203
      %v5214 = vpop.permute.xlu0 %5213
      %v5216 = vperm.slane %v5039, 1
      %v5217 = vmul.f32 %v1625, %v5216
      %v5218 = vmul.f32 %v1629, %v5216
      %v5219 = vmul.f32 %v1633, %v5216
      %v5220 = vmul.f32 %v1637, %v5216
      %v5221 = vmul.f32 %v1641, %v5216
      %v5222 = vmul.f32 %v1645, %v5216
      %v5223 = vmul.f32 %v1649, %v5216
      %v5224 = vmul.f32 %v1653, %v5216
      %v5225 = vmul.f32 %v1657, %v5216
      %v5226 = vmul.f32 %v1661, %v5216
      %v5227 = vmul.f32 %v1665, %v5216
      %v5228 = vmul.f32 %v1669, %v5216
      %v5229 = vmul.f32 %v1673, %v5216
      %v5230 = vmul.f32 %v1677, %v5216
      %v5231 = vmul.f32 %v1681, %v5216
      %v5232 = vmul.f32 %v1685, %v5216
      %v5233 = vmul.f32 %v1689, %v5216
      %v5234 = vmul.f32 %v1693, %v5216
      %v5235 = vmul.f32 %v1697, %v5216
      %v5236 = vmul.f32 %v1701, %v5216
      %v5237 = vmul.f32 %v1705, %v5216
      %v5238 = vmul.f32 %v1709, %v5216
      %v5239 = vmul.f32 %v1713, %v5216
      %v5240 = vmul.f32 %v1717, %v5216
      %v5241 = vmul.f32 %v1721, %v5216
      %v5242 = vmul.f32 %v1725, %v5216
      %v5243 = vmul.f32 %v1729, %v5216
      %v5244 = vmul.f32 %v1733, %v5216
      %v5245 = vmul.f32 %v1737, %v5216
      %v5246 = vmul.f32 %v1741, %v5216
      %v5247 = vmul.f32 %v1745, %v5216
      %v5248 = vmul.f32 %v1749, %v5216
      %v5249 = vmul.f32 %v1753, %v5216
      %v5250 = vmul.f32 %v1757, %v5216
      %v5251 = vmul.f32 %v1761, %v5216
      %v5252 = vmul.f32 %v1765, %v5216
      %v5253 = vmul.f32 %v1769, %v5216
      %v5254 = vmul.f32 %v1773, %v5216
      %v5255 = vmul.f32 %v1777, %v5216
      %v5256 = vmul.f32 %v1781, %v5216
      %v5257 = vmul.f32 %v1785, %v5216
      %v5258 = vmul.f32 %v1789, %v5216
      %v5259 = vmul.f32 %v1793, %v5216
      %v5260 = vmul.f32 %v1797, %v5216
      %v5261 = vmul.f32 %v1801, %v5216
      %v5262 = vmul.f32 %v1805, %v5216
      %v5263 = vmul.f32 %v1809, %v5216
      %v5264 = vmul.f32 %v1813, %v5216
      %v5265 = vmul.f32 %v1817, %v5216
      %v5266 = vmul.f32 %v1821, %v5216
      %v5267 = vmul.f32 %v1825, %v5216
      %v5268 = vmul.f32 %v1829, %v5216
      %v5269 = vmul.f32 %v1833, %v5216
      %v5270 = vmul.f32 %v1837, %v5216
      %v5271 = vmul.f32 %v1841, %v5216
      %v5272 = vmul.f32 %v1845, %v5216
      %v5273 = vmul.f32 %v1849, %v5216
      %v5274 = vmul.f32 %v1853, %v5216
      %v5275 = vmul.f32 %v1857, %v5216
      %v5276 = vmul.f32 %v1861, %v5216
      %v5277 = vmul.f32 %v1865, %v5216
      %v5278 = vmul.f32 %v1869, %v5216
      %v5279 = vmul.f32 %v1873, %v5216
      %v5280 = vmul.f32 %v3562, %v5216
      %v5281 = vmul.f32 %v3566, %v5216
      %v5282 = vmul.f32 %v3570, %v5216
      %v5283 = vmul.f32 %v4385, %v5216
      %v5284 = vmul.f32 %v4389, %v5216
      %v5285 = vmul.f32 %v4393, %v5216
      %v5286 = vmul.f32 %v5206, %v5216
      %v5287 = vmul.f32 %v5210, %v5216
      %v5288 = vmul.f32 %v5214, %v5216
      %v5289 = vadd.f32 %v5125, %v5217
      %v5290 = vadd.f32 %v5126, %v5218
      %v5291 = vadd.f32 %v5127, %v5219
      %v5292 = vadd.f32 %v5128, %v5220
      %v5293 = vadd.f32 %v5129, %v5221
      %v5294 = vadd.f32 %v5130, %v5222
      %v5295 = vadd.f32 %v5131, %v5223
      %v5296 = vadd.f32 %v5132, %v5224
      %v5297 = vadd.f32 %v5133, %v5225
      %v5298 = vadd.f32 %v5134, %v5226
      %v5299 = vadd.f32 %v5135, %v5227
      %v5300 = vadd.f32 %v5136, %v5228
      %v5301 = vadd.f32 %v5137, %v5229
      %v5302 = vadd.f32 %v5138, %v5230
      %v5303 = vadd.f32 %v5139, %v5231
      %v5304 = vadd.f32 %v5140, %v5232
      %v5305 = vadd.f32 %v5141, %v5233
      %v5306 = vadd.f32 %v5142, %v5234
      %v5307 = vadd.f32 %v5143, %v5235
      %v5308 = vadd.f32 %v5144, %v5236
      %v5309 = vadd.f32 %v5145, %v5237
      %v5310 = vadd.f32 %v5146, %v5238
      %v5311 = vadd.f32 %v5147, %v5239
      %v5312 = vadd.f32 %v5148, %v5240
      %v5313 = vadd.f32 %v5149, %v5241
      %v5314 = vadd.f32 %v5150, %v5242
      %v5315 = vadd.f32 %v5151, %v5243
      %v5316 = vadd.f32 %v5152, %v5244
      %v5317 = vadd.f32 %v5153, %v5245
      %v5318 = vadd.f32 %v5154, %v5246
      %v5319 = vadd.f32 %v5155, %v5247
      %v5320 = vadd.f32 %v5156, %v5248
      %v5321 = vadd.f32 %v5157, %v5249
      %v5322 = vadd.f32 %v5158, %v5250
      %v5323 = vadd.f32 %v5159, %v5251
      %v5324 = vadd.f32 %v5160, %v5252
      %v5325 = vadd.f32 %v5161, %v5253
      %v5326 = vadd.f32 %v5162, %v5254
      %v5327 = vadd.f32 %v5163, %v5255
      %v5328 = vadd.f32 %v5164, %v5256
      %v5329 = vadd.f32 %v5165, %v5257
      %v5330 = vadd.f32 %v5166, %v5258
      %v5331 = vadd.f32 %v5167, %v5259
      %v5332 = vadd.f32 %v5168, %v5260
      %v5333 = vadd.f32 %v5169, %v5261
      %v5334 = vadd.f32 %v5170, %v5262
      %v5335 = vadd.f32 %v5171, %v5263
      %v5336 = vadd.f32 %v5172, %v5264
      %v5337 = vadd.f32 %v5173, %v5265
      %v5338 = vadd.f32 %v5174, %v5266
      %v5339 = vadd.f32 %v5175, %v5267
      %v5340 = vadd.f32 %v5176, %v5268
      %v5341 = vadd.f32 %v5177, %v5269
      %v5342 = vadd.f32 %v5178, %v5270
      %v5343 = vadd.f32 %v5179, %v5271
      %v5344 = vadd.f32 %v5180, %v5272
      %v5345 = vadd.f32 %v5181, %v5273
      %v5346 = vadd.f32 %v5182, %v5274
      %v5347 = vadd.f32 %v5183, %v5275
      %v5348 = vadd.f32 %v5184, %v5276
      %v5349 = vadd.f32 %v5185, %v5277
      %v5350 = vadd.f32 %v5186, %v5278
      %v5351 = vadd.f32 %v5187, %v5279
      %v5352 = vadd.f32 %v5188, %v5280
      %v5353 = vadd.f32 %v5189, %v5281
      %v5354 = vadd.f32 %v5190, %v5282
      %v5355 = vadd.f32 %v5191, %v5283
      %v5356 = vadd.f32 %v5192, %v5284
      %v5357 = vadd.f32 %v5193, %v5285
      %v5358 = vadd.f32 %v5194, %v5286
      %v5359 = vadd.f32 %v5195, %v5287
      %v5360 = vadd.f32 %v5196, %v5288
      %v5361 = vrot.slane %v275, 3
      %v5362 = vrot.slane %v276, 3
      %v5363 = vsel %vm2020, %v5361, %v5362
      %v5364 = vrot.slane %v277, 3
      %v5365 = vsel %vm2020, %v5362, %v5364
      %v5366 = vrot.slane %v278, 3
      %v5367 = vsel %vm2020, %v5364, %v5366
      %v5368 = vld [vmem:[%s1 + $0x8] sm:$0x2]
      %v5369 = vunpack.c.l.bf16 %v5368
      %5370 = vset.pattern.permute.xlu0 0
      %5371 = vperm.xlu0 %5370, %v5363
      %v5372 = vpop.permute.xlu0 %5371
      %5374 = vset.pattern.permute.xlu0 0
      %5375 = vperm.xlu0 %5374, %v5365
      %v5376 = vpop.permute.xlu0 %5375
      %5378 = vset.pattern.permute.xlu0 0
      %5379 = vperm.xlu0 %5378, %v5367
      %v5380 = vpop.permute.xlu0 %5379
      %v5382 = vperm.slane %v5369, 2
      %v5383 = vmul.f32 %v2227, %v5382
      %v5384 = vmul.f32 %v2231, %v5382
      %v5385 = vmul.f32 %v2235, %v5382
      %v5386 = vmul.f32 %v2239, %v5382
      %v5387 = vmul.f32 %v2243, %v5382
      %v5388 = vmul.f32 %v2247, %v5382
      %v5389 = vmul.f32 %v2251, %v5382
      %v5390 = vmul.f32 %v2255, %v5382
      %v5391 = vmul.f32 %v2259, %v5382
      %v5392 = vmul.f32 %v2263, %v5382
      %v5393 = vmul.f32 %v2267, %v5382
      %v5394 = vmul.f32 %v2271, %v5382
      %v5395 = vmul.f32 %v2275, %v5382
      %v5396 = vmul.f32 %v2279, %v5382
      %v5397 = vmul.f32 %v2283, %v5382
      %v5398 = vmul.f32 %v2287, %v5382
      %v5399 = vmul.f32 %v2291, %v5382
      %v5400 = vmul.f32 %v2295, %v5382
      %v5401 = vmul.f32 %v2299, %v5382
      %v5402 = vmul.f32 %v2303, %v5382
      %v5403 = vmul.f32 %v2307, %v5382
      %v5404 = vmul.f32 %v2311, %v5382
      %v5405 = vmul.f32 %v2315, %v5382
      %v5406 = vmul.f32 %v2319, %v5382
      %v5407 = vmul.f32 %v2323, %v5382
      %v5408 = vmul.f32 %v2327, %v5382
      %v5409 = vmul.f32 %v2331, %v5382
      %v5410 = vmul.f32 %v2335, %v5382
      %v5411 = vmul.f32 %v2339, %v5382
      %v5412 = vmul.f32 %v2343, %v5382
      %v5413 = vmul.f32 %v2347, %v5382
      %v5414 = vmul.f32 %v2351, %v5382
      %v5415 = vmul.f32 %v2355, %v5382
      %v5416 = vmul.f32 %v2359, %v5382
      %v5417 = vmul.f32 %v2363, %v5382
      %v5418 = vmul.f32 %v2367, %v5382
      %v5419 = vmul.f32 %v2371, %v5382
      %v5420 = vmul.f32 %v2375, %v5382
      %v5421 = vmul.f32 %v2379, %v5382
      %v5422 = vmul.f32 %v2383, %v5382
      %v5423 = vmul.f32 %v2387, %v5382
      %v5424 = vmul.f32 %v2391, %v5382
      %v5425 = vmul.f32 %v2395, %v5382
      %v5426 = vmul.f32 %v2399, %v5382
      %v5427 = vmul.f32 %v2403, %v5382
      %v5428 = vmul.f32 %v2407, %v5382
      %v5429 = vmul.f32 %v2411, %v5382
      %v5430 = vmul.f32 %v2415, %v5382
      %v5431 = vmul.f32 %v2419, %v5382
      %v5432 = vmul.f32 %v2423, %v5382
      %v5433 = vmul.f32 %v2427, %v5382
      %v5434 = vmul.f32 %v2431, %v5382
      %v5435 = vmul.f32 %v2435, %v5382
      %v5436 = vmul.f32 %v2439, %v5382
      %v5437 = vmul.f32 %v2443, %v5382
      %v5438 = vmul.f32 %v2447, %v5382
      %v5439 = vmul.f32 %v2451, %v5382
      %v5440 = vmul.f32 %v2455, %v5382
      %v5441 = vmul.f32 %v2459, %v5382
      %v5442 = vmul.f32 %v2463, %v5382
      %v5443 = vmul.f32 %v2467, %v5382
      %v5444 = vmul.f32 %v2471, %v5382
      %v5445 = vmul.f32 %v2475, %v5382
      %v5446 = vmul.f32 %v3728, %v5382
      %v5447 = vmul.f32 %v3732, %v5382
      %v5448 = vmul.f32 %v3736, %v5382
      %v5449 = vmul.f32 %v4549, %v5382
      %v5450 = vmul.f32 %v4553, %v5382
      %v5451 = vmul.f32 %v4557, %v5382
      %v5452 = vmul.f32 %v5372, %v5382
      %v5453 = vmul.f32 %v5376, %v5382
      %v5454 = vmul.f32 %v5380, %v5382
      %v5455 = vadd.f32 %v5289, %v5383
      %v5456 = vadd.f32 %v5290, %v5384
      %v5457 = vadd.f32 %v5291, %v5385
      %v5458 = vadd.f32 %v5292, %v5386
      %v5459 = vadd.f32 %v5293, %v5387
      %v5460 = vadd.f32 %v5294, %v5388
      %v5461 = vadd.f32 %v5295, %v5389
      %v5462 = vadd.f32 %v5296, %v5390
      %v5463 = vadd.f32 %v5297, %v5391
      %v5464 = vadd.f32 %v5298, %v5392
      %v5465 = vadd.f32 %v5299, %v5393
      %v5466 = vadd.f32 %v5300, %v5394
      %v5467 = vadd.f32 %v5301, %v5395
      %v5468 = vadd.f32 %v5302, %v5396
      %v5469 = vadd.f32 %v5303, %v5397
      %v5470 = vadd.f32 %v5304, %v5398
      %v5471 = vadd.f32 %v5305, %v5399
      %v5472 = vadd.f32 %v5306, %v5400
      %v5473 = vadd.f32 %v5307, %v5401
      %v5474 = vadd.f32 %v5308, %v5402
      %v5475 = vadd.f32 %v5309, %v5403
      %v5476 = vadd.f32 %v5310, %v5404
      %v5477 = vadd.f32 %v5311, %v5405
      %v5478 = vadd.f32 %v5312, %v5406
      %v5479 = vadd.f32 %v5313, %v5407
      %v5480 = vadd.f32 %v5314, %v5408
      %v5481 = vadd.f32 %v5315, %v5409
      %v5482 = vadd.f32 %v5316, %v5410
      %v5483 = vadd.f32 %v5317, %v5411
      %v5484 = vadd.f32 %v5318, %v5412
      %v5485 = vadd.f32 %v5319, %v5413
      %v5486 = vadd.f32 %v5320, %v5414
      %v5487 = vadd.f32 %v5321, %v5415
      %v5488 = vadd.f32 %v5322, %v5416
      %v5489 = vadd.f32 %v5323, %v5417
      %v5490 = vadd.f32 %v5324, %v5418
      %v5491 = vadd.f32 %v5325, %v5419
      %v5492 = vadd.f32 %v5326, %v5420
      %v5493 = vadd.f32 %v5327, %v5421
      %v5494 = vadd.f32 %v5328, %v5422
      %v5495 = vadd.f32 %v5329, %v5423
      %v5496 = vadd.f32 %v5330, %v5424
      %v5497 = vadd.f32 %v5331, %v5425
      %v5498 = vadd.f32 %v5332, %v5426
      %v5499 = vadd.f32 %v5333, %v5427
      %v5500 = vadd.f32 %v5334, %v5428
      %v5501 = vadd.f32 %v5335, %v5429
      %v5502 = vadd.f32 %v5336, %v5430
      %v5503 = vadd.f32 %v5337, %v5431
      %v5504 = vadd.f32 %v5338, %v5432
      %v5505 = vadd.f32 %v5339, %v5433
      %v5506 = vadd.f32 %v5340, %v5434
      %v5507 = vadd.f32 %v5341, %v5435
      %v5508 = vadd.f32 %v5342, %v5436
      %v5509 = vadd.f32 %v5343, %v5437
      %v5510 = vadd.f32 %v5344, %v5438
      %v5511 = vadd.f32 %v5345, %v5439
      %v5512 = vadd.f32 %v5346, %v5440
      %v5513 = vadd.f32 %v5347, %v5441
      %v5514 = vadd.f32 %v5348, %v5442
      %v5515 = vadd.f32 %v5349, %v5443
      %v5516 = vadd.f32 %v5350, %v5444
      %v5517 = vadd.f32 %v5351, %v5445
      %v5518 = vadd.f32 %v5352, %v5446
      %v5519 = vadd.f32 %v5353, %v5447
      %v5520 = vadd.f32 %v5354, %v5448
      %v5521 = vadd.f32 %v5355, %v5449
      %v5522 = vadd.f32 %v5356, %v5450
      %v5523 = vadd.f32 %v5357, %v5451
      %v5524 = vadd.f32 %v5358, %v5452
      %v5525 = vadd.f32 %v5359, %v5453
      %v5526 = vadd.f32 %v5360, %v5454
      %v5527 = vrot.slane %v275, 4
      %v5528 = vrot.slane %v276, 4
      %v5529 = vsel %vm2622, %v5527, %v5528
      %v5530 = vrot.slane %v277, 4
      %v5531 = vsel %vm2622, %v5528, %v5530
      %v5532 = vrot.slane %v278, 4
      %v5533 = vsel %vm2622, %v5530, %v5532
      %5534 = vset.pattern.permute.xlu0 0
      %5535 = vperm.xlu0 %5534, %v5529
      %v5536 = vpop.permute.xlu0 %5535
      %5538 = vset.pattern.permute.xlu0 0
      %5539 = vperm.xlu0 %5538, %v5531
      %v5540 = vpop.permute.xlu0 %5539
      %5542 = vset.pattern.permute.xlu0 0
      %5543 = vperm.xlu0 %5542, %v5533
      %v5544 = vpop.permute.xlu0 %5543
      %v5546 = vperm.slane %v5369, 3
      %v5547 = vmul.f32 %v2831, %v5546
      %v5548 = vmul.f32 %v2835, %v5546
      %v5549 = vmul.f32 %v2839, %v5546
      %v5550 = vmul.f32 %v2843, %v5546
      %v5551 = vmul.f32 %v2847, %v5546
      %v5552 = vmul.f32 %v2851, %v5546
      %v5553 = vmul.f32 %v2855, %v5546
      %v5554 = vmul.f32 %v2859, %v5546
      %v5555 = vmul.f32 %v2863, %v5546
      %v5556 = vmul.f32 %v2867, %v5546
      %v5557 = vmul.f32 %v2871, %v5546
      %v5558 = vmul.f32 %v2875, %v5546
      %v5559 = vmul.f32 %v2879, %v5546
      %v5560 = vmul.f32 %v2883, %v5546
      %v5561 = vmul.f32 %v2887, %v5546
      %v5562 = vmul.f32 %v2891, %v5546
      %v5563 = vmul.f32 %v2895, %v5546
      %v5564 = vmul.f32 %v2899, %v5546
      %v5565 = vmul.f32 %v2903, %v5546
      %v5566 = vmul.f32 %v2907, %v5546
      %v5567 = vmul.f32 %v2911, %v5546
      %v5568 = vmul.f32 %v2915, %v5546
      %v5569 = vmul.f32 %v2919, %v5546
      %v5570 = vmul.f32 %v2923, %v5546
      %v5571 = vmul.f32 %v2927, %v5546
      %v5572 = vmul.f32 %v2931, %v5546
      %v5573 = vmul.f32 %v2935, %v5546
      %v5574 = vmul.f32 %v2939, %v5546
      %v5575 = vmul.f32 %v2943, %v5546
      %v5576 = vmul.f32 %v2947, %v5546
      %v5577 = vmul.f32 %v2951, %v5546
      %v5578 = vmul.f32 %v2955, %v5546
      %v5579 = vmul.f32 %v2959, %v5546
      %v5580 = vmul.f32 %v2963, %v5546
      %v5581 = vmul.f32 %v2967, %v5546
      %v5582 = vmul.f32 %v2971, %v5546
      %v5583 = vmul.f32 %v2975, %v5546
      %v5584 = vmul.f32 %v2979, %v5546
      %v5585 = vmul.f32 %v2983, %v5546
      %v5586 = vmul.f32 %v2987, %v5546
      %v5587 = vmul.f32 %v2991, %v5546
      %v5588 = vmul.f32 %v2995, %v5546
      %v5589 = vmul.f32 %v2999, %v5546
      %v5590 = vmul.f32 %v3003, %v5546
      %v5591 = vmul.f32 %v3007, %v5546
      %v5592 = vmul.f32 %v3011, %v5546
      %v5593 = vmul.f32 %v3015, %v5546
      %v5594 = vmul.f32 %v3019, %v5546
      %v5595 = vmul.f32 %v3023, %v5546
      %v5596 = vmul.f32 %v3027, %v5546
      %v5597 = vmul.f32 %v3031, %v5546
      %v5598 = vmul.f32 %v3035, %v5546
      %v5599 = vmul.f32 %v3039, %v5546
      %v5600 = vmul.f32 %v3043, %v5546
      %v5601 = vmul.f32 %v3047, %v5546
      %v5602 = vmul.f32 %v3051, %v5546
      %v5603 = vmul.f32 %v3055, %v5546
      %v5604 = vmul.f32 %v3059, %v5546
      %v5605 = vmul.f32 %v3063, %v5546
      %v5606 = vmul.f32 %v3067, %v5546
      %v5607 = vmul.f32 %v3071, %v5546
      %v5608 = vmul.f32 %v3075, %v5546
      %v5609 = vmul.f32 %v3079, %v5546
      %v5610 = vmul.f32 %v3892, %v5546
      %v5611 = vmul.f32 %v3896, %v5546
      %v5612 = vmul.f32 %v3900, %v5546
      %v5613 = vmul.f32 %v4715, %v5546
      %v5614 = vmul.f32 %v4719, %v5546
      %v5615 = vmul.f32 %v4723, %v5546
      %v5616 = vmul.f32 %v5536, %v5546
      %v5617 = vmul.f32 %v5540, %v5546
      %v5618 = vmul.f32 %v5544, %v5546
      %v5619 = vadd.f32 %v5455, %v5547
      %v5620 = vadd.f32 %v5456, %v5548
      %v5621 = vadd.f32 %v5457, %v5549
      %v5622 = vadd.f32 %v5458, %v5550
      %v5623 = vadd.f32 %v5459, %v5551
      %v5624 = vadd.f32 %v5460, %v5552
      %v5625 = vadd.f32 %v5461, %v5553
      %v5626 = vadd.f32 %v5462, %v5554
      %v5627 = vadd.f32 %v5463, %v5555
      %v5628 = vadd.f32 %v5464, %v5556
      %v5629 = vadd.f32 %v5465, %v5557
      %v5630 = vadd.f32 %v5466, %v5558
      %v5631 = vadd.f32 %v5467, %v5559
      %v5632 = vadd.f32 %v5468, %v5560
      %v5633 = vadd.f32 %v5469, %v5561
      %v5634 = vadd.f32 %v5470, %v5562
      %v5635 = vadd.f32 %v5471, %v5563
      %v5636 = vadd.f32 %v5472, %v5564
      %v5637 = vadd.f32 %v5473, %v5565
      %v5638 = vadd.f32 %v5474, %v5566
      %v5639 = vadd.f32 %v5475, %v5567
      %v5640 = vadd.f32 %v5476, %v5568
      %v5641 = vadd.f32 %v5477, %v5569
      %v5642 = vadd.f32 %v5478, %v5570
      %v5643 = vadd.f32 %v5479, %v5571
      %v5644 = vadd.f32 %v5480, %v5572
      %v5645 = vadd.f32 %v5481, %v5573
      %v5646 = vadd.f32 %v5482, %v5574
      %v5647 = vadd.f32 %v5483, %v5575
      %v5648 = vadd.f32 %v5484, %v5576
      %v5649 = vadd.f32 %v5485, %v5577
      %v5650 = vadd.f32 %v5486, %v5578
      %v5651 = vadd.f32 %v5487, %v5579
      %v5652 = vadd.f32 %v5488, %v5580
      %v5653 = vadd.f32 %v5489, %v5581
      %v5654 = vadd.f32 %v5490, %v5582
      %v5655 = vadd.f32 %v5491, %v5583
      %v5656 = vadd.f32 %v5492, %v5584
      %v5657 = vadd.f32 %v5493, %v5585
      %v5658 = vadd.f32 %v5494, %v5586
      %v5659 = vadd.f32 %v5495, %v5587
      %v5660 = vadd.f32 %v5496, %v5588
      %v5661 = vadd.f32 %v5497, %v5589
      %v5662 = vadd.f32 %v5498, %v5590
      %v5663 = vadd.f32 %v5499, %v5591
      %v5664 = vadd.f32 %v5500, %v5592
      %v5665 = vadd.f32 %v5501, %v5593
      %v5666 = vadd.f32 %v5502, %v5594
      %v5667 = vadd.f32 %v5503, %v5595
      %v5668 = vadd.f32 %v5504, %v5596
      %v5669 = vadd.f32 %v5505, %v5597
      %v5670 = vadd.f32 %v5506, %v5598
      %v5671 = vadd.f32 %v5507, %v5599
      %v5672 = vadd.f32 %v5508, %v5600
      %v5673 = vadd.f32 %v5509, %v5601
      %v5674 = vadd.f32 %v5510, %v5602
      %v5675 = vadd.f32 %v5511, %v5603
      %v5676 = vadd.f32 %v5512, %v5604
      %v5677 = vadd.f32 %v5513, %v5605
      %v5678 = vadd.f32 %v5514, %v5606
      %v5679 = vadd.f32 %v5515, %v5607
      %v5680 = vadd.f32 %v5516, %v5608
      %v5681 = vadd.f32 %v5517, %v5609
      %v5682 = vadd.f32 %v5518, %v5610
      %v5683 = vadd.f32 %v5519, %v5611
      %v5684 = vadd.f32 %v5520, %v5612
      %v5685 = vadd.f32 %v5521, %v5613
      %v5686 = vadd.f32 %v5522, %v5614
      %v5687 = vadd.f32 %v5523, %v5615
      %v5688 = vadd.f32 %v5524, %v5616
      %v5689 = vadd.f32 %v5525, %v5617
      %v5690 = vadd.f32 %v5526, %v5618
      %v5691 = vld [vmem:[%s1 + $0x8] sm:$0x4]
      %v5692 = vunpack.c.l.bf16 %v5691
      %5694 = vset.pattern.permute.xlu0 0
      %5695 = vperm.xlu0 %5694, %v279
      %v5696 = vpop.permute.xlu0 %5695
      %5699 = vset.pattern.permute.xlu0 0
      %5700 = vperm.xlu0 %5699, %v280
      %v5701 = vpop.permute.xlu0 %5700
      %5704 = vset.pattern.permute.xlu0 0
      %5705 = vperm.xlu0 %5704, %v281
      %v5706 = vpop.permute.xlu0 %5705
      %v5708 = vperm.slane %v5692, 4
      %v5709 = vmul.f32 %v348, %v5708
      %v5710 = vmul.f32 %v353, %v5708
      %v5711 = vmul.f32 %v358, %v5708
      %v5712 = vmul.f32 %v363, %v5708
      %v5713 = vmul.f32 %v368, %v5708
      %v5714 = vmul.f32 %v373, %v5708
      %v5715 = vmul.f32 %v378, %v5708
      %v5716 = vmul.f32 %v383, %v5708
      %v5717 = vmul.f32 %v388, %v5708
      %v5718 = vmul.f32 %v393, %v5708
      %v5719 = vmul.f32 %v398, %v5708
      %v5720 = vmul.f32 %v403, %v5708
      %v5721 = vmul.f32 %v408, %v5708
      %v5722 = vmul.f32 %v413, %v5708
      %v5723 = vmul.f32 %v418, %v5708
      %v5724 = vmul.f32 %v423, %v5708
      %v5725 = vmul.f32 %v428, %v5708
      %v5726 = vmul.f32 %v433, %v5708
      %v5727 = vmul.f32 %v438, %v5708
      %v5728 = vmul.f32 %v443, %v5708
      %v5729 = vmul.f32 %v448, %v5708
      %v5730 = vmul.f32 %v453, %v5708
      %v5731 = vmul.f32 %v458, %v5708
      %v5732 = vmul.f32 %v463, %v5708
      %v5733 = vmul.f32 %v468, %v5708
      %v5734 = vmul.f32 %v473, %v5708
      %v5735 = vmul.f32 %v478, %v5708
      %v5736 = vmul.f32 %v483, %v5708
      %v5737 = vmul.f32 %v488, %v5708
      %v5738 = vmul.f32 %v493, %v5708
      %v5739 = vmul.f32 %v498, %v5708
      %v5740 = vmul.f32 %v503, %v5708
      %v5741 = vmul.f32 %v508, %v5708
      %v5742 = vmul.f32 %v513, %v5708
      %v5743 = vmul.f32 %v518, %v5708
      %v5744 = vmul.f32 %v523, %v5708
      %v5745 = vmul.f32 %v528, %v5708
      %v5746 = vmul.f32 %v533, %v5708
      %v5747 = vmul.f32 %v538, %v5708
      %v5748 = vmul.f32 %v543, %v5708
      %v5749 = vmul.f32 %v548, %v5708
      %v5750 = vmul.f32 %v553, %v5708
      %v5751 = vmul.f32 %v558, %v5708
      %v5752 = vmul.f32 %v563, %v5708
      %v5753 = vmul.f32 %v568, %v5708
      %v5754 = vmul.f32 %v573, %v5708
      %v5755 = vmul.f32 %v578, %v5708
      %v5756 = vmul.f32 %v583, %v5708
      %v5757 = vmul.f32 %v588, %v5708
      %v5758 = vmul.f32 %v593, %v5708
      %v5759 = vmul.f32 %v598, %v5708
      %v5760 = vmul.f32 %v603, %v5708
      %v5761 = vmul.f32 %v608, %v5708
      %v5762 = vmul.f32 %v613, %v5708
      %v5763 = vmul.f32 %v618, %v5708
      %v5764 = vmul.f32 %v623, %v5708
      %v5765 = vmul.f32 %v628, %v5708
      %v5766 = vmul.f32 %v633, %v5708
      %v5767 = vmul.f32 %v638, %v5708
      %v5768 = vmul.f32 %v643, %v5708
      %v5769 = vmul.f32 %v3229, %v5708
      %v5770 = vmul.f32 %v3234, %v5708
      %v5771 = vmul.f32 %v3239, %v5708
      %v5772 = vmul.f32 %v4052, %v5708
      %v5773 = vmul.f32 %v4057, %v5708
      %v5774 = vmul.f32 %v4062, %v5708
      %v5775 = vmul.f32 %v4873, %v5708
      %v5776 = vmul.f32 %v4878, %v5708
      %v5777 = vmul.f32 %v4883, %v5708
      %v5778 = vmul.f32 %v5696, %v5708
      %v5779 = vmul.f32 %v5701, %v5708
      %v5780 = vmul.f32 %v5706, %v5708
      %v5781 = vadd.f32 %v5619, %v5709
      %v5782 = vadd.f32 %v5620, %v5710
      %v5783 = vadd.f32 %v5621, %v5711
      %v5784 = vadd.f32 %v5622, %v5712
      %v5785 = vadd.f32 %v5623, %v5713
      %v5786 = vadd.f32 %v5624, %v5714
      %v5787 = vadd.f32 %v5625, %v5715
      %v5788 = vadd.f32 %v5626, %v5716
      %v5789 = vadd.f32 %v5627, %v5717
      %v5790 = vadd.f32 %v5628, %v5718
      %v5791 = vadd.f32 %v5629, %v5719
      %v5792 = vadd.f32 %v5630, %v5720
      %v5793 = vadd.f32 %v5631, %v5721
      %v5794 = vadd.f32 %v5632, %v5722
      %v5795 = vadd.f32 %v5633, %v5723
      %v5796 = vadd.f32 %v5634, %v5724
      %v5797 = vadd.f32 %v5635, %v5725
      %v5798 = vadd.f32 %v5636, %v5726
      %v5799 = vadd.f32 %v5637, %v5727
      %v5800 = vadd.f32 %v5638, %v5728
      %v5801 = vadd.f32 %v5639, %v5729
      %v5802 = vadd.f32 %v5640, %v5730
      %v5803 = vadd.f32 %v5641, %v5731
      %v5804 = vadd.f32 %v5642, %v5732
      %v5805 = vadd.f32 %v5643, %v5733
      %v5806 = vadd.f32 %v5644, %v5734
      %v5807 = vadd.f32 %v5645, %v5735
      %v5808 = vadd.f32 %v5646, %v5736
      %v5809 = vadd.f32 %v5647, %v5737
      %v5810 = vadd.f32 %v5648, %v5738
      %v5811 = vadd.f32 %v5649, %v5739
      %v5812 = vadd.f32 %v5650, %v5740
      %v5813 = vadd.f32 %v5651, %v5741
      %v5814 = vadd.f32 %v5652, %v5742
      %v5815 = vadd.f32 %v5653, %v5743
      %v5816 = vadd.f32 %v5654, %v5744
      %v5817 = vadd.f32 %v5655, %v5745
      %v5818 = vadd.f32 %v5656, %v5746
      %v5819 = vadd.f32 %v5657, %v5747
      %v5820 = vadd.f32 %v5658, %v5748
      %v5821 = vadd.f32 %v5659, %v5749
      %v5822 = vadd.f32 %v5660, %v5750
      %v5823 = vadd.f32 %v5661, %v5751
      %v5824 = vadd.f32 %v5662, %v5752
      %v5825 = vadd.f32 %v5663, %v5753
      %v5826 = vadd.f32 %v5664, %v5754
      %v5827 = vadd.f32 %v5665, %v5755
      %v5828 = vadd.f32 %v5666, %v5756
      %v5829 = vadd.f32 %v5667, %v5757
      %v5830 = vadd.f32 %v5668, %v5758
      %v5831 = vadd.f32 %v5669, %v5759
      %v5832 = vadd.f32 %v5670, %v5760
      %v5833 = vadd.f32 %v5671, %v5761
      %v5834 = vadd.f32 %v5672, %v5762
      %v5835 = vadd.f32 %v5673, %v5763
      %v5836 = vadd.f32 %v5674, %v5764
      %v5837 = vadd.f32 %v5675, %v5765
      %v5838 = vadd.f32 %v5676, %v5766
      %v5839 = vadd.f32 %v5677, %v5767
      %v5840 = vadd.f32 %v5678, %v5768
      %v5841 = vadd.f32 %v5679, %v5769
      %v5842 = vadd.f32 %v5680, %v5770
      %v5843 = vadd.f32 %v5681, %v5771
      %v5844 = vadd.f32 %v5682, %v5772
      %v5845 = vadd.f32 %v5683, %v5773
      %v5846 = vadd.f32 %v5684, %v5774
      %v5847 = vadd.f32 %v5685, %v5775
      %v5848 = vadd.f32 %v5686, %v5776
      %v5849 = vadd.f32 %v5687, %v5777
      %v5850 = vadd.f32 %v5688, %v5778
      %v5851 = vadd.f32 %v5689, %v5779
      %v5852 = vadd.f32 %v5690, %v5780
      %v5854 = vrot.slane %v279, 1
      %v5855 = vrot.slane %v280, 1
      %v5856 = vsel %vm814, %v5854, %v5855
      %v5857 = vrot.slane %v281, 1
      %v5858 = vsel %vm814, %v5855, %v5857
      %v5859 = vrot.slane %v282, 1
      %v5860 = vsel %vm814, %v5857, %v5859
      %5861 = vset.pattern.permute.xlu0 0
      %5862 = vperm.xlu0 %5861, %v5856
      %v5863 = vpop.permute.xlu0 %5862
      %5865 = vset.pattern.permute.xlu0 0
      %5866 = vperm.xlu0 %5865, %v5858
      %v5867 = vpop.permute.xlu0 %5866
      %5869 = vset.pattern.permute.xlu0 0
      %5870 = vperm.xlu0 %5869, %v5860
      %v5871 = vpop.permute.xlu0 %5870
      %v5873 = vperm.slane %v5692, 5
      %v5874 = vmul.f32 %v1033, %v5873
      %v5875 = vmul.f32 %v1037, %v5873
      %v5876 = vmul.f32 %v1041, %v5873
      %v5877 = vmul.f32 %v1045, %v5873
      %v5878 = vmul.f32 %v1049, %v5873
      %v5879 = vmul.f32 %v1053, %v5873
      %v5880 = vmul.f32 %v1057, %v5873
      %v5881 = vmul.f32 %v1061, %v5873
      %v5882 = vmul.f32 %v1065, %v5873
      %v5883 = vmul.f32 %v1069, %v5873
      %v5884 = vmul.f32 %v1073, %v5873
      %v5885 = vmul.f32 %v1077, %v5873
      %v5886 = vmul.f32 %v1081, %v5873
      %v5887 = vmul.f32 %v1085, %v5873
      %v5888 = vmul.f32 %v1089, %v5873
      %v5889 = vmul.f32 %v1093, %v5873
      %v5890 = vmul.f32 %v1097, %v5873
      %v5891 = vmul.f32 %v1101, %v5873
      %v5892 = vmul.f32 %v1105, %v5873
      %v5893 = vmul.f32 %v1109, %v5873
      %v5894 = vmul.f32 %v1113, %v5873
      %v5895 = vmul.f32 %v1117, %v5873
      %v5896 = vmul.f32 %v1121, %v5873
      %v5897 = vmul.f32 %v1125, %v5873
      %v5898 = vmul.f32 %v1129, %v5873
      %v5899 = vmul.f32 %v1133, %v5873
      %v5900 = vmul.f32 %v1137, %v5873
      %v5901 = vmul.f32 %v1141, %v5873
      %v5902 = vmul.f32 %v1145, %v5873
      %v5903 = vmul.f32 %v1149, %v5873
      %v5904 = vmul.f32 %v1153, %v5873
      %v5905 = vmul.f32 %v1157, %v5873
      %v5906 = vmul.f32 %v1161, %v5873
      %v5907 = vmul.f32 %v1165, %v5873
      %v5908 = vmul.f32 %v1169, %v5873
      %v5909 = vmul.f32 %v1173, %v5873
      %v5910 = vmul.f32 %v1177, %v5873
      %v5911 = vmul.f32 %v1181, %v5873
      %v5912 = vmul.f32 %v1185, %v5873
      %v5913 = vmul.f32 %v1189, %v5873
      %v5914 = vmul.f32 %v1193, %v5873
      %v5915 = vmul.f32 %v1197, %v5873
      %v5916 = vmul.f32 %v1201, %v5873
      %v5917 = vmul.f32 %v1205, %v5873
      %v5918 = vmul.f32 %v1209, %v5873
      %v5919 = vmul.f32 %v1213, %v5873
      %v5920 = vmul.f32 %v1217, %v5873
      %v5921 = vmul.f32 %v1221, %v5873
      %v5922 = vmul.f32 %v1225, %v5873
      %v5923 = vmul.f32 %v1229, %v5873
      %v5924 = vmul.f32 %v1233, %v5873
      %v5925 = vmul.f32 %v1237, %v5873
      %v5926 = vmul.f32 %v1241, %v5873
      %v5927 = vmul.f32 %v1245, %v5873
      %v5928 = vmul.f32 %v1249, %v5873
      %v5929 = vmul.f32 %v1253, %v5873
      %v5930 = vmul.f32 %v1257, %v5873
      %v5931 = vmul.f32 %v1261, %v5873
      %v5932 = vmul.f32 %v1265, %v5873
      %v5933 = vmul.f32 %v1269, %v5873
      %v5934 = vmul.f32 %v3398, %v5873
      %v5935 = vmul.f32 %v3402, %v5873
      %v5936 = vmul.f32 %v3406, %v5873
      %v5937 = vmul.f32 %v4219, %v5873
      %v5938 = vmul.f32 %v4223, %v5873
      %v5939 = vmul.f32 %v4227, %v5873
      %v5940 = vmul.f32 %v5042, %v5873
      %v5941 = vmul.f32 %v5046, %v5873
      %v5942 = vmul.f32 %v5050, %v5873
      %v5943 = vmul.f32 %v5863, %v5873
      %v5944 = vmul.f32 %v5867, %v5873
      %v5945 = vmul.f32 %v5871, %v5873
      %v5946 = vadd.f32 %v5781, %v5874
      %v5947 = vadd.f32 %v5782, %v5875
      %v5948 = vadd.f32 %v5783, %v5876
      %v5949 = vadd.f32 %v5784, %v5877
      %v5950 = vadd.f32 %v5785, %v5878
      %v5951 = vadd.f32 %v5786, %v5879
      %v5952 = vadd.f32 %v5787, %v5880
      %v5953 = vadd.f32 %v5788, %v5881
      %v5954 = vadd.f32 %v5789, %v5882
      %v5955 = vadd.f32 %v5790, %v5883
      %v5956 = vadd.f32 %v5791, %v5884
      %v5957 = vadd.f32 %v5792, %v5885
      %v5958 = vadd.f32 %v5793, %v5886
      %v5959 = vadd.f32 %v5794, %v5887
      %v5960 = vadd.f32 %v5795, %v5888
      %v5961 = vadd.f32 %v5796, %v5889
      %v5962 = vadd.f32 %v5797, %v5890
      %v5963 = vadd.f32 %v5798, %v5891
      %v5964 = vadd.f32 %v5799, %v5892
      %v5965 = vadd.f32 %v5800, %v5893
      %v5966 = vadd.f32 %v5801, %v5894
      %v5967 = vadd.f32 %v5802, %v5895
      %v5968 = vadd.f32 %v5803, %v5896
      %v5969 = vadd.f32 %v5804, %v5897
      %v5970 = vadd.f32 %v5805, %v5898
      %v5971 = vadd.f32 %v5806, %v5899
      %v5972 = vadd.f32 %v5807, %v5900
      %v5973 = vadd.f32 %v5808, %v5901
      %v5974 = vadd.f32 %v5809, %v5902
      %v5975 = vadd.f32 %v5810, %v5903
      %v5976 = vadd.f32 %v5811, %v5904
      %v5977 = vadd.f32 %v5812, %v5905
      %v5978 = vadd.f32 %v5813, %v5906
      %v5979 = vadd.f32 %v5814, %v5907
      %v5980 = vadd.f32 %v5815, %v5908
      %v5981 = vadd.f32 %v5816, %v5909
      %v5982 = vadd.f32 %v5817, %v5910
      %v5983 = vadd.f32 %v5818, %v5911
      %v5984 = vadd.f32 %v5819, %v5912
      %v5985 = vadd.f32 %v5820, %v5913
      %v5986 = vadd.f32 %v5821, %v5914
      %v5987 = vadd.f32 %v5822, %v5915
      %v5988 = vadd.f32 %v5823, %v5916
      %v5989 = vadd.f32 %v5824, %v5917
      %v5990 = vadd.f32 %v5825, %v5918
      %v5991 = vadd.f32 %v5826, %v5919
      %v5992 = vadd.f32 %v5827, %v5920
      %v5993 = vadd.f32 %v5828, %v5921
      %v5994 = vadd.f32 %v5829, %v5922
      %v5995 = vadd.f32 %v5830, %v5923
      %v5996 = vadd.f32 %v5831, %v5924
      %v5997 = vadd.f32 %v5832, %v5925
      %v5998 = vadd.f32 %v5833, %v5926
      %v5999 = vadd.f32 %v5834, %v5927
      %v6000 = vadd.f32 %v5835, %v5928
      %v6001 = vadd.f32 %v5836, %v5929
      %v6002 = vadd.f32 %v5837, %v5930
      %v6003 = vadd.f32 %v5838, %v5931
      %v6004 = vadd.f32 %v5839, %v5932
      %v6005 = vadd.f32 %v5840, %v5933
      %v6006 = vadd.f32 %v5841, %v5934
      %v6007 = vadd.f32 %v5842, %v5935
      %v6008 = vadd.f32 %v5843, %v5936
      %v6009 = vadd.f32 %v5844, %v5937
      %v6010 = vadd.f32 %v5845, %v5938
      %v6011 = vadd.f32 %v5846, %v5939
      %v6012 = vadd.f32 %v5847, %v5940
      %v6013 = vadd.f32 %v5848, %v5941
      %v6014 = vadd.f32 %v5849, %v5942
      %v6015 = vadd.f32 %v5850, %v5943
      %v6016 = vadd.f32 %v5851, %v5944
      %v6017 = vadd.f32 %v5852, %v5945
      %v6018 = vrot.slane %v279, 2
      %v6019 = vrot.slane %v280, 2
      %v6020 = vsel %vm1416, %v6018, %v6019
      %v6021 = vrot.slane %v281, 2
      %v6022 = vsel %vm1416, %v6019, %v6021
      %v6023 = vrot.slane %v282, 2
      %v6024 = vsel %vm1416, %v6021, %v6023
      %v6025 = vld [vmem:[%s1 + $0x8] sm:$0x8]
      %v6026 = vunpack.c.l.bf16 %v6025
      %6027 = vset.pattern.permute.xlu0 0
      %6028 = vperm.xlu0 %6027, %v6020
      %v6029 = vpop.permute.xlu0 %6028
      %6031 = vset.pattern.permute.xlu0 0
      %6032 = vperm.xlu0 %6031, %v6022
      %v6033 = vpop.permute.xlu0 %6032
      %6035 = vset.pattern.permute.xlu0 0
      %6036 = vperm.xlu0 %6035, %v6024
      %v6037 = vpop.permute.xlu0 %6036
      %v6039 = vperm.slane %v6026, 6
      %v6040 = vmul.f32 %v1637, %v6039
      %v6041 = vmul.f32 %v1641, %v6039
      %v6042 = vmul.f32 %v1645, %v6039
      %v6043 = vmul.f32 %v1649, %v6039
      %v6044 = vmul.f32 %v1653, %v6039
      %v6045 = vmul.f32 %v1657, %v6039
      %v6046 = vmul.f32 %v1661, %v6039
      %v6047 = vmul.f32 %v1665, %v6039
      %v6048 = vmul.f32 %v1669, %v6039
      %v6049 = vmul.f32 %v1673, %v6039
      %v6050 = vmul.f32 %v1677, %v6039
      %v6051 = vmul.f32 %v1681, %v6039
      %v6052 = vmul.f32 %v1685, %v6039
      %v6053 = vmul.f32 %v1689, %v6039
      %v6054 = vmul.f32 %v1693, %v6039
      %v6055 = vmul.f32 %v1697, %v6039
      %v6056 = vmul.f32 %v1701, %v6039
      %v6057 = vmul.f32 %v1705, %v6039
      %v6058 = vmul.f32 %v1709, %v6039
      %v6059 = vmul.f32 %v1713, %v6039
      %v6060 = vmul.f32 %v1717, %v6039
      %v6061 = vmul.f32 %v1721, %v6039
      %v6062 = vmul.f32 %v1725, %v6039
      %v6063 = vmul.f32 %v1729, %v6039
      %v6064 = vmul.f32 %v1733, %v6039
      %v6065 = vmul.f32 %v1737, %v6039
      %v6066 = vmul.f32 %v1741, %v6039
      %v6067 = vmul.f32 %v1745, %v6039
      %v6068 = vmul.f32 %v1749, %v6039
      %v6069 = vmul.f32 %v1753, %v6039
      %v6070 = vmul.f32 %v1757, %v6039
      %v6071 = vmul.f32 %v1761, %v6039
      %v6072 = vmul.f32 %v1765, %v6039
      %v6073 = vmul.f32 %v1769, %v6039
      %v6074 = vmul.f32 %v1773, %v6039
      %v6075 = vmul.f32 %v1777, %v6039
      %v6076 = vmul.f32 %v1781, %v6039
      %v6077 = vmul.f32 %v1785, %v6039
      %v6078 = vmul.f32 %v1789, %v6039
      %v6079 = vmul.f32 %v1793, %v6039
      %v6080 = vmul.f32 %v1797, %v6039
      %v6081 = vmul.f32 %v1801, %v6039
      %v6082 = vmul.f32 %v1805, %v6039
      %v6083 = vmul.f32 %v1809, %v6039
      %v6084 = vmul.f32 %v1813, %v6039
      %v6085 = vmul.f32 %v1817, %v6039
      %v6086 = vmul.f32 %v1821, %v6039
      %v6087 = vmul.f32 %v1825, %v6039
      %v6088 = vmul.f32 %v1829, %v6039
      %v6089 = vmul.f32 %v1833, %v6039
      %v6090 = vmul.f32 %v1837, %v6039
      %v6091 = vmul.f32 %v1841, %v6039
      %v6092 = vmul.f32 %v1845, %v6039
      %v6093 = vmul.f32 %v1849, %v6039
      %v6094 = vmul.f32 %v1853, %v6039
      %v6095 = vmul.f32 %v1857, %v6039
      %v6096 = vmul.f32 %v1861, %v6039
      %v6097 = vmul.f32 %v1865, %v6039
      %v6098 = vmul.f32 %v1869, %v6039
      %v6099 = vmul.f32 %v1873, %v6039
      %v6100 = vmul.f32 %v3562, %v6039
      %v6101 = vmul.f32 %v3566, %v6039
      %v6102 = vmul.f32 %v3570, %v6039
      %v6103 = vmul.f32 %v4385, %v6039
      %v6104 = vmul.f32 %v4389, %v6039
      %v6105 = vmul.f32 %v4393, %v6039
      %v6106 = vmul.f32 %v5206, %v6039
      %v6107 = vmul.f32 %v5210, %v6039
      %v6108 = vmul.f32 %v5214, %v6039
      %v6109 = vmul.f32 %v6029, %v6039
      %v6110 = vmul.f32 %v6033, %v6039
      %v6111 = vmul.f32 %v6037, %v6039
      %v6112 = vadd.f32 %v5946, %v6040
      %v6113 = vadd.f32 %v5947, %v6041
      %v6114 = vadd.f32 %v5948, %v6042
      %v6115 = vadd.f32 %v5949, %v6043
      %v6116 = vadd.f32 %v5950, %v6044
      %v6117 = vadd.f32 %v5951, %v6045
      %v6118 = vadd.f32 %v5952, %v6046
      %v6119 = vadd.f32 %v5953, %v6047
      %v6120 = vadd.f32 %v5954, %v6048
      %v6121 = vadd.f32 %v5955, %v6049
      %v6122 = vadd.f32 %v5956, %v6050
      %v6123 = vadd.f32 %v5957, %v6051
      %v6124 = vadd.f32 %v5958, %v6052
      %v6125 = vadd.f32 %v5959, %v6053
      %v6126 = vadd.f32 %v5960, %v6054
      %v6127 = vadd.f32 %v5961, %v6055
      %v6128 = vadd.f32 %v5962, %v6056
      %v6129 = vadd.f32 %v5963, %v6057
      %v6130 = vadd.f32 %v5964, %v6058
      %v6131 = vadd.f32 %v5965, %v6059
      %v6132 = vadd.f32 %v5966, %v6060
      %v6133 = vadd.f32 %v5967, %v6061
      %v6134 = vadd.f32 %v5968, %v6062
      %v6135 = vadd.f32 %v5969, %v6063
      %v6136 = vadd.f32 %v5970, %v6064
      %v6137 = vadd.f32 %v5971, %v6065
      %v6138 = vadd.f32 %v5972, %v6066
      %v6139 = vadd.f32 %v5973, %v6067
      %v6140 = vadd.f32 %v5974, %v6068
      %v6141 = vadd.f32 %v5975, %v6069
      %v6142 = vadd.f32 %v5976, %v6070
      %v6143 = vadd.f32 %v5977, %v6071
      %v6144 = vadd.f32 %v5978, %v6072
      %v6145 = vadd.f32 %v5979, %v6073
      %v6146 = vadd.f32 %v5980, %v6074
      %v6147 = vadd.f32 %v5981, %v6075
      %v6148 = vadd.f32 %v5982, %v6076
      %v6149 = vadd.f32 %v5983, %v6077
      %v6150 = vadd.f32 %v5984, %v6078
      %v6151 = vadd.f32 %v5985, %v6079
      %v6152 = vadd.f32 %v5986, %v6080
      %v6153 = vadd.f32 %v5987, %v6081
      %v6154 = vadd.f32 %v5988, %v6082
      %v6155 = vadd.f32 %v5989, %v6083
      %v6156 = vadd.f32 %v5990, %v6084
      %v6157 = vadd.f32 %v5991, %v6085
      %v6158 = vadd.f32 %v5992, %v6086
      %v6159 = vadd.f32 %v5993, %v6087
      %v6160 = vadd.f32 %v5994, %v6088
      %v6161 = vadd.f32 %v5995, %v6089
      %v6162 = vadd.f32 %v5996, %v6090
      %v6163 = vadd.f32 %v5997, %v6091
      %v6164 = vadd.f32 %v5998, %v6092
      %v6165 = vadd.f32 %v5999, %v6093
      %v6166 = vadd.f32 %v6000, %v6094
      %v6167 = vadd.f32 %v6001, %v6095
      %v6168 = vadd.f32 %v6002, %v6096
      %v6169 = vadd.f32 %v6003, %v6097
      %v6170 = vadd.f32 %v6004, %v6098
      %v6171 = vadd.f32 %v6005, %v6099
      %v6172 = vadd.f32 %v6006, %v6100
      %v6173 = vadd.f32 %v6007, %v6101
      %v6174 = vadd.f32 %v6008, %v6102
      %v6175 = vadd.f32 %v6009, %v6103
      %v6176 = vadd.f32 %v6010, %v6104
      %v6177 = vadd.f32 %v6011, %v6105
      %v6178 = vadd.f32 %v6012, %v6106
      %v6179 = vadd.f32 %v6013, %v6107
      %v6180 = vadd.f32 %v6014, %v6108
      %v6181 = vadd.f32 %v6015, %v6109
      %v6182 = vadd.f32 %v6016, %v6110
      %v6183 = vadd.f32 %v6017, %v6111
      %v6184 = vrot.slane %v279, 3
      %v6185 = vrot.slane %v280, 3
      %v6186 = vsel %vm2020, %v6184, %v6185
      %v6187 = vrot.slane %v281, 3
      %v6188 = vsel %vm2020, %v6185, %v6187
      %v6189 = vrot.slane %v282, 3
      %v6190 = vsel %vm2020, %v6187, %v6189
      %6191 = vset.pattern.permute.xlu0 0
      %6192 = vperm.xlu0 %6191, %v6186
      %v6193 = vpop.permute.xlu0 %6192
      %6195 = vset.pattern.permute.xlu0 0
      %6196 = vperm.xlu0 %6195, %v6188
      %v6197 = vpop.permute.xlu0 %6196
      %6199 = vset.pattern.permute.xlu0 0
      %6200 = vperm.xlu0 %6199, %v6190
      %v6201 = vpop.permute.xlu0 %6200
      %v6203 = vperm.slane %v6026, 7
      %v6204 = vmul.f32 %v2239, %v6203
      %v6205 = vmul.f32 %v2243, %v6203
      %v6206 = vmul.f32 %v2247, %v6203
      %v6207 = vmul.f32 %v2251, %v6203
      %v6208 = vmul.f32 %v2255, %v6203
      %v6209 = vmul.f32 %v2259, %v6203
      %v6210 = vmul.f32 %v2263, %v6203
      %v6211 = vmul.f32 %v2267, %v6203
      %v6212 = vmul.f32 %v2271, %v6203
      %v6213 = vmul.f32 %v2275, %v6203
      %v6214 = vmul.f32 %v2279, %v6203
      %v6215 = vmul.f32 %v2283, %v6203
      %v6216 = vmul.f32 %v2287, %v6203
      %v6217 = vmul.f32 %v2291, %v6203
      %v6218 = vmul.f32 %v2295, %v6203
      %v6219 = vmul.f32 %v2299, %v6203
      %v6220 = vmul.f32 %v2303, %v6203
      %v6221 = vmul.f32 %v2307, %v6203
      %v6222 = vmul.f32 %v2311, %v6203
      %v6223 = vmul.f32 %v2315, %v6203
      %v6224 = vmul.f32 %v2319, %v6203
      %v6225 = vmul.f32 %v2323, %v6203
      %v6226 = vmul.f32 %v2327, %v6203
      %v6227 = vmul.f32 %v2331, %v6203
      %v6228 = vmul.f32 %v2335, %v6203
      %v6229 = vmul.f32 %v2339, %v6203
      %v6230 = vmul.f32 %v2343, %v6203
      %v6231 = vmul.f32 %v2347, %v6203
      %v6232 = vmul.f32 %v2351, %v6203
      %v6233 = vmul.f32 %v2355, %v6203
      %v6234 = vmul.f32 %v2359, %v6203
      %v6235 = vmul.f32 %v2363, %v6203
      %v6236 = vmul.f32 %v2367, %v6203
      %v6237 = vmul.f32 %v2371, %v6203
      %v6238 = vmul.f32 %v2375, %v6203
      %v6239 = vmul.f32 %v2379, %v6203
      %v6240 = vmul.f32 %v2383, %v6203
      %v6241 = vmul.f32 %v2387, %v6203
      %v6242 = vmul.f32 %v2391, %v6203
      %v6243 = vmul.f32 %v2395, %v6203
      %v6244 = vmul.f32 %v2399, %v6203
      %v6245 = vmul.f32 %v2403, %v6203
      %v6246 = vmul.f32 %v2407, %v6203
      %v6247 = vmul.f32 %v2411, %v6203
      %v6248 = vmul.f32 %v2415, %v6203
      %v6249 = vmul.f32 %v2419, %v6203
      %v6250 = vmul.f32 %v2423, %v6203
      %v6251 = vmul.f32 %v2427, %v6203
      %v6252 = vmul.f32 %v2431, %v6203
      %v6253 = vmul.f32 %v2435, %v6203
      %v6254 = vmul.f32 %v2439, %v6203
      %v6255 = vmul.f32 %v2443, %v6203
      %v6256 = vmul.f32 %v2447, %v6203
      %v6257 = vmul.f32 %v2451, %v6203
      %v6258 = vmul.f32 %v2455, %v6203
      %v6259 = vmul.f32 %v2459, %v6203
      %v6260 = vmul.f32 %v2463, %v6203
      %v6261 = vmul.f32 %v2467, %v6203
      %v6262 = vmul.f32 %v2471, %v6203
      %v6263 = vmul.f32 %v2475, %v6203
      %v6264 = vmul.f32 %v3728, %v6203
      %v6265 = vmul.f32 %v3732, %v6203
      %v6266 = vmul.f32 %v3736, %v6203
      %v6267 = vmul.f32 %v4549, %v6203
      %v6268 = vmul.f32 %v4553, %v6203
      %v6269 = vmul.f32 %v4557, %v6203
      %v6270 = vmul.f32 %v5372, %v6203
      %v6271 = vmul.f32 %v5376, %v6203
      %v6272 = vmul.f32 %v5380, %v6203
      %v6273 = vmul.f32 %v6193, %v6203
      %v6274 = vmul.f32 %v6197, %v6203
      %v6275 = vmul.f32 %v6201, %v6203
      %v6276 = vadd.f32 %v6112, %v6204
      %v6277 = vadd.f32 %v6113, %v6205
      %v6278 = vadd.f32 %v6114, %v6206
      %v6279 = vadd.f32 %v6115, %v6207
      %v6280 = vadd.f32 %v6116, %v6208
      %v6281 = vadd.f32 %v6117, %v6209
      %v6282 = vadd.f32 %v6118, %v6210
      %v6283 = vadd.f32 %v6119, %v6211
      %v6284 = vadd.f32 %v6120, %v6212
      %v6285 = vadd.f32 %v6121, %v6213
      %v6286 = vadd.f32 %v6122, %v6214
      %v6287 = vadd.f32 %v6123, %v6215
      %v6288 = vadd.f32 %v6124, %v6216
      %v6289 = vadd.f32 %v6125, %v6217
      %v6290 = vadd.f32 %v6126, %v6218
      %v6291 = vadd.f32 %v6127, %v6219
      %v6292 = vadd.f32 %v6128, %v6220
      %v6293 = vadd.f32 %v6129, %v6221
      %v6294 = vadd.f32 %v6130, %v6222
      %v6295 = vadd.f32 %v6131, %v6223
      %v6296 = vadd.f32 %v6132, %v6224
      %v6297 = vadd.f32 %v6133, %v6225
      %v6298 = vadd.f32 %v6134, %v6226
      %v6299 = vadd.f32 %v6135, %v6227
      %v6300 = vadd.f32 %v6136, %v6228
      %v6301 = vadd.f32 %v6137, %v6229
      %v6302 = vadd.f32 %v6138, %v6230
      %v6303 = vadd.f32 %v6139, %v6231
      %v6304 = vadd.f32 %v6140, %v6232
      %v6305 = vadd.f32 %v6141, %v6233
      %v6306 = vadd.f32 %v6142, %v6234
      %v6307 = vadd.f32 %v6143, %v6235
      %v6308 = vadd.f32 %v6144, %v6236
      %v6309 = vadd.f32 %v6145, %v6237
      %v6310 = vadd.f32 %v6146, %v6238
      %v6311 = vadd.f32 %v6147, %v6239
      %v6312 = vadd.f32 %v6148, %v6240
      %v6313 = vadd.f32 %v6149, %v6241
      %v6314 = vadd.f32 %v6150, %v6242
      %v6315 = vadd.f32 %v6151, %v6243
      %v6316 = vadd.f32 %v6152, %v6244
      %v6317 = vadd.f32 %v6153, %v6245
      %v6318 = vadd.f32 %v6154, %v6246
      %v6319 = vadd.f32 %v6155, %v6247
      %v6320 = vadd.f32 %v6156, %v6248
      %v6321 = vadd.f32 %v6157, %v6249
      %v6322 = vadd.f32 %v6158, %v6250
      %v6323 = vadd.f32 %v6159, %v6251
      %v6324 = vadd.f32 %v6160, %v6252
      %v6325 = vadd.f32 %v6161, %v6253
      %v6326 = vadd.f32 %v6162, %v6254
      %v6327 = vadd.f32 %v6163, %v6255
      %v6328 = vadd.f32 %v6164, %v6256
      %v6329 = vadd.f32 %v6165, %v6257
      %v6330 = vadd.f32 %v6166, %v6258
      %v6331 = vadd.f32 %v6167, %v6259
      %v6332 = vadd.f32 %v6168, %v6260
      %v6333 = vadd.f32 %v6169, %v6261
      %v6334 = vadd.f32 %v6170, %v6262
      %v6335 = vadd.f32 %v6171, %v6263
      %v6336 = vadd.f32 %v6172, %v6264
      %v6337 = vadd.f32 %v6173, %v6265
      %v6338 = vadd.f32 %v6174, %v6266
      %v6339 = vadd.f32 %v6175, %v6267
      %v6340 = vadd.f32 %v6176, %v6268
      %v6341 = vadd.f32 %v6177, %v6269
      %v6342 = vadd.f32 %v6178, %v6270
      %v6343 = vadd.f32 %v6179, %v6271
      %v6344 = vadd.f32 %v6180, %v6272
      %v6345 = vadd.f32 %v6181, %v6273
      %v6346 = vadd.f32 %v6182, %v6274
      %v6347 = vadd.f32 %v6183, %v6275
      %v6348 = vrot.slane %v279, 4
      %v6349 = vrot.slane %v280, 4
      %v6350 = vsel %vm2622, %v6348, %v6349
      %v6351 = vrot.slane %v281, 4
      %v6352 = vsel %vm2622, %v6349, %v6351
      %v6353 = vrot.slane %v282, 4
      %v6354 = vsel %vm2622, %v6351, %v6353
      %v6355 = vld [vmem:[%s1 + $0xc] sm:$0x1]
      %v6356 = vunpack.c.l.bf16 %v6355
      %6357 = vset.pattern.permute.xlu0 0
      %6358 = vperm.xlu0 %6357, %v6350
      %v6359 = vpop.permute.xlu0 %6358
      %6361 = vset.pattern.permute.xlu0 0
      %6362 = vperm.xlu0 %6361, %v6352
      %v6363 = vpop.permute.xlu0 %6362
      %6365 = vset.pattern.permute.xlu0 0
      %6366 = vperm.xlu0 %6365, %v6354
      %v6367 = vpop.permute.xlu0 %6366
      %v6369 = vperm.slane %v6356, 0
      %v6370 = vmul.f32 %v2843, %v6369
      %v6371 = vmul.f32 %v2847, %v6369
      %v6372 = vmul.f32 %v2851, %v6369
      %v6373 = vmul.f32 %v2855, %v6369
      %v6374 = vmul.f32 %v2859, %v6369
      %v6375 = vmul.f32 %v2863, %v6369
      %v6376 = vmul.f32 %v2867, %v6369
      %v6377 = vmul.f32 %v2871, %v6369
      %v6378 = vmul.f32 %v2875, %v6369
      %v6379 = vmul.f32 %v2879, %v6369
      %v6380 = vmul.f32 %v2883, %v6369
      %v6381 = vmul.f32 %v2887, %v6369
      %v6382 = vmul.f32 %v2891, %v6369
      %v6383 = vmul.f32 %v2895, %v6369
      %v6384 = vmul.f32 %v2899, %v6369
      %v6385 = vmul.f32 %v2903, %v6369
      %v6386 = vmul.f32 %v2907, %v6369
      %v6387 = vmul.f32 %v2911, %v6369
      %v6388 = vmul.f32 %v2915, %v6369
      %v6389 = vmul.f32 %v2919, %v6369
      %v6390 = vmul.f32 %v2923, %v6369
      %v6391 = vmul.f32 %v2927, %v6369
      %v6392 = vmul.f32 %v2931, %v6369
      %v6393 = vmul.f32 %v2935, %v6369
      %v6394 = vmul.f32 %v2939, %v6369
      %v6395 = vmul.f32 %v2943, %v6369
      %v6396 = vmul.f32 %v2947, %v6369
      %v6397 = vmul.f32 %v2951, %v6369
      %v6398 = vmul.f32 %v2955, %v6369
      %v6399 = vmul.f32 %v2959, %v6369
      %v6400 = vmul.f32 %v2963, %v6369
      %v6401 = vmul.f32 %v2967, %v6369
      %v6402 = vmul.f32 %v2971, %v6369
      %v6403 = vmul.f32 %v2975, %v6369
      %v6404 = vmul.f32 %v2979, %v6369
      %v6405 = vmul.f32 %v2983, %v6369
      %v6406 = vmul.f32 %v2987, %v6369
      %v6407 = vmul.f32 %v2991, %v6369
      %v6408 = vmul.f32 %v2995, %v6369
      %v6409 = vmul.f32 %v2999, %v6369
      %v6410 = vmul.f32 %v3003, %v6369
      %v6411 = vmul.f32 %v3007, %v6369
      %v6412 = vmul.f32 %v3011, %v6369
      %v6413 = vmul.f32 %v3015, %v6369
      %v6414 = vmul.f32 %v3019, %v6369
      %v6415 = vmul.f32 %v3023, %v6369
      %v6416 = vmul.f32 %v3027, %v6369
      %v6417 = vmul.f32 %v3031, %v6369
      %v6418 = vmul.f32 %v3035, %v6369
      %v6419 = vmul.f32 %v3039, %v6369
      %v6420 = vmul.f32 %v3043, %v6369
      %v6421 = vmul.f32 %v3047, %v6369
      %v6422 = vmul.f32 %v3051, %v6369
      %v6423 = vmul.f32 %v3055, %v6369
      %v6424 = vmul.f32 %v3059, %v6369
      %v6425 = vmul.f32 %v3063, %v6369
      %v6426 = vmul.f32 %v3067, %v6369
      %v6427 = vmul.f32 %v3071, %v6369
      %v6428 = vmul.f32 %v3075, %v6369
      %v6429 = vmul.f32 %v3079, %v6369
      %v6430 = vmul.f32 %v3892, %v6369
      %v6431 = vmul.f32 %v3896, %v6369
      %v6432 = vmul.f32 %v3900, %v6369
      %v6433 = vmul.f32 %v4715, %v6369
      %v6434 = vmul.f32 %v4719, %v6369
      %v6435 = vmul.f32 %v4723, %v6369
      %v6436 = vmul.f32 %v5536, %v6369
      %v6437 = vmul.f32 %v5540, %v6369
      %v6438 = vmul.f32 %v5544, %v6369
      %v6439 = vmul.f32 %v6359, %v6369
      %v6440 = vmul.f32 %v6363, %v6369
      %v6441 = vmul.f32 %v6367, %v6369
      %v6442 = vadd.f32 %v6276, %v6370
      %v6443 = vadd.f32 %v6277, %v6371
      %v6444 = vadd.f32 %v6278, %v6372
      %v6445 = vadd.f32 %v6279, %v6373
      %v6446 = vadd.f32 %v6280, %v6374
      %v6447 = vadd.f32 %v6281, %v6375
      %v6448 = vadd.f32 %v6282, %v6376
      %v6449 = vadd.f32 %v6283, %v6377
      %v6450 = vadd.f32 %v6284, %v6378
      %v6451 = vadd.f32 %v6285, %v6379
      %v6452 = vadd.f32 %v6286, %v6380
      %v6453 = vadd.f32 %v6287, %v6381
      %v6454 = vadd.f32 %v6288, %v6382
      %v6455 = vadd.f32 %v6289, %v6383
      %v6456 = vadd.f32 %v6290, %v6384
      %v6457 = vadd.f32 %v6291, %v6385
      %v6458 = vadd.f32 %v6292, %v6386
      %v6459 = vadd.f32 %v6293, %v6387
      %v6460 = vadd.f32 %v6294, %v6388
      %v6461 = vadd.f32 %v6295, %v6389
      %v6462 = vadd.f32 %v6296, %v6390
      %v6463 = vadd.f32 %v6297, %v6391
      %v6464 = vadd.f32 %v6298, %v6392
      %v6465 = vadd.f32 %v6299, %v6393
      %v6466 = vadd.f32 %v6300, %v6394
      %v6467 = vadd.f32 %v6301, %v6395
      %v6468 = vadd.f32 %v6302, %v6396
      %v6469 = vadd.f32 %v6303, %v6397
      %v6470 = vadd.f32 %v6304, %v6398
      %v6471 = vadd.f32 %v6305, %v6399
      %v6472 = vadd.f32 %v6306, %v6400
      %v6473 = vadd.f32 %v6307, %v6401
      %v6474 = vadd.f32 %v6308, %v6402
      %v6475 = vadd.f32 %v6309, %v6403
      %v6476 = vadd.f32 %v6310, %v6404
      %v6477 = vadd.f32 %v6311, %v6405
      %v6478 = vadd.f32 %v6312, %v6406
      %v6479 = vadd.f32 %v6313, %v6407
      %v6480 = vadd.f32 %v6314, %v6408
      %v6481 = vadd.f32 %v6315, %v6409
      %v6482 = vadd.f32 %v6316, %v6410
      %v6483 = vadd.f32 %v6317, %v6411
      %v6484 = vadd.f32 %v6318, %v6412
      %v6485 = vadd.f32 %v6319, %v6413
      %v6486 = vadd.f32 %v6320, %v6414
      %v6487 = vadd.f32 %v6321, %v6415
      %v6488 = vadd.f32 %v6322, %v6416
      %v6489 = vadd.f32 %v6323, %v6417
      %v6490 = vadd.f32 %v6324, %v6418
      %v6491 = vadd.f32 %v6325, %v6419
      %v6492 = vadd.f32 %v6326, %v6420
      %v6493 = vadd.f32 %v6327, %v6421
      %v6494 = vadd.f32 %v6328, %v6422
      %v6495 = vadd.f32 %v6329, %v6423
      %v6496 = vadd.f32 %v6330, %v6424
      %v6497 = vadd.f32 %v6331, %v6425
      %v6498 = vadd.f32 %v6332, %v6426
      %v6499 = vadd.f32 %v6333, %v6427
      %v6500 = vadd.f32 %v6334, %v6428
      %v6501 = vadd.f32 %v6335, %v6429
      %v6502 = vadd.f32 %v6336, %v6430
      %v6503 = vadd.f32 %v6337, %v6431
      %v6504 = vadd.f32 %v6338, %v6432
      %v6505 = vadd.f32 %v6339, %v6433
      %v6506 = vadd.f32 %v6340, %v6434
      %v6507 = vadd.f32 %v6341, %v6435
      %v6508 = vadd.f32 %v6342, %v6436
      %v6509 = vadd.f32 %v6343, %v6437
      %v6510 = vadd.f32 %v6344, %v6438
      %v6511 = vadd.f32 %v6345, %v6439
      %v6512 = vadd.f32 %v6346, %v6440
      %v6513 = vadd.f32 %v6347, %v6441
      %v6514 = vld [vmem:[%s2] sm:$0x1]
      %v6516 = vperm.slane %v6514, 0
      %v6518 = vadd.f32 %v6442, %v6516
      %v6519 = vadd.f32 %v6443, %v6516
      %v6520 = vadd.f32 %v6444, %v6516
      %v6521 = vadd.f32 %v6445, %v6516
      %v6522 = vadd.f32 %v6446, %v6516
      %v6523 = vadd.f32 %v6447, %v6516
      %v6524 = vadd.f32 %v6448, %v6516
      %v6525 = vadd.f32 %v6449, %v6516
      %v6526 = vadd.f32 %v6450, %v6516
      %v6527 = vadd.f32 %v6451, %v6516
      %v6528 = vadd.f32 %v6452, %v6516
      %v6529 = vadd.f32 %v6453, %v6516
      %v6530 = vadd.f32 %v6454, %v6516
      %v6531 = vadd.f32 %v6455, %v6516
      %v6532 = vadd.f32 %v6456, %v6516
      %v6533 = vadd.f32 %v6457, %v6516
      %v6534 = vadd.f32 %v6458, %v6516
      %v6535 = vadd.f32 %v6459, %v6516
      %v6536 = vadd.f32 %v6460, %v6516
      %v6537 = vadd.f32 %v6461, %v6516
      %v6538 = vadd.f32 %v6462, %v6516
      %v6539 = vadd.f32 %v6463, %v6516
      %v6540 = vadd.f32 %v6464, %v6516
      %v6541 = vadd.f32 %v6465, %v6516
      %v6542 = vadd.f32 %v6466, %v6516
      %v6543 = vadd.f32 %v6467, %v6516
      %v6544 = vadd.f32 %v6468, %v6516
      %v6545 = vadd.f32 %v6469, %v6516
      %v6546 = vadd.f32 %v6470, %v6516
      %v6547 = vadd.f32 %v6471, %v6516
      %v6548 = vadd.f32 %v6472, %v6516
      %v6549 = vadd.f32 %v6473, %v6516
      %v6550 = vadd.f32 %v6474, %v6516
      %v6551 = vadd.f32 %v6475, %v6516
      %v6552 = vadd.f32 %v6476, %v6516
      %v6553 = vadd.f32 %v6477, %v6516
      %v6554 = vadd.f32 %v6478, %v6516
      %v6555 = vadd.f32 %v6479, %v6516
      %v6556 = vadd.f32 %v6480, %v6516
      %v6557 = vadd.f32 %v6481, %v6516
      %v6558 = vadd.f32 %v6482, %v6516
      %v6559 = vadd.f32 %v6483, %v6516
      %v6560 = vadd.f32 %v6484, %v6516
      %v6561 = vadd.f32 %v6485, %v6516
      %v6562 = vadd.f32 %v6486, %v6516
      %v6563 = vadd.f32 %v6487, %v6516
      %v6564 = vadd.f32 %v6488, %v6516
      %v6565 = vadd.f32 %v6489, %v6516
      %v6566 = vadd.f32 %v6490, %v6516
      %v6567 = vadd.f32 %v6491, %v6516
      %v6568 = vadd.f32 %v6492, %v6516
      %v6569 = vadd.f32 %v6493, %v6516
      %v6570 = vadd.f32 %v6494, %v6516
      %v6571 = vadd.f32 %v6495, %v6516
      %v6572 = vadd.f32 %v6496, %v6516
      %v6573 = vadd.f32 %v6497, %v6516
      %v6574 = vadd.f32 %v6498, %v6516
      %v6575 = vadd.f32 %v6499, %v6516
      %v6576 = vadd.f32 %v6500, %v6516
      %v6577 = vadd.f32 %v6501, %v6516
      %v6578 = vadd.f32 %v6502, %v6516
      %v6579 = vadd.f32 %v6503, %v6516
      %v6580 = vadd.f32 %v6504, %v6516
      %v6581 = vadd.f32 %v6505, %v6516
      %v6582 = vadd.f32 %v6506, %v6516
      %v6583 = vadd.f32 %v6507, %v6516
      %v6584 = vadd.f32 %v6508, %v6516
      %v6585 = vadd.f32 %v6509, %v6516
      %v6586 = vadd.f32 %v6510, %v6516
      %v6587 = vadd.f32 %v6511, %v6516
      %v6588 = vadd.f32 %v6512, %v6516
      %v6589 = vadd.f32 %v6513, %v6516
      %v6590 = vmax.f32 %v6518, %v6521
      %v6591 = vmax.f32 %v6519, %v6522
      %v6592 = vmax.f32 %v6520, %v6523
      %v6593 = vmax.f32 %v6524, %v6527
      %v6594 = vmax.f32 %v6525, %v6528
      %v6595 = vmax.f32 %v6526, %v6529
      %v6596 = vmax.f32 %v6530, %v6533
      %v6597 = vmax.f32 %v6531, %v6534
      %v6598 = vmax.f32 %v6532, %v6535
      %v6599 = vmax.f32 %v6536, %v6539
      %v6600 = vmax.f32 %v6537, %v6540
      %v6601 = vmax.f32 %v6538, %v6541
      %v6602 = vmax.f32 %v6542, %v6545
      %v6603 = vmax.f32 %v6543, %v6546
      %v6604 = vmax.f32 %v6544, %v6547
      %v6605 = vmax.f32 %v6548, %v6551
      %v6606 = vmax.f32 %v6549, %v6552
      %v6607 = vmax.f32 %v6550, %v6553
      %v6608 = vmax.f32 %v6554, %v6557
      %v6609 = vmax.f32 %v6555, %v6558
      %v6610 = vmax.f32 %v6556, %v6559
      %v6611 = vmax.f32 %v6560, %v6563
      %v6612 = vmax.f32 %v6561, %v6564
      %v6613 = vmax.f32 %v6562, %v6565
      %v6614 = vmax.f32 %v6566, %v6569
      %v6615 = vmax.f32 %v6567, %v6570
      %v6616 = vmax.f32 %v6568, %v6571
      %v6617 = vmax.f32 %v6572, %v6575
      %v6618 = vmax.f32 %v6573, %v6576
      %v6619 = vmax.f32 %v6574, %v6577
      %v6620 = vmax.f32 %v6578, %v6581
      %v6621 = vmax.f32 %v6579, %v6582
      %v6622 = vmax.f32 %v6580, %v6583
      %v6623 = vmax.f32 %v6584, %v6587
      %v6624 = vmax.f32 %v6585, %v6588
      %v6625 = vmax.f32 %v6586, %v6589
      %6626 = vst [vmem:[#allocation2] sm:$0xff] %v6590
      %6627 = vst [vmem:[#allocation2 + $0x8] sm:$0xff] %v6591
      %6628 = vst [vmem:[#allocation2 + $0x10] sm:$0xff] %v6592
      %6629 = vst [vmem:[#allocation2 + $0x18] sm:$0xff] %v6593
      %6630 = vst [vmem:[#allocation2 + $0x20] sm:$0xff] %v6594
      %6631 = vst [vmem:[#allocation2 + $0x28] sm:$0xff] %v6595
      %6632 = vst [vmem:[#allocation2 + $0x30] sm:$0xff] %v6596
      %6633 = vst [vmem:[#allocation2 + $0x38] sm:$0xff] %v6597
      %6634 = vst [vmem:[#allocation2 + $0x40] sm:$0xff] %v6598
      %6635 = vst [vmem:[#allocation2 + $0x48] sm:$0xff] %v6599
      %6636 = vst [vmem:[#allocation2 + $0x50] sm:$0xff] %v6600
      %6637 = vst [vmem:[#allocation2 + $0x58] sm:$0xff] %v6601
      %6638 = vst [vmem:[#allocation2 + $0x60] sm:$0xff] %v6602
      %6639 = vst [vmem:[#allocation2 + $0x68] sm:$0xff] %v6603
      %6640 = vst [vmem:[#allocation2 + $0x70] sm:$0xff] %v6604
      %6641 = vst [vmem:[#allocation2 + $0x78] sm:$0xff] %v6605
      %6642 = vst [vmem:[#allocation2 + $0x80] sm:$0xff] %v6606
      %6643 = vst [vmem:[#allocation2 + $0x88] sm:$0xff] %v6607
      %6644 = vst [vmem:[#allocation2 + $0x90] sm:$0xff] %v6608
      %6645 = vst [vmem:[#allocation2 + $0x98] sm:$0xff] %v6609
      %6646 = vst [vmem:[#allocation2 + $0xa0] sm:$0xff] %v6610
      %6647 = vst [vmem:[#allocation2 + $0xa8] sm:$0xff] %v6611
      %6648 = vst [vmem:[#allocation2 + $0xb0] sm:$0xff] %v6612
      %6649 = vst [vmem:[#allocation2 + $0xb8] sm:$0xff] %v6613
      %6650 = vst [vmem:[#allocation2 + $0xc0] sm:$0xff] %v6614
      %6651 = vst [vmem:[#allocation2 + $0xc8] sm:$0xff] %v6615
      %6652 = vst [vmem:[#allocation2 + $0xd0] sm:$0xff] %v6616
      %6653 = vst [vmem:[#allocation2 + $0xd8] sm:$0xff] %v6617
      %6654 = vst [vmem:[#allocation2 + $0xe0] sm:$0xff] %v6618
      %6655 = vst [vmem:[#allocation2 + $0xe8] sm:$0xff] %v6619
      %6656 = vst [vmem:[#allocation2 + $0xf0] sm:$0xff] %v6620
      %6657 = vst [vmem:[#allocation2 + $0xf8] sm:$0xff] %v6621
      %6658 = vst [vmem:[#allocation2 + $0x100] sm:$0xff] %v6622
      %6659 = vst [vmem:[#allocation2 + $0x108] sm:$0xff] %v6623
      %6660 = vst [vmem:[#allocation2 + $0x110] sm:$0xff] %v6624
      %6661 = vst [vmem:[#allocation2 + $0x118] sm:$0xff] %v6625
      %v6662 = vld [vmem:[#allocation2] ss:$2 sm:$0xff]
      %s6663 = scalar_lea.vmem [#allocation2], 16
      %v6664 = vld [vmem:[%s6663] ss:$2 sm:$0xff]
      %s6665 = scalar_lea.vmem [#allocation2], 32
      %v6666 = vld [vmem:[%s6665] ss:$2 sm:$0xff]
      %s6667 = scalar_lea.vmem [#allocation2], 48
      %v6668 = vld [vmem:[%s6667] ss:$2 sm:$0xff]
      %s6669 = scalar_lea.vmem [#allocation2], 64
      %v6670 = vld [vmem:[%s6669] ss:$2 sm:$0xff]
      %s6671 = scalar_lea.vmem [#allocation2], 80
      %v6672 = vld [vmem:[%s6671] ss:$2 sm:$0xff]
      %s6673 = scalar_lea.vmem [#allocation2], 96
      %v6674 = vld [vmem:[%s6673] ss:$2 sm:$0xff]
      %s6675 = scalar_lea.vmem [#allocation2], 112
      %v6676 = vld [vmem:[%s6675] ss:$2 sm:$0xff]
      %s6677 = scalar_lea.vmem [#allocation2], 128
      %v6678 = vld [vmem:[%s6677] ss:$2 sm:$0xff]
      %s6679 = scalar_lea.vmem [#allocation2], 144
      %v6680 = vld [vmem:[%s6679] ss:$2 sm:$0xff]
      %s6681 = scalar_lea.vmem [#allocation2], 160
      %v6682 = vld [vmem:[%s6681] ss:$2 sm:$0xff]
      %s6683 = scalar_lea.vmem [#allocation2], 176
      %v6684 = vld [vmem:[%s6683] ss:$2 sm:$0xff]
      %s6685 = scalar_lea.vmem [#allocation2], 192
      %v6686 = vld [vmem:[%s6685] ss:$2 sm:$0xff]
      %s6687 = scalar_lea.vmem [#allocation2], 208
      %v6688 = vld [vmem:[%s6687] ss:$2 sm:$0xff]
      %s6689 = scalar_lea.vmem [#allocation2], 224
      %v6690 = vld [vmem:[%s6689] ss:$2 sm:$0xff]
      %s6691 = scalar_lea.vmem [#allocation2], 240
      %v6692 = vld [vmem:[%s6691] ss:$2 sm:$0xff]
      %s6693 = scalar_lea.vmem [#allocation2], 256
      %v6694 = vld [vmem:[%s6693] ss:$2 sm:$0xff]
      %s6695 = scalar_lea.vmem [#allocation2], 272
      %v6696 = vld [vmem:[%s6695] ss:$2 sm:$0xff]
      %s6697 = scalar_lea.vmem [#allocation2], 1
      %v6698 = vld [vmem:[%s6697] ss:$2 sm:$0xff]
      %s6699 = scalar_lea.vmem [#allocation2], 17
      %v6700 = vld [vmem:[%s6699] ss:$2 sm:$0xff]
      %s6701 = scalar_lea.vmem [#allocation2], 33
      %v6702 = vld [vmem:[%s6701] ss:$2 sm:$0xff]
      %s6703 = scalar_lea.vmem [#allocation2], 49
      %v6704 = vld [vmem:[%s6703] ss:$2 sm:$0xff]
      %s6705 = scalar_lea.vmem [#allocation2], 65
      %v6706 = vld [vmem:[%s6705] ss:$2 sm:$0xff]
      %s6707 = scalar_lea.vmem [#allocation2], 81
      %v6708 = vld [vmem:[%s6707] ss:$2 sm:$0xff]
      %s6709 = scalar_lea.vmem [#allocation2], 97
      %v6710 = vld [vmem:[%s6709] ss:$2 sm:$0xff]
      %s6711 = scalar_lea.vmem [#allocation2], 113
      %v6712 = vld [vmem:[%s6711] ss:$2 sm:$0xff]
      %s6713 = scalar_lea.vmem [#allocation2], 129
      %v6714 = vld [vmem:[%s6713] ss:$2 sm:$0xff]
      %s6715 = scalar_lea.vmem [#allocation2], 145
      %v6716 = vld [vmem:[%s6715] ss:$2 sm:$0xff]
      %s6717 = scalar_lea.vmem [#allocation2], 161
      %v6718 = vld [vmem:[%s6717] ss:$2 sm:$0xff]
      %s6719 = scalar_lea.vmem [#allocation2], 177
      %v6720 = vld [vmem:[%s6719] ss:$2 sm:$0xff]
      %s6721 = scalar_lea.vmem [#allocation2], 193
      %v6722 = vld [vmem:[%s6721] ss:$2 sm:$0xff]
      %s6723 = scalar_lea.vmem [#allocation2], 209
      %v6724 = vld [vmem:[%s6723] ss:$2 sm:$0xff]
      %s6725 = scalar_lea.vmem [#allocation2], 225
      %v6726 = vld [vmem:[%s6725] ss:$2 sm:$0xff]
      %s6727 = scalar_lea.vmem [#allocation2], 241
      %v6728 = vld [vmem:[%s6727] ss:$2 sm:$0xff]
      %s6729 = scalar_lea.vmem [#allocation2], 257
      %v6730 = vld [vmem:[%s6729] ss:$2 sm:$0xff]
      %s6731 = scalar_lea.vmem [#allocation2], 273
      %v6732 = vld [vmem:[%s6731] ss:$2 sm:$0xff]
      %v6733 = vmax.f32 %v6662, %v6698
      %v6734 = vmax.f32 %v6664, %v6700
      %v6735 = vmax.f32 %v6666, %v6702
      %v6736 = vmax.f32 %v6668, %v6704
      %v6737 = vmax.f32 %v6670, %v6706
      %v6738 = vmax.f32 %v6672, %v6708
      %v6739 = vmax.f32 %v6674, %v6710
      %v6740 = vmax.f32 %v6676, %v6712
      %v6741 = vmax.f32 %v6678, %v6714
      %v6742 = vmax.f32 %v6680, %v6716
      %v6743 = vmax.f32 %v6682, %v6718
      %v6744 = vmax.f32 %v6684, %v6720
      %v6745 = vmax.f32 %v6686, %v6722
      %v6746 = vmax.f32 %v6688, %v6724
      %v6747 = vmax.f32 %v6690, %v6726
      %v6748 = vmax.f32 %v6692, %v6728
      %v6749 = vmax.f32 %v6694, %v6730
      %v6750 = vmax.f32 %v6696, %v6732
      %v6751 = vmax.f32 %v6733, 0.0
      %v6752 = vmax.f32 %v6734, 0.0
      %v6753 = vmax.f32 %v6735, 0.0
      %v6754 = vmax.f32 %v6736, 0.0
      %v6755 = vmax.f32 %v6737, 0.0
      %v6756 = vmax.f32 %v6738, 0.0
      %v6757 = vmax.f32 %v6739, 0.0
      %v6758 = vmax.f32 %v6740, 0.0
      %v6759 = vmax.f32 %v6741, 0.0
      %v6760 = vmax.f32 %v6742, 0.0
      %v6761 = vmax.f32 %v6743, 0.0
      %v6762 = vmax.f32 %v6744, 0.0
      %v6763 = vmax.f32 %v6745, 0.0
      %v6764 = vmax.f32 %v6746, 0.0
      %v6765 = vmax.f32 %v6747, 0.0
      %v6766 = vmax.f32 %v6748, 0.0
      %v6767 = vmax.f32 %v6749, 0.0
      %v6768 = vmax.f32 %v6750, 0.0
      %v6769 = vpack.c.bf16 %v6751, %v6751
      %v6770 = vpack.c.bf16 %v6752, %v6752
      %v6771 = vpack.c.bf16 %v6753, %v6753
      %v6772 = vpack.c.bf16 %v6754, %v6754
      %v6773 = vpack.c.bf16 %v6755, %v6755
      %v6774 = vpack.c.bf16 %v6756, %v6756
      %v6775 = vpack.c.bf16 %v6757, %v6757
      %v6776 = vpack.c.bf16 %v6758, %v6758
      %v6777 = vpack.c.bf16 %v6759, %v6759
      %v6778 = vpack.c.bf16 %v6760, %v6760
      %v6779 = vpack.c.bf16 %v6761, %v6761
      %v6780 = vpack.c.bf16 %v6762, %v6762
      %v6781 = vpack.c.bf16 %v6763, %v6763
      %v6782 = vpack.c.bf16 %v6764, %v6764
      %v6783 = vpack.c.bf16 %v6765, %v6765
      %v6784 = vpack.c.bf16 %v6766, %v6766
      %v6785 = vpack.c.bf16 %v6767, %v6767
      %v6786 = vpack.c.bf16 %v6768, %v6768
      %6787 = vst [vmem:[%s170] sm:$0xf] %v6769
      %6788 = vst [vmem:[%s170 + $0x4] sm:$0xf] %v6770
      %6789 = vst [vmem:[%s170 + $0x8] sm:$0xf] %v6771
      %6790 = vst [vmem:[%s170 + $0xc] sm:$0xf] %v6772
      %6791 = vst [vmem:[%s170 + $0x10] sm:$0xf] %v6773
      %6792 = vst [vmem:[%s170 + $0x14] sm:$0xf] %v6774
      %6793 = vst [vmem:[%s170 + $0x18] sm:$0xf] %v6775
      %6794 = vst [vmem:[%s170 + $0x1c] sm:$0xf] %v6776
      %6795 = vst [vmem:[%s170 + $0x20] sm:$0xf] %v6777
      %6796 = vst [vmem:[%s170 + $0x24] sm:$0xf] %v6778
      %6797 = vst [vmem:[%s170 + $0x28] sm:$0xf] %v6779
      %6798 = vst [vmem:[%s170 + $0x2c] sm:$0xf] %v6780
      %6799 = vst [vmem:[%s170 + $0x30] sm:$0xf] %v6781
      %6800 = vst [vmem:[%s170 + $0x34] sm:$0xf] %v6782
      %6801 = vst [vmem:[%s170 + $0x38] sm:$0xf] %v6783
      %6802 = vst [vmem:[%s170 + $0x3c] sm:$0xf] %v6784
      %6803 = vst [vmem:[%s170 + $0x40] sm:$0xf] %v6785
      %6804 = vst [vmem:[%s170 + $0x44] sm:$0xf] %v6786
      %p6805 = scmp.lt.s32.totalorder %s14, 1
      %s6806 = scalar_select %p6805, %s14, 1
      %s6807 = smul.addr %s6806, 18
      %s6808 = smul.addr %s6807, 4
      %s6809 = scalar_lea.vmem %s3, %s6808
      // Predicated region
      $region33: #{compliant_relu_forward.3} parent=31 // pred_check
        %p6810 = pneg %p100
      $region34: #{compliant_relu_forward.3} parent=31 // pred_check_branch
        %6812 = sbr.rel (%p6810) target = $region36
      $region35: #{compliant_relu_forward.3} parent=31 // pred_region
        _
      $region36: #{compliant_relu_forward.3} parent=31 // pred_fallthru
        _
    $region32: #{compliant_relu_forward.3} parent=5 // pred_fallthru
      _
    %p6813 = scmp.le.s32.totalorder 2, %s9
    // Predicated region
    $region37: #{compliant_relu_forward.3} parent=5 // pred_check
      %p6814 = pneg %p6813
    $region38: #{compliant_relu_forward.3} parent=5 // pred_check_branch
      %6816 = sbr.rel (%p6814) target = $region40
    $region39: #{compliant_relu_forward.3} parent=5 // pred_region
      %s6817 = ssub.s32 %s9, 2
      // Predicated region
      $region41: #{compliant_relu_forward.3} parent=39 // pred_check
        %p6818 = pneg %p106
      $region42: #{compliant_relu_forward.3} parent=39 // pred_check_branch
        %6820 = sbr.rel (%p6818) target = $region44
      $region43: #{compliant_relu_forward.3} parent=39 // pred_region
        %p6821 = scmp.lt.s32.totalorder %s15, 1
        %s6822 = scalar_select %p6821, %s15, 1
        %s6823 = smul.addr %s6822, 18
        %s6824 = smul.addr %s6823, 4
        %s6825 = scalar_lea.vmem %s3, %s6824
      $region44: #{compliant_relu_forward.3} parent=39 // pred_fallthru
        _
    $region40: #{compliant_relu_forward.3} parent=5 // pred_fallthru
      _
  $region6: #{compliant_relu_forward.3} parent=0 // loop_footer
    %s13 = sadd.s32 1, %s9
  $region7: #{compliant_relu_forward.3} parent=0 // loop_footer_branch
    %8 = sbr.rel target = $region3
  $region8: #{compliant_relu_forward.3} parent=0 // loop_exit
    _

</llo_original>
